<compile_context>
chip_gen: v6e
topology: v6e:2x2x1
jax: 0.10.0
libtpu: 0.0.40
codegen_flags: <defaults>
</compile_context>

<pallas_src>
import jax
import jax.numpy as jnp
from jax.experimental import pallas as pl
from jax.experimental.pallas import tpu as pltpu

VOCAB = 28            # vocab_size
EMBED = 64            # embed_dim
HEADS = 8             # num_heads (module default 10 is invalid for embed_dim=64)
HEAD_DIM = EMBED // HEADS
LAYERS = 3            # num_layers
FF = 64               # dim_feedforward
CTX = 10              # context_size
BATCH = 2
EPS = 1e-5            # nn.LayerNorm default
FC_PAD = 128          # lane-dense padded fc output width
NEG_INF = -1e30       # additive mask for cross-sequence attention entries


def _layernorm(x, w, b):
    # f32 math (VPU/EUP); biased variance, matching nn.LayerNorm.
    mean = jnp.mean(x, axis=-1, keepdims=True)
    var = jnp.mean(jnp.square(x - mean), axis=-1, keepdims=True)
    return (x - mean) * jax.lax.rsqrt(var + EPS) * w + b


def transformer_kernel(x_ref, bias_ref,
                       wq_ref, bq_ref, wk_ref, bk_ref, wv_ref, bv_ref,
                       wo_ref, bo_ref, ln1w_ref, ln1b_ref,
                       w1_ref, b1_ref, w2_ref, b2_ref,
                       ln2w_ref, ln2b_ref, fcw_ref, fcb_ref,
                       out_ref):
    x = x_ref[...]                      # [B*T, E] f32 residual stream
    attn_bias = bias_ref[...]           # [B*T, B*T] f32, 0 on same-sequence, -1e30 across
    D = HEAD_DIM

    for l in range(LAYERS):             # static unrolled layer loop (weights stay resident)
        # ---- fused multi-head self-attention (post-LN) --------------------
        xb = x.astype(jnp.bfloat16)
        # scale 1/sqrt(D) is pre-folded into wq/bq on the host
        q = jnp.dot(xb, wq_ref[l], preferred_element_type=jnp.float32) + bq_ref[l]
        k = jnp.dot(xb, wk_ref[l], preferred_element_type=jnp.float32) + bk_ref[l]
        v = jnp.dot(xb, wv_ref[l], preferred_element_type=jnp.float32) + bv_ref[l]
        q = q.astype(jnp.bfloat16)
        k = k.astype(jnp.bfloat16)
        v = v.astype(jnp.bfloat16)

        # heads -> leading batch dim: one batched score einsum, ONE softmax,
        # one batched context einsum (instead of an 8-way per-head loop).
        qh = jnp.stack([q[:, h * D:(h + 1) * D] for h in range(HEADS)], axis=0)  # [H, BT, D]
        kh = jnp.stack([k[:, h * D:(h + 1) * D] for h in range(HEADS)], axis=0)
        vh = jnp.stack([v[:, h * D:(h + 1) * D] for h in range(HEADS)], axis=0)

        s = jnp.einsum('htd,hsd->hts', qh, kh,
                       preferred_element_type=jnp.float32)      # [H, BT, BT] f32
        s = s + attn_bias                                        # block-diag batch mask
        s = s - jnp.max(s, axis=-1, keepdims=True)
        p = jnp.exp(s)
        p = p * pl.reciprocal(jnp.sum(p, axis=-1, keepdims=True), approx=True)
        ctx = jnp.einsum('hts,hsd->htd', p.astype(jnp.bfloat16), vh,
                         preferred_element_type=jnp.float32)     # [H, BT, D]
        ctx = ctx.astype(jnp.bfloat16)
        ctx_cat = jnp.concatenate([ctx[h] for h in range(HEADS)], axis=-1)  # [BT, E]

        attn = jnp.dot(ctx_cat, wo_ref[l],
                       preferred_element_type=jnp.float32) + bo_ref[l]
        x = _layernorm(x + attn, ln1w_ref[l], ln1b_ref[l])

        # ---- feed-forward block (relu; dropout = identity) ----------------
        xb = x.astype(jnp.bfloat16)
        h1 = jnp.dot(xb, w1_ref[l], preferred_element_type=jnp.float32) + b1_ref[l]
        h1 = jnp.maximum(h1, 0.0)
        h2 = jnp.dot(h1.astype(jnp.bfloat16), w2_ref[l],
                     preferred_element_type=jnp.float32) + b2_ref[l]
        x = _layernorm(x + h2, ln2w_ref[l], ln2b_ref[l])

    # ---- final projection (128-lane padded output; wrapper picks last token + :VOCAB)
    out = jnp.dot(x.astype(jnp.bfloat16), fcw_ref[...],
                  preferred_element_type=jnp.float32) + fcb_ref[...]
    out_ref[...] = out                                           # [B*T, FC_PAD]


def init_params(key):
    """Generate PyTorch-convention params, then pre-transpose/split/pad for the kernel."""
    ks = jax.random.split(key, 12)

    def nrm(k, shape, s=0.05):
        return (s * jax.random.normal(k, shape)).astype(jnp.float32)

    # PyTorch-layout parameters ([out_features, in_features] etc.)
    in_w = nrm(ks[1], (LAYERS, 3 * EMBED, EMBED))     # in_proj_weight
    in_b = nrm(ks[2], (LAYERS, 3 * EMBED))            # in_proj_bias
    out_w = nrm(ks[3], (LAYERS, EMBED, EMBED))        # out_proj.weight
    out_b = nrm(ks[4], (LAYERS, EMBED))
    w1 = nrm(ks[5], (LAYERS, FF, EMBED))              # linear1
    b1 = nrm(ks[6], (LAYERS, FF))
    w2 = nrm(ks[7], (LAYERS, EMBED, FF))              # linear2
    b2 = nrm(ks[8], (LAYERS, EMBED))
    fc_w = nrm(ks[9], (VOCAB, EMBED))                 # self.fc
    fc_b = nrm(ks[10], (VOCAB,))

    scale = 1.0 / (HEAD_DIM ** 0.5)
    tT = lambda w: jnp.transpose(w, (0, 2, 1))        # [L, out, in] -> [L, in, out]
    bf = lambda w: w.astype(jnp.bfloat16)

    # split in_proj into q/k/v, pre-transpose to [in, out], fold scale into q
    wq = bf(tT(in_w[:, 0 * EMBED:1 * EMBED, :]) * scale)
    wk = bf(tT(in_w[:, 1 * EMBED:2 * EMBED, :]))
    wv = bf(tT(in_w[:, 2 * EMBED:3 * EMBED, :]))
    bq = (in_b[:, 0 * EMBED:1 * EMBED] * scale)[:, None, :]
    bk = in_b[:, 1 * EMBED:2 * EMBED][:, None, :]
    bv = in_b[:, 2 * EMBED:3 * EMBED][:, None, :]

    # zero-pad fc to 128 output lanes (lane-dense store), pre-transposed
    fcw_pad = jnp.zeros((EMBED, FC_PAD), jnp.float32).at[:, :VOCAB].set(fc_w.T)
    fcb_pad = jnp.zeros((1, FC_PAD), jnp.float32).at[0, :VOCAB].set(fc_b)

    return dict(
        emb=nrm(ks[0], (VOCAB, EMBED), 1.0),                     # nn.Embedding
        pos=jnp.zeros((1, CTX, EMBED), jnp.float32),             # zeros, as in __init__
        wq=wq, bq=bq, wk=wk, bk=bk, wv=wv, bv=bv,
        wo=bf(tT(out_w)), bo=out_b[:, None, :],
        ln1_w=jnp.ones((LAYERS, 1, EMBED), jnp.float32),
        ln1_b=jnp.zeros((LAYERS, 1, EMBED), jnp.float32),
        w1=bf(tT(w1)), b1=b1[:, None, :],
        w2=bf(tT(w2)), b2=b2[:, None, :],
        ln2_w=jnp.ones((LAYERS, 1, EMBED), jnp.float32),
        ln2_b=jnp.zeros((LAYERS, 1, EMBED), jnp.float32),
        fc_w=bf(fcw_pad), fc_b=fcb_pad,
    )


@jax.jit
def name_generator_forward(tokens, params):
    B, T = tokens.shape
    # glue: embedding gather + positional-encoding add, then flatten ONCE
    x = params['emb'][tokens] + params['pos']        # [B, T, E] f32
    x2 = x.reshape(B * T, EMBED)

    # block-diagonal additive attention bias (0 within a sequence, -1e30 across)
    ids = jnp.arange(B * T, dtype=jnp.int32) // T
    attn_bias = jnp.where(ids[:, None] == ids[None, :], 0.0, NEG_INF).astype(jnp.float32)

    args = (x2, attn_bias,
            params['wq'], params['bq'], params['wk'], params['bk'],
            params['wv'], params['bv'], params['wo'], params['bo'],
            params['ln1_w'], params['ln1_b'],
            params['w1'], params['b1'], params['w2'], params['b2'],
            params['ln2_w'], params['ln2_b'],
            params['fc_w'], params['fc_b'])

    vmem = pl.BlockSpec(memory_space=pltpu.MemorySpace.VMEM)
    out_padded = pl.pallas_call(
        transformer_kernel,
        out_shape=jax.ShapeDtypeStruct((B * T, FC_PAD), jnp.float32),
        in_specs=[vmem] * len(args),
        out_specs=vmem,
    )(*args)
    # last token of each sequence, un-pad to vocab width
    return out_padded[T - 1::T, :VOCAB]


if __name__ == "__main__":
    key = jax.random.PRNGKey(0)
    pkey, tkey = jax.random.split(key)
    params = init_params(pkey)
    tokens = jax.random.randint(tkey, (BATCH, CTX), 0, VOCAB, dtype=jnp.int32)

    logits = name_generator_forward(tokens, params)
    jax.block_until_ready(logits)
    assert logits.shape == (BATCH, VOCAB) and logits.dtype == jnp.float32
    assert bool(jnp.all(jnp.isfinite(logits)))
    print("KERNEL_OK")
</pallas_src>

<mosaic_0001>
module attributes {stable_mosaic.version = 11 : i64} {
  func.func @transformer_kernel(%arg0: memref<20x64xf32, #tpu.memory_space<vmem>>, %arg1: memref<20x20xf32, #tpu.memory_space<vmem>>, %arg2: memref<3x64x64xbf16, #tpu.memory_space<vmem>>, %arg3: memref<3x1x64xf32, #tpu.memory_space<vmem>>, %arg4: memref<3x64x64xbf16, #tpu.memory_space<vmem>>, %arg5: memref<3x1x64xf32, #tpu.memory_space<vmem>>, %arg6: memref<3x64x64xbf16, #tpu.memory_space<vmem>>, %arg7: memref<3x1x64xf32, #tpu.memory_space<vmem>>, %arg8: memref<3x64x64xbf16, #tpu.memory_space<vmem>>, %arg9: memref<3x1x64xf32, #tpu.memory_space<vmem>>, %arg10: memref<3x1x64xf32, #tpu.memory_space<vmem>>, %arg11: memref<3x1x64xf32, #tpu.memory_space<vmem>>, %arg12: memref<3x64x64xbf16, #tpu.memory_space<vmem>>, %arg13: memref<3x1x64xf32, #tpu.memory_space<vmem>>, %arg14: memref<3x64x64xbf16, #tpu.memory_space<vmem>>, %arg15: memref<3x1x64xf32, #tpu.memory_space<vmem>>, %arg16: memref<3x1x64xf32, #tpu.memory_space<vmem>>, %arg17: memref<3x1x64xf32, #tpu.memory_space<vmem>>, %arg18: memref<64x128xbf16, #tpu.memory_space<vmem>>, %arg19: memref<1x128xf32, #tpu.memory_space<vmem>>, %arg20: memref<20x128xf32, #tpu.memory_space<vmem>>) attributes {dimension_semantics = [], scalar_prefetch = 0 : i64, scratch_operands = 0 : i64, tpu.core_type = #tpu.core_type<tc>} {
    %c0 = arith.constant 0 : index
    %c0_0 = arith.constant 0 : index
    %0 = vector.load %arg0[%c0, %c0_0] : memref<20x64xf32, #tpu.memory_space<vmem>>, vector<20x64xf32>
    %c0_1 = arith.constant 0 : index
    %c0_2 = arith.constant 0 : index
    %1 = vector.load %arg1[%c0_1, %c0_2] : memref<20x20xf32, #tpu.memory_space<vmem>>, vector<20x20xf32>
    %2 = arith.truncf %0 : vector<20x64xf32> to vector<20x64xbf16>
    %c0_3 = arith.constant 0 : index
    %c0_4 = arith.constant 0 : index
    %c0_5 = arith.constant 0 : index
    %3 = vector.load %arg2[%c0_3, %c0_4, %c0_5] : memref<3x64x64xbf16, #tpu.memory_space<vmem>>, vector<1x64x64xbf16>
    %4 = vector.shape_cast %3 : vector<1x64x64xbf16> to vector<64x64xbf16>
    %cst = arith.constant dense<0.000000e+00> : vector<20x64xf32>
    %5 = tpu.matmul %2, %4, %cst {dimension_numbers = #tpu.dot_dimension_numbers<[1], [0], [0], [1], [0, 0, 1, 1], [], []>} : vector<20x64xbf16>, vector<64x64xbf16>, vector<20x64xf32> -> vector<20x64xf32>
    %c0_6 = arith.constant 0 : index
    %c0_7 = arith.constant 0 : index
    %c0_8 = arith.constant 0 : index
    %6 = vector.load %arg3[%c0_6, %c0_7, %c0_8] : memref<3x1x64xf32, #tpu.memory_space<vmem>>, vector<1x1x64xf32>
    %7 = vector.shape_cast %6 : vector<1x1x64xf32> to vector<1x64xf32>
    %8 = vector.broadcast %7 : vector<1x64xf32> to vector<20x64xf32>
    %9 = arith.addf %5, %8 : vector<20x64xf32>
    %c0_9 = arith.constant 0 : index
    %c0_10 = arith.constant 0 : index
    %c0_11 = arith.constant 0 : index
    %10 = vector.load %arg4[%c0_9, %c0_10, %c0_11] : memref<3x64x64xbf16, #tpu.memory_space<vmem>>, vector<1x64x64xbf16>
    %11 = vector.shape_cast %10 : vector<1x64x64xbf16> to vector<64x64xbf16>
    %cst_12 = arith.constant dense<0.000000e+00> : vector<20x64xf32>
    %12 = tpu.matmul %2, %11, %cst_12 {dimension_numbers = #tpu.dot_dimension_numbers<[1], [0], [0], [1], [0, 0, 1, 1], [], []>} : vector<20x64xbf16>, vector<64x64xbf16>, vector<20x64xf32> -> vector<20x64xf32>
    %c0_13 = arith.constant 0 : index
    %c0_14 = arith.constant 0 : index
    %c0_15 = arith.constant 0 : index
    %13 = vector.load %arg5[%c0_13, %c0_14, %c0_15] : memref<3x1x64xf32, #tpu.memory_space<vmem>>, vector<1x1x64xf32>
    %14 = vector.shape_cast %13 : vector<1x1x64xf32> to vector<1x64xf32>
    %15 = vector.broadcast %14 : vector<1x64xf32> to vector<20x64xf32>
    %16 = arith.addf %12, %15 : vector<20x64xf32>
    %c0_16 = arith.constant 0 : index
    %c0_17 = arith.constant 0 : index
    %c0_18 = arith.constant 0 : index
    %17 = vector.load %arg6[%c0_16, %c0_17, %c0_18] : memref<3x64x64xbf16, #tpu.memory_space<vmem>>, vector<1x64x64xbf16>
    %18 = vector.shape_cast %17 : vector<1x64x64xbf16> to vector<64x64xbf16>
    %cst_19 = arith.constant dense<0.000000e+00> : vector<20x64xf32>
    %19 = tpu.matmul %2, %18, %cst_19 {dimension_numbers = #tpu.dot_dimension_numbers<[1], [0], [0], [1], [0, 0, 1, 1], [], []>} : vector<20x64xbf16>, vector<64x64xbf16>, vector<20x64xf32> -> vector<20x64xf32>
    %c0_20 = arith.constant 0 : index
    %c0_21 = arith.constant 0 : index
    %c0_22 = arith.constant 0 : index
    %20 = vector.load %arg7[%c0_20, %c0_21, %c0_22] : memref<3x1x64xf32, #tpu.memory_space<vmem>>, vector<1x1x64xf32>
    %21 = vector.shape_cast %20 : vector<1x1x64xf32> to vector<1x64xf32>
    %22 = vector.broadcast %21 : vector<1x64xf32> to vector<20x64xf32>
    %23 = arith.addf %19, %22 : vector<20x64xf32>
    %24 = arith.truncf %9 : vector<20x64xf32> to vector<20x64xbf16>
    %25 = arith.truncf %16 : vector<20x64xf32> to vector<20x64xbf16>
    %26 = arith.truncf %23 : vector<20x64xf32> to vector<20x64xbf16>
    %27 = vector.extract_strided_slice %24 {offsets = [0, 0], sizes = [20, 8], strides = [1, 1]} : vector<20x64xbf16> to vector<20x8xbf16>
    %28 = vector.extract_strided_slice %24 {offsets = [0, 8], sizes = [20, 8], strides = [1, 1]} : vector<20x64xbf16> to vector<20x8xbf16>
    %29 = vector.extract_strided_slice %24 {offsets = [0, 16], sizes = [20, 8], strides = [1, 1]} : vector<20x64xbf16> to vector<20x8xbf16>
    %30 = vector.extract_strided_slice %24 {offsets = [0, 24], sizes = [20, 8], strides = [1, 1]} : vector<20x64xbf16> to vector<20x8xbf16>
    %31 = vector.extract_strided_slice %24 {offsets = [0, 32], sizes = [20, 8], strides = [1, 1]} : vector<20x64xbf16> to vector<20x8xbf16>
    %32 = vector.extract_strided_slice %24 {offsets = [0, 40], sizes = [20, 8], strides = [1, 1]} : vector<20x64xbf16> to vector<20x8xbf16>
    %33 = vector.extract_strided_slice %24 {offsets = [0, 48], sizes = [20, 8], strides = [1, 1]} : vector<20x64xbf16> to vector<20x8xbf16>
    %34 = vector.extract_strided_slice %24 {offsets = [0, 56], sizes = [20, 8], strides = [1, 1]} : vector<20x64xbf16> to vector<20x8xbf16>
    %35 = vector.shape_cast %27 : vector<20x8xbf16> to vector<1x20x8xbf16>
    %36 = vector.shape_cast %28 : vector<20x8xbf16> to vector<1x20x8xbf16>
    %37 = vector.shape_cast %29 : vector<20x8xbf16> to vector<1x20x8xbf16>
    %38 = vector.shape_cast %30 : vector<20x8xbf16> to vector<1x20x8xbf16>
    %39 = vector.shape_cast %31 : vector<20x8xbf16> to vector<1x20x8xbf16>
    %40 = vector.shape_cast %32 : vector<20x8xbf16> to vector<1x20x8xbf16>
    %41 = vector.shape_cast %33 : vector<20x8xbf16> to vector<1x20x8xbf16>
    %42 = vector.shape_cast %34 : vector<20x8xbf16> to vector<1x20x8xbf16>
    %43 = tpu.concatenate %35, %36, %37, %38, %39, %40, %41, %42 in 0 : vector<1x20x8xbf16>, vector<1x20x8xbf16>, vector<1x20x8xbf16>, vector<1x20x8xbf16>, vector<1x20x8xbf16>, vector<1x20x8xbf16>, vector<1x20x8xbf16>, vector<1x20x8xbf16> -> vector<8x20x8xbf16>
    %44 = vector.extract_strided_slice %25 {offsets = [0, 0], sizes = [20, 8], strides = [1, 1]} : vector<20x64xbf16> to vector<20x8xbf16>
    %45 = vector.extract_strided_slice %25 {offsets = [0, 8], sizes = [20, 8], strides = [1, 1]} : vector<20x64xbf16> to vector<20x8xbf16>
    %46 = vector.extract_strided_slice %25 {offsets = [0, 16], sizes = [20, 8], strides = [1, 1]} : vector<20x64xbf16> to vector<20x8xbf16>
    %47 = vector.extract_strided_slice %25 {offsets = [0, 24], sizes = [20, 8], strides = [1, 1]} : vector<20x64xbf16> to vector<20x8xbf16>
    %48 = vector.extract_strided_slice %25 {offsets = [0, 32], sizes = [20, 8], strides = [1, 1]} : vector<20x64xbf16> to vector<20x8xbf16>
    %49 = vector.extract_strided_slice %25 {offsets = [0, 40], sizes = [20, 8], strides = [1, 1]} : vector<20x64xbf16> to vector<20x8xbf16>
    %50 = vector.extract_strided_slice %25 {offsets = [0, 48], sizes = [20, 8], strides = [1, 1]} : vector<20x64xbf16> to vector<20x8xbf16>
    %51 = vector.extract_strided_slice %25 {offsets = [0, 56], sizes = [20, 8], strides = [1, 1]} : vector<20x64xbf16> to vector<20x8xbf16>
    %52 = vector.shape_cast %44 : vector<20x8xbf16> to vector<1x20x8xbf16>
    %53 = vector.shape_cast %45 : vector<20x8xbf16> to vector<1x20x8xbf16>
    %54 = vector.shape_cast %46 : vector<20x8xbf16> to vector<1x20x8xbf16>
    %55 = vector.shape_cast %47 : vector<20x8xbf16> to vector<1x20x8xbf16>
    %56 = vector.shape_cast %48 : vector<20x8xbf16> to vector<1x20x8xbf16>
    %57 = vector.shape_cast %49 : vector<20x8xbf16> to vector<1x20x8xbf16>
    %58 = vector.shape_cast %50 : vector<20x8xbf16> to vector<1x20x8xbf16>
    %59 = vector.shape_cast %51 : vector<20x8xbf16> to vector<1x20x8xbf16>
    %60 = tpu.concatenate %52, %53, %54, %55, %56, %57, %58, %59 in 0 : vector<1x20x8xbf16>, vector<1x20x8xbf16>, vector<1x20x8xbf16>, vector<1x20x8xbf16>, vector<1x20x8xbf16>, vector<1x20x8xbf16>, vector<1x20x8xbf16>, vector<1x20x8xbf16> -> vector<8x20x8xbf16>
    %61 = vector.extract_strided_slice %26 {offsets = [0, 0], sizes = [20, 8], strides = [1, 1]} : vector<20x64xbf16> to vector<20x8xbf16>
    %62 = vector.extract_strided_slice %26 {offsets = [0, 8], sizes = [20, 8], strides = [1, 1]} : vector<20x64xbf16> to vector<20x8xbf16>
    %63 = vector.extract_strided_slice %26 {offsets = [0, 16], sizes = [20, 8], strides = [1, 1]} : vector<20x64xbf16> to vector<20x8xbf16>
    %64 = vector.extract_strided_slice %26 {offsets = [0, 24], sizes = [20, 8], strides = [1, 1]} : vector<20x64xbf16> to vector<20x8xbf16>
    %65 = vector.extract_strided_slice %26 {offsets = [0, 32], sizes = [20, 8], strides = [1, 1]} : vector<20x64xbf16> to vector<20x8xbf16>
    %66 = vector.extract_strided_slice %26 {offsets = [0, 40], sizes = [20, 8], strides = [1, 1]} : vector<20x64xbf16> to vector<20x8xbf16>
    %67 = vector.extract_strided_slice %26 {offsets = [0, 48], sizes = [20, 8], strides = [1, 1]} : vector<20x64xbf16> to vector<20x8xbf16>
    %68 = vector.extract_strided_slice %26 {offsets = [0, 56], sizes = [20, 8], strides = [1, 1]} : vector<20x64xbf16> to vector<20x8xbf16>
    %69 = vector.shape_cast %61 : vector<20x8xbf16> to vector<1x20x8xbf16>
    %70 = vector.shape_cast %62 : vector<20x8xbf16> to vector<1x20x8xbf16>
    %71 = vector.shape_cast %63 : vector<20x8xbf16> to vector<1x20x8xbf16>
    %72 = vector.shape_cast %64 : vector<20x8xbf16> to vector<1x20x8xbf16>
    %73 = vector.shape_cast %65 : vector<20x8xbf16> to vector<1x20x8xbf16>
    %74 = vector.shape_cast %66 : vector<20x8xbf16> to vector<1x20x8xbf16>
    %75 = vector.shape_cast %67 : vector<20x8xbf16> to vector<1x20x8xbf16>
    %76 = vector.shape_cast %68 : vector<20x8xbf16> to vector<1x20x8xbf16>
    %77 = tpu.concatenate %69, %70, %71, %72, %73, %74, %75, %76 in 0 : vector<1x20x8xbf16>, vector<1x20x8xbf16>, vector<1x20x8xbf16>, vector<1x20x8xbf16>, vector<1x20x8xbf16>, vector<1x20x8xbf16>, vector<1x20x8xbf16>, vector<1x20x8xbf16> -> vector<8x20x8xbf16>
    "tpu.trace_start"() <{level = 10 : i32, message = "htd,hsd->hts"}> : () -> ()
    %cst_23 = arith.constant dense<0.000000e+00> : vector<8x20x20xf32>
    %78 = tpu.matmul %43, %60, %cst_23 {dimension_numbers = #tpu.dot_dimension_numbers<[2], [2], [1], [1], [0, 0, 0, 1, 1, 1], [0], [0]>} : vector<8x20x8xbf16>, vector<8x20x8xbf16>, vector<8x20x20xf32> -> vector<8x20x20xf32>
    "tpu.trace_stop"() : () -> ()
    %79 = vector.shape_cast %1 : vector<20x20xf32> to vector<1x20x20xf32>
    %80 = vector.broadcast %79 : vector<1x20x20xf32> to vector<8x20x20xf32>
    %81 = arith.addf %78, %80 : vector<8x20x20xf32>
    %cst_24 = arith.constant dense<0xFF800000> : vector<8x20xf32>
    %82 = vector.multi_reduction <maximumf>, %81, %cst_24 [2] : vector<8x20x20xf32> to vector<8x20xf32>
    %83 = vector.shape_cast %82 : vector<8x20xf32> to vector<8x20x1xf32>
    %84 = vector.broadcast %83 : vector<8x20x1xf32> to vector<8x20x20xf32>
    %85 = arith.subf %81, %84 : vector<8x20x20xf32>
    %86 = math.exp %85 : vector<8x20x20xf32>
    %cst_25 = arith.constant dense<0.000000e+00> : vector<8x20xf32>
    %87 = vector.multi_reduction <add>, %86, %cst_25 [2] : vector<8x20x20xf32> to vector<8x20xf32>
    %88 = vector.shape_cast %87 : vector<8x20xf32> to vector<8x20x1xf32>
    %89 = tpu.reciprocal %88 {approx = true} : vector<8x20x1xf32> -> vector<8x20x1xf32>
    %90 = vector.broadcast %89 : vector<8x20x1xf32> to vector<8x20x20xf32>
    %91 = arith.mulf %86, %90 : vector<8x20x20xf32>
    %92 = arith.truncf %91 : vector<8x20x20xf32> to vector<8x20x20xbf16>
    "tpu.trace_start"() <{level = 10 : i32, message = "hts,hsd->htd"}> : () -> ()
    %cst_26 = arith.constant dense<0.000000e+00> : vector<8x20x8xf32>
    %93 = tpu.matmul %92, %77, %cst_26 {dimension_numbers = #tpu.dot_dimension_numbers<[2], [1], [1], [2], [0, 0, 0, 1, 1, 2], [0], [0]>} : vector<8x20x20xbf16>, vector<8x20x8xbf16>, vector<8x20x8xf32> -> vector<8x20x8xf32>
    "tpu.trace_stop"() : () -> ()
    %94 = arith.truncf %93 : vector<8x20x8xf32> to vector<8x20x8xbf16>
    %95 = vector.extract_strided_slice %94 {offsets = [0, 0, 0], sizes = [1, 20, 8], strides = [1, 1, 1]} : vector<8x20x8xbf16> to vector<1x20x8xbf16>
    %96 = vector.shape_cast %95 : vector<1x20x8xbf16> to vector<20x8xbf16>
    %97 = vector.extract_strided_slice %94 {offsets = [1, 0, 0], sizes = [1, 20, 8], strides = [1, 1, 1]} : vector<8x20x8xbf16> to vector<1x20x8xbf16>
    %98 = vector.shape_cast %97 : vector<1x20x8xbf16> to vector<20x8xbf16>
    %99 = vector.extract_strided_slice %94 {offsets = [2, 0, 0], sizes = [1, 20, 8], strides = [1, 1, 1]} : vector<8x20x8xbf16> to vector<1x20x8xbf16>
    %100 = vector.shape_cast %99 : vector<1x20x8xbf16> to vector<20x8xbf16>
    %101 = vector.extract_strided_slice %94 {offsets = [3, 0, 0], sizes = [1, 20, 8], strides = [1, 1, 1]} : vector<8x20x8xbf16> to vector<1x20x8xbf16>
    %102 = vector.shape_cast %101 : vector<1x20x8xbf16> to vector<20x8xbf16>
    %103 = vector.extract_strided_slice %94 {offsets = [4, 0, 0], sizes = [1, 20, 8], strides = [1, 1, 1]} : vector<8x20x8xbf16> to vector<1x20x8xbf16>
    %104 = vector.shape_cast %103 : vector<1x20x8xbf16> to vector<20x8xbf16>
    %105 = vector.extract_strided_slice %94 {offsets = [5, 0, 0], sizes = [1, 20, 8], strides = [1, 1, 1]} : vector<8x20x8xbf16> to vector<1x20x8xbf16>
    %106 = vector.shape_cast %105 : vector<1x20x8xbf16> to vector<20x8xbf16>
    %107 = vector.extract_strided_slice %94 {offsets = [6, 0, 0], sizes = [1, 20, 8], strides = [1, 1, 1]} : vector<8x20x8xbf16> to vector<1x20x8xbf16>
    %108 = vector.shape_cast %107 : vector<1x20x8xbf16> to vector<20x8xbf16>
    %109 = vector.extract_strided_slice %94 {offsets = [7, 0, 0], sizes = [1, 20, 8], strides = [1, 1, 1]} : vector<8x20x8xbf16> to vector<1x20x8xbf16>
    %110 = vector.shape_cast %109 : vector<1x20x8xbf16> to vector<20x8xbf16>
    %111 = tpu.concatenate %96, %98, %100, %102, %104, %106, %108, %110 in 1 : vector<20x8xbf16>, vector<20x8xbf16>, vector<20x8xbf16>, vector<20x8xbf16>, vector<20x8xbf16>, vector<20x8xbf16>, vector<20x8xbf16>, vector<20x8xbf16> -> vector<20x64xbf16>
    %c0_27 = arith.constant 0 : index
    %c0_28 = arith.constant 0 : index
    %c0_29 = arith.constant 0 : index
    %112 = vector.load %arg8[%c0_27, %c0_28, %c0_29] : memref<3x64x64xbf16, #tpu.memory_space<vmem>>, vector<1x64x64xbf16>
    %113 = vector.shape_cast %112 : vector<1x64x64xbf16> to vector<64x64xbf16>
    %cst_30 = arith.constant dense<0.000000e+00> : vector<20x64xf32>
    %114 = tpu.matmul %111, %113, %cst_30 {dimension_numbers = #tpu.dot_dimension_numbers<[1], [0], [0], [1], [0, 0, 1, 1], [], []>} : vector<20x64xbf16>, vector<64x64xbf16>, vector<20x64xf32> -> vector<20x64xf32>
    %c0_31 = arith.constant 0 : index
    %c0_32 = arith.constant 0 : index
    %c0_33 = arith.constant 0 : index
    %115 = vector.load %arg9[%c0_31, %c0_32, %c0_33] : memref<3x1x64xf32, #tpu.memory_space<vmem>>, vector<1x1x64xf32>
    %116 = vector.shape_cast %115 : vector<1x1x64xf32> to vector<1x64xf32>
    %117 = vector.broadcast %116 : vector<1x64xf32> to vector<20x64xf32>
    %118 = arith.addf %114, %117 : vector<20x64xf32>
    %119 = arith.addf %0, %118 : vector<20x64xf32>
    %c0_34 = arith.constant 0 : index
    %c0_35 = arith.constant 0 : index
    %c0_36 = arith.constant 0 : index
    %120 = vector.load %arg10[%c0_34, %c0_35, %c0_36] : memref<3x1x64xf32, #tpu.memory_space<vmem>>, vector<1x1x64xf32>
    %121 = vector.shape_cast %120 : vector<1x1x64xf32> to vector<1x64xf32>
    %c0_37 = arith.constant 0 : index
    %c0_38 = arith.constant 0 : index
    %c0_39 = arith.constant 0 : index
    %122 = vector.load %arg11[%c0_37, %c0_38, %c0_39] : memref<3x1x64xf32, #tpu.memory_space<vmem>>, vector<1x1x64xf32>
    %123 = vector.shape_cast %122 : vector<1x1x64xf32> to vector<1x64xf32>
    %cst_40 = arith.constant dense<0.000000e+00> : vector<20xf32>
    %124 = vector.multi_reduction <add>, %119, %cst_40 [1] : vector<20x64xf32> to vector<20xf32>
    %125 = vector.shape_cast %124 : vector<20xf32> to vector<20x1xf32>
    %cst_41 = arith.constant 6.400000e+01 : f32
    %126 = vector.broadcast %cst_41 : f32 to vector<20x1xf32>
    %127 = arith.divf %125, %126 : vector<20x1xf32>
    %128 = vector.broadcast %127 : vector<20x1xf32> to vector<20x64xf32>
    %129 = arith.subf %119, %128 : vector<20x64xf32>
    %130 = arith.mulf %129, %129 : vector<20x64xf32>
    %cst_42 = arith.constant dense<0.000000e+00> : vector<20xf32>
    %131 = vector.multi_reduction <add>, %130, %cst_42 [1] : vector<20x64xf32> to vector<20xf32>
    %132 = vector.shape_cast %131 : vector<20xf32> to vector<20x1xf32>
    %cst_43 = arith.constant 6.400000e+01 : f32
    %133 = vector.broadcast %cst_43 : f32 to vector<20x1xf32>
    %134 = arith.divf %132, %133 : vector<20x1xf32>
    %135 = vector.broadcast %127 : vector<20x1xf32> to vector<20x64xf32>
    %136 = arith.subf %119, %135 : vector<20x64xf32>
    %cst_44 = arith.constant 9.99999974E-6 : f32
    %137 = vector.broadcast %cst_44 : f32 to vector<20x1xf32>
    %138 = arith.addf %134, %137 : vector<20x1xf32>
    %139 = math.rsqrt %138 : vector<20x1xf32>
    %140 = vector.broadcast %139 : vector<20x1xf32> to vector<20x64xf32>
    %141 = arith.mulf %136, %140 : vector<20x64xf32>
    %142 = vector.broadcast %121 : vector<1x64xf32> to vector<20x64xf32>
    %143 = arith.mulf %141, %142 : vector<20x64xf32>
    %144 = vector.broadcast %123 : vector<1x64xf32> to vector<20x64xf32>
    %145 = arith.addf %143, %144 : vector<20x64xf32>
    %146 = arith.truncf %145 : vector<20x64xf32> to vector<20x64xbf16>
    %c0_45 = arith.constant 0 : index
    %c0_46 = arith.constant 0 : index
    %c0_47 = arith.constant 0 : index
    %147 = vector.load %arg12[%c0_45, %c0_46, %c0_47] : memref<3x64x64xbf16, #tpu.memory_space<vmem>>, vector<1x64x64xbf16>
    %148 = vector.shape_cast %147 : vector<1x64x64xbf16> to vector<64x64xbf16>
    %cst_48 = arith.constant dense<0.000000e+00> : vector<20x64xf32>
    %149 = tpu.matmul %146, %148, %cst_48 {dimension_numbers = #tpu.dot_dimension_numbers<[1], [0], [0], [1], [0, 0, 1, 1], [], []>} : vector<20x64xbf16>, vector<64x64xbf16>, vector<20x64xf32> -> vector<20x64xf32>
    %c0_49 = arith.constant 0 : index
    %c0_50 = arith.constant 0 : index
    %c0_51 = arith.constant 0 : index
    %150 = vector.load %arg13[%c0_49, %c0_50, %c0_51] : memref<3x1x64xf32, #tpu.memory_space<vmem>>, vector<1x1x64xf32>
    %151 = vector.shape_cast %150 : vector<1x1x64xf32> to vector<1x64xf32>
    %152 = vector.broadcast %151 : vector<1x64xf32> to vector<20x64xf32>
    %153 = arith.addf %149, %152 : vector<20x64xf32>
    %cst_52 = arith.constant 0.000000e+00 : f32
    %154 = vector.broadcast %cst_52 : f32 to vector<20x64xf32>
    %155 = arith.maximumf %153, %154 : vector<20x64xf32>
    %156 = arith.truncf %155 : vector<20x64xf32> to vector<20x64xbf16>
    %c0_53 = arith.constant 0 : index
    %c0_54 = arith.constant 0 : index
    %c0_55 = arith.constant 0 : index
    %157 = vector.load %arg14[%c0_53, %c0_54, %c0_55] : memref<3x64x64xbf16, #tpu.memory_space<vmem>>, vector<1x64x64xbf16>
    %158 = vector.shape_cast %157 : vector<1x64x64xbf16> to vector<64x64xbf16>
    %cst_56 = arith.constant dense<0.000000e+00> : vector<20x64xf32>
    %159 = tpu.matmul %156, %158, %cst_56 {dimension_numbers = #tpu.dot_dimension_numbers<[1], [0], [0], [1], [0, 0, 1, 1], [], []>} : vector<20x64xbf16>, vector<64x64xbf16>, vector<20x64xf32> -> vector<20x64xf32>
    %c0_57 = arith.constant 0 : index
    %c0_58 = arith.constant 0 : index
    %c0_59 = arith.constant 0 : index
    %160 = vector.load %arg15[%c0_57, %c0_58, %c0_59] : memref<3x1x64xf32, #tpu.memory_space<vmem>>, vector<1x1x64xf32>
    %161 = vector.shape_cast %160 : vector<1x1x64xf32> to vector<1x64xf32>
    %162 = vector.broadcast %161 : vector<1x64xf32> to vector<20x64xf32>
    %163 = arith.addf %159, %162 : vector<20x64xf32>
    %164 = arith.addf %145, %163 : vector<20x64xf32>
    %c0_60 = arith.constant 0 : index
    %c0_61 = arith.constant 0 : index
    %c0_62 = arith.constant 0 : index
    %165 = vector.load %arg16[%c0_60, %c0_61, %c0_62] : memref<3x1x64xf32, #tpu.memory_space<vmem>>, vector<1x1x64xf32>
    %166 = vector.shape_cast %165 : vector<1x1x64xf32> to vector<1x64xf32>
    %c0_63 = arith.constant 0 : index
    %c0_64 = arith.constant 0 : index
    %c0_65 = arith.constant 0 : index
    %167 = vector.load %arg17[%c0_63, %c0_64, %c0_65] : memref<3x1x64xf32, #tpu.memory_space<vmem>>, vector<1x1x64xf32>
    %168 = vector.shape_cast %167 : vector<1x1x64xf32> to vector<1x64xf32>
    %cst_66 = arith.constant dense<0.000000e+00> : vector<20xf32>
    %169 = vector.multi_reduction <add>, %164, %cst_66 [1] : vector<20x64xf32> to vector<20xf32>
    %170 = vector.shape_cast %169 : vector<20xf32> to vector<20x1xf32>
    %cst_67 = arith.constant 6.400000e+01 : f32
    %171 = vector.broadcast %cst_67 : f32 to vector<20x1xf32>
    %172 = arith.divf %170, %171 : vector<20x1xf32>
    %173 = vector.broadcast %172 : vector<20x1xf32> to vector<20x64xf32>
    %174 = arith.subf %164, %173 : vector<20x64xf32>
    %175 = arith.mulf %174, %174 : vector<20x64xf32>
    %cst_68 = arith.constant dense<0.000000e+00> : vector<20xf32>
    %176 = vector.multi_reduction <add>, %175, %cst_68 [1] : vector<20x64xf32> to vector<20xf32>
    %177 = vector.shape_cast %176 : vector<20xf32> to vector<20x1xf32>
    %cst_69 = arith.constant 6.400000e+01 : f32
    %178 = vector.broadcast %cst_69 : f32 to vector<20x1xf32>
    %179 = arith.divf %177, %178 : vector<20x1xf32>
    %180 = vector.broadcast %172 : vector<20x1xf32> to vector<20x64xf32>
    %181 = arith.subf %164, %180 : vector<20x64xf32>
    %cst_70 = arith.constant 9.99999974E-6 : f32
    %182 = vector.broadcast %cst_70 : f32 to vector<20x1xf32>
    %183 = arith.addf %179, %182 : vector<20x1xf32>
    %184 = math.rsqrt %183 : vector<20x1xf32>
    %185 = vector.broadcast %184 : vector<20x1xf32> to vector<20x64xf32>
    %186 = arith.mulf %181, %185 : vector<20x64xf32>
    %187 = vector.broadcast %166 : vector<1x64xf32> to vector<20x64xf32>
    %188 = arith.mulf %186, %187 : vector<20x64xf32>
    %189 = vector.broadcast %168 : vector<1x64xf32> to vector<20x64xf32>
    %190 = arith.addf %188, %189 : vector<20x64xf32>
    %191 = arith.truncf %190 : vector<20x64xf32> to vector<20x64xbf16>
    %c1 = arith.constant 1 : index
    %c0_71 = arith.constant 0 : index
    %c0_72 = arith.constant 0 : index
    %192 = vector.load %arg2[%c1, %c0_71, %c0_72] : memref<3x64x64xbf16, #tpu.memory_space<vmem>>, vector<1x64x64xbf16>
    %193 = vector.shape_cast %192 : vector<1x64x64xbf16> to vector<64x64xbf16>
    %cst_73 = arith.constant dense<0.000000e+00> : vector<20x64xf32>
    %194 = tpu.matmul %191, %193, %cst_73 {dimension_numbers = #tpu.dot_dimension_numbers<[1], [0], [0], [1], [0, 0, 1, 1], [], []>} : vector<20x64xbf16>, vector<64x64xbf16>, vector<20x64xf32> -> vector<20x64xf32>
    %c1_74 = arith.constant 1 : index
    %c0_75 = arith.constant 0 : index
    %c0_76 = arith.constant 0 : index
    %195 = vector.load %arg3[%c1_74, %c0_75, %c0_76] : memref<3x1x64xf32, #tpu.memory_space<vmem>>, vector<1x1x64xf32>
    %196 = vector.shape_cast %195 : vector<1x1x64xf32> to vector<1x64xf32>
    %197 = vector.broadcast %196 : vector<1x64xf32> to vector<20x64xf32>
    %198 = arith.addf %194, %197 : vector<20x64xf32>
    %c1_77 = arith.constant 1 : index
    %c0_78 = arith.constant 0 : index
    %c0_79 = arith.constant 0 : index
    %199 = vector.load %arg4[%c1_77, %c0_78, %c0_79] : memref<3x64x64xbf16, #tpu.memory_space<vmem>>, vector<1x64x64xbf16>
    %200 = vector.shape_cast %199 : vector<1x64x64xbf16> to vector<64x64xbf16>
    %cst_80 = arith.constant dense<0.000000e+00> : vector<20x64xf32>
    %201 = tpu.matmul %191, %200, %cst_80 {dimension_numbers = #tpu.dot_dimension_numbers<[1], [0], [0], [1], [0, 0, 1, 1], [], []>} : vector<20x64xbf16>, vector<64x64xbf16>, vector<20x64xf32> -> vector<20x64xf32>
    %c1_81 = arith.constant 1 : index
    %c0_82 = arith.constant 0 : index
    %c0_83 = arith.constant 0 : index
    %202 = vector.load %arg5[%c1_81, %c0_82, %c0_83] : memref<3x1x64xf32, #tpu.memory_space<vmem>>, vector<1x1x64xf32>
    %203 = vector.shape_cast %202 : vector<1x1x64xf32> to vector<1x64xf32>
    %204 = vector.broadcast %203 : vector<1x64xf32> to vector<20x64xf32>
    %205 = arith.addf %201, %204 : vector<20x64xf32>
    %c1_84 = arith.constant 1 : index
    %c0_85 = arith.constant 0 : index
    %c0_86 = arith.constant 0 : index
    %206 = vector.load %arg6[%c1_84, %c0_85, %c0_86] : memref<3x64x64xbf16, #tpu.memory_space<vmem>>, vector<1x64x64xbf16>
    %207 = vector.shape_cast %206 : vector<1x64x64xbf16> to vector<64x64xbf16>
    %cst_87 = arith.constant dense<0.000000e+00> : vector<20x64xf32>
    %208 = tpu.matmul %191, %207, %cst_87 {dimension_numbers = #tpu.dot_dimension_numbers<[1], [0], [0], [1], [0, 0, 1, 1], [], []>} : vector<20x64xbf16>, vector<64x64xbf16>, vector<20x64xf32> -> vector<20x64xf32>
    %c1_88 = arith.constant 1 : index
    %c0_89 = arith.constant 0 : index
    %c0_90 = arith.constant 0 : index
    %209 = vector.load %arg7[%c1_88, %c0_89, %c0_90] : memref<3x1x64xf32, #tpu.memory_space<vmem>>, vector<1x1x64xf32>
    %210 = vector.shape_cast %209 : vector<1x1x64xf32> to vector<1x64xf32>
    %211 = vector.broadcast %210 : vector<1x64xf32> to vector<20x64xf32>
    %212 = arith.addf %208, %211 : vector<20x64xf32>
    %213 = arith.truncf %198 : vector<20x64xf32> to vector<20x64xbf16>
    %214 = arith.truncf %205 : vector<20x64xf32> to vector<20x64xbf16>
    %215 = arith.truncf %212 : vector<20x64xf32> to vector<20x64xbf16>
    %216 = vector.extract_strided_slice %213 {offsets = [0, 0], sizes = [20, 8], strides = [1, 1]} : vector<20x64xbf16> to vector<20x8xbf16>
    %217 = vector.extract_strided_slice %213 {offsets = [0, 8], sizes = [20, 8], strides = [1, 1]} : vector<20x64xbf16> to vector<20x8xbf16>
    %218 = vector.extract_strided_slice %213 {offsets = [0, 16], sizes = [20, 8], strides = [1, 1]} : vector<20x64xbf16> to vector<20x8xbf16>
    %219 = vector.extract_strided_slice %213 {offsets = [0, 24], sizes = [20, 8], strides = [1, 1]} : vector<20x64xbf16> to vector<20x8xbf16>
    %220 = vector.extract_strided_slice %213 {offsets = [0, 32], sizes = [20, 8], strides = [1, 1]} : vector<20x64xbf16> to vector<20x8xbf16>
    %221 = vector.extract_strided_slice %213 {offsets = [0, 40], sizes = [20, 8], strides = [1, 1]} : vector<20x64xbf16> to vector<20x8xbf16>
    %222 = vector.extract_strided_slice %213 {offsets = [0, 48], sizes = [20, 8], strides = [1, 1]} : vector<20x64xbf16> to vector<20x8xbf16>
    %223 = vector.extract_strided_slice %213 {offsets = [0, 56], sizes = [20, 8], strides = [1, 1]} : vector<20x64xbf16> to vector<20x8xbf16>
    %224 = vector.shape_cast %216 : vector<20x8xbf16> to vector<1x20x8xbf16>
    %225 = vector.shape_cast %217 : vector<20x8xbf16> to vector<1x20x8xbf16>
    %226 = vector.shape_cast %218 : vector<20x8xbf16> to vector<1x20x8xbf16>
    %227 = vector.shape_cast %219 : vector<20x8xbf16> to vector<1x20x8xbf16>
    %228 = vector.shape_cast %220 : vector<20x8xbf16> to vector<1x20x8xbf16>
    %229 = vector.shape_cast %221 : vector<20x8xbf16> to vector<1x20x8xbf16>
    %230 = vector.shape_cast %222 : vector<20x8xbf16> to vector<1x20x8xbf16>
    %231 = vector.shape_cast %223 : vector<20x8xbf16> to vector<1x20x8xbf16>
    %232 = tpu.concatenate %224, %225, %226, %227, %228, %229, %230, %231 in 0 : vector<1x20x8xbf16>, vector<1x20x8xbf16>, vector<1x20x8xbf16>, vector<1x20x8xbf16>, vector<1x20x8xbf16>, vector<1x20x8xbf16>, vector<1x20x8xbf16>, vector<1x20x8xbf16> -> vector<8x20x8xbf16>
    %233 = vector.extract_strided_slice %214 {offsets = [0, 0], sizes = [20, 8], strides = [1, 1]} : vector<20x64xbf16> to vector<20x8xbf16>
    %234 = vector.extract_strided_slice %214 {offsets = [0, 8], sizes = [20, 8], strides = [1, 1]} : vector<20x64xbf16> to vector<20x8xbf16>
    %235 = vector.extract_strided_slice %214 {offsets = [0, 16], sizes = [20, 8], strides = [1, 1]} : vector<20x64xbf16> to vector<20x8xbf16>
    %236 = vector.extract_strided_slice %214 {offsets = [0, 24], sizes = [20, 8], strides = [1, 1]} : vector<20x64xbf16> to vector<20x8xbf16>
    %237 = vector.extract_strided_slice %214 {offsets = [0, 32], sizes = [20, 8], strides = [1, 1]} : vector<20x64xbf16> to vector<20x8xbf16>
    %238 = vector.extract_strided_slice %214 {offsets = [0, 40], sizes = [20, 8], strides = [1, 1]} : vector<20x64xbf16> to vector<20x8xbf16>
    %239 = vector.extract_strided_slice %214 {offsets = [0, 48], sizes = [20, 8], strides = [1, 1]} : vector<20x64xbf16> to vector<20x8xbf16>
    %240 = vector.extract_strided_slice %214 {offsets = [0, 56], sizes = [20, 8], strides = [1, 1]} : vector<20x64xbf16> to vector<20x8xbf16>
    %241 = vector.shape_cast %233 : vector<20x8xbf16> to vector<1x20x8xbf16>
    %242 = vector.shape_cast %234 : vector<20x8xbf16> to vector<1x20x8xbf16>
    %243 = vector.shape_cast %235 : vector<20x8xbf16> to vector<1x20x8xbf16>
    %244 = vector.shape_cast %236 : vector<20x8xbf16> to vector<1x20x8xbf16>
    %245 = vector.shape_cast %237 : vector<20x8xbf16> to vector<1x20x8xbf16>
    %246 = vector.shape_cast %238 : vector<20x8xbf16> to vector<1x20x8xbf16>
    %247 = vector.shape_cast %239 : vector<20x8xbf16> to vector<1x20x8xbf16>
    %248 = vector.shape_cast %240 : vector<20x8xbf16> to vector<1x20x8xbf16>
    %249 = tpu.concatenate %241, %242, %243, %244, %245, %246, %247, %248 in 0 : vector<1x20x8xbf16>, vector<1x20x8xbf16>, vector<1x20x8xbf16>, vector<1x20x8xbf16>, vector<1x20x8xbf16>, vector<1x20x8xbf16>, vector<1x20x8xbf16>, vector<1x20x8xbf16> -> vector<8x20x8xbf16>
    %250 = vector.extract_strided_slice %215 {offsets = [0, 0], sizes = [20, 8], strides = [1, 1]} : vector<20x64xbf16> to vector<20x8xbf16>
    %251 = vector.extract_strided_slice %215 {offsets = [0, 8], sizes = [20, 8], strides = [1, 1]} : vector<20x64xbf16> to vector<20x8xbf16>
    %252 = vector.extract_strided_slice %215 {offsets = [0, 16], sizes = [20, 8], strides = [1, 1]} : vector<20x64xbf16> to vector<20x8xbf16>
    %253 = vector.extract_strided_slice %215 {offsets = [0, 24], sizes = [20, 8], strides = [1, 1]} : vector<20x64xbf16> to vector<20x8xbf16>
    %254 = vector.extract_strided_slice %215 {offsets = [0, 32], sizes = [20, 8], strides = [1, 1]} : vector<20x64xbf16> to vector<20x8xbf16>
    %255 = vector.extract_strided_slice %215 {offsets = [0, 40], sizes = [20, 8], strides = [1, 1]} : vector<20x64xbf16> to vector<20x8xbf16>
    %256 = vector.extract_strided_slice %215 {offsets = [0, 48], sizes = [20, 8], strides = [1, 1]} : vector<20x64xbf16> to vector<20x8xbf16>
    %257 = vector.extract_strided_slice %215 {offsets = [0, 56], sizes = [20, 8], strides = [1, 1]} : vector<20x64xbf16> to vector<20x8xbf16>
    %258 = vector.shape_cast %250 : vector<20x8xbf16> to vector<1x20x8xbf16>
    %259 = vector.shape_cast %251 : vector<20x8xbf16> to vector<1x20x8xbf16>
    %260 = vector.shape_cast %252 : vector<20x8xbf16> to vector<1x20x8xbf16>
    %261 = vector.shape_cast %253 : vector<20x8xbf16> to vector<1x20x8xbf16>
    %262 = vector.shape_cast %254 : vector<20x8xbf16> to vector<1x20x8xbf16>
    %263 = vector.shape_cast %255 : vector<20x8xbf16> to vector<1x20x8xbf16>
    %264 = vector.shape_cast %256 : vector<20x8xbf16> to vector<1x20x8xbf16>
    %265 = vector.shape_cast %257 : vector<20x8xbf16> to vector<1x20x8xbf16>
    %266 = tpu.concatenate %258, %259, %260, %261, %262, %263, %264, %265 in 0 : vector<1x20x8xbf16>, vector<1x20x8xbf16>, vector<1x20x8xbf16>, vector<1x20x8xbf16>, vector<1x20x8xbf16>, vector<1x20x8xbf16>, vector<1x20x8xbf16>, vector<1x20x8xbf16> -> vector<8x20x8xbf16>
    "tpu.trace_start"() <{level = 10 : i32, message = "htd,hsd->hts"}> : () -> ()
    %cst_91 = arith.constant dense<0.000000e+00> : vector<8x20x20xf32>
    %267 = tpu.matmul %232, %249, %cst_91 {dimension_numbers = #tpu.dot_dimension_numbers<[2], [2], [1], [1], [0, 0, 0, 1, 1, 1], [0], [0]>} : vector<8x20x8xbf16>, vector<8x20x8xbf16>, vector<8x20x20xf32> -> vector<8x20x20xf32>
    "tpu.trace_stop"() : () -> ()
    %268 = vector.shape_cast %1 : vector<20x20xf32> to vector<1x20x20xf32>
    %269 = vector.broadcast %268 : vector<1x20x20xf32> to vector<8x20x20xf32>
    %270 = arith.addf %267, %269 : vector<8x20x20xf32>
    %cst_92 = arith.constant dense<0xFF800000> : vector<8x20xf32>
    %271 = vector.multi_reduction <maximumf>, %270, %cst_92 [2] : vector<8x20x20xf32> to vector<8x20xf32>
    %272 = vector.shape_cast %271 : vector<8x20xf32> to vector<8x20x1xf32>
    %273 = vector.broadcast %272 : vector<8x20x1xf32> to vector<8x20x20xf32>
    %274 = arith.subf %270, %273 : vector<8x20x20xf32>
    %275 = math.exp %274 : vector<8x20x20xf32>
    %cst_93 = arith.constant dense<0.000000e+00> : vector<8x20xf32>
    %276 = vector.multi_reduction <add>, %275, %cst_93 [2] : vector<8x20x20xf32> to vector<8x20xf32>
    %277 = vector.shape_cast %276 : vector<8x20xf32> to vector<8x20x1xf32>
    %278 = tpu.reciprocal %277 {approx = true} : vector<8x20x1xf32> -> vector<8x20x1xf32>
    %279 = vector.broadcast %278 : vector<8x20x1xf32> to vector<8x20x20xf32>
    %280 = arith.mulf %275, %279 : vector<8x20x20xf32>
    %281 = arith.truncf %280 : vector<8x20x20xf32> to vector<8x20x20xbf16>
    "tpu.trace_start"() <{level = 10 : i32, message = "hts,hsd->htd"}> : () -> ()
    %cst_94 = arith.constant dense<0.000000e+00> : vector<8x20x8xf32>
    %282 = tpu.matmul %281, %266, %cst_94 {dimension_numbers = #tpu.dot_dimension_numbers<[2], [1], [1], [2], [0, 0, 0, 1, 1, 2], [0], [0]>} : vector<8x20x20xbf16>, vector<8x20x8xbf16>, vector<8x20x8xf32> -> vector<8x20x8xf32>
    "tpu.trace_stop"() : () -> ()
    %283 = arith.truncf %282 : vector<8x20x8xf32> to vector<8x20x8xbf16>
    %284 = vector.extract_strided_slice %283 {offsets = [0, 0, 0], sizes = [1, 20, 8], strides = [1, 1, 1]} : vector<8x20x8xbf16> to vector<1x20x8xbf16>
    %285 = vector.shape_cast %284 : vector<1x20x8xbf16> to vector<20x8xbf16>
    %286 = vector.extract_strided_slice %283 {offsets = [1, 0, 0], sizes = [1, 20, 8], strides = [1, 1, 1]} : vector<8x20x8xbf16> to vector<1x20x8xbf16>
    %287 = vector.shape_cast %286 : vector<1x20x8xbf16> to vector<20x8xbf16>
    %288 = vector.extract_strided_slice %283 {offsets = [2, 0, 0], sizes = [1, 20, 8], strides = [1, 1, 1]} : vector<8x20x8xbf16> to vector<1x20x8xbf16>
    %289 = vector.shape_cast %288 : vector<1x20x8xbf16> to vector<20x8xbf16>
    %290 = vector.extract_strided_slice %283 {offsets = [3, 0, 0], sizes = [1, 20, 8], strides = [1, 1, 1]} : vector<8x20x8xbf16> to vector<1x20x8xbf16>
    %291 = vector.shape_cast %290 : vector<1x20x8xbf16> to vector<20x8xbf16>
    %292 = vector.extract_strided_slice %283 {offsets = [4, 0, 0], sizes = [1, 20, 8], strides = [1, 1, 1]} : vector<8x20x8xbf16> to vector<1x20x8xbf16>
    %293 = vector.shape_cast %292 : vector<1x20x8xbf16> to vector<20x8xbf16>
    %294 = vector.extract_strided_slice %283 {offsets = [5, 0, 0], sizes = [1, 20, 8], strides = [1, 1, 1]} : vector<8x20x8xbf16> to vector<1x20x8xbf16>
    %295 = vector.shape_cast %294 : vector<1x20x8xbf16> to vector<20x8xbf16>
    %296 = vector.extract_strided_slice %283 {offsets = [6, 0, 0], sizes = [1, 20, 8], strides = [1, 1, 1]} : vector<8x20x8xbf16> to vector<1x20x8xbf16>
    %297 = vector.shape_cast %296 : vector<1x20x8xbf16> to vector<20x8xbf16>
    %298 = vector.extract_strided_slice %283 {offsets = [7, 0, 0], sizes = [1, 20, 8], strides = [1, 1, 1]} : vector<8x20x8xbf16> to vector<1x20x8xbf16>
    %299 = vector.shape_cast %298 : vector<1x20x8xbf16> to vector<20x8xbf16>
    %300 = tpu.concatenate %285, %287, %289, %291, %293, %295, %297, %299 in 1 : vector<20x8xbf16>, vector<20x8xbf16>, vector<20x8xbf16>, vector<20x8xbf16>, vector<20x8xbf16>, vector<20x8xbf16>, vector<20x8xbf16>, vector<20x8xbf16> -> vector<20x64xbf16>
    %c1_95 = arith.constant 1 : index
    %c0_96 = arith.constant 0 : index
    %c0_97 = arith.constant 0 : index
    %301 = vector.load %arg8[%c1_95, %c0_96, %c0_97] : memref<3x64x64xbf16, #tpu.memory_space<vmem>>, vector<1x64x64xbf16>
    %302 = vector.shape_cast %301 : vector<1x64x64xbf16> to vector<64x64xbf16>
    %cst_98 = arith.constant dense<0.000000e+00> : vector<20x64xf32>
    %303 = tpu.matmul %300, %302, %cst_98 {dimension_numbers = #tpu.dot_dimension_numbers<[1], [0], [0], [1], [0, 0, 1, 1], [], []>} : vector<20x64xbf16>, vector<64x64xbf16>, vector<20x64xf32> -> vector<20x64xf32>
    %c1_99 = arith.constant 1 : index
    %c0_100 = arith.constant 0 : index
    %c0_101 = arith.constant 0 : index
    %304 = vector.load %arg9[%c1_99, %c0_100, %c0_101] : memref<3x1x64xf32, #tpu.memory_space<vmem>>, vector<1x1x64xf32>
    %305 = vector.shape_cast %304 : vector<1x1x64xf32> to vector<1x64xf32>
    %306 = vector.broadcast %305 : vector<1x64xf32> to vector<20x64xf32>
    %307 = arith.addf %303, %306 : vector<20x64xf32>
    %308 = arith.addf %190, %307 : vector<20x64xf32>
    %c1_102 = arith.constant 1 : index
    %c0_103 = arith.constant 0 : index
    %c0_104 = arith.constant 0 : index
    %309 = vector.load %arg10[%c1_102, %c0_103, %c0_104] : memref<3x1x64xf32, #tpu.memory_space<vmem>>, vector<1x1x64xf32>
    %310 = vector.shape_cast %309 : vector<1x1x64xf32> to vector<1x64xf32>
    %c1_105 = arith.constant 1 : index
    %c0_106 = arith.constant 0 : index
    %c0_107 = arith.constant 0 : index
    %311 = vector.load %arg11[%c1_105, %c0_106, %c0_107] : memref<3x1x64xf32, #tpu.memory_space<vmem>>, vector<1x1x64xf32>
    %312 = vector.shape_cast %311 : vector<1x1x64xf32> to vector<1x64xf32>
    %cst_108 = arith.constant dense<0.000000e+00> : vector<20xf32>
    %313 = vector.multi_reduction <add>, %308, %cst_108 [1] : vector<20x64xf32> to vector<20xf32>
    %314 = vector.shape_cast %313 : vector<20xf32> to vector<20x1xf32>
    %cst_109 = arith.constant 6.400000e+01 : f32
    %315 = vector.broadcast %cst_109 : f32 to vector<20x1xf32>
    %316 = arith.divf %314, %315 : vector<20x1xf32>
    %317 = vector.broadcast %316 : vector<20x1xf32> to vector<20x64xf32>
    %318 = arith.subf %308, %317 : vector<20x64xf32>
    %319 = arith.mulf %318, %318 : vector<20x64xf32>
    %cst_110 = arith.constant dense<0.000000e+00> : vector<20xf32>
    %320 = vector.multi_reduction <add>, %319, %cst_110 [1] : vector<20x64xf32> to vector<20xf32>
    %321 = vector.shape_cast %320 : vector<20xf32> to vector<20x1xf32>
    %cst_111 = arith.constant 6.400000e+01 : f32
    %322 = vector.broadcast %cst_111 : f32 to vector<20x1xf32>
    %323 = arith.divf %321, %322 : vector<20x1xf32>
    %324 = vector.broadcast %316 : vector<20x1xf32> to vector<20x64xf32>
    %325 = arith.subf %308, %324 : vector<20x64xf32>
    %cst_112 = arith.constant 9.99999974E-6 : f32
    %326 = vector.broadcast %cst_112 : f32 to vector<20x1xf32>
    %327 = arith.addf %323, %326 : vector<20x1xf32>
    %328 = math.rsqrt %327 : vector<20x1xf32>
    %329 = vector.broadcast %328 : vector<20x1xf32> to vector<20x64xf32>
    %330 = arith.mulf %325, %329 : vector<20x64xf32>
    %331 = vector.broadcast %310 : vector<1x64xf32> to vector<20x64xf32>
    %332 = arith.mulf %330, %331 : vector<20x64xf32>
    %333 = vector.broadcast %312 : vector<1x64xf32> to vector<20x64xf32>
    %334 = arith.addf %332, %333 : vector<20x64xf32>
    %335 = arith.truncf %334 : vector<20x64xf32> to vector<20x64xbf16>
    %c1_113 = arith.constant 1 : index
    %c0_114 = arith.constant 0 : index
    %c0_115 = arith.constant 0 : index
    %336 = vector.load %arg12[%c1_113, %c0_114, %c0_115] : memref<3x64x64xbf16, #tpu.memory_space<vmem>>, vector<1x64x64xbf16>
    %337 = vector.shape_cast %336 : vector<1x64x64xbf16> to vector<64x64xbf16>
    %cst_116 = arith.constant dense<0.000000e+00> : vector<20x64xf32>
    %338 = tpu.matmul %335, %337, %cst_116 {dimension_numbers = #tpu.dot_dimension_numbers<[1], [0], [0], [1], [0, 0, 1, 1], [], []>} : vector<20x64xbf16>, vector<64x64xbf16>, vector<20x64xf32> -> vector<20x64xf32>
    %c1_117 = arith.constant 1 : index
    %c0_118 = arith.constant 0 : index
    %c0_119 = arith.constant 0 : index
    %339 = vector.load %arg13[%c1_117, %c0_118, %c0_119] : memref<3x1x64xf32, #tpu.memory_space<vmem>>, vector<1x1x64xf32>
    %340 = vector.shape_cast %339 : vector<1x1x64xf32> to vector<1x64xf32>
    %341 = vector.broadcast %340 : vector<1x64xf32> to vector<20x64xf32>
    %342 = arith.addf %338, %341 : vector<20x64xf32>
    %cst_120 = arith.constant 0.000000e+00 : f32
    %343 = vector.broadcast %cst_120 : f32 to vector<20x64xf32>
    %344 = arith.maximumf %342, %343 : vector<20x64xf32>
    %345 = arith.truncf %344 : vector<20x64xf32> to vector<20x64xbf16>
    %c1_121 = arith.constant 1 : index
    %c0_122 = arith.constant 0 : index
    %c0_123 = arith.constant 0 : index
    %346 = vector.load %arg14[%c1_121, %c0_122, %c0_123] : memref<3x64x64xbf16, #tpu.memory_space<vmem>>, vector<1x64x64xbf16>
    %347 = vector.shape_cast %346 : vector<1x64x64xbf16> to vector<64x64xbf16>
    %cst_124 = arith.constant dense<0.000000e+00> : vector<20x64xf32>
    %348 = tpu.matmul %345, %347, %cst_124 {dimension_numbers = #tpu.dot_dimension_numbers<[1], [0], [0], [1], [0, 0, 1, 1], [], []>} : vector<20x64xbf16>, vector<64x64xbf16>, vector<20x64xf32> -> vector<20x64xf32>
    %c1_125 = arith.constant 1 : index
    %c0_126 = arith.constant 0 : index
    %c0_127 = arith.constant 0 : index
    %349 = vector.load %arg15[%c1_125, %c0_126, %c0_127] : memref<3x1x64xf32, #tpu.memory_space<vmem>>, vector<1x1x64xf32>
    %350 = vector.shape_cast %349 : vector<1x1x64xf32> to vector<1x64xf32>
    %351 = vector.broadcast %350 : vector<1x64xf32> to vector<20x64xf32>
    %352 = arith.addf %348, %351 : vector<20x64xf32>
    %353 = arith.addf %334, %352 : vector<20x64xf32>
    %c1_128 = arith.constant 1 : index
    %c0_129 = arith.constant 0 : index
    %c0_130 = arith.constant 0 : index
    %354 = vector.load %arg16[%c1_128, %c0_129, %c0_130] : memref<3x1x64xf32, #tpu.memory_space<vmem>>, vector<1x1x64xf32>
    %355 = vector.shape_cast %354 : vector<1x1x64xf32> to vector<1x64xf32>
    %c1_131 = arith.constant 1 : index
    %c0_132 = arith.constant 0 : index
    %c0_133 = arith.constant 0 : index
    %356 = vector.load %arg17[%c1_131, %c0_132, %c0_133] : memref<3x1x64xf32, #tpu.memory_space<vmem>>, vector<1x1x64xf32>
    %357 = vector.shape_cast %356 : vector<1x1x64xf32> to vector<1x64xf32>
    %cst_134 = arith.constant dense<0.000000e+00> : vector<20xf32>
    %358 = vector.multi_reduction <add>, %353, %cst_134 [1] : vector<20x64xf32> to vector<20xf32>
    %359 = vector.shape_cast %358 : vector<20xf32> to vector<20x1xf32>
    %cst_135 = arith.constant 6.400000e+01 : f32
    %360 = vector.broadcast %cst_135 : f32 to vector<20x1xf32>
    %361 = arith.divf %359, %360 : vector<20x1xf32>
    %362 = vector.broadcast %361 : vector<20x1xf32> to vector<20x64xf32>
    %363 = arith.subf %353, %362 : vector<20x64xf32>
    %364 = arith.mulf %363, %363 : vector<20x64xf32>
    %cst_136 = arith.constant dense<0.000000e+00> : vector<20xf32>
    %365 = vector.multi_reduction <add>, %364, %cst_136 [1] : vector<20x64xf32> to vector<20xf32>
    %366 = vector.shape_cast %365 : vector<20xf32> to vector<20x1xf32>
    %cst_137 = arith.constant 6.400000e+01 : f32
    %367 = vector.broadcast %cst_137 : f32 to vector<20x1xf32>
    %368 = arith.divf %366, %367 : vector<20x1xf32>
    %369 = vector.broadcast %361 : vector<20x1xf32> to vector<20x64xf32>
    %370 = arith.subf %353, %369 : vector<20x64xf32>
    %cst_138 = arith.constant 9.99999974E-6 : f32
    %371 = vector.broadcast %cst_138 : f32 to vector<20x1xf32>
    %372 = arith.addf %368, %371 : vector<20x1xf32>
    %373 = math.rsqrt %372 : vector<20x1xf32>
    %374 = vector.broadcast %373 : vector<20x1xf32> to vector<20x64xf32>
    %375 = arith.mulf %370, %374 : vector<20x64xf32>
    %376 = vector.broadcast %355 : vector<1x64xf32> to vector<20x64xf32>
    %377 = arith.mulf %375, %376 : vector<20x64xf32>
    %378 = vector.broadcast %357 : vector<1x64xf32> to vector<20x64xf32>
    %379 = arith.addf %377, %378 : vector<20x64xf32>
    %380 = arith.truncf %379 : vector<20x64xf32> to vector<20x64xbf16>
    %c2 = arith.constant 2 : index
    %c0_139 = arith.constant 0 : index
    %c0_140 = arith.constant 0 : index
    %381 = vector.load %arg2[%c2, %c0_139, %c0_140] : memref<3x64x64xbf16, #tpu.memory_space<vmem>>, vector<1x64x64xbf16>
    %382 = vector.shape_cast %381 : vector<1x64x64xbf16> to vector<64x64xbf16>
    %cst_141 = arith.constant dense<0.000000e+00> : vector<20x64xf32>
    %383 = tpu.matmul %380, %382, %cst_141 {dimension_numbers = #tpu.dot_dimension_numbers<[1], [0], [0], [1], [0, 0, 1, 1], [], []>} : vector<20x64xbf16>, vector<64x64xbf16>, vector<20x64xf32> -> vector<20x64xf32>
    %c2_142 = arith.constant 2 : index
    %c0_143 = arith.constant 0 : index
    %c0_144 = arith.constant 0 : index
    %384 = vector.load %arg3[%c2_142, %c0_143, %c0_144] : memref<3x1x64xf32, #tpu.memory_space<vmem>>, vector<1x1x64xf32>
    %385 = vector.shape_cast %384 : vector<1x1x64xf32> to vector<1x64xf32>
    %386 = vector.broadcast %385 : vector<1x64xf32> to vector<20x64xf32>
    %387 = arith.addf %383, %386 : vector<20x64xf32>
    %c2_145 = arith.constant 2 : index
    %c0_146 = arith.constant 0 : index
    %c0_147 = arith.constant 0 : index
    %388 = vector.load %arg4[%c2_145, %c0_146, %c0_147] : memref<3x64x64xbf16, #tpu.memory_space<vmem>>, vector<1x64x64xbf16>
    %389 = vector.shape_cast %388 : vector<1x64x64xbf16> to vector<64x64xbf16>
    %cst_148 = arith.constant dense<0.000000e+00> : vector<20x64xf32>
    %390 = tpu.matmul %380, %389, %cst_148 {dimension_numbers = #tpu.dot_dimension_numbers<[1], [0], [0], [1], [0, 0, 1, 1], [], []>} : vector<20x64xbf16>, vector<64x64xbf16>, vector<20x64xf32> -> vector<20x64xf32>
    %c2_149 = arith.constant 2 : index
    %c0_150 = arith.constant 0 : index
    %c0_151 = arith.constant 0 : index
    %391 = vector.load %arg5[%c2_149, %c0_150, %c0_151] : memref<3x1x64xf32, #tpu.memory_space<vmem>>, vector<1x1x64xf32>
    %392 = vector.shape_cast %391 : vector<1x1x64xf32> to vector<1x64xf32>
    %393 = vector.broadcast %392 : vector<1x64xf32> to vector<20x64xf32>
    %394 = arith.addf %390, %393 : vector<20x64xf32>
    %c2_152 = arith.constant 2 : index
    %c0_153 = arith.constant 0 : index
    %c0_154 = arith.constant 0 : index
    %395 = vector.load %arg6[%c2_152, %c0_153, %c0_154] : memref<3x64x64xbf16, #tpu.memory_space<vmem>>, vector<1x64x64xbf16>
    %396 = vector.shape_cast %395 : vector<1x64x64xbf16> to vector<64x64xbf16>
    %cst_155 = arith.constant dense<0.000000e+00> : vector<20x64xf32>
    %397 = tpu.matmul %380, %396, %cst_155 {dimension_numbers = #tpu.dot_dimension_numbers<[1], [0], [0], [1], [0, 0, 1, 1], [], []>} : vector<20x64xbf16>, vector<64x64xbf16>, vector<20x64xf32> -> vector<20x64xf32>
    %c2_156 = arith.constant 2 : index
    %c0_157 = arith.constant 0 : index
    %c0_158 = arith.constant 0 : index
    %398 = vector.load %arg7[%c2_156, %c0_157, %c0_158] : memref<3x1x64xf32, #tpu.memory_space<vmem>>, vector<1x1x64xf32>
    %399 = vector.shape_cast %398 : vector<1x1x64xf32> to vector<1x64xf32>
    %400 = vector.broadcast %399 : vector<1x64xf32> to vector<20x64xf32>
    %401 = arith.addf %397, %400 : vector<20x64xf32>
    %402 = arith.truncf %387 : vector<20x64xf32> to vector<20x64xbf16>
    %403 = arith.truncf %394 : vector<20x64xf32> to vector<20x64xbf16>
    %404 = arith.truncf %401 : vector<20x64xf32> to vector<20x64xbf16>
    %405 = vector.extract_strided_slice %402 {offsets = [0, 0], sizes = [20, 8], strides = [1, 1]} : vector<20x64xbf16> to vector<20x8xbf16>
    %406 = vector.extract_strided_slice %402 {offsets = [0, 8], sizes = [20, 8], strides = [1, 1]} : vector<20x64xbf16> to vector<20x8xbf16>
    %407 = vector.extract_strided_slice %402 {offsets = [0, 16], sizes = [20, 8], strides = [1, 1]} : vector<20x64xbf16> to vector<20x8xbf16>
    %408 = vector.extract_strided_slice %402 {offsets = [0, 24], sizes = [20, 8], strides = [1, 1]} : vector<20x64xbf16> to vector<20x8xbf16>
    %409 = vector.extract_strided_slice %402 {offsets = [0, 32], sizes = [20, 8], strides = [1, 1]} : vector<20x64xbf16> to vector<20x8xbf16>
    %410 = vector.extract_strided_slice %402 {offsets = [0, 40], sizes = [20, 8], strides = [1, 1]} : vector<20x64xbf16> to vector<20x8xbf16>
    %411 = vector.extract_strided_slice %402 {offsets = [0, 48], sizes = [20, 8], strides = [1, 1]} : vector<20x64xbf16> to vector<20x8xbf16>
    %412 = vector.extract_strided_slice %402 {offsets = [0, 56], sizes = [20, 8], strides = [1, 1]} : vector<20x64xbf16> to vector<20x8xbf16>
    %413 = vector.shape_cast %405 : vector<20x8xbf16> to vector<1x20x8xbf16>
    %414 = vector.shape_cast %406 : vector<20x8xbf16> to vector<1x20x8xbf16>
    %415 = vector.shape_cast %407 : vector<20x8xbf16> to vector<1x20x8xbf16>
    %416 = vector.shape_cast %408 : vector<20x8xbf16> to vector<1x20x8xbf16>
    %417 = vector.shape_cast %409 : vector<20x8xbf16> to vector<1x20x8xbf16>
    %418 = vector.shape_cast %410 : vector<20x8xbf16> to vector<1x20x8xbf16>
    %419 = vector.shape_cast %411 : vector<20x8xbf16> to vector<1x20x8xbf16>
    %420 = vector.shape_cast %412 : vector<20x8xbf16> to vector<1x20x8xbf16>
    %421 = tpu.concatenate %413, %414, %415, %416, %417, %418, %419, %420 in 0 : vector<1x20x8xbf16>, vector<1x20x8xbf16>, vector<1x20x8xbf16>, vector<1x20x8xbf16>, vector<1x20x8xbf16>, vector<1x20x8xbf16>, vector<1x20x8xbf16>, vector<1x20x8xbf16> -> vector<8x20x8xbf16>
    %422 = vector.extract_strided_slice %403 {offsets = [0, 0], sizes = [20, 8], strides = [1, 1]} : vector<20x64xbf16> to vector<20x8xbf16>
    %423 = vector.extract_strided_slice %403 {offsets = [0, 8], sizes = [20, 8], strides = [1, 1]} : vector<20x64xbf16> to vector<20x8xbf16>
    %424 = vector.extract_strided_slice %403 {offsets = [0, 16], sizes = [20, 8], strides = [1, 1]} : vector<20x64xbf16> to vector<20x8xbf16>
    %425 = vector.extract_strided_slice %403 {offsets = [0, 24], sizes = [20, 8], strides = [1, 1]} : vector<20x64xbf16> to vector<20x8xbf16>
    %426 = vector.extract_strided_slice %403 {offsets = [0, 32], sizes = [20, 8], strides = [1, 1]} : vector<20x64xbf16> to vector<20x8xbf16>
    %427 = vector.extract_strided_slice %403 {offsets = [0, 40], sizes = [20, 8], strides = [1, 1]} : vector<20x64xbf16> to vector<20x8xbf16>
    %428 = vector.extract_strided_slice %403 {offsets = [0, 48], sizes = [20, 8], strides = [1, 1]} : vector<20x64xbf16> to vector<20x8xbf16>
    %429 = vector.extract_strided_slice %403 {offsets = [0, 56], sizes = [20, 8], strides = [1, 1]} : vector<20x64xbf16> to vector<20x8xbf16>
    %430 = vector.shape_cast %422 : vector<20x8xbf16> to vector<1x20x8xbf16>
    %431 = vector.shape_cast %423 : vector<20x8xbf16> to vector<1x20x8xbf16>
    %432 = vector.shape_cast %424 : vector<20x8xbf16> to vector<1x20x8xbf16>
    %433 = vector.shape_cast %425 : vector<20x8xbf16> to vector<1x20x8xbf16>
    %434 = vector.shape_cast %426 : vector<20x8xbf16> to vector<1x20x8xbf16>
    %435 = vector.shape_cast %427 : vector<20x8xbf16> to vector<1x20x8xbf16>
    %436 = vector.shape_cast %428 : vector<20x8xbf16> to vector<1x20x8xbf16>
    %437 = vector.shape_cast %429 : vector<20x8xbf16> to vector<1x20x8xbf16>
    %438 = tpu.concatenate %430, %431, %432, %433, %434, %435, %436, %437 in 0 : vector<1x20x8xbf16>, vector<1x20x8xbf16>, vector<1x20x8xbf16>, vector<1x20x8xbf16>, vector<1x20x8xbf16>, vector<1x20x8xbf16>, vector<1x20x8xbf16>, vector<1x20x8xbf16> -> vector<8x20x8xbf16>
    %439 = vector.extract_strided_slice %404 {offsets = [0, 0], sizes = [20, 8], strides = [1, 1]} : vector<20x64xbf16> to vector<20x8xbf16>
    %440 = vector.extract_strided_slice %404 {offsets = [0, 8], sizes = [20, 8], strides = [1, 1]} : vector<20x64xbf16> to vector<20x8xbf16>
    %441 = vector.extract_strided_slice %404 {offsets = [0, 16], sizes = [20, 8], strides = [1, 1]} : vector<20x64xbf16> to vector<20x8xbf16>
    %442 = vector.extract_strided_slice %404 {offsets = [0, 24], sizes = [20, 8], strides = [1, 1]} : vector<20x64xbf16> to vector<20x8xbf16>
    %443 = vector.extract_strided_slice %404 {offsets = [0, 32], sizes = [20, 8], strides = [1, 1]} : vector<20x64xbf16> to vector<20x8xbf16>
    %444 = vector.extract_strided_slice %404 {offsets = [0, 40], sizes = [20, 8], strides = [1, 1]} : vector<20x64xbf16> to vector<20x8xbf16>
    %445 = vector.extract_strided_slice %404 {offsets = [0, 48], sizes = [20, 8], strides = [1, 1]} : vector<20x64xbf16> to vector<20x8xbf16>
    %446 = vector.extract_strided_slice %404 {offsets = [0, 56], sizes = [20, 8], strides = [1, 1]} : vector<20x64xbf16> to vector<20x8xbf16>
    %447 = vector.shape_cast %439 : vector<20x8xbf16> to vector<1x20x8xbf16>
    %448 = vector.shape_cast %440 : vector<20x8xbf16> to vector<1x20x8xbf16>
    %449 = vector.shape_cast %441 : vector<20x8xbf16> to vector<1x20x8xbf16>
    %450 = vector.shape_cast %442 : vector<20x8xbf16> to vector<1x20x8xbf16>
    %451 = vector.shape_cast %443 : vector<20x8xbf16> to vector<1x20x8xbf16>
    %452 = vector.shape_cast %444 : vector<20x8xbf16> to vector<1x20x8xbf16>
    %453 = vector.shape_cast %445 : vector<20x8xbf16> to vector<1x20x8xbf16>
    %454 = vector.shape_cast %446 : vector<20x8xbf16> to vector<1x20x8xbf16>
    %455 = tpu.concatenate %447, %448, %449, %450, %451, %452, %453, %454 in 0 : vector<1x20x8xbf16>, vector<1x20x8xbf16>, vector<1x20x8xbf16>, vector<1x20x8xbf16>, vector<1x20x8xbf16>, vector<1x20x8xbf16>, vector<1x20x8xbf16>, vector<1x20x8xbf16> -> vector<8x20x8xbf16>
    "tpu.trace_start"() <{level = 10 : i32, message = "htd,hsd->hts"}> : () -> ()
    %cst_159 = arith.constant dense<0.000000e+00> : vector<8x20x20xf32>
    %456 = tpu.matmul %421, %438, %cst_159 {dimension_numbers = #tpu.dot_dimension_numbers<[2], [2], [1], [1], [0, 0, 0, 1, 1, 1], [0], [0]>} : vector<8x20x8xbf16>, vector<8x20x8xbf16>, vector<8x20x20xf32> -> vector<8x20x20xf32>
    "tpu.trace_stop"() : () -> ()
    %457 = vector.shape_cast %1 : vector<20x20xf32> to vector<1x20x20xf32>
    %458 = vector.broadcast %457 : vector<1x20x20xf32> to vector<8x20x20xf32>
    %459 = arith.addf %456, %458 : vector<8x20x20xf32>
    %cst_160 = arith.constant dense<0xFF800000> : vector<8x20xf32>
    %460 = vector.multi_reduction <maximumf>, %459, %cst_160 [2] : vector<8x20x20xf32> to vector<8x20xf32>
    %461 = vector.shape_cast %460 : vector<8x20xf32> to vector<8x20x1xf32>
    %462 = vector.broadcast %461 : vector<8x20x1xf32> to vector<8x20x20xf32>
    %463 = arith.subf %459, %462 : vector<8x20x20xf32>
    %464 = math.exp %463 : vector<8x20x20xf32>
    %cst_161 = arith.constant dense<0.000000e+00> : vector<8x20xf32>
    %465 = vector.multi_reduction <add>, %464, %cst_161 [2] : vector<8x20x20xf32> to vector<8x20xf32>
    %466 = vector.shape_cast %465 : vector<8x20xf32> to vector<8x20x1xf32>
    %467 = tpu.reciprocal %466 {approx = true} : vector<8x20x1xf32> -> vector<8x20x1xf32>
    %468 = vector.broadcast %467 : vector<8x20x1xf32> to vector<8x20x20xf32>
    %469 = arith.mulf %464, %468 : vector<8x20x20xf32>
    %470 = arith.truncf %469 : vector<8x20x20xf32> to vector<8x20x20xbf16>
    "tpu.trace_start"() <{level = 10 : i32, message = "hts,hsd->htd"}> : () -> ()
    %cst_162 = arith.constant dense<0.000000e+00> : vector<8x20x8xf32>
    %471 = tpu.matmul %470, %455, %cst_162 {dimension_numbers = #tpu.dot_dimension_numbers<[2], [1], [1], [2], [0, 0, 0, 1, 1, 2], [0], [0]>} : vector<8x20x20xbf16>, vector<8x20x8xbf16>, vector<8x20x8xf32> -> vector<8x20x8xf32>
    "tpu.trace_stop"() : () -> ()
    %472 = arith.truncf %471 : vector<8x20x8xf32> to vector<8x20x8xbf16>
    %473 = vector.extract_strided_slice %472 {offsets = [0, 0, 0], sizes = [1, 20, 8], strides = [1, 1, 1]} : vector<8x20x8xbf16> to vector<1x20x8xbf16>
    %474 = vector.shape_cast %473 : vector<1x20x8xbf16> to vector<20x8xbf16>
    %475 = vector.extract_strided_slice %472 {offsets = [1, 0, 0], sizes = [1, 20, 8], strides = [1, 1, 1]} : vector<8x20x8xbf16> to vector<1x20x8xbf16>
    %476 = vector.shape_cast %475 : vector<1x20x8xbf16> to vector<20x8xbf16>
    %477 = vector.extract_strided_slice %472 {offsets = [2, 0, 0], sizes = [1, 20, 8], strides = [1, 1, 1]} : vector<8x20x8xbf16> to vector<1x20x8xbf16>
    %478 = vector.shape_cast %477 : vector<1x20x8xbf16> to vector<20x8xbf16>
    %479 = vector.extract_strided_slice %472 {offsets = [3, 0, 0], sizes = [1, 20, 8], strides = [1, 1, 1]} : vector<8x20x8xbf16> to vector<1x20x8xbf16>
    %480 = vector.shape_cast %479 : vector<1x20x8xbf16> to vector<20x8xbf16>
    %481 = vector.extract_strided_slice %472 {offsets = [4, 0, 0], sizes = [1, 20, 8], strides = [1, 1, 1]} : vector<8x20x8xbf16> to vector<1x20x8xbf16>
    %482 = vector.shape_cast %481 : vector<1x20x8xbf16> to vector<20x8xbf16>
    %483 = vector.extract_strided_slice %472 {offsets = [5, 0, 0], sizes = [1, 20, 8], strides = [1, 1, 1]} : vector<8x20x8xbf16> to vector<1x20x8xbf16>
    %484 = vector.shape_cast %483 : vector<1x20x8xbf16> to vector<20x8xbf16>
    %485 = vector.extract_strided_slice %472 {offsets = [6, 0, 0], sizes = [1, 20, 8], strides = [1, 1, 1]} : vector<8x20x8xbf16> to vector<1x20x8xbf16>
    %486 = vector.shape_cast %485 : vector<1x20x8xbf16> to vector<20x8xbf16>
    %487 = vector.extract_strided_slice %472 {offsets = [7, 0, 0], sizes = [1, 20, 8], strides = [1, 1, 1]} : vector<8x20x8xbf16> to vector<1x20x8xbf16>
    %488 = vector.shape_cast %487 : vector<1x20x8xbf16> to vector<20x8xbf16>
    %489 = tpu.concatenate %474, %476, %478, %480, %482, %484, %486, %488 in 1 : vector<20x8xbf16>, vector<20x8xbf16>, vector<20x8xbf16>, vector<20x8xbf16>, vector<20x8xbf16>, vector<20x8xbf16>, vector<20x8xbf16>, vector<20x8xbf16> -> vector<20x64xbf16>
    %c2_163 = arith.constant 2 : index
    %c0_164 = arith.constant 0 : index
    %c0_165 = arith.constant 0 : index
    %490 = vector.load %arg8[%c2_163, %c0_164, %c0_165] : memref<3x64x64xbf16, #tpu.memory_space<vmem>>, vector<1x64x64xbf16>
    %491 = vector.shape_cast %490 : vector<1x64x64xbf16> to vector<64x64xbf16>
    %cst_166 = arith.constant dense<0.000000e+00> : vector<20x64xf32>
    %492 = tpu.matmul %489, %491, %cst_166 {dimension_numbers = #tpu.dot_dimension_numbers<[1], [0], [0], [1], [0, 0, 1, 1], [], []>} : vector<20x64xbf16>, vector<64x64xbf16>, vector<20x64xf32> -> vector<20x64xf32>
    %c2_167 = arith.constant 2 : index
    %c0_168 = arith.constant 0 : index
    %c0_169 = arith.constant 0 : index
    %493 = vector.load %arg9[%c2_167, %c0_168, %c0_169] : memref<3x1x64xf32, #tpu.memory_space<vmem>>, vector<1x1x64xf32>
    %494 = vector.shape_cast %493 : vector<1x1x64xf32> to vector<1x64xf32>
    %495 = vector.broadcast %494 : vector<1x64xf32> to vector<20x64xf32>
    %496 = arith.addf %492, %495 : vector<20x64xf32>
    %497 = arith.addf %379, %496 : vector<20x64xf32>
    %c2_170 = arith.constant 2 : index
    %c0_171 = arith.constant 0 : index
    %c0_172 = arith.constant 0 : index
    %498 = vector.load %arg10[%c2_170, %c0_171, %c0_172] : memref<3x1x64xf32, #tpu.memory_space<vmem>>, vector<1x1x64xf32>
    %499 = vector.shape_cast %498 : vector<1x1x64xf32> to vector<1x64xf32>
    %c2_173 = arith.constant 2 : index
    %c0_174 = arith.constant 0 : index
    %c0_175 = arith.constant 0 : index
    %500 = vector.load %arg11[%c2_173, %c0_174, %c0_175] : memref<3x1x64xf32, #tpu.memory_space<vmem>>, vector<1x1x64xf32>
    %501 = vector.shape_cast %500 : vector<1x1x64xf32> to vector<1x64xf32>
    %cst_176 = arith.constant dense<0.000000e+00> : vector<20xf32>
    %502 = vector.multi_reduction <add>, %497, %cst_176 [1] : vector<20x64xf32> to vector<20xf32>
    %503 = vector.shape_cast %502 : vector<20xf32> to vector<20x1xf32>
    %cst_177 = arith.constant 6.400000e+01 : f32
    %504 = vector.broadcast %cst_177 : f32 to vector<20x1xf32>
    %505 = arith.divf %503, %504 : vector<20x1xf32>
    %506 = vector.broadcast %505 : vector<20x1xf32> to vector<20x64xf32>
    %507 = arith.subf %497, %506 : vector<20x64xf32>
    %508 = arith.mulf %507, %507 : vector<20x64xf32>
    %cst_178 = arith.constant dense<0.000000e+00> : vector<20xf32>
    %509 = vector.multi_reduction <add>, %508, %cst_178 [1] : vector<20x64xf32> to vector<20xf32>
    %510 = vector.shape_cast %509 : vector<20xf32> to vector<20x1xf32>
    %cst_179 = arith.constant 6.400000e+01 : f32
    %511 = vector.broadcast %cst_179 : f32 to vector<20x1xf32>
    %512 = arith.divf %510, %511 : vector<20x1xf32>
    %513 = vector.broadcast %505 : vector<20x1xf32> to vector<20x64xf32>
    %514 = arith.subf %497, %513 : vector<20x64xf32>
    %cst_180 = arith.constant 9.99999974E-6 : f32
    %515 = vector.broadcast %cst_180 : f32 to vector<20x1xf32>
    %516 = arith.addf %512, %515 : vector<20x1xf32>
    %517 = math.rsqrt %516 : vector<20x1xf32>
    %518 = vector.broadcast %517 : vector<20x1xf32> to vector<20x64xf32>
    %519 = arith.mulf %514, %518 : vector<20x64xf32>
    %520 = vector.broadcast %499 : vector<1x64xf32> to vector<20x64xf32>
    %521 = arith.mulf %519, %520 : vector<20x64xf32>
    %522 = vector.broadcast %501 : vector<1x64xf32> to vector<20x64xf32>
    %523 = arith.addf %521, %522 : vector<20x64xf32>
    %524 = arith.truncf %523 : vector<20x64xf32> to vector<20x64xbf16>
    %c2_181 = arith.constant 2 : index
    %c0_182 = arith.constant 0 : index
    %c0_183 = arith.constant 0 : index
    %525 = vector.load %arg12[%c2_181, %c0_182, %c0_183] : memref<3x64x64xbf16, #tpu.memory_space<vmem>>, vector<1x64x64xbf16>
    %526 = vector.shape_cast %525 : vector<1x64x64xbf16> to vector<64x64xbf16>
    %cst_184 = arith.constant dense<0.000000e+00> : vector<20x64xf32>
    %527 = tpu.matmul %524, %526, %cst_184 {dimension_numbers = #tpu.dot_dimension_numbers<[1], [0], [0], [1], [0, 0, 1, 1], [], []>} : vector<20x64xbf16>, vector<64x64xbf16>, vector<20x64xf32> -> vector<20x64xf32>
    %c2_185 = arith.constant 2 : index
    %c0_186 = arith.constant 0 : index
    %c0_187 = arith.constant 0 : index
    %528 = vector.load %arg13[%c2_185, %c0_186, %c0_187] : memref<3x1x64xf32, #tpu.memory_space<vmem>>, vector<1x1x64xf32>
    %529 = vector.shape_cast %528 : vector<1x1x64xf32> to vector<1x64xf32>
    %530 = vector.broadcast %529 : vector<1x64xf32> to vector<20x64xf32>
    %531 = arith.addf %527, %530 : vector<20x64xf32>
    %cst_188 = arith.constant 0.000000e+00 : f32
    %532 = vector.broadcast %cst_188 : f32 to vector<20x64xf32>
    %533 = arith.maximumf %531, %532 : vector<20x64xf32>
    %534 = arith.truncf %533 : vector<20x64xf32> to vector<20x64xbf16>
    %c2_189 = arith.constant 2 : index
    %c0_190 = arith.constant 0 : index
    %c0_191 = arith.constant 0 : index
    %535 = vector.load %arg14[%c2_189, %c0_190, %c0_191] : memref<3x64x64xbf16, #tpu.memory_space<vmem>>, vector<1x64x64xbf16>
    %536 = vector.shape_cast %535 : vector<1x64x64xbf16> to vector<64x64xbf16>
    %cst_192 = arith.constant dense<0.000000e+00> : vector<20x64xf32>
    %537 = tpu.matmul %534, %536, %cst_192 {dimension_numbers = #tpu.dot_dimension_numbers<[1], [0], [0], [1], [0, 0, 1, 1], [], []>} : vector<20x64xbf16>, vector<64x64xbf16>, vector<20x64xf32> -> vector<20x64xf32>
    %c2_193 = arith.constant 2 : index
    %c0_194 = arith.constant 0 : index
    %c0_195 = arith.constant 0 : index
    %538 = vector.load %arg15[%c2_193, %c0_194, %c0_195] : memref<3x1x64xf32, #tpu.memory_space<vmem>>, vector<1x1x64xf32>
    %539 = vector.shape_cast %538 : vector<1x1x64xf32> to vector<1x64xf32>
    %540 = vector.broadcast %539 : vector<1x64xf32> to vector<20x64xf32>
    %541 = arith.addf %537, %540 : vector<20x64xf32>
    %542 = arith.addf %523, %541 : vector<20x64xf32>
    %c2_196 = arith.constant 2 : index
    %c0_197 = arith.constant 0 : index
    %c0_198 = arith.constant 0 : index
    %543 = vector.load %arg16[%c2_196, %c0_197, %c0_198] : memref<3x1x64xf32, #tpu.memory_space<vmem>>, vector<1x1x64xf32>
    %544 = vector.shape_cast %543 : vector<1x1x64xf32> to vector<1x64xf32>
    %c2_199 = arith.constant 2 : index
    %c0_200 = arith.constant 0 : index
    %c0_201 = arith.constant 0 : index
    %545 = vector.load %arg17[%c2_199, %c0_200, %c0_201] : memref<3x1x64xf32, #tpu.memory_space<vmem>>, vector<1x1x64xf32>
    %546 = vector.shape_cast %545 : vector<1x1x64xf32> to vector<1x64xf32>
    %cst_202 = arith.constant dense<0.000000e+00> : vector<20xf32>
    %547 = vector.multi_reduction <add>, %542, %cst_202 [1] : vector<20x64xf32> to vector<20xf32>
    %548 = vector.shape_cast %547 : vector<20xf32> to vector<20x1xf32>
    %cst_203 = arith.constant 6.400000e+01 : f32
    %549 = vector.broadcast %cst_203 : f32 to vector<20x1xf32>
    %550 = arith.divf %548, %549 : vector<20x1xf32>
    %551 = vector.broadcast %550 : vector<20x1xf32> to vector<20x64xf32>
    %552 = arith.subf %542, %551 : vector<20x64xf32>
    %553 = arith.mulf %552, %552 : vector<20x64xf32>
    %cst_204 = arith.constant dense<0.000000e+00> : vector<20xf32>
    %554 = vector.multi_reduction <add>, %553, %cst_204 [1] : vector<20x64xf32> to vector<20xf32>
    %555 = vector.shape_cast %554 : vector<20xf32> to vector<20x1xf32>
    %cst_205 = arith.constant 6.400000e+01 : f32
    %556 = vector.broadcast %cst_205 : f32 to vector<20x1xf32>
    %557 = arith.divf %555, %556 : vector<20x1xf32>
    %558 = vector.broadcast %550 : vector<20x1xf32> to vector<20x64xf32>
    %559 = arith.subf %542, %558 : vector<20x64xf32>
    %cst_206 = arith.constant 9.99999974E-6 : f32
    %560 = vector.broadcast %cst_206 : f32 to vector<20x1xf32>
    %561 = arith.addf %557, %560 : vector<20x1xf32>
    %562 = math.rsqrt %561 : vector<20x1xf32>
    %563 = vector.broadcast %562 : vector<20x1xf32> to vector<20x64xf32>
    %564 = arith.mulf %559, %563 : vector<20x64xf32>
    %565 = vector.broadcast %544 : vector<1x64xf32> to vector<20x64xf32>
    %566 = arith.mulf %564, %565 : vector<20x64xf32>
    %567 = vector.broadcast %546 : vector<1x64xf32> to vector<20x64xf32>
    %568 = arith.addf %566, %567 : vector<20x64xf32>
    %569 = arith.truncf %568 : vector<20x64xf32> to vector<20x64xbf16>
    %c0_207 = arith.constant 0 : index
    %c0_208 = arith.constant 0 : index
    %570 = vector.load %arg18[%c0_207, %c0_208] : memref<64x128xbf16, #tpu.memory_space<vmem>>, vector<64x128xbf16>
    %cst_209 = arith.constant dense<0.000000e+00> : vector<20x128xf32>
    %571 = tpu.matmul %569, %570, %cst_209 {dimension_numbers = #tpu.dot_dimension_numbers<[1], [0], [0], [1], [0, 0, 1, 1], [], []>} : vector<20x64xbf16>, vector<64x128xbf16>, vector<20x128xf32> -> vector<20x128xf32>
    %c0_210 = arith.constant 0 : index
    %c0_211 = arith.constant 0 : index
    %572 = vector.load %arg19[%c0_210, %c0_211] : memref<1x128xf32, #tpu.memory_space<vmem>>, vector<1x128xf32>
    %573 = vector.broadcast %572 : vector<1x128xf32> to vector<20x128xf32>
    %574 = arith.addf %571, %573 : vector<20x128xf32>
    %c0_212 = arith.constant 0 : index
    %c0_213 = arith.constant 0 : index
    %575 = vector.load %arg20[%c0_212, %c0_213] : memref<20x128xf32, #tpu.memory_space<vmem>>, vector<20x128xf32>
    tpu.vector_store %arg20[%c0_212, %c0_213], %574 {strides = array<i32>} : memref<20x128xf32, #tpu.memory_space<vmem>>, vector<20x128xf32>,
    return
  }
}

</mosaic_0001>

<llo_original>
// kernel: name_generator_forward.1
$region0: #{name_generator_forward.1}
  #allocation0 [shape = 'u32[]', space=smem, size = 0x4, offset = 0x4, fixed_abs, tag = 'smem constant byte address 0x4 - core index']
  #allocation1 [shape = 'u32[144,128]{1,0:T(1,128)}', space=vmem, size = 0x12000, scoped, tag = 'internal scratch']
  %s0 = inlined_call_operand.vmem [shape: f32[20,64], index: 0, kind: input, shape index: {}]
  %s1 = inlined_call_operand.vmem [shape: f32[20,20], index: 1, kind: input, shape index: {}]
  %s2 = inlined_call_operand.vmem [shape: bf16[3,64,64], index: 2, kind: input, shape index: {}]
  %s3 = inlined_call_operand.vmem [shape: f32[3,1,64], index: 3, kind: input, shape index: {}]
  %s4 = inlined_call_operand.vmem [shape: bf16[3,64,64], index: 4, kind: input, shape index: {}]
  %s5 = inlined_call_operand.hbm [shape: f32[3,1,64], index: 5, kind: input, shape index: {}]
  %s6 = inlined_call_operand.vmem [shape: bf16[3,64,64], index: 6, kind: input, shape index: {}]
  %s7 = inlined_call_operand.hbm [shape: f32[3,1,64], index: 7, kind: input, shape index: {}]
  %s8 = inlined_call_operand.vmem [shape: bf16[3,64,64], index: 8, kind: input, shape index: {}]
  %s9 = inlined_call_operand.hbm [shape: f32[3,1,64], index: 9, kind: input, shape index: {}]
  %s10 = inlined_call_operand.hbm [shape: f32[3,1,64], index: 10, kind: input, shape index: {}]
  %s11 = inlined_call_operand.hbm [shape: f32[3,1,64], index: 11, kind: input, shape index: {}]
  %s12 = inlined_call_operand.vmem [shape: bf16[3,64,64], index: 12, kind: input, shape index: {}]
  %s13 = inlined_call_operand.hbm [shape: f32[3,1,64], index: 13, kind: input, shape index: {}]
  %s14 = inlined_call_operand.vmem [shape: bf16[3,64,64], index: 14, kind: input, shape index: {}]
  %s15 = inlined_call_operand.hbm [shape: f32[3,1,64], index: 15, kind: input, shape index: {}]
  %s16 = inlined_call_operand.hbm [shape: f32[3,1,64], index: 16, kind: input, shape index: {}]
  %s17 = inlined_call_operand.hbm [shape: f32[3,1,64], index: 17, kind: input, shape index: {}]
  %s18 = inlined_call_operand.hbm [shape: bf16[64,128], index: 18, kind: input, shape index: {}]
  %s19 = inlined_call_operand.hbm [shape: f32[1,128], index: 19, kind: input, shape index: {}]
  %s20 = inlined_call_operand.vmem [shape: f32[20,128], index: 20, kind: output, shape index: {}]
  %s21 = sld [smem:[#allocation0]]
  $region134: #{name_generator_forward.1} parent=0
    _
  %s23 = ssub.s32 1, %s21
  %s24 = scalar_select 0, %s23, %s21
  $region1: #{name_generator_forward.1} parent=0
    #allocation2 [shape = 'u8[1536]{0}', space=vmem, size = 0x800, scoped, tag = 'input window, operand 5, single buffered']
    #allocation3 [shape = 's32[1]{0}', space=sflag, size = 0x4, scoped, tag = 'scoped memory for name_generator_forward.1']
    #allocation4 [shape = 'u8[1536]{0}', space=vmem, size = 0x800, scoped, tag = 'input window, operand 7, single buffered']
    #allocation5 [shape = 's32[1]{0}', space=sflag, size = 0x4, scoped, tag = 'scoped memory for name_generator_forward.1']
    #allocation6 [shape = 'u8[1536]{0}', space=vmem, size = 0x800, scoped, tag = 'input window, operand 9, single buffered']
    #allocation7 [shape = 'u8[1536]{0}', space=vmem, size = 0x800, scoped, tag = 'input window, operand 10, single buffered']
    #allocation8 [shape = 's32[1]{0}', space=sflag, size = 0x4, scoped, tag = 'scoped memory for name_generator_forward.1']
    #allocation9 [shape = 'u8[1536]{0}', space=vmem, size = 0x800, scoped, tag = 'input window, operand 11, single buffered']
    #allocation10 [shape = 'u8[1536]{0}', space=vmem, size = 0x800, scoped, tag = 'input window, operand 13, single buffered']
    #allocation11 [shape = 's32[1]{0}', space=sflag, size = 0x4, scoped, tag = 'scoped memory for name_generator_forward.1']
    #allocation12 [shape = 'u8[1536]{0}', space=vmem, size = 0x800, scoped, tag = 'input window, operand 15, single buffered']
    #allocation13 [shape = 'u8[1536]{0}', space=vmem, size = 0x800, scoped, tag = 'input window, operand 16, single buffered']
    #allocation14 [shape = 's32[1]{0}', space=sflag, size = 0x4, scoped, tag = 'scoped memory for name_generator_forward.1']
    #allocation15 [shape = 'u8[1536]{0}', space=vmem, size = 0x800, scoped, tag = 'input window, operand 17, single buffered']
    #allocation16 [shape = 'u8[16384]{0}', space=vmem, size = 0x4000, scoped, tag = 'input window, operand 18, single buffered']
    #allocation17 [shape = 's32[1]{0}', space=sflag, size = 0x4, scoped, tag = 'scoped memory for name_generator_forward.1']
    #allocation18 [shape = 'u8[512]{0}', space=vmem, size = 0x400, scoped, tag = 'input window, operand 19, single buffered']
    %25 = vsyncpa [#allocation3], 0
    %26 = vsyncpa [#allocation5], 0
    %27 = vsyncpa [#allocation8], 0
    %28 = vsyncpa [#allocation11], 0
    %29 = vsyncpa [#allocation14], 0
    %30 = vsyncpa [#allocation17], 0
    // Predicated region
    $region2: #{name_generator_forward.1} parent=1 // pred_check
      _
    $region3: #{name_generator_forward.1} parent=1 // pred_check_branch
      %32 = sbr.rel (0) target = $region5
    $region4: #{name_generator_forward.1} parent=1 // pred_region
      _
    $region5: #{name_generator_forward.1} parent=1 // pred_fallthru
      _
    // Predicated region
    $region6: #{name_generator_forward.1} parent=1 // pred_check
      _
    $region7: #{name_generator_forward.1} parent=1 // pred_check_branch
      %34 = sbr.rel (0) target = $region9
    $region8: #{name_generator_forward.1} parent=1 // pred_region
      _
    $region9: #{name_generator_forward.1} parent=1 // pred_fallthru
      _
    // Predicated region
    $region10: #{name_generator_forward.1} parent=1 // pred_check
      _
    $region11: #{name_generator_forward.1} parent=1 // pred_check_branch
      %36 = sbr.rel (0) target = $region13
    $region12: #{name_generator_forward.1} parent=1 // pred_region
      _
    $region13: #{name_generator_forward.1} parent=1 // pred_fallthru
      _
    // Predicated region
    $region14: #{name_generator_forward.1} parent=1 // pred_check
      _
    $region15: #{name_generator_forward.1} parent=1 // pred_check_branch
      %38 = sbr.rel (0) target = $region17
    $region16: #{name_generator_forward.1} parent=1 // pred_region
      _
    $region17: #{name_generator_forward.1} parent=1 // pred_fallthru
      _
    // Predicated region
    $region18: #{name_generator_forward.1} parent=1 // pred_check
      _
    $region19: #{name_generator_forward.1} parent=1 // pred_check_branch
      %40 = sbr.rel (0) target = $region21
    $region20: #{name_generator_forward.1} parent=1 // pred_region
      _
    $region21: #{name_generator_forward.1} parent=1 // pred_fallthru
      _
    // Predicated region
    $region22: #{name_generator_forward.1} parent=1 // pred_check
      _
    $region23: #{name_generator_forward.1} parent=1 // pred_check_branch
      %42 = sbr.rel (0) target = $region25
    $region24: #{name_generator_forward.1} parent=1 // pred_region
      %s44 = ssub.s32 48, 48
      %45 = vsyncadd [#allocation3], %s44
      %s46 = sshll.u32 [#allocation2], 4
      %s47 = int_to_ptr.vmem [resolvable:$true] %s46
      %52 = dma.hbm_to_vmem [thread:$0]  %s5, 48, %s47, [#allocation3], 16, 16, 1
    $region25: #{name_generator_forward.1} parent=1 // pred_fallthru
      _
    // Predicated region
    $region26: #{name_generator_forward.1} parent=1 // pred_check
      _
    $region27: #{name_generator_forward.1} parent=1 // pred_check_branch
      %54 = sbr.rel (0) target = $region29
    $region28: #{name_generator_forward.1} parent=1 // pred_region
      _
    $region29: #{name_generator_forward.1} parent=1 // pred_fallthru
      _
    // Predicated region
    $region30: #{name_generator_forward.1} parent=1 // pred_check
      _
    $region31: #{name_generator_forward.1} parent=1 // pred_check_branch
      %56 = sbr.rel (0) target = $region33
    $region32: #{name_generator_forward.1} parent=1 // pred_region
      %s58 = ssub.s32 48, 48
      %59 = vsyncadd [#allocation5], %s58
      %s60 = sshll.u32 [#allocation4], 4
      %s61 = int_to_ptr.vmem [resolvable:$true] %s60
      %66 = dma.hbm_to_vmem [thread:$0]  %s7, 48, %s61, [#allocation5], 16, 16, 1
    $region33: #{name_generator_forward.1} parent=1 // pred_fallthru
      _
    // Predicated region
    $region34: #{name_generator_forward.1} parent=1 // pred_check
      _
    $region35: #{name_generator_forward.1} parent=1 // pred_check_branch
      %68 = sbr.rel (0) target = $region37
    $region36: #{name_generator_forward.1} parent=1 // pred_region
      _
    $region37: #{name_generator_forward.1} parent=1 // pred_fallthru
      _
    // Predicated region
    $region38: #{name_generator_forward.1} parent=1 // pred_check
      _
    $region39: #{name_generator_forward.1} parent=1 // pred_check_branch
      %70 = sbr.rel (0) target = $region41
    $region40: #{name_generator_forward.1} parent=1 // pred_region
      %s72 = ssub.s32 48, 48
      %73 = vsyncadd [#allocation5], %s72
      %s74 = sshll.u32 [#allocation6], 4
      %s75 = int_to_ptr.vmem [resolvable:$true] %s74
      %80 = dma.hbm_to_vmem [thread:$0]  %s9, 48, %s75, [#allocation5], 16, 16, 1
    $region41: #{name_generator_forward.1} parent=1 // pred_fallthru
      _
    // Predicated region
    $region42: #{name_generator_forward.1} parent=1 // pred_check
      _
    $region43: #{name_generator_forward.1} parent=1 // pred_check_branch
      %82 = sbr.rel (0) target = $region45
    $region44: #{name_generator_forward.1} parent=1 // pred_region
      %s84 = ssub.s32 48, 48
      %85 = vsyncadd [#allocation8], %s84
      %s86 = sshll.u32 [#allocation7], 4
      %s87 = int_to_ptr.vmem [resolvable:$true] %s86
      %92 = dma.hbm_to_vmem [thread:$0]  %s10, 48, %s87, [#allocation8], 16, 16, 1
    $region45: #{name_generator_forward.1} parent=1 // pred_fallthru
      _
    // Predicated region
    $region46: #{name_generator_forward.1} parent=1 // pred_check
      _
    $region47: #{name_generator_forward.1} parent=1 // pred_check_branch
      %94 = sbr.rel (0) target = $region49
    $region48: #{name_generator_forward.1} parent=1 // pred_region
      %s96 = ssub.s32 48, 48
      %97 = vsyncadd [#allocation8], %s96
      %s98 = sshll.u32 [#allocation9], 4
      %s99 = int_to_ptr.vmem [resolvable:$true] %s98
      %104 = dma.hbm_to_vmem [thread:$0]  %s11, 48, %s99, [#allocation8], 16, 16, 1
    $region49: #{name_generator_forward.1} parent=1 // pred_fallthru
      _
    // Predicated region
    $region50: #{name_generator_forward.1} parent=1 // pred_check
      _
    $region51: #{name_generator_forward.1} parent=1 // pred_check_branch
      %106 = sbr.rel (0) target = $region53
    $region52: #{name_generator_forward.1} parent=1 // pred_region
      _
    $region53: #{name_generator_forward.1} parent=1 // pred_fallthru
      _
    // Predicated region
    $region54: #{name_generator_forward.1} parent=1 // pred_check
      _
    $region55: #{name_generator_forward.1} parent=1 // pred_check_branch
      %108 = sbr.rel (0) target = $region57
    $region56: #{name_generator_forward.1} parent=1 // pred_region
      %s110 = ssub.s32 48, 48
      %111 = vsyncadd [#allocation11], %s110
      %s112 = sshll.u32 [#allocation10], 4
      %s113 = int_to_ptr.vmem [resolvable:$true] %s112
      %118 = dma.hbm_to_vmem [thread:$0]  %s13, 48, %s113, [#allocation11], 16, 16, 1
    $region57: #{name_generator_forward.1} parent=1 // pred_fallthru
      _
    // Predicated region
    $region58: #{name_generator_forward.1} parent=1 // pred_check
      _
    $region59: #{name_generator_forward.1} parent=1 // pred_check_branch
      %120 = sbr.rel (0) target = $region61
    $region60: #{name_generator_forward.1} parent=1 // pred_region
      _
    $region61: #{name_generator_forward.1} parent=1 // pred_fallthru
      _
    // Predicated region
    $region62: #{name_generator_forward.1} parent=1 // pred_check
      _
    $region63: #{name_generator_forward.1} parent=1 // pred_check_branch
      %122 = sbr.rel (0) target = $region65
    $region64: #{name_generator_forward.1} parent=1 // pred_region
      %s124 = ssub.s32 48, 48
      %125 = vsyncadd [#allocation11], %s124
      %s126 = sshll.u32 [#allocation12], 4
      %s127 = int_to_ptr.vmem [resolvable:$true] %s126
      %132 = dma.hbm_to_vmem [thread:$0]  %s15, 48, %s127, [#allocation11], 16, 16, 1
    $region65: #{name_generator_forward.1} parent=1 // pred_fallthru
      _
    // Predicated region
    $region66: #{name_generator_forward.1} parent=1 // pred_check
      _
    $region67: #{name_generator_forward.1} parent=1 // pred_check_branch
      %134 = sbr.rel (0) target = $region69
    $region68: #{name_generator_forward.1} parent=1 // pred_region
      %s136 = ssub.s32 48, 48
      %137 = vsyncadd [#allocation14], %s136
      %s138 = sshll.u32 [#allocation13], 4
      %s139 = int_to_ptr.vmem [resolvable:$true] %s138
      %144 = dma.hbm_to_vmem [thread:$0]  %s16, 48, %s139, [#allocation14], 16, 16, 1
    $region69: #{name_generator_forward.1} parent=1 // pred_fallthru
      _
    // Predicated region
    $region70: #{name_generator_forward.1} parent=1 // pred_check
      _
    $region71: #{name_generator_forward.1} parent=1 // pred_check_branch
      %146 = sbr.rel (0) target = $region73
    $region72: #{name_generator_forward.1} parent=1 // pred_region
      %s148 = ssub.s32 48, 48
      %149 = vsyncadd [#allocation14], %s148
      %s150 = sshll.u32 [#allocation15], 4
      %s151 = int_to_ptr.vmem [resolvable:$true] %s150
      %156 = dma.hbm_to_vmem [thread:$0]  %s17, 48, %s151, [#allocation14], 16, 16, 1
    $region73: #{name_generator_forward.1} parent=1 // pred_fallthru
      _
    // Predicated region
    $region74: #{name_generator_forward.1} parent=1 // pred_check
      _
    $region75: #{name_generator_forward.1} parent=1 // pred_check_branch
      %158 = sbr.rel (0) target = $region77
    $region76: #{name_generator_forward.1} parent=1 // pred_region
      %s160 = ssub.s32 512, 512
      %161 = vsyncadd [#allocation17], %s160
      %s162 = sshll.u32 [#allocation16], 4
      %s163 = int_to_ptr.vmem [resolvable:$true] %s162
      %168 = dma.hbm_to_vmem [thread:$0]  %s18, 512, %s163, [#allocation17], 64, 64, 4
    $region77: #{name_generator_forward.1} parent=1 // pred_fallthru
      _
    // Predicated region
    $region78: #{name_generator_forward.1} parent=1 // pred_check
      _
    $region79: #{name_generator_forward.1} parent=1 // pred_check_branch
      %170 = sbr.rel (0) target = $region81
    $region80: #{name_generator_forward.1} parent=1 // pred_region
      %s172 = ssub.s32 16, 16
      %173 = vsyncadd [#allocation17], %s172
      %s175 = sshll.u32 [#allocation18], 4
      %s176 = int_to_ptr.vmem [resolvable:$true] %s175
      %178 = dma.hbm_to_vmem [thread:$0]  %s19, 16, %s176, [#allocation17]
    $region81: #{name_generator_forward.1} parent=1 // pred_fallthru
      _
    // Predicated region
    $region82: #{name_generator_forward.1} parent=1 // pred_check
      _
    $region83: #{name_generator_forward.1} parent=1 // pred_check_branch
      %180 = sbr.rel (0) target = $region85
    $region84: #{name_generator_forward.1} parent=1 // pred_region
      %181 = dma.done [#allocation3], 48
    $region85: #{name_generator_forward.1} parent=1 // pred_fallthru
      _
    // Predicated region
    $region86: #{name_generator_forward.1} parent=1 // pred_check
      _
    $region87: #{name_generator_forward.1} parent=1 // pred_check_branch
      %183 = sbr.rel (0) target = $region89
    $region88: #{name_generator_forward.1} parent=1 // pred_region
      %184 = dma.done [#allocation5], 48
    $region89: #{name_generator_forward.1} parent=1 // pred_fallthru
      _
    // Predicated region
    $region90: #{name_generator_forward.1} parent=1 // pred_check
      _
    $region91: #{name_generator_forward.1} parent=1 // pred_check_branch
      %186 = sbr.rel (0) target = $region93
    $region92: #{name_generator_forward.1} parent=1 // pred_region
      %187 = dma.done [#allocation5], 48
    $region93: #{name_generator_forward.1} parent=1 // pred_fallthru
      _
    // Predicated region
    $region94: #{name_generator_forward.1} parent=1 // pred_check
      _
    $region95: #{name_generator_forward.1} parent=1 // pred_check_branch
      %189 = sbr.rel (0) target = $region97
    $region96: #{name_generator_forward.1} parent=1 // pred_region
      %190 = dma.done [#allocation8], 48
    $region97: #{name_generator_forward.1} parent=1 // pred_fallthru
      _
    // Predicated region
    $region98: #{name_generator_forward.1} parent=1 // pred_check
      _
    $region99: #{name_generator_forward.1} parent=1 // pred_check_branch
      %192 = sbr.rel (0) target = $region101
    $region100: #{name_generator_forward.1} parent=1 // pred_region
      %193 = dma.done [#allocation8], 48
    $region101: #{name_generator_forward.1} parent=1 // pred_fallthru
      _
    // Predicated region
    $region102: #{name_generator_forward.1} parent=1 // pred_check
      _
    $region103: #{name_generator_forward.1} parent=1 // pred_check_branch
      %195 = sbr.rel (0) target = $region105
    $region104: #{name_generator_forward.1} parent=1 // pred_region
      %196 = dma.done [#allocation11], 48
    $region105: #{name_generator_forward.1} parent=1 // pred_fallthru
      _
    // Predicated region
    $region106: #{name_generator_forward.1} parent=1 // pred_check
      _
    $region107: #{name_generator_forward.1} parent=1 // pred_check_branch
      %198 = sbr.rel (0) target = $region109
    $region108: #{name_generator_forward.1} parent=1 // pred_region
      %199 = dma.done [#allocation11], 48
    $region109: #{name_generator_forward.1} parent=1 // pred_fallthru
      _
    // Predicated region
    $region110: #{name_generator_forward.1} parent=1 // pred_check
      _
    $region111: #{name_generator_forward.1} parent=1 // pred_check_branch
      %201 = sbr.rel (0) target = $region113
    $region112: #{name_generator_forward.1} parent=1 // pred_region
      %202 = dma.done [#allocation14], 48
    $region113: #{name_generator_forward.1} parent=1 // pred_fallthru
      _
    // Predicated region
    $region114: #{name_generator_forward.1} parent=1 // pred_check
      _
    $region115: #{name_generator_forward.1} parent=1 // pred_check_branch
      %204 = sbr.rel (0) target = $region117
    $region116: #{name_generator_forward.1} parent=1 // pred_region
      %205 = dma.done [#allocation14], 48
    $region117: #{name_generator_forward.1} parent=1 // pred_fallthru
      _
    // Predicated region
    $region118: #{name_generator_forward.1} parent=1 // pred_check
      _
    $region119: #{name_generator_forward.1} parent=1 // pred_check_branch
      %207 = sbr.rel (0) target = $region121
    $region120: #{name_generator_forward.1} parent=1 // pred_region
      %208 = dma.done [#allocation17], 512
    $region121: #{name_generator_forward.1} parent=1 // pred_fallthru
      _
    // Predicated region
    $region122: #{name_generator_forward.1} parent=1 // pred_check
      _
    $region123: #{name_generator_forward.1} parent=1 // pred_check_branch
      %210 = sbr.rel (0) target = $region125
    $region124: #{name_generator_forward.1} parent=1 // pred_region
      %211 = dma.done [#allocation17], 16
    $region125: #{name_generator_forward.1} parent=1 // pred_fallthru
      _
    %v213 = vld [vmem:[%s0] sm:$0xff]
    %v214 = vld [vmem:[%s0 + $0x8] sm:$0xff]
    %v215 = vld [vmem:[%s0 + $0x10] sm:$0xf]
    %v216 = vld [vmem:[%s1] sm:$0xff]
    %v217 = vld [vmem:[%s1 + $0x8] sm:$0xff]
    %v218 = vld [vmem:[%s1 + $0x10] sm:$0xf]
    %v219 = vpack.c.bf16 %v214, %v213
    %v220 = vpack.c.bf16 %v215, %v215
    %v221 = vld [vmem:[%s2] sm:$0xf]
    %v222 = vld [vmem:[%s2 + $0x4] sm:$0xf]
    %v223 = vld [vmem:[%s2 + $0x8] sm:$0xf]
    %v224 = vld [vmem:[%s2 + $0xc] sm:$0xf]
    %v225 = vld [vmem:[%s2 + $0x10] sm:$0xf]
    %v226 = vld [vmem:[%s2 + $0x14] sm:$0xf]
    %v227 = vld [vmem:[%s2 + $0x18] sm:$0xf]
    %v228 = vld [vmem:[%s2 + $0x1c] sm:$0xf]
    %v229 = vld [vmem:[%s3] sm:$0x1]
    %v231 = vlaneseq
    %v232 = vshrl.u32 %v231, 7
    %v233 = vsub.s32 0, %v232
    %v234 = vrot.slane %v229, %v233
    %v244 = vunpack.c.l.b16 %v221
    %v245 = vunpack.c.l.b16 %v222
    %v246 = vunpack.c.l.b16 %v223
    %v247 = vunpack.c.l.b16 %v224
    %v248 = vunpack.c.l.b16 %v225
    %v249 = vunpack.c.l.b16 %v226
    %v250 = vunpack.c.l.b16 %v227
    %v251 = vunpack.c.l.b16 %v228
    %v252 = vpack.c.b16 %v245, %v244
    %v253 = vpack.c.b16 %v247, %v246
    %v254 = vpack.c.b16 %v249, %v248
    %v255 = vpack.c.b16 %v251, %v250
    %vm260 = vcmask 523264
    %v262 = vsel %vm260, %v219, 0
    %v265 = vsel %vm260, %v220, 0
    %267 = vmatprep.subr.bf16.mxu0 0
    %268 = vmatpush1.bf16.msra.mxu0 0
    %269 = vmatprep.subr.bf16.mxu0 0
    %270 = vmatpush1.bf16.msra.mxu0 0
    %271 = vmatprep.subr.bf16.mxu0 0
    %272 = vmatpush1.bf16.msra.mxu0 0
    %273 = vmatprep.subr.bf16.mxu0 0
    %274 = vmatpush1.bf16.msra.mxu0 0
    %275 = vmatprep.subr.bf16.mxu0 0
    %276 = vmatpush1.bf16.msra.mxu0 %v255
    %277 = vmatprep.subr.bf16.mxu0 0
    %278 = vmatpush1.bf16.msra.mxu0 %v254
    %279 = vmatprep.subr.bf16.mxu0 0
    %280 = vmatpush1.bf16.msra.mxu0 %v253
    %281 = vmatprep.subr.bf16.mxu0 0
    %282 = vmatpush1.bf16.msra.mxu0 %v252
    %283 = vmatprep.subr.bf16.mxu0 0
    %284 = vmatpush2.bf16.msra.mxu0 0
    %285 = vmatprep.subr.bf16.mxu0 0
    %286 = vmatpush2.bf16.msra.mxu0 0
    %287 = vmatprep.subr.bf16.mxu0 0
    %288 = vmatpush2.bf16.msra.mxu0 0
    %289 = vmatprep.subr.bf16.mxu0 0
    %290 = vmatpush2.bf16.msra.mxu0 0
    %291 = vmatprep.subr.bf16.mxu0 0
    %292 = vmatpush2.bf16.msra.mxu0 0
    %293 = vmatprep.subr.bf16.mxu0 0
    %294 = vmatpush2.bf16.msra.mxu0 0
    %295 = vmatprep.subr.bf16.mxu0 0
    %296 = vmatpush2.bf16.msra.mxu0 0
    %297 = vmatprep.subr.bf16.mxu0 0
    %298 = vmatpush2.bf16.msra.mxu0 0
    %299 = vmatprep.mubr.bf16.mxu0 0
    %300 = vmatmul.mubr.bf16.gmra.mxu0 %v262
    %v301 = vpop.f32.mrf.mxu0
    %v302 = vadd.f32 %v234, %v301
    %v303 = vpop.f32.mrf.mxu0
    %v304 = vpop.f32.mrf.mxu0
    %v305 = vadd.f32 %v234, %v304
    %v306 = vpop.f32.mrf.mxu0
    %307 = vmatprep.mubr.bf16.mxu0 0
    %308 = vmatmul.mubr.bf16.gmra.mxu0 %v265
    %v309 = vpop.f32.mrf.mxu0
    %v310 = vadd.f32 %v234, %v309
    %v311 = vpop.f32.mrf.mxu0
    %v312 = vpop.f32.mrf.mxu0
    %v313 = vpop.f32.mrf.mxu0
    %314 = vdwg.mxu0
    %v315 = vld [vmem:[%s4] sm:$0xf]
    %v316 = vld [vmem:[%s4 + $0x4] sm:$0xf]
    %v317 = vld [vmem:[%s4 + $0x8] sm:$0xf]
    %v318 = vld [vmem:[%s4 + $0xc] sm:$0xf]
    %v319 = vld [vmem:[%s4 + $0x10] sm:$0xf]
    %v320 = vld [vmem:[%s4 + $0x14] sm:$0xf]
    %v321 = vld [vmem:[%s4 + $0x18] sm:$0xf]
    %v322 = vld [vmem:[%s4 + $0x1c] sm:$0xf]
    %v323 = vld [vmem:[#allocation2] sm:$0x1]
    %v325 = vlaneseq
    %v326 = vshrl.u32 %v325, 7
    %v327 = vsub.s32 0, %v326
    %v328 = vrot.slane %v323, %v327
    %v338 = vunpack.c.l.b16 %v315
    %v339 = vunpack.c.l.b16 %v316
    %v340 = vunpack.c.l.b16 %v317
    %v341 = vunpack.c.l.b16 %v318
    %v342 = vunpack.c.l.b16 %v319
    %v343 = vunpack.c.l.b16 %v320
    %v344 = vunpack.c.l.b16 %v321
    %v345 = vunpack.c.l.b16 %v322
    %v346 = vpack.c.b16 %v339, %v338
    %v347 = vpack.c.b16 %v341, %v340
    %v348 = vpack.c.b16 %v343, %v342
    %v349 = vpack.c.b16 %v345, %v344
    %354 = vmatprep.subr.bf16.mxu0 0
    %355 = vmatpush1.bf16.msra.mxu0 0
    %356 = vmatprep.subr.bf16.mxu0 0
    %357 = vmatpush1.bf16.msra.mxu0 0
    %358 = vmatprep.subr.bf16.mxu0 0
    %359 = vmatpush1.bf16.msra.mxu0 0
    %360 = vmatprep.subr.bf16.mxu0 0
    %361 = vmatpush1.bf16.msra.mxu0 0
    %362 = vmatprep.subr.bf16.mxu0 0
    %363 = vmatpush1.bf16.msra.mxu0 %v349
    %364 = vmatprep.subr.bf16.mxu0 0
    %365 = vmatpush1.bf16.msra.mxu0 %v348
    %366 = vmatprep.subr.bf16.mxu0 0
    %367 = vmatpush1.bf16.msra.mxu0 %v347
    %368 = vmatprep.subr.bf16.mxu0 0
    %369 = vmatpush1.bf16.msra.mxu0 %v346
    %370 = vmatprep.subr.bf16.mxu0 0
    %371 = vmatpush2.bf16.msra.mxu0 0
    %372 = vmatprep.subr.bf16.mxu0 0
    %373 = vmatpush2.bf16.msra.mxu0 0
    %374 = vmatprep.subr.bf16.mxu0 0
    %375 = vmatpush2.bf16.msra.mxu0 0
    %376 = vmatprep.subr.bf16.mxu0 0
    %377 = vmatpush2.bf16.msra.mxu0 0
    %378 = vmatprep.subr.bf16.mxu0 0
    %379 = vmatpush2.bf16.msra.mxu0 0
    %380 = vmatprep.subr.bf16.mxu0 0
    %381 = vmatpush2.bf16.msra.mxu0 0
    %382 = vmatprep.subr.bf16.mxu0 0
    %383 = vmatpush2.bf16.msra.mxu0 0
    %384 = vmatprep.subr.bf16.mxu0 0
    %385 = vmatpush2.bf16.msra.mxu0 0
    %386 = vmatprep.mubr.bf16.mxu0 0
    %387 = vmatmul.mubr.bf16.gmra.mxu0 %v262
    %v388 = vpop.f32.mrf.mxu0
    %v389 = vadd.f32 %v328, %v388
    %v390 = vpop.f32.mrf.mxu0
    %v391 = vpop.f32.mrf.mxu0
    %v392 = vadd.f32 %v328, %v391
    %v393 = vpop.f32.mrf.mxu0
    %394 = vmatprep.mubr.bf16.mxu0 0
    %395 = vmatmul.mubr.bf16.gmra.mxu0 %v265
    %v396 = vpop.f32.mrf.mxu0
    %v397 = vadd.f32 %v328, %v396
    %v398 = vpop.f32.mrf.mxu0
    %v399 = vpop.f32.mrf.mxu0
    %v400 = vpop.f32.mrf.mxu0
    %401 = vdwg.mxu0
    %v402 = vld [vmem:[%s6] sm:$0xf]
    %v403 = vld [vmem:[%s6 + $0x4] sm:$0xf]
    %v404 = vld [vmem:[%s6 + $0x8] sm:$0xf]
    %v405 = vld [vmem:[%s6 + $0xc] sm:$0xf]
    %v406 = vld [vmem:[%s6 + $0x10] sm:$0xf]
    %v407 = vld [vmem:[%s6 + $0x14] sm:$0xf]
    %v408 = vld [vmem:[%s6 + $0x18] sm:$0xf]
    %v409 = vld [vmem:[%s6 + $0x1c] sm:$0xf]
    %v410 = vld [vmem:[#allocation4] sm:$0x1]
    %v412 = vlaneseq
    %v413 = vshrl.u32 %v412, 7
    %v414 = vsub.s32 0, %v413
    %v415 = vrot.slane %v410, %v414
    %v425 = vunpack.c.l.b16 %v402
    %v426 = vunpack.c.l.b16 %v403
    %v427 = vunpack.c.l.b16 %v404
    %v428 = vunpack.c.l.b16 %v405
    %v429 = vunpack.c.l.b16 %v406
    %v430 = vunpack.c.l.b16 %v407
    %v431 = vunpack.c.l.b16 %v408
    %v432 = vunpack.c.l.b16 %v409
    %v433 = vpack.c.b16 %v426, %v425
    %v434 = vpack.c.b16 %v428, %v427
    %v435 = vpack.c.b16 %v430, %v429
    %v436 = vpack.c.b16 %v432, %v431
    %441 = vmatprep.subr.bf16.mxu0 0
    %442 = vmatpush1.bf16.msra.mxu0 0
    %443 = vmatprep.subr.bf16.mxu0 0
    %444 = vmatpush1.bf16.msra.mxu0 0
    %445 = vmatprep.subr.bf16.mxu0 0
    %446 = vmatpush1.bf16.msra.mxu0 0
    %447 = vmatprep.subr.bf16.mxu0 0
    %448 = vmatpush1.bf16.msra.mxu0 0
    %449 = vmatprep.subr.bf16.mxu0 0
    %450 = vmatpush1.bf16.msra.mxu0 %v436
    %451 = vmatprep.subr.bf16.mxu0 0
    %452 = vmatpush1.bf16.msra.mxu0 %v435
    %453 = vmatprep.subr.bf16.mxu0 0
    %454 = vmatpush1.bf16.msra.mxu0 %v434
    %455 = vmatprep.subr.bf16.mxu0 0
    %456 = vmatpush1.bf16.msra.mxu0 %v433
    %457 = vmatprep.subr.bf16.mxu0 0
    %458 = vmatpush2.bf16.msra.mxu0 0
    %459 = vmatprep.subr.bf16.mxu0 0
    %460 = vmatpush2.bf16.msra.mxu0 0
    %461 = vmatprep.subr.bf16.mxu0 0
    %462 = vmatpush2.bf16.msra.mxu0 0
    %463 = vmatprep.subr.bf16.mxu0 0
    %464 = vmatpush2.bf16.msra.mxu0 0
    %465 = vmatprep.subr.bf16.mxu0 0
    %466 = vmatpush2.bf16.msra.mxu0 0
    %467 = vmatprep.subr.bf16.mxu0 0
    %468 = vmatpush2.bf16.msra.mxu0 0
    %469 = vmatprep.subr.bf16.mxu0 0
    %470 = vmatpush2.bf16.msra.mxu0 0
    %471 = vmatprep.subr.bf16.mxu0 0
    %472 = vmatpush2.bf16.msra.mxu0 0
    %473 = vmatprep.mubr.bf16.mxu0 0
    %474 = vmatmul.mubr.bf16.gmra.mxu0 %v262
    %v475 = vpop.f32.mrf.mxu0
    %v476 = vadd.f32 %v415, %v475
    %v477 = vpop.f32.mrf.mxu0
    %v478 = vpop.f32.mrf.mxu0
    %v479 = vadd.f32 %v415, %v478
    %v480 = vpop.f32.mrf.mxu0
    %481 = vmatprep.mubr.bf16.mxu0 0
    %482 = vmatmul.mubr.bf16.gmra.mxu0 %v265
    %v483 = vpop.f32.mrf.mxu0
    %v484 = vadd.f32 %v415, %v483
    %v485 = vpop.f32.mrf.mxu0
    %v486 = vpop.f32.mrf.mxu0
    %v487 = vpop.f32.mrf.mxu0
    %488 = vdwg.mxu0
    %v489 = vpack.c.bf16 %v305, %v302
    %v490 = vpack.c.bf16 %v310, %v310
    %v491 = vpack.c.bf16 %v392, %v389
    %v492 = vpack.c.bf16 %v397, %v397
    %v493 = vpack.c.bf16 %v479, %v476
    %v494 = vpack.c.bf16 %v484, %v484
    %497 = vrot.lane.b32.xlu0 %v489, 120
    %v498 = vpop.permute.xlu0 %497
    %499 = vrot.lane.b32.xlu0 %v490, 120
    %v500 = vpop.permute.xlu0 %499
    %501 = vrot.lane.b32.xlu0 %v489, 112
    %v502 = vpop.permute.xlu0 %501
    %503 = vrot.lane.b32.xlu0 %v490, 112
    %v504 = vpop.permute.xlu0 %503
    %505 = vrot.lane.b32.xlu0 %v489, 104
    %v506 = vpop.permute.xlu0 %505
    %507 = vrot.lane.b32.xlu0 %v490, 104
    %v508 = vpop.permute.xlu0 %507
    %509 = vrot.lane.b32.xlu0 %v489, 96
    %v510 = vpop.permute.xlu0 %509
    %511 = vrot.lane.b32.xlu0 %v490, 96
    %v512 = vpop.permute.xlu0 %511
    %513 = vrot.lane.b32.xlu0 %v489, 88
    %v514 = vpop.permute.xlu0 %513
    %515 = vrot.lane.b32.xlu0 %v490, 88
    %v516 = vpop.permute.xlu0 %515
    %517 = vrot.lane.b32.xlu0 %v489, 80
    %v518 = vpop.permute.xlu0 %517
    %519 = vrot.lane.b32.xlu0 %v490, 80
    %v520 = vpop.permute.xlu0 %519
    %521 = vrot.lane.b32.xlu0 %v489, 72
    %v522 = vpop.permute.xlu0 %521
    %523 = vrot.lane.b32.xlu0 %v490, 72
    %v524 = vpop.permute.xlu0 %523
    %527 = vrot.lane.b32.xlu0 %v491, 120
    %v528 = vpop.permute.xlu0 %527
    %529 = vrot.lane.b32.xlu0 %v492, 120
    %v530 = vpop.permute.xlu0 %529
    %531 = vrot.lane.b32.xlu0 %v491, 112
    %v532 = vpop.permute.xlu0 %531
    %533 = vrot.lane.b32.xlu0 %v492, 112
    %v534 = vpop.permute.xlu0 %533
    %535 = vrot.lane.b32.xlu0 %v491, 104
    %v536 = vpop.permute.xlu0 %535
    %537 = vrot.lane.b32.xlu0 %v492, 104
    %v538 = vpop.permute.xlu0 %537
    %539 = vrot.lane.b32.xlu0 %v491, 96
    %v540 = vpop.permute.xlu0 %539
    %541 = vrot.lane.b32.xlu0 %v492, 96
    %v542 = vpop.permute.xlu0 %541
    %543 = vrot.lane.b32.xlu0 %v491, 88
    %v544 = vpop.permute.xlu0 %543
    %545 = vrot.lane.b32.xlu0 %v492, 88
    %v546 = vpop.permute.xlu0 %545
    %547 = vrot.lane.b32.xlu0 %v491, 80
    %v548 = vpop.permute.xlu0 %547
    %549 = vrot.lane.b32.xlu0 %v492, 80
    %v550 = vpop.permute.xlu0 %549
    %551 = vrot.lane.b32.xlu0 %v491, 72
    %v552 = vpop.permute.xlu0 %551
    %553 = vrot.lane.b32.xlu0 %v492, 72
    %v554 = vpop.permute.xlu0 %553
    %557 = vrot.lane.b32.xlu0 %v493, 120
    %v558 = vpop.permute.xlu0 %557
    %559 = vrot.lane.b32.xlu0 %v494, 120
    %v560 = vpop.permute.xlu0 %559
    %562 = vrot.lane.b32.xlu0 %v493, 112
    %v563 = vpop.permute.xlu0 %562
    %564 = vrot.lane.b32.xlu0 %v494, 112
    %v565 = vpop.permute.xlu0 %564
    %567 = vrot.lane.b32.xlu0 %v493, 104
    %v568 = vpop.permute.xlu0 %567
    %569 = vrot.lane.b32.xlu0 %v494, 104
    %v570 = vpop.permute.xlu0 %569
    %572 = vrot.lane.b32.xlu0 %v493, 96
    %v573 = vpop.permute.xlu0 %572
    %574 = vrot.lane.b32.xlu0 %v494, 96
    %v575 = vpop.permute.xlu0 %574
    %577 = vrot.lane.b32.xlu0 %v493, 88
    %v578 = vpop.permute.xlu0 %577
    %579 = vrot.lane.b32.xlu0 %v494, 88
    %v580 = vpop.permute.xlu0 %579
    %582 = vrot.lane.b32.xlu0 %v493, 80
    %v583 = vpop.permute.xlu0 %582
    %584 = vrot.lane.b32.xlu0 %v494, 80
    %v585 = vpop.permute.xlu0 %584
    %587 = vrot.lane.b32.xlu0 %v493, 72
    %v588 = vpop.permute.xlu0 %587
    %589 = vrot.lane.b32.xlu0 %v494, 72
    %v590 = vpop.permute.xlu0 %589
    %vm592 = vcmask 64512
    %v594 = vsel %vm592, %v489, 0
    %v597 = vsel %vm592, %v490, 0
    %v600 = vsel %vm592, %v491, 0
    %v603 = vsel %vm592, %v492, 0
    %605 = vmatprep.subr.bf16.mxu0 0
    %606 = vmatpush1.bf16.xpose.msra.mxu0 0
    %607 = vmatprep.subr.bf16.mxu0 0
    %608 = vmatpush1.bf16.xpose.msra.mxu0 0
    %609 = vmatprep.subr.bf16.mxu0 0
    %610 = vmatpush1.bf16.xpose.msra.mxu0 0
    %611 = vmatprep.subr.bf16.mxu0 0
    %612 = vmatpush1.bf16.xpose.msra.mxu0 0
    %613 = vmatprep.subr.bf16.mxu0 0
    %614 = vmatpush1.bf16.xpose.msra.mxu0 0
    %615 = vmatprep.subr.bf16.mxu0 0
    %616 = vmatpush1.bf16.xpose.msra.mxu0 0
    %617 = vmatprep.subr.bf16.mxu0 0
    %618 = vmatpush1.bf16.xpose.msra.mxu0 %v603
    %619 = vmatprep.subr.bf16.mxu0 0
    %620 = vmatpush1.bf16.xpose.msra.mxu0 %v600
    %621 = vmatprep.subr.bf16.mxu0 0
    %622 = vmatpush2.bf16.xpose.msra.mxu0 0
    %623 = vmatprep.subr.bf16.mxu0 0
    %624 = vmatpush2.bf16.xpose.msra.mxu0 0
    %625 = vmatprep.subr.bf16.mxu0 0
    %626 = vmatpush2.bf16.xpose.msra.mxu0 0
    %627 = vmatprep.subr.bf16.mxu0 0
    %628 = vmatpush2.bf16.xpose.msra.mxu0 0
    %629 = vmatprep.subr.bf16.mxu0 0
    %630 = vmatpush2.bf16.xpose.msra.mxu0 0
    %631 = vmatprep.subr.bf16.mxu0 0
    %632 = vmatpush2.bf16.xpose.msra.mxu0 0
    %633 = vmatprep.subr.bf16.mxu0 0
    %634 = vmatpush2.bf16.xpose.msra.mxu0 0
    %635 = vmatprep.subr.bf16.mxu0 0
    %636 = vmatpush2.bf16.xpose.msra.mxu0 0
    %637 = vmatprep.mubr.bf16.mxu0 0
    %638 = vmatmul.mubr.bf16.gmra.mxu0 %v594
    %v639 = vpop.f32.mrf.mxu0
    %v640 = vadd.f32 %v216, %v639
    %v641 = vpop.f32.mrf.mxu0
    %v642 = vpop.f32.mrf.mxu0
    %v643 = vadd.f32 %v217, %v642
    %v644 = vpop.f32.mrf.mxu0
    %645 = vmatprep.mubr.bf16.mxu0 0
    %646 = vmatmul.mubr.bf16.gmra.mxu0 %v597
    %v647 = vpop.f32.mrf.mxu0
    %v648 = vadd.f32 %v218, %v647
    %v649 = vpop.f32.mrf.mxu0
    %v650 = vpop.f32.mrf.mxu0
    %v651 = vpop.f32.mrf.mxu0
    %652 = vdwg.mxu0
    %v654 = vsel %vm592, %v498, 0
    %v657 = vsel %vm592, %v500, 0
    %v660 = vsel %vm592, %v528, 0
    %v663 = vsel %vm592, %v530, 0
    %665 = vmatprep.subr.bf16.mxu0 0
    %666 = vmatpush1.bf16.xpose.msra.mxu0 0
    %667 = vmatprep.subr.bf16.mxu0 0
    %668 = vmatpush1.bf16.xpose.msra.mxu0 0
    %669 = vmatprep.subr.bf16.mxu0 0
    %670 = vmatpush1.bf16.xpose.msra.mxu0 0
    %671 = vmatprep.subr.bf16.mxu0 0
    %672 = vmatpush1.bf16.xpose.msra.mxu0 0
    %673 = vmatprep.subr.bf16.mxu0 0
    %674 = vmatpush1.bf16.xpose.msra.mxu0 0
    %675 = vmatprep.subr.bf16.mxu0 0
    %676 = vmatpush1.bf16.xpose.msra.mxu0 0
    %677 = vmatprep.subr.bf16.mxu0 0
    %678 = vmatpush1.bf16.xpose.msra.mxu0 %v663
    %679 = vmatprep.subr.bf16.mxu0 0
    %680 = vmatpush1.bf16.xpose.msra.mxu0 %v660
    %681 = vmatprep.subr.bf16.mxu0 0
    %682 = vmatpush2.bf16.xpose.msra.mxu0 0
    %683 = vmatprep.subr.bf16.mxu0 0
    %684 = vmatpush2.bf16.xpose.msra.mxu0 0
    %685 = vmatprep.subr.bf16.mxu0 0
    %686 = vmatpush2.bf16.xpose.msra.mxu0 0
    %687 = vmatprep.subr.bf16.mxu0 0
    %688 = vmatpush2.bf16.xpose.msra.mxu0 0
    %689 = vmatprep.subr.bf16.mxu0 0
    %690 = vmatpush2.bf16.xpose.msra.mxu0 0
    %691 = vmatprep.subr.bf16.mxu0 0
    %692 = vmatpush2.bf16.xpose.msra.mxu0 0
    %693 = vmatprep.subr.bf16.mxu0 0
    %694 = vmatpush2.bf16.xpose.msra.mxu0 0
    %695 = vmatprep.subr.bf16.mxu0 0
    %696 = vmatpush2.bf16.xpose.msra.mxu0 0
    %697 = vmatprep.mubr.bf16.mxu0 0
    %698 = vmatmul.mubr.bf16.gmra.mxu0 %v654
    %v699 = vpop.f32.mrf.mxu0
    %v700 = vadd.f32 %v216, %v699
    %v701 = vpop.f32.mrf.mxu0
    %v702 = vpop.f32.mrf.mxu0
    %v703 = vadd.f32 %v217, %v702
    %v704 = vpop.f32.mrf.mxu0
    %705 = vmatprep.mubr.bf16.mxu0 0
    %706 = vmatmul.mubr.bf16.gmra.mxu0 %v657
    %v707 = vpop.f32.mrf.mxu0
    %v708 = vadd.f32 %v218, %v707
    %v709 = vpop.f32.mrf.mxu0
    %v710 = vpop.f32.mrf.mxu0
    %v711 = vpop.f32.mrf.mxu0
    %712 = vdwg.mxu0
    %v714 = vsel %vm592, %v502, 0
    %v717 = vsel %vm592, %v504, 0
    %v720 = vsel %vm592, %v532, 0
    %v723 = vsel %vm592, %v534, 0
    %725 = vmatprep.subr.bf16.mxu0 0
    %726 = vmatpush1.bf16.xpose.msra.mxu0 0
    %727 = vmatprep.subr.bf16.mxu0 0
    %728 = vmatpush1.bf16.xpose.msra.mxu0 0
    %729 = vmatprep.subr.bf16.mxu0 0
    %730 = vmatpush1.bf16.xpose.msra.mxu0 0
    %731 = vmatprep.subr.bf16.mxu0 0
    %732 = vmatpush1.bf16.xpose.msra.mxu0 0
    %733 = vmatprep.subr.bf16.mxu0 0
    %734 = vmatpush1.bf16.xpose.msra.mxu0 0
    %735 = vmatprep.subr.bf16.mxu0 0
    %736 = vmatpush1.bf16.xpose.msra.mxu0 0
    %737 = vmatprep.subr.bf16.mxu0 0
    %738 = vmatpush1.bf16.xpose.msra.mxu0 %v723
    %739 = vmatprep.subr.bf16.mxu0 0
    %740 = vmatpush1.bf16.xpose.msra.mxu0 %v720
    %741 = vmatprep.subr.bf16.mxu0 0
    %742 = vmatpush2.bf16.xpose.msra.mxu0 0
    %743 = vmatprep.subr.bf16.mxu0 0
    %744 = vmatpush2.bf16.xpose.msra.mxu0 0
    %745 = vmatprep.subr.bf16.mxu0 0
    %746 = vmatpush2.bf16.xpose.msra.mxu0 0
    %747 = vmatprep.subr.bf16.mxu0 0
    %748 = vmatpush2.bf16.xpose.msra.mxu0 0
    %749 = vmatprep.subr.bf16.mxu0 0
    %750 = vmatpush2.bf16.xpose.msra.mxu0 0
    %751 = vmatprep.subr.bf16.mxu0 0
    %752 = vmatpush2.bf16.xpose.msra.mxu0 0
    %753 = vmatprep.subr.bf16.mxu0 0
    %754 = vmatpush2.bf16.xpose.msra.mxu0 0
    %755 = vmatprep.subr.bf16.mxu0 0
    %756 = vmatpush2.bf16.xpose.msra.mxu0 0
    %757 = vmatprep.mubr.bf16.mxu0 0
    %758 = vmatmul.mubr.bf16.gmra.mxu0 %v714
    %v759 = vpop.f32.mrf.mxu0
    %v760 = vadd.f32 %v216, %v759
    %v761 = vpop.f32.mrf.mxu0
    %v762 = vpop.f32.mrf.mxu0
    %v763 = vadd.f32 %v217, %v762
    %v764 = vpop.f32.mrf.mxu0
    %765 = vmatprep.mubr.bf16.mxu0 0
    %766 = vmatmul.mubr.bf16.gmra.mxu0 %v717
    %v767 = vpop.f32.mrf.mxu0
    %v768 = vadd.f32 %v218, %v767
    %v769 = vpop.f32.mrf.mxu0
    %v770 = vpop.f32.mrf.mxu0
    %v771 = vpop.f32.mrf.mxu0
    %772 = vdwg.mxu0
    %v774 = vsel %vm592, %v506, 0
    %v777 = vsel %vm592, %v508, 0
    %v780 = vsel %vm592, %v536, 0
    %v783 = vsel %vm592, %v538, 0
    %785 = vmatprep.subr.bf16.mxu0 0
    %786 = vmatpush1.bf16.xpose.msra.mxu0 0
    %787 = vmatprep.subr.bf16.mxu0 0
    %788 = vmatpush1.bf16.xpose.msra.mxu0 0
    %789 = vmatprep.subr.bf16.mxu0 0
    %790 = vmatpush1.bf16.xpose.msra.mxu0 0
    %791 = vmatprep.subr.bf16.mxu0 0
    %792 = vmatpush1.bf16.xpose.msra.mxu0 0
    %793 = vmatprep.subr.bf16.mxu0 0
    %794 = vmatpush1.bf16.xpose.msra.mxu0 0
    %795 = vmatprep.subr.bf16.mxu0 0
    %796 = vmatpush1.bf16.xpose.msra.mxu0 0
    %797 = vmatprep.subr.bf16.mxu0 0
    %798 = vmatpush1.bf16.xpose.msra.mxu0 %v783
    %799 = vmatprep.subr.bf16.mxu0 0
    %800 = vmatpush1.bf16.xpose.msra.mxu0 %v780
    %801 = vmatprep.subr.bf16.mxu0 0
    %802 = vmatpush2.bf16.xpose.msra.mxu0 0
    %803 = vmatprep.subr.bf16.mxu0 0
    %804 = vmatpush2.bf16.xpose.msra.mxu0 0
    %805 = vmatprep.subr.bf16.mxu0 0
    %806 = vmatpush2.bf16.xpose.msra.mxu0 0
    %807 = vmatprep.subr.bf16.mxu0 0
    %808 = vmatpush2.bf16.xpose.msra.mxu0 0
    %809 = vmatprep.subr.bf16.mxu0 0
    %810 = vmatpush2.bf16.xpose.msra.mxu0 0
    %811 = vmatprep.subr.bf16.mxu0 0
    %812 = vmatpush2.bf16.xpose.msra.mxu0 0
    %813 = vmatprep.subr.bf16.mxu0 0
    %814 = vmatpush2.bf16.xpose.msra.mxu0 0
    %815 = vmatprep.subr.bf16.mxu0 0
    %816 = vmatpush2.bf16.xpose.msra.mxu0 0
    %817 = vmatprep.mubr.bf16.mxu0 0
    %818 = vmatmul.mubr.bf16.gmra.mxu0 %v774
    %v819 = vpop.f32.mrf.mxu0
    %v820 = vadd.f32 %v216, %v819
    %v821 = vpop.f32.mrf.mxu0
    %v822 = vpop.f32.mrf.mxu0
    %v823 = vadd.f32 %v217, %v822
    %v824 = vpop.f32.mrf.mxu0
    %825 = vmatprep.mubr.bf16.mxu0 0
    %826 = vmatmul.mubr.bf16.gmra.mxu0 %v777
    %v827 = vpop.f32.mrf.mxu0
    %v828 = vadd.f32 %v218, %v827
    %v829 = vpop.f32.mrf.mxu0
    %v830 = vpop.f32.mrf.mxu0
    %v831 = vpop.f32.mrf.mxu0
    %832 = vdwg.mxu0
    %v834 = vsel %vm592, %v510, 0
    %v837 = vsel %vm592, %v512, 0
    %v840 = vsel %vm592, %v540, 0
    %v843 = vsel %vm592, %v542, 0
    %845 = vmatprep.subr.bf16.mxu0 0
    %846 = vmatpush1.bf16.xpose.msra.mxu0 0
    %847 = vmatprep.subr.bf16.mxu0 0
    %848 = vmatpush1.bf16.xpose.msra.mxu0 0
    %849 = vmatprep.subr.bf16.mxu0 0
    %850 = vmatpush1.bf16.xpose.msra.mxu0 0
    %851 = vmatprep.subr.bf16.mxu0 0
    %852 = vmatpush1.bf16.xpose.msra.mxu0 0
    %853 = vmatprep.subr.bf16.mxu0 0
    %854 = vmatpush1.bf16.xpose.msra.mxu0 0
    %855 = vmatprep.subr.bf16.mxu0 0
    %856 = vmatpush1.bf16.xpose.msra.mxu0 0
    %857 = vmatprep.subr.bf16.mxu0 0
    %858 = vmatpush1.bf16.xpose.msra.mxu0 %v843
    %859 = vmatprep.subr.bf16.mxu0 0
    %860 = vmatpush1.bf16.xpose.msra.mxu0 %v840
    %861 = vmatprep.subr.bf16.mxu0 0
    %862 = vmatpush2.bf16.xpose.msra.mxu0 0
    %863 = vmatprep.subr.bf16.mxu0 0
    %864 = vmatpush2.bf16.xpose.msra.mxu0 0
    %865 = vmatprep.subr.bf16.mxu0 0
    %866 = vmatpush2.bf16.xpose.msra.mxu0 0
    %867 = vmatprep.subr.bf16.mxu0 0
    %868 = vmatpush2.bf16.xpose.msra.mxu0 0
    %869 = vmatprep.subr.bf16.mxu0 0
    %870 = vmatpush2.bf16.xpose.msra.mxu0 0
    %871 = vmatprep.subr.bf16.mxu0 0
    %872 = vmatpush2.bf16.xpose.msra.mxu0 0
    %873 = vmatprep.subr.bf16.mxu0 0
    %874 = vmatpush2.bf16.xpose.msra.mxu0 0
    %875 = vmatprep.subr.bf16.mxu0 0
    %876 = vmatpush2.bf16.xpose.msra.mxu0 0
    %877 = vmatprep.mubr.bf16.mxu0 0
    %878 = vmatmul.mubr.bf16.gmra.mxu0 %v834
    %v879 = vpop.f32.mrf.mxu0
    %v880 = vadd.f32 %v216, %v879
    %v881 = vpop.f32.mrf.mxu0
    %v882 = vpop.f32.mrf.mxu0
    %v883 = vadd.f32 %v217, %v882
    %v884 = vpop.f32.mrf.mxu0
    %885 = vmatprep.mubr.bf16.mxu0 0
    %886 = vmatmul.mubr.bf16.gmra.mxu0 %v837
    %v887 = vpop.f32.mrf.mxu0
    %v888 = vadd.f32 %v218, %v887
    %v889 = vpop.f32.mrf.mxu0
    %v890 = vpop.f32.mrf.mxu0
    %v891 = vpop.f32.mrf.mxu0
    %892 = vdwg.mxu0
    %v894 = vsel %vm592, %v514, 0
    %v897 = vsel %vm592, %v516, 0
    %v900 = vsel %vm592, %v544, 0
    %v903 = vsel %vm592, %v546, 0
    %905 = vmatprep.subr.bf16.mxu0 0
    %906 = vmatpush1.bf16.xpose.msra.mxu0 0
    %907 = vmatprep.subr.bf16.mxu0 0
    %908 = vmatpush1.bf16.xpose.msra.mxu0 0
    %909 = vmatprep.subr.bf16.mxu0 0
    %910 = vmatpush1.bf16.xpose.msra.mxu0 0
    %911 = vmatprep.subr.bf16.mxu0 0
    %912 = vmatpush1.bf16.xpose.msra.mxu0 0
    %913 = vmatprep.subr.bf16.mxu0 0
    %914 = vmatpush1.bf16.xpose.msra.mxu0 0
    %915 = vmatprep.subr.bf16.mxu0 0
    %916 = vmatpush1.bf16.xpose.msra.mxu0 0
    %917 = vmatprep.subr.bf16.mxu0 0
    %918 = vmatpush1.bf16.xpose.msra.mxu0 %v903
    %919 = vmatprep.subr.bf16.mxu0 0
    %920 = vmatpush1.bf16.xpose.msra.mxu0 %v900
    %921 = vmatprep.subr.bf16.mxu0 0
    %922 = vmatpush2.bf16.xpose.msra.mxu0 0
    %923 = vmatprep.subr.bf16.mxu0 0
    %924 = vmatpush2.bf16.xpose.msra.mxu0 0
    %925 = vmatprep.subr.bf16.mxu0 0
    %926 = vmatpush2.bf16.xpose.msra.mxu0 0
    %927 = vmatprep.subr.bf16.mxu0 0
    %928 = vmatpush2.bf16.xpose.msra.mxu0 0
    %929 = vmatprep.subr.bf16.mxu0 0
    %930 = vmatpush2.bf16.xpose.msra.mxu0 0
    %931 = vmatprep.subr.bf16.mxu0 0
    %932 = vmatpush2.bf16.xpose.msra.mxu0 0
    %933 = vmatprep.subr.bf16.mxu0 0
    %934 = vmatpush2.bf16.xpose.msra.mxu0 0
    %935 = vmatprep.subr.bf16.mxu0 0
    %936 = vmatpush2.bf16.xpose.msra.mxu0 0
    %937 = vmatprep.mubr.bf16.mxu0 0
    %938 = vmatmul.mubr.bf16.gmra.mxu0 %v894
    %v939 = vpop.f32.mrf.mxu0
    %v940 = vadd.f32 %v216, %v939
    %v941 = vpop.f32.mrf.mxu0
    %v942 = vpop.f32.mrf.mxu0
    %v943 = vadd.f32 %v217, %v942
    %v944 = vpop.f32.mrf.mxu0
    %945 = vmatprep.mubr.bf16.mxu0 0
    %946 = vmatmul.mubr.bf16.gmra.mxu0 %v897
    %v947 = vpop.f32.mrf.mxu0
    %v948 = vadd.f32 %v218, %v947
    %v949 = vpop.f32.mrf.mxu0
    %v950 = vpop.f32.mrf.mxu0
    %v951 = vpop.f32.mrf.mxu0
    %952 = vdwg.mxu0
    %v954 = vsel %vm592, %v518, 0
    %v957 = vsel %vm592, %v520, 0
    %v960 = vsel %vm592, %v548, 0
    %v963 = vsel %vm592, %v550, 0
    %965 = vmatprep.subr.bf16.mxu0 0
    %966 = vmatpush1.bf16.xpose.msra.mxu0 0
    %967 = vmatprep.subr.bf16.mxu0 0
    %968 = vmatpush1.bf16.xpose.msra.mxu0 0
    %969 = vmatprep.subr.bf16.mxu0 0
    %970 = vmatpush1.bf16.xpose.msra.mxu0 0
    %971 = vmatprep.subr.bf16.mxu0 0
    %972 = vmatpush1.bf16.xpose.msra.mxu0 0
    %973 = vmatprep.subr.bf16.mxu0 0
    %974 = vmatpush1.bf16.xpose.msra.mxu0 0
    %975 = vmatprep.subr.bf16.mxu0 0
    %976 = vmatpush1.bf16.xpose.msra.mxu0 0
    %977 = vmatprep.subr.bf16.mxu0 0
    %978 = vmatpush1.bf16.xpose.msra.mxu0 %v963
    %979 = vmatprep.subr.bf16.mxu0 0
    %980 = vmatpush1.bf16.xpose.msra.mxu0 %v960
    %981 = vmatprep.subr.bf16.mxu0 0
    %982 = vmatpush2.bf16.xpose.msra.mxu0 0
    %983 = vmatprep.subr.bf16.mxu0 0
    %984 = vmatpush2.bf16.xpose.msra.mxu0 0
    %985 = vmatprep.subr.bf16.mxu0 0
    %986 = vmatpush2.bf16.xpose.msra.mxu0 0
    %987 = vmatprep.subr.bf16.mxu0 0
    %988 = vmatpush2.bf16.xpose.msra.mxu0 0
    %989 = vmatprep.subr.bf16.mxu0 0
    %990 = vmatpush2.bf16.xpose.msra.mxu0 0
    %991 = vmatprep.subr.bf16.mxu0 0
    %992 = vmatpush2.bf16.xpose.msra.mxu0 0
    %993 = vmatprep.subr.bf16.mxu0 0
    %994 = vmatpush2.bf16.xpose.msra.mxu0 0
    %995 = vmatprep.subr.bf16.mxu0 0
    %996 = vmatpush2.bf16.xpose.msra.mxu0 0
    %997 = vmatprep.mubr.bf16.mxu0 0
    %998 = vmatmul.mubr.bf16.gmra.mxu0 %v954
    %v999 = vpop.f32.mrf.mxu0
    %v1000 = vadd.f32 %v216, %v999
    %v1001 = vpop.f32.mrf.mxu0
    %v1002 = vpop.f32.mrf.mxu0
    %v1003 = vadd.f32 %v217, %v1002
    %v1004 = vpop.f32.mrf.mxu0
    %1005 = vmatprep.mubr.bf16.mxu0 0
    %1006 = vmatmul.mubr.bf16.gmra.mxu0 %v957
    %v1007 = vpop.f32.mrf.mxu0
    %v1008 = vadd.f32 %v218, %v1007
    %v1009 = vpop.f32.mrf.mxu0
    %v1010 = vpop.f32.mrf.mxu0
    %v1011 = vpop.f32.mrf.mxu0
    %1012 = vdwg.mxu0
    %v1014 = vsel %vm592, %v522, 0
    %v1017 = vsel %vm592, %v524, 0
    %v1020 = vsel %vm592, %v552, 0
    %v1023 = vsel %vm592, %v554, 0
    %1025 = vmatprep.subr.bf16.mxu0 0
    %1026 = vmatpush1.bf16.xpose.msra.mxu0 0
    %1027 = vmatprep.subr.bf16.mxu0 0
    %1028 = vmatpush1.bf16.xpose.msra.mxu0 0
    %1029 = vmatprep.subr.bf16.mxu0 0
    %1030 = vmatpush1.bf16.xpose.msra.mxu0 0
    %1031 = vmatprep.subr.bf16.mxu0 0
    %1032 = vmatpush1.bf16.xpose.msra.mxu0 0
    %1033 = vmatprep.subr.bf16.mxu0 0
    %1034 = vmatpush1.bf16.xpose.msra.mxu0 0
    %1035 = vmatprep.subr.bf16.mxu0 0
    %1036 = vmatpush1.bf16.xpose.msra.mxu0 0
    %1037 = vmatprep.subr.bf16.mxu0 0
    %1038 = vmatpush1.bf16.xpose.msra.mxu0 %v1023
    %1039 = vmatprep.subr.bf16.mxu0 0
    %1040 = vmatpush1.bf16.xpose.msra.mxu0 %v1020
    %1041 = vmatprep.subr.bf16.mxu0 0
    %1042 = vmatpush2.bf16.xpose.msra.mxu0 0
    %1043 = vmatprep.subr.bf16.mxu0 0
    %1044 = vmatpush2.bf16.xpose.msra.mxu0 0
    %1045 = vmatprep.subr.bf16.mxu0 0
    %1046 = vmatpush2.bf16.xpose.msra.mxu0 0
    %1047 = vmatprep.subr.bf16.mxu0 0
    %1048 = vmatpush2.bf16.xpose.msra.mxu0 0
    %1049 = vmatprep.subr.bf16.mxu0 0
    %1050 = vmatpush2.bf16.xpose.msra.mxu0 0
    %1051 = vmatprep.subr.bf16.mxu0 0
    %1052 = vmatpush2.bf16.xpose.msra.mxu0 0
    %1053 = vmatprep.subr.bf16.mxu0 0
    %1054 = vmatpush2.bf16.xpose.msra.mxu0 0
    %1055 = vmatprep.subr.bf16.mxu0 0
    %1056 = vmatpush2.bf16.xpose.msra.mxu0 0
    %1057 = vmatprep.mubr.bf16.mxu0 0
    %1058 = vmatmul.mubr.bf16.gmra.mxu0 %v1014
    %v1059 = vpop.f32.mrf.mxu0
    %v1060 = vadd.f32 %v216, %v1059
    %v1061 = vpop.f32.mrf.mxu0
    %v1062 = vpop.f32.mrf.mxu0
    %v1063 = vadd.f32 %v217, %v1062
    %v1064 = vpop.f32.mrf.mxu0
    %1065 = vmatprep.mubr.bf16.mxu0 0
    %1066 = vmatmul.mubr.bf16.gmra.mxu0 %v1017
    %v1067 = vpop.f32.mrf.mxu0
    %v1068 = vadd.f32 %v218, %v1067
    %v1069 = vpop.f32.mrf.mxu0
    %v1070 = vpop.f32.mrf.mxu0
    %v1071 = vpop.f32.mrf.mxu0
    %1072 = vdwg.mxu0
    %vm1073 = vcmask 162816
    %v1074 = vsel %vm1073, %v640, -inf
    %1075 = vmax.xlane.f32.xlu0 %v1074
    %v1076 = vpop.xlane.xlu0 %1075
    %v1077 = vsel %vm1073, %v643, -inf
    %1078 = vmax.xlane.f32.xlu0 %v1077
    %v1079 = vpop.xlane.xlu0 %1078
    %vm1080 = vcmask 158720
    %v1081 = vsel %vm1080, %v648, -inf
    %1082 = vmax.xlane.f32.xlu0 %v1081
    %v1083 = vpop.xlane.xlu0 %1082
    %v1084 = vsel %vm1073, %v700, -inf
    %1085 = vmax.xlane.f32.xlu0 %v1084
    %v1086 = vpop.xlane.xlu0 %1085
    %v1087 = vsel %vm1073, %v703, -inf
    %1088 = vmax.xlane.f32.xlu0 %v1087
    %v1089 = vpop.xlane.xlu0 %1088
    %v1090 = vsel %vm1080, %v708, -inf
    %1091 = vmax.xlane.f32.xlu0 %v1090
    %v1092 = vpop.xlane.xlu0 %1091
    %v1093 = vsel %vm1073, %v760, -inf
    %1094 = vmax.xlane.f32.xlu0 %v1093
    %v1095 = vpop.xlane.xlu0 %1094
    %v1096 = vsel %vm1073, %v763, -inf
    %1097 = vmax.xlane.f32.xlu0 %v1096
    %v1098 = vpop.xlane.xlu0 %1097
    %v1099 = vsel %vm1080, %v768, -inf
    %1100 = vmax.xlane.f32.xlu0 %v1099
    %v1101 = vpop.xlane.xlu0 %1100
    %v1102 = vsel %vm1073, %v820, -inf
    %1103 = vmax.xlane.f32.xlu0 %v1102
    %v1104 = vpop.xlane.xlu0 %1103
    %v1105 = vsel %vm1073, %v823, -inf
    %1106 = vmax.xlane.f32.xlu0 %v1105
    %v1107 = vpop.xlane.xlu0 %1106
    %v1108 = vsel %vm1080, %v828, -inf
    %1109 = vmax.xlane.f32.xlu0 %v1108
    %v1110 = vpop.xlane.xlu0 %1109
    %v1111 = vsel %vm1073, %v880, -inf
    %1112 = vmax.xlane.f32.xlu0 %v1111
    %v1113 = vpop.xlane.xlu0 %1112
    %v1114 = vsel %vm1073, %v883, -inf
    %1115 = vmax.xlane.f32.xlu0 %v1114
    %v1116 = vpop.xlane.xlu0 %1115
    %v1117 = vsel %vm1080, %v888, -inf
    %1118 = vmax.xlane.f32.xlu0 %v1117
    %v1119 = vpop.xlane.xlu0 %1118
    %v1120 = vsel %vm1073, %v940, -inf
    %1121 = vmax.xlane.f32.xlu0 %v1120
    %v1122 = vpop.xlane.xlu0 %1121
    %v1123 = vsel %vm1073, %v943, -inf
    %1124 = vmax.xlane.f32.xlu0 %v1123
    %v1125 = vpop.xlane.xlu0 %1124
    %v1126 = vsel %vm1080, %v948, -inf
    %1127 = vmax.xlane.f32.xlu0 %v1126
    %v1128 = vpop.xlane.xlu0 %1127
    %v1129 = vsel %vm1073, %v1000, -inf
    %1130 = vmax.xlane.f32.xlu0 %v1129
    %v1131 = vpop.xlane.xlu0 %1130
    %v1132 = vsel %vm1073, %v1003, -inf
    %1133 = vmax.xlane.f32.xlu0 %v1132
    %v1134 = vpop.xlane.xlu0 %1133
    %v1135 = vsel %vm1080, %v1008, -inf
    %1136 = vmax.xlane.f32.xlu0 %v1135
    %v1137 = vpop.xlane.xlu0 %1136
    %v1138 = vsel %vm1073, %v1060, -inf
    %1139 = vmax.xlane.f32.xlu0 %v1138
    %v1140 = vpop.xlane.xlu0 %1139
    %v1141 = vsel %vm1073, %v1063, -inf
    %1142 = vmax.xlane.f32.xlu0 %v1141
    %v1143 = vpop.xlane.xlu0 %1142
    %v1144 = vsel %vm1080, %v1068, -inf
    %1145 = vmax.xlane.f32.xlu0 %v1144
    %v1146 = vpop.xlane.xlu0 %1145
    %v1147 = vsub.f32 %v640, %v1076
    %v1148 = vsub.f32 %v643, %v1079
    %v1149 = vsub.f32 %v648, %v1083
    %v1150 = vsub.f32 %v700, %v1086
    %v1151 = vsub.f32 %v703, %v1089
    %v1152 = vsub.f32 %v708, %v1092
    %v1153 = vsub.f32 %v760, %v1095
    %v1154 = vsub.f32 %v763, %v1098
    %v1155 = vsub.f32 %v768, %v1101
    %v1156 = vsub.f32 %v820, %v1104
    %v1157 = vsub.f32 %v823, %v1107
    %v1158 = vsub.f32 %v828, %v1110
    %v1159 = vsub.f32 %v880, %v1113
    %v1160 = vsub.f32 %v883, %v1116
    %v1161 = vsub.f32 %v888, %v1119
    %v1162 = vsub.f32 %v940, %v1122
    %v1163 = vsub.f32 %v943, %v1125
    %v1164 = vsub.f32 %v948, %v1128
    %v1165 = vsub.f32 %v1000, %v1131
    %v1166 = vsub.f32 %v1003, %v1134
    %v1167 = vsub.f32 %v1008, %v1137
    %v1168 = vsub.f32 %v1060, %v1140
    %v1169 = vsub.f32 %v1063, %v1143
    %v1170 = vsub.f32 %v1068, %v1146
    %v1171 = vmul.f32 %v1147, 1.442695
    %v1172 = vpow.pop %v1171
    %v1173 = vmul.f32 %v1148, 1.442695
    %v1174 = vpow.pop %v1173
    %v1175 = vmul.f32 %v1149, 1.442695
    %v1176 = vpow.pop %v1175
    %v1177 = vmul.f32 %v1150, 1.442695
    %v1178 = vpow.pop %v1177
    %v1179 = vmul.f32 %v1151, 1.442695
    %v1180 = vpow.pop %v1179
    %v1181 = vmul.f32 %v1152, 1.442695
    %v1182 = vpow.pop %v1181
    %v1183 = vmul.f32 %v1153, 1.442695
    %v1184 = vpow.pop %v1183
    %v1185 = vmul.f32 %v1154, 1.442695
    %v1186 = vpow.pop %v1185
    %v1187 = vmul.f32 %v1155, 1.442695
    %v1188 = vpow.pop %v1187
    %v1189 = vmul.f32 %v1156, 1.442695
    %v1190 = vpow.pop %v1189
    %v1191 = vmul.f32 %v1157, 1.442695
    %v1192 = vpow.pop %v1191
    %v1193 = vmul.f32 %v1158, 1.442695
    %v1194 = vpow.pop %v1193
    %v1195 = vmul.f32 %v1159, 1.442695
    %v1196 = vpow.pop %v1195
    %v1197 = vmul.f32 %v1160, 1.442695
    %v1198 = vpow.pop %v1197
    %v1199 = vmul.f32 %v1161, 1.442695
    %v1200 = vpow.pop %v1199
    %v1201 = vmul.f32 %v1162, 1.442695
    %v1202 = vpow.pop %v1201
    %v1203 = vmul.f32 %v1163, 1.442695
    %v1204 = vpow.pop %v1203
    %v1205 = vmul.f32 %v1164, 1.442695
    %v1206 = vpow.pop %v1205
    %v1207 = vmul.f32 %v1165, 1.442695
    %v1208 = vpow.pop %v1207
    %v1209 = vmul.f32 %v1166, 1.442695
    %v1210 = vpow.pop %v1209
    %v1211 = vmul.f32 %v1167, 1.442695
    %v1212 = vpow.pop %v1211
    %v1213 = vmul.f32 %v1168, 1.442695
    %v1214 = vpow.pop %v1213
    %v1215 = vmul.f32 %v1169, 1.442695
    %v1216 = vpow.pop %v1215
    %v1217 = vmul.f32 %v1170, 1.442695
    %v1218 = vpow.pop %v1217
    %v1219 = vsel %vm1073, %v1172, 0.0
    %1220 = vadd.xlane.f32.xlu0 %v1219
    %v1221 = vpop.xlane.xlu0 %1220
    %v1222 = vsel %vm1073, %v1174, 0.0
    %1223 = vadd.xlane.f32.xlu0 %v1222
    %v1224 = vpop.xlane.xlu0 %1223
    %v1225 = vsel %vm1080, %v1176, 0.0
    %1226 = vadd.xlane.f32.xlu0 %v1225
    %v1227 = vpop.xlane.xlu0 %1226
    %v1228 = vsel %vm1073, %v1178, 0.0
    %1229 = vadd.xlane.f32.xlu0 %v1228
    %v1230 = vpop.xlane.xlu0 %1229
    %v1231 = vsel %vm1073, %v1180, 0.0
    %1232 = vadd.xlane.f32.xlu0 %v1231
    %v1233 = vpop.xlane.xlu0 %1232
    %v1234 = vsel %vm1080, %v1182, 0.0
    %1235 = vadd.xlane.f32.xlu0 %v1234
    %v1236 = vpop.xlane.xlu0 %1235
    %v1237 = vsel %vm1073, %v1184, 0.0
    %1238 = vadd.xlane.f32.xlu0 %v1237
    %v1239 = vpop.xlane.xlu0 %1238
    %v1240 = vsel %vm1073, %v1186, 0.0
    %1241 = vadd.xlane.f32.xlu0 %v1240
    %v1242 = vpop.xlane.xlu0 %1241
    %v1243 = vsel %vm1080, %v1188, 0.0
    %1244 = vadd.xlane.f32.xlu0 %v1243
    %v1245 = vpop.xlane.xlu0 %1244
    %v1246 = vsel %vm1073, %v1190, 0.0
    %1247 = vadd.xlane.f32.xlu0 %v1246
    %v1248 = vpop.xlane.xlu0 %1247
    %v1249 = vsel %vm1073, %v1192, 0.0
    %1250 = vadd.xlane.f32.xlu0 %v1249
    %v1251 = vpop.xlane.xlu0 %1250
    %v1252 = vsel %vm1080, %v1194, 0.0
    %1253 = vadd.xlane.f32.xlu0 %v1252
    %v1254 = vpop.xlane.xlu0 %1253
    %v1255 = vsel %vm1073, %v1196, 0.0
    %1256 = vadd.xlane.f32.xlu0 %v1255
    %v1257 = vpop.xlane.xlu0 %1256
    %v1258 = vsel %vm1073, %v1198, 0.0
    %1259 = vadd.xlane.f32.xlu0 %v1258
    %v1260 = vpop.xlane.xlu0 %1259
    %v1261 = vsel %vm1080, %v1200, 0.0
    %1262 = vadd.xlane.f32.xlu0 %v1261
    %v1263 = vpop.xlane.xlu0 %1262
    %v1264 = vsel %vm1073, %v1202, 0.0
    %1265 = vadd.xlane.f32.xlu0 %v1264
    %v1266 = vpop.xlane.xlu0 %1265
    %v1267 = vsel %vm1073, %v1204, 0.0
    %1268 = vadd.xlane.f32.xlu0 %v1267
    %v1269 = vpop.xlane.xlu0 %1268
    %v1270 = vsel %vm1080, %v1206, 0.0
    %1271 = vadd.xlane.f32.xlu0 %v1270
    %v1272 = vpop.xlane.xlu0 %1271
    %v1273 = vsel %vm1073, %v1208, 0.0
    %1274 = vadd.xlane.f32.xlu0 %v1273
    %v1275 = vpop.xlane.xlu0 %1274
    %v1276 = vsel %vm1073, %v1210, 0.0
    %1277 = vadd.xlane.f32.xlu0 %v1276
    %v1278 = vpop.xlane.xlu0 %1277
    %v1279 = vsel %vm1080, %v1212, 0.0
    %1280 = vadd.xlane.f32.xlu0 %v1279
    %v1281 = vpop.xlane.xlu0 %1280
    %v1282 = vsel %vm1073, %v1214, 0.0
    %1283 = vadd.xlane.f32.xlu0 %v1282
    %v1284 = vpop.xlane.xlu0 %1283
    %v1285 = vsel %vm1073, %v1216, 0.0
    %1286 = vadd.xlane.f32.xlu0 %v1285
    %v1287 = vpop.xlane.xlu0 %1286
    %v1288 = vsel %vm1080, %v1218, 0.0
    %1289 = vadd.xlane.f32.xlu0 %v1288
    %v1290 = vpop.xlane.xlu0 %1289
    %v1291 = vrcp.pop %v1221
    %v1292 = vrcp.pop %v1224
    %v1293 = vrcp.pop %v1227
    %v1294 = vrcp.pop %v1230
    %v1295 = vrcp.pop %v1233
    %v1296 = vrcp.pop %v1236
    %v1297 = vrcp.pop %v1239
    %v1298 = vrcp.pop %v1242
    %v1299 = vrcp.pop %v1245
    %v1300 = vrcp.pop %v1248
    %v1301 = vrcp.pop %v1251
    %v1302 = vrcp.pop %v1254
    %v1303 = vrcp.pop %v1257
    %v1304 = vrcp.pop %v1260
    %v1305 = vrcp.pop %v1263
    %v1306 = vrcp.pop %v1266
    %v1307 = vrcp.pop %v1269
    %v1308 = vrcp.pop %v1272
    %v1309 = vrcp.pop %v1275
    %v1310 = vrcp.pop %v1278
    %v1311 = vrcp.pop %v1281
    %v1312 = vrcp.pop %v1284
    %v1313 = vrcp.pop %v1287
    %v1314 = vrcp.pop %v1290
    %v1315 = vmul.f32 %v1172, %v1291
    %v1316 = vmul.f32 %v1174, %v1292
    %v1317 = vmul.f32 %v1176, %v1293
    %v1318 = vmul.f32 %v1178, %v1294
    %v1319 = vmul.f32 %v1180, %v1295
    %v1320 = vmul.f32 %v1182, %v1296
    %v1321 = vmul.f32 %v1184, %v1297
    %v1322 = vmul.f32 %v1186, %v1298
    %v1323 = vmul.f32 %v1188, %v1299
    %v1324 = vmul.f32 %v1190, %v1300
    %v1325 = vmul.f32 %v1192, %v1301
    %v1326 = vmul.f32 %v1194, %v1302
    %v1327 = vmul.f32 %v1196, %v1303
    %v1328 = vmul.f32 %v1198, %v1304
    %v1329 = vmul.f32 %v1200, %v1305
    %v1330 = vmul.f32 %v1202, %v1306
    %v1331 = vmul.f32 %v1204, %v1307
    %v1332 = vmul.f32 %v1206, %v1308
    %v1333 = vmul.f32 %v1208, %v1309
    %v1334 = vmul.f32 %v1210, %v1310
    %v1335 = vmul.f32 %v1212, %v1311
    %v1336 = vmul.f32 %v1214, %v1312
    %v1337 = vmul.f32 %v1216, %v1313
    %v1338 = vmul.f32 %v1218, %v1314
    %v1339 = vpack.c.bf16 %v1316, %v1315
    %v1340 = vpack.c.bf16 %v1317, %v1317
    %v1341 = vpack.c.bf16 %v1319, %v1318
    %v1342 = vpack.c.bf16 %v1320, %v1320
    %v1343 = vpack.c.bf16 %v1322, %v1321
    %v1344 = vpack.c.bf16 %v1323, %v1323
    %v1345 = vpack.c.bf16 %v1325, %v1324
    %v1346 = vpack.c.bf16 %v1326, %v1326
    %v1347 = vpack.c.bf16 %v1328, %v1327
    %v1348 = vpack.c.bf16 %v1329, %v1329
    %v1349 = vpack.c.bf16 %v1331, %v1330
    %v1350 = vpack.c.bf16 %v1332, %v1332
    %v1351 = vpack.c.bf16 %v1334, %v1333
    %v1352 = vpack.c.bf16 %v1335, %v1335
    %v1353 = vpack.c.bf16 %v1337, %v1336
    %v1354 = vpack.c.bf16 %v1338, %v1338
    %v1356 = vsel %vm1073, %v1339, 0
    %v1359 = vsel %vm1073, %v1340, 0
    %vm1361 = vcmask 1041408
    %v1363 = vsel %vm1361, %v494, 0
    %1365 = vmatprep.subr.bf16.mxu0 0
    %1366 = vmatpush1.bf16.msra.mxu0 0
    %1367 = vmatprep.subr.bf16.mxu0 0
    %1368 = vmatpush1.bf16.msra.mxu0 0
    %1369 = vmatprep.subr.bf16.mxu0 0
    %1370 = vmatpush1.bf16.msra.mxu0 0
    %1371 = vmatprep.subr.bf16.mxu0 0
    %1372 = vmatpush1.bf16.msra.mxu0 0
    %1373 = vmatprep.subr.bf16.mxu0 0
    %1374 = vmatpush1.bf16.msra.mxu0 0
    %1375 = vmatprep.subr.bf16.mxu0 0
    %1376 = vmatpush1.bf16.msra.mxu0 0
    %1377 = vmatprep.subr.bf16.mxu0 0
    %1378 = vmatpush1.bf16.msra.mxu0 %v1363
    %1379 = vmatprep.subr.bf16.mxu0 0
    %1380 = vmatpush1.bf16.msra.mxu0 %v493
    %1381 = vmatprep.subr.bf16.mxu0 0
    %1382 = vmatpush2.bf16.msra.mxu0 0
    %1383 = vmatprep.subr.bf16.mxu0 0
    %1384 = vmatpush2.bf16.msra.mxu0 0
    %1385 = vmatprep.subr.bf16.mxu0 0
    %1386 = vmatpush2.bf16.msra.mxu0 0
    %1387 = vmatprep.subr.bf16.mxu0 0
    %1388 = vmatpush2.bf16.msra.mxu0 0
    %1389 = vmatprep.subr.bf16.mxu0 0
    %1390 = vmatpush2.bf16.msra.mxu0 0
    %1391 = vmatprep.subr.bf16.mxu0 0
    %1392 = vmatpush2.bf16.msra.mxu0 0
    %1393 = vmatprep.subr.bf16.mxu0 0
    %1394 = vmatpush2.bf16.msra.mxu0 0
    %1395 = vmatprep.subr.bf16.mxu0 0
    %1396 = vmatpush2.bf16.msra.mxu0 0
    %1397 = vmatprep.mubr.bf16.mxu0 0
    %1398 = vmatmul.mubr.bf16.gmra.mxu0 %v1356
    %v1399 = vpop.f32.mrf.mxu0
    %v1400 = vadd.f32 0.0, %v1399
    %v1401 = vpop.f32.mrf.mxu0
    %v1402 = vpop.f32.mrf.mxu0
    %v1403 = vadd.f32 0.0, %v1402
    %v1404 = vpop.f32.mrf.mxu0
    %1405 = vmatprep.mubr.bf16.mxu0 0
    %1406 = vmatmul.mubr.bf16.gmra.mxu0 %v1359
    %v1407 = vpop.f32.mrf.mxu0
    %v1408 = vadd.f32 0.0, %v1407
    %v1409 = vpop.f32.mrf.mxu0
    %v1410 = vpop.f32.mrf.mxu0
    %v1411 = vpop.f32.mrf.mxu0
    %1412 = vdwg.mxu0
    %v1414 = vsel %vm1073, %v1341, 0
    %v1417 = vsel %vm1073, %v1342, 0
    %v1420 = vsel %vm1361, %v560, 0
    %1422 = vmatprep.subr.bf16.mxu0 0
    %1423 = vmatpush1.bf16.msra.mxu0 0
    %1424 = vmatprep.subr.bf16.mxu0 0
    %1425 = vmatpush1.bf16.msra.mxu0 0
    %1426 = vmatprep.subr.bf16.mxu0 0
    %1427 = vmatpush1.bf16.msra.mxu0 0
    %1428 = vmatprep.subr.bf16.mxu0 0
    %1429 = vmatpush1.bf16.msra.mxu0 0
    %1430 = vmatprep.subr.bf16.mxu0 0
    %1431 = vmatpush1.bf16.msra.mxu0 0
    %1432 = vmatprep.subr.bf16.mxu0 0
    %1433 = vmatpush1.bf16.msra.mxu0 0
    %1434 = vmatprep.subr.bf16.mxu0 0
    %1435 = vmatpush1.bf16.msra.mxu0 %v1420
    %1436 = vmatprep.subr.bf16.mxu0 0
    %1437 = vmatpush1.bf16.msra.mxu0 %v558
    %1438 = vmatprep.subr.bf16.mxu0 0
    %1439 = vmatpush2.bf16.msra.mxu0 0
    %1440 = vmatprep.subr.bf16.mxu0 0
    %1441 = vmatpush2.bf16.msra.mxu0 0
    %1442 = vmatprep.subr.bf16.mxu0 0
    %1443 = vmatpush2.bf16.msra.mxu0 0
    %1444 = vmatprep.subr.bf16.mxu0 0
    %1445 = vmatpush2.bf16.msra.mxu0 0
    %1446 = vmatprep.subr.bf16.mxu0 0
    %1447 = vmatpush2.bf16.msra.mxu0 0
    %1448 = vmatprep.subr.bf16.mxu0 0
    %1449 = vmatpush2.bf16.msra.mxu0 0
    %1450 = vmatprep.subr.bf16.mxu0 0
    %1451 = vmatpush2.bf16.msra.mxu0 0
    %1452 = vmatprep.subr.bf16.mxu0 0
    %1453 = vmatpush2.bf16.msra.mxu0 0
    %1454 = vmatprep.mubr.bf16.mxu0 0
    %1455 = vmatmul.mubr.bf16.gmra.mxu0 %v1414
    %v1456 = vpop.f32.mrf.mxu0
    %v1457 = vadd.f32 0.0, %v1456
    %v1458 = vpop.f32.mrf.mxu0
    %v1459 = vpop.f32.mrf.mxu0
    %v1460 = vadd.f32 0.0, %v1459
    %v1461 = vpop.f32.mrf.mxu0
    %1462 = vmatprep.mubr.bf16.mxu0 0
    %1463 = vmatmul.mubr.bf16.gmra.mxu0 %v1417
    %v1464 = vpop.f32.mrf.mxu0
    %v1465 = vadd.f32 0.0, %v1464
    %v1466 = vpop.f32.mrf.mxu0
    %v1467 = vpop.f32.mrf.mxu0
    %v1468 = vpop.f32.mrf.mxu0
    %1469 = vdwg.mxu0
    %v1471 = vsel %vm1073, %v1343, 0
    %v1474 = vsel %vm1073, %v1344, 0
    %v1477 = vsel %vm1361, %v565, 0
    %1479 = vmatprep.subr.bf16.mxu0 0
    %1480 = vmatpush1.bf16.msra.mxu0 0
    %1481 = vmatprep.subr.bf16.mxu0 0
    %1482 = vmatpush1.bf16.msra.mxu0 0
    %1483 = vmatprep.subr.bf16.mxu0 0
    %1484 = vmatpush1.bf16.msra.mxu0 0
    %1485 = vmatprep.subr.bf16.mxu0 0
    %1486 = vmatpush1.bf16.msra.mxu0 0
    %1487 = vmatprep.subr.bf16.mxu0 0
    %1488 = vmatpush1.bf16.msra.mxu0 0
    %1489 = vmatprep.subr.bf16.mxu0 0
    %1490 = vmatpush1.bf16.msra.mxu0 0
    %1491 = vmatprep.subr.bf16.mxu0 0
    %1492 = vmatpush1.bf16.msra.mxu0 %v1477
    %1493 = vmatprep.subr.bf16.mxu0 0
    %1494 = vmatpush1.bf16.msra.mxu0 %v563
    %1495 = vmatprep.subr.bf16.mxu0 0
    %1496 = vmatpush2.bf16.msra.mxu0 0
    %1497 = vmatprep.subr.bf16.mxu0 0
    %1498 = vmatpush2.bf16.msra.mxu0 0
    %1499 = vmatprep.subr.bf16.mxu0 0
    %1500 = vmatpush2.bf16.msra.mxu0 0
    %1501 = vmatprep.subr.bf16.mxu0 0
    %1502 = vmatpush2.bf16.msra.mxu0 0
    %1503 = vmatprep.subr.bf16.mxu0 0
    %1504 = vmatpush2.bf16.msra.mxu0 0
    %1505 = vmatprep.subr.bf16.mxu0 0
    %1506 = vmatpush2.bf16.msra.mxu0 0
    %1507 = vmatprep.subr.bf16.mxu0 0
    %1508 = vmatpush2.bf16.msra.mxu0 0
    %1509 = vmatprep.subr.bf16.mxu0 0
    %1510 = vmatpush2.bf16.msra.mxu0 0
    %1511 = vmatprep.mubr.bf16.mxu0 0
    %1512 = vmatmul.mubr.bf16.gmra.mxu0 %v1471
    %v1513 = vpop.f32.mrf.mxu0
    %v1514 = vadd.f32 0.0, %v1513
    %v1515 = vpop.f32.mrf.mxu0
    %v1516 = vpop.f32.mrf.mxu0
    %v1517 = vadd.f32 0.0, %v1516
    %v1518 = vpop.f32.mrf.mxu0
    %1519 = vmatprep.mubr.bf16.mxu0 0
    %1520 = vmatmul.mubr.bf16.gmra.mxu0 %v1474
    %v1521 = vpop.f32.mrf.mxu0
    %v1522 = vadd.f32 0.0, %v1521
    %v1523 = vpop.f32.mrf.mxu0
    %v1524 = vpop.f32.mrf.mxu0
    %v1525 = vpop.f32.mrf.mxu0
    %1526 = vdwg.mxu0
    %v1528 = vsel %vm1073, %v1345, 0
    %v1531 = vsel %vm1073, %v1346, 0
    %v1534 = vsel %vm1361, %v570, 0
    %1536 = vmatprep.subr.bf16.mxu0 0
    %1537 = vmatpush1.bf16.msra.mxu0 0
    %1538 = vmatprep.subr.bf16.mxu0 0
    %1539 = vmatpush1.bf16.msra.mxu0 0
    %1540 = vmatprep.subr.bf16.mxu0 0
    %1541 = vmatpush1.bf16.msra.mxu0 0
    %1542 = vmatprep.subr.bf16.mxu0 0
    %1543 = vmatpush1.bf16.msra.mxu0 0
    %1544 = vmatprep.subr.bf16.mxu0 0
    %1545 = vmatpush1.bf16.msra.mxu0 0
    %1546 = vmatprep.subr.bf16.mxu0 0
    %1547 = vmatpush1.bf16.msra.mxu0 0
    %1548 = vmatprep.subr.bf16.mxu0 0
    %1549 = vmatpush1.bf16.msra.mxu0 %v1534
    %1550 = vmatprep.subr.bf16.mxu0 0
    %1551 = vmatpush1.bf16.msra.mxu0 %v568
    %1552 = vmatprep.subr.bf16.mxu0 0
    %1553 = vmatpush2.bf16.msra.mxu0 0
    %1554 = vmatprep.subr.bf16.mxu0 0
    %1555 = vmatpush2.bf16.msra.mxu0 0
    %1556 = vmatprep.subr.bf16.mxu0 0
    %1557 = vmatpush2.bf16.msra.mxu0 0
    %1558 = vmatprep.subr.bf16.mxu0 0
    %1559 = vmatpush2.bf16.msra.mxu0 0
    %1560 = vmatprep.subr.bf16.mxu0 0
    %1561 = vmatpush2.bf16.msra.mxu0 0
    %1562 = vmatprep.subr.bf16.mxu0 0
    %1563 = vmatpush2.bf16.msra.mxu0 0
    %1564 = vmatprep.subr.bf16.mxu0 0
    %1565 = vmatpush2.bf16.msra.mxu0 0
    %1566 = vmatprep.subr.bf16.mxu0 0
    %1567 = vmatpush2.bf16.msra.mxu0 0
    %1568 = vmatprep.mubr.bf16.mxu0 0
    %1569 = vmatmul.mubr.bf16.gmra.mxu0 %v1528
    %v1570 = vpop.f32.mrf.mxu0
    %v1571 = vadd.f32 0.0, %v1570
    %v1572 = vpop.f32.mrf.mxu0
    %v1573 = vpop.f32.mrf.mxu0
    %v1574 = vadd.f32 0.0, %v1573
    %v1575 = vpop.f32.mrf.mxu0
    %1576 = vmatprep.mubr.bf16.mxu0 0
    %1577 = vmatmul.mubr.bf16.gmra.mxu0 %v1531
    %v1578 = vpop.f32.mrf.mxu0
    %v1579 = vadd.f32 0.0, %v1578
    %v1580 = vpop.f32.mrf.mxu0
    %v1581 = vpop.f32.mrf.mxu0
    %v1582 = vpop.f32.mrf.mxu0
    %1583 = vdwg.mxu0
    %v1585 = vsel %vm1073, %v1347, 0
    %v1588 = vsel %vm1073, %v1348, 0
    %v1591 = vsel %vm1361, %v575, 0
    %1593 = vmatprep.subr.bf16.mxu0 0
    %1594 = vmatpush1.bf16.msra.mxu0 0
    %1595 = vmatprep.subr.bf16.mxu0 0
    %1596 = vmatpush1.bf16.msra.mxu0 0
    %1597 = vmatprep.subr.bf16.mxu0 0
    %1598 = vmatpush1.bf16.msra.mxu0 0
    %1599 = vmatprep.subr.bf16.mxu0 0
    %1600 = vmatpush1.bf16.msra.mxu0 0
    %1601 = vmatprep.subr.bf16.mxu0 0
    %1602 = vmatpush1.bf16.msra.mxu0 0
    %1603 = vmatprep.subr.bf16.mxu0 0
    %1604 = vmatpush1.bf16.msra.mxu0 0
    %1605 = vmatprep.subr.bf16.mxu0 0
    %1606 = vmatpush1.bf16.msra.mxu0 %v1591
    %1607 = vmatprep.subr.bf16.mxu0 0
    %1608 = vmatpush1.bf16.msra.mxu0 %v573
    %1609 = vmatprep.subr.bf16.mxu0 0
    %1610 = vmatpush2.bf16.msra.mxu0 0
    %1611 = vmatprep.subr.bf16.mxu0 0
    %1612 = vmatpush2.bf16.msra.mxu0 0
    %1613 = vmatprep.subr.bf16.mxu0 0
    %1614 = vmatpush2.bf16.msra.mxu0 0
    %1615 = vmatprep.subr.bf16.mxu0 0
    %1616 = vmatpush2.bf16.msra.mxu0 0
    %1617 = vmatprep.subr.bf16.mxu0 0
    %1618 = vmatpush2.bf16.msra.mxu0 0
    %1619 = vmatprep.subr.bf16.mxu0 0
    %1620 = vmatpush2.bf16.msra.mxu0 0
    %1621 = vmatprep.subr.bf16.mxu0 0
    %1622 = vmatpush2.bf16.msra.mxu0 0
    %1623 = vmatprep.subr.bf16.mxu0 0
    %1624 = vmatpush2.bf16.msra.mxu0 0
    %1625 = vmatprep.mubr.bf16.mxu0 0
    %1626 = vmatmul.mubr.bf16.gmra.mxu0 %v1585
    %v1627 = vpop.f32.mrf.mxu0
    %v1628 = vadd.f32 0.0, %v1627
    %v1629 = vpop.f32.mrf.mxu0
    %v1630 = vpop.f32.mrf.mxu0
    %v1631 = vadd.f32 0.0, %v1630
    %v1632 = vpop.f32.mrf.mxu0
    %1633 = vmatprep.mubr.bf16.mxu0 0
    %1634 = vmatmul.mubr.bf16.gmra.mxu0 %v1588
    %v1635 = vpop.f32.mrf.mxu0
    %v1636 = vadd.f32 0.0, %v1635
    %v1637 = vpop.f32.mrf.mxu0
    %v1638 = vpop.f32.mrf.mxu0
    %v1639 = vpop.f32.mrf.mxu0
    %1640 = vdwg.mxu0
    %v1642 = vsel %vm1073, %v1349, 0
    %v1645 = vsel %vm1073, %v1350, 0
    %v1648 = vsel %vm1361, %v580, 0
    %1650 = vmatprep.subr.bf16.mxu0 0
    %1651 = vmatpush1.bf16.msra.mxu0 0
    %1652 = vmatprep.subr.bf16.mxu0 0
    %1653 = vmatpush1.bf16.msra.mxu0 0
    %1654 = vmatprep.subr.bf16.mxu0 0
    %1655 = vmatpush1.bf16.msra.mxu0 0
    %1656 = vmatprep.subr.bf16.mxu0 0
    %1657 = vmatpush1.bf16.msra.mxu0 0
    %1658 = vmatprep.subr.bf16.mxu0 0
    %1659 = vmatpush1.bf16.msra.mxu0 0
    %1660 = vmatprep.subr.bf16.mxu0 0
    %1661 = vmatpush1.bf16.msra.mxu0 0
    %1662 = vmatprep.subr.bf16.mxu0 0
    %1663 = vmatpush1.bf16.msra.mxu0 %v1648
    %1664 = vmatprep.subr.bf16.mxu0 0
    %1665 = vmatpush1.bf16.msra.mxu0 %v578
    %1666 = vmatprep.subr.bf16.mxu0 0
    %1667 = vmatpush2.bf16.msra.mxu0 0
    %1668 = vmatprep.subr.bf16.mxu0 0
    %1669 = vmatpush2.bf16.msra.mxu0 0
    %1670 = vmatprep.subr.bf16.mxu0 0
    %1671 = vmatpush2.bf16.msra.mxu0 0
    %1672 = vmatprep.subr.bf16.mxu0 0
    %1673 = vmatpush2.bf16.msra.mxu0 0
    %1674 = vmatprep.subr.bf16.mxu0 0
    %1675 = vmatpush2.bf16.msra.mxu0 0
    %1676 = vmatprep.subr.bf16.mxu0 0
    %1677 = vmatpush2.bf16.msra.mxu0 0
    %1678 = vmatprep.subr.bf16.mxu0 0
    %1679 = vmatpush2.bf16.msra.mxu0 0
    %1680 = vmatprep.subr.bf16.mxu0 0
    %1681 = vmatpush2.bf16.msra.mxu0 0
    %1682 = vmatprep.mubr.bf16.mxu0 0
    %1683 = vmatmul.mubr.bf16.gmra.mxu0 %v1642
    %v1684 = vpop.f32.mrf.mxu0
    %v1685 = vadd.f32 0.0, %v1684
    %v1686 = vpop.f32.mrf.mxu0
    %v1687 = vpop.f32.mrf.mxu0
    %v1688 = vadd.f32 0.0, %v1687
    %v1689 = vpop.f32.mrf.mxu0
    %1690 = vmatprep.mubr.bf16.mxu0 0
    %1691 = vmatmul.mubr.bf16.gmra.mxu0 %v1645
    %v1692 = vpop.f32.mrf.mxu0
    %v1693 = vadd.f32 0.0, %v1692
    %v1694 = vpop.f32.mrf.mxu0
    %v1695 = vpop.f32.mrf.mxu0
    %v1696 = vpop.f32.mrf.mxu0
    %1697 = vdwg.mxu0
    %v1699 = vsel %vm1073, %v1351, 0
    %v1702 = vsel %vm1073, %v1352, 0
    %v1705 = vsel %vm1361, %v585, 0
    %1707 = vmatprep.subr.bf16.mxu0 0
    %1708 = vmatpush1.bf16.msra.mxu0 0
    %1709 = vmatprep.subr.bf16.mxu0 0
    %1710 = vmatpush1.bf16.msra.mxu0 0
    %1711 = vmatprep.subr.bf16.mxu0 0
    %1712 = vmatpush1.bf16.msra.mxu0 0
    %1713 = vmatprep.subr.bf16.mxu0 0
    %1714 = vmatpush1.bf16.msra.mxu0 0
    %1715 = vmatprep.subr.bf16.mxu0 0
    %1716 = vmatpush1.bf16.msra.mxu0 0
    %1717 = vmatprep.subr.bf16.mxu0 0
    %1718 = vmatpush1.bf16.msra.mxu0 0
    %1719 = vmatprep.subr.bf16.mxu0 0
    %1720 = vmatpush1.bf16.msra.mxu0 %v1705
    %1721 = vmatprep.subr.bf16.mxu0 0
    %1722 = vmatpush1.bf16.msra.mxu0 %v583
    %1723 = vmatprep.subr.bf16.mxu0 0
    %1724 = vmatpush2.bf16.msra.mxu0 0
    %1725 = vmatprep.subr.bf16.mxu0 0
    %1726 = vmatpush2.bf16.msra.mxu0 0
    %1727 = vmatprep.subr.bf16.mxu0 0
    %1728 = vmatpush2.bf16.msra.mxu0 0
    %1729 = vmatprep.subr.bf16.mxu0 0
    %1730 = vmatpush2.bf16.msra.mxu0 0
    %1731 = vmatprep.subr.bf16.mxu0 0
    %1732 = vmatpush2.bf16.msra.mxu0 0
    %1733 = vmatprep.subr.bf16.mxu0 0
    %1734 = vmatpush2.bf16.msra.mxu0 0
    %1735 = vmatprep.subr.bf16.mxu0 0
    %1736 = vmatpush2.bf16.msra.mxu0 0
    %1737 = vmatprep.subr.bf16.mxu0 0
    %1738 = vmatpush2.bf16.msra.mxu0 0
    %1739 = vmatprep.mubr.bf16.mxu0 0
    %1740 = vmatmul.mubr.bf16.gmra.mxu0 %v1699
    %v1741 = vpop.f32.mrf.mxu0
    %v1742 = vadd.f32 0.0, %v1741
    %v1743 = vpop.f32.mrf.mxu0
    %v1744 = vpop.f32.mrf.mxu0
    %v1745 = vadd.f32 0.0, %v1744
    %v1746 = vpop.f32.mrf.mxu0
    %1747 = vmatprep.mubr.bf16.mxu0 0
    %1748 = vmatmul.mubr.bf16.gmra.mxu0 %v1702
    %v1749 = vpop.f32.mrf.mxu0
    %v1750 = vadd.f32 0.0, %v1749
    %v1751 = vpop.f32.mrf.mxu0
    %v1752 = vpop.f32.mrf.mxu0
    %v1753 = vpop.f32.mrf.mxu0
    %1754 = vdwg.mxu0
    %v1756 = vsel %vm1073, %v1353, 0
    %v1759 = vsel %vm1073, %v1354, 0
    %v1762 = vsel %vm1361, %v590, 0
    %1764 = vmatprep.subr.bf16.mxu0 0
    %1765 = vmatpush1.bf16.msra.mxu0 0
    %1766 = vmatprep.subr.bf16.mxu0 0
    %1767 = vmatpush1.bf16.msra.mxu0 0
    %1768 = vmatprep.subr.bf16.mxu0 0
    %1769 = vmatpush1.bf16.msra.mxu0 0
    %1770 = vmatprep.subr.bf16.mxu0 0
    %1771 = vmatpush1.bf16.msra.mxu0 0
    %1772 = vmatprep.subr.bf16.mxu0 0
    %1773 = vmatpush1.bf16.msra.mxu0 0
    %1774 = vmatprep.subr.bf16.mxu0 0
    %1775 = vmatpush1.bf16.msra.mxu0 0
    %1776 = vmatprep.subr.bf16.mxu0 0
    %1777 = vmatpush1.bf16.msra.mxu0 %v1762
    %1778 = vmatprep.subr.bf16.mxu0 0
    %1779 = vmatpush1.bf16.msra.mxu0 %v588
    %1780 = vmatprep.subr.bf16.mxu0 0
    %1781 = vmatpush2.bf16.msra.mxu0 0
    %1782 = vmatprep.subr.bf16.mxu0 0
    %1783 = vmatpush2.bf16.msra.mxu0 0
    %1784 = vmatprep.subr.bf16.mxu0 0
    %1785 = vmatpush2.bf16.msra.mxu0 0
    %1786 = vmatprep.subr.bf16.mxu0 0
    %1787 = vmatpush2.bf16.msra.mxu0 0
    %1788 = vmatprep.subr.bf16.mxu0 0
    %1789 = vmatpush2.bf16.msra.mxu0 0
    %1790 = vmatprep.subr.bf16.mxu0 0
    %1791 = vmatpush2.bf16.msra.mxu0 0
    %1792 = vmatprep.subr.bf16.mxu0 0
    %1793 = vmatpush2.bf16.msra.mxu0 0
    %1794 = vmatprep.subr.bf16.mxu0 0
    %1795 = vmatpush2.bf16.msra.mxu0 0
    %1796 = vmatprep.mubr.bf16.mxu0 0
    %1797 = vmatmul.mubr.bf16.gmra.mxu0 %v1756
    %v1798 = vpop.f32.mrf.mxu0
    %v1799 = vadd.f32 0.0, %v1798
    %v1800 = vpop.f32.mrf.mxu0
    %v1801 = vpop.f32.mrf.mxu0
    %v1802 = vadd.f32 0.0, %v1801
    %v1803 = vpop.f32.mrf.mxu0
    %1804 = vmatprep.mubr.bf16.mxu0 0
    %1805 = vmatmul.mubr.bf16.gmra.mxu0 %v1759
    %v1806 = vpop.f32.mrf.mxu0
    %v1807 = vadd.f32 0.0, %v1806
    %v1808 = vpop.f32.mrf.mxu0
    %v1809 = vpop.f32.mrf.mxu0
    %v1810 = vpop.f32.mrf.mxu0
    %1811 = vdwg.mxu0
    %v1812 = vpack.c.bf16 %v1403, %v1400
    %v1813 = vpack.c.bf16 %v1408, %v1408
    %v1814 = vpack.c.bf16 %v1460, %v1457
    %v1815 = vpack.c.bf16 %v1465, %v1465
    %v1816 = vpack.c.bf16 %v1517, %v1514
    %v1817 = vpack.c.bf16 %v1522, %v1522
    %v1818 = vpack.c.bf16 %v1574, %v1571
    %v1819 = vpack.c.bf16 %v1579, %v1579
    %v1820 = vpack.c.bf16 %v1631, %v1628
    %v1821 = vpack.c.bf16 %v1636, %v1636
    %v1822 = vpack.c.bf16 %v1688, %v1685
    %v1823 = vpack.c.bf16 %v1693, %v1693
    %v1824 = vpack.c.bf16 %v1745, %v1742
    %v1825 = vpack.c.bf16 %v1750, %v1750
    %v1826 = vpack.c.bf16 %v1802, %v1799
    %v1827 = vpack.c.bf16 %v1807, %v1807
    %1830 = vrot.lane.b32.xlu0 %v1814, 8
    %v1831 = vpop.permute.xlu0 %1830
    %1832 = vrot.lane.b32.xlu0 %v1815, 8
    %v1833 = vpop.permute.xlu0 %1832
    %1836 = vrot.lane.b32.xlu0 %v1816, 16
    %v1837 = vpop.permute.xlu0 %1836
    %1838 = vrot.lane.b32.xlu0 %v1817, 16
    %v1839 = vpop.permute.xlu0 %1838
    %1842 = vrot.lane.b32.xlu0 %v1818, 24
    %v1843 = vpop.permute.xlu0 %1842
    %1844 = vrot.lane.b32.xlu0 %v1819, 24
    %v1845 = vpop.permute.xlu0 %1844
    %1848 = vrot.lane.b32.xlu0 %v1820, 32
    %v1849 = vpop.permute.xlu0 %1848
    %1850 = vrot.lane.b32.xlu0 %v1821, 32
    %v1851 = vpop.permute.xlu0 %1850
    %1854 = vrot.lane.b32.xlu0 %v1822, 40
    %v1855 = vpop.permute.xlu0 %1854
    %1856 = vrot.lane.b32.xlu0 %v1823, 40
    %v1857 = vpop.permute.xlu0 %1856
    %1860 = vrot.lane.b32.xlu0 %v1824, 48
    %v1861 = vpop.permute.xlu0 %1860
    %1862 = vrot.lane.b32.xlu0 %v1825, 48
    %v1863 = vpop.permute.xlu0 %1862
    %1866 = vrot.lane.b32.xlu0 %v1826, 56
    %v1867 = vpop.permute.xlu0 %1866
    %1868 = vrot.lane.b32.xlu0 %v1827, 56
    %v1869 = vpop.permute.xlu0 %1868
    %v1872 = vsel %vm592, %v1812, %v1831
    %v1875 = vsel %vm592, %v1813, %v1833
    %vm1876 = vcmask 130048
    %v1878 = vsel %vm1876, %v1872, %v1837
    %v1880 = vsel %vm1876, %v1875, %v1839
    %vm1881 = vcmask 195584
    %v1883 = vsel %vm1881, %v1878, %v1843
    %v1885 = vsel %vm1881, %v1880, %v1845
    %vm1886 = vcmask 261120
    %v1888 = vsel %vm1886, %v1883, %v1849
    %v1890 = vsel %vm1886, %v1885, %v1851
    %vm1891 = vcmask 326656
    %v1893 = vsel %vm1891, %v1888, %v1855
    %v1895 = vsel %vm1891, %v1890, %v1857
    %vm1896 = vcmask 392192
    %v1898 = vsel %vm1896, %v1893, %v1861
    %v1900 = vsel %vm1896, %v1895, %v1863
    %vm1901 = vcmask 457728
    %v1903 = vsel %vm1901, %v1898, %v1867
    %v1905 = vsel %vm1901, %v1900, %v1869
    %v1906 = vld [vmem:[%s8] sm:$0xf]
    %v1907 = vld [vmem:[%s8 + $0x4] sm:$0xf]
    %v1908 = vld [vmem:[%s8 + $0x8] sm:$0xf]
    %v1909 = vld [vmem:[%s8 + $0xc] sm:$0xf]
    %v1910 = vld [vmem:[%s8 + $0x10] sm:$0xf]
    %v1911 = vld [vmem:[%s8 + $0x14] sm:$0xf]
    %v1912 = vld [vmem:[%s8 + $0x18] sm:$0xf]
    %v1913 = vld [vmem:[%s8 + $0x1c] sm:$0xf]
    %v1914 = vld [vmem:[#allocation6] sm:$0x1]
    %v1916 = vlaneseq
    %v1917 = vshrl.u32 %v1916, 7
    %v1918 = vsub.s32 0, %v1917
    %v1919 = vrot.slane %v1914, %v1918
    %v1929 = vunpack.c.l.b16 %v1906
    %v1930 = vunpack.c.l.b16 %v1907
    %v1931 = vunpack.c.l.b16 %v1908
    %v1932 = vunpack.c.l.b16 %v1909
    %v1933 = vunpack.c.l.b16 %v1910
    %v1934 = vunpack.c.l.b16 %v1911
    %v1935 = vunpack.c.l.b16 %v1912
    %v1936 = vunpack.c.l.b16 %v1913
    %v1937 = vpack.c.b16 %v1930, %v1929
    %v1938 = vpack.c.b16 %v1932, %v1931
    %v1939 = vpack.c.b16 %v1934, %v1933
    %v1940 = vpack.c.b16 %v1936, %v1935
    %v1945 = vsel %vm260, %v1903, 0
    %v1947 = vsel %vm260, %v1905, 0
    %1949 = vmatprep.subr.bf16.mxu0 0
    %1950 = vmatpush1.bf16.msra.mxu0 0
    %1951 = vmatprep.subr.bf16.mxu0 0
    %1952 = vmatpush1.bf16.msra.mxu0 0
    %1953 = vmatprep.subr.bf16.mxu0 0
    %1954 = vmatpush1.bf16.msra.mxu0 0
    %1955 = vmatprep.subr.bf16.mxu0 0
    %1956 = vmatpush1.bf16.msra.mxu0 0
    %1957 = vmatprep.subr.bf16.mxu0 0
    %1958 = vmatpush1.bf16.msra.mxu0 %v1940
    %1959 = vmatprep.subr.bf16.mxu0 0
    %1960 = vmatpush1.bf16.msra.mxu0 %v1939
    %1961 = vmatprep.subr.bf16.mxu0 0
    %1962 = vmatpush1.bf16.msra.mxu0 %v1938
    %1963 = vmatprep.subr.bf16.mxu0 0
    %1964 = vmatpush1.bf16.msra.mxu0 %v1937
    %1965 = vmatprep.subr.bf16.mxu0 0
    %1966 = vmatpush2.bf16.msra.mxu0 0
    %1967 = vmatprep.subr.bf16.mxu0 0
    %1968 = vmatpush2.bf16.msra.mxu0 0
    %1969 = vmatprep.subr.bf16.mxu0 0
    %1970 = vmatpush2.bf16.msra.mxu0 0
    %1971 = vmatprep.subr.bf16.mxu0 0
    %1972 = vmatpush2.bf16.msra.mxu0 0
    %1973 = vmatprep.subr.bf16.mxu0 0
    %1974 = vmatpush2.bf16.msra.mxu0 0
    %1975 = vmatprep.subr.bf16.mxu0 0
    %1976 = vmatpush2.bf16.msra.mxu0 0
    %1977 = vmatprep.subr.bf16.mxu0 0
    %1978 = vmatpush2.bf16.msra.mxu0 0
    %1979 = vmatprep.subr.bf16.mxu0 0
    %1980 = vmatpush2.bf16.msra.mxu0 0
    %1981 = vmatprep.mubr.bf16.mxu0 0
    %1982 = vmatmul.mubr.bf16.gmra.mxu0 %v1945
    %v1983 = vpop.f32.mrf.mxu0
    %v1984 = vadd.f32 %v1919, %v1983
    %v1985 = vpop.f32.mrf.mxu0
    %v1986 = vpop.f32.mrf.mxu0
    %v1987 = vadd.f32 %v1919, %v1986
    %v1988 = vpop.f32.mrf.mxu0
    %1989 = vmatprep.mubr.bf16.mxu0 0
    %1990 = vmatmul.mubr.bf16.gmra.mxu0 %v1947
    %v1991 = vpop.f32.mrf.mxu0
    %v1992 = vadd.f32 %v1919, %v1991
    %v1993 = vpop.f32.mrf.mxu0
    %v1994 = vpop.f32.mrf.mxu0
    %v1995 = vpop.f32.mrf.mxu0
    %1996 = vdwg.mxu0
    %v1997 = vadd.f32 %v213, %v1984
    %v1998 = vadd.f32 %v214, %v1987
    %v1999 = vadd.f32 %v215, %v1992
    %v2000 = vld [vmem:[#allocation7] sm:$0x1]
    %v2001 = vld [vmem:[#allocation9] sm:$0x1]
    %v2002 = vsel %vm260, %v1997, 0.0
    %2003 = vadd.xlane.f32.xlu0 %v2002
    %v2004 = vpop.xlane.xlu0 %2003
    %v2005 = vsel %vm260, %v1998, 0.0
    %2006 = vadd.xlane.f32.xlu0 %v2005
    %v2007 = vpop.xlane.xlu0 %2006
    %vm2008 = vcmask 519168
    %v2009 = vsel %vm2008, %v1999, 0.0
    %2010 = vadd.xlane.f32.xlu0 %v2009
    %v2011 = vpop.xlane.xlu0 %2010
    %v2012 = vrcp.pop 64.0
    %v2013 = vmul.f32 %v2004, %v2012
    %v2014 = vmul.f32 %v2007, %v2012
    %v2015 = vmul.f32 %v2011, %v2012
    %v2016 = vsub.f32 %v1997, %v2013
    %v2017 = vsub.f32 %v1998, %v2014
    %v2018 = vsub.f32 %v1999, %v2015
    %v2019 = vmul.f32 %v2016, %v2016
    %v2020 = vmul.f32 %v2017, %v2017
    %v2021 = vmul.f32 %v2018, %v2018
    %v2022 = vsel %vm260, %v2019, 0.0
    %2023 = vadd.xlane.f32.xlu0 %v2022
    %v2024 = vpop.xlane.xlu0 %2023
    %v2025 = vsel %vm260, %v2020, 0.0
    %2026 = vadd.xlane.f32.xlu0 %v2025
    %v2027 = vpop.xlane.xlu0 %2026
    %v2028 = vsel %vm2008, %v2021, 0.0
    %2029 = vadd.xlane.f32.xlu0 %v2028
    %v2030 = vpop.xlane.xlu0 %2029
    %v2031 = vmul.f32 %v2024, %v2012
    %v2032 = vmul.f32 %v2027, %v2012
    %v2033 = vmul.f32 %v2030, %v2012
    %v2034 = vadd.f32 %v2031, 1e-05
    %v2035 = vadd.f32 %v2032, 1e-05
    %v2036 = vadd.f32 %v2033, 1e-05
    %v2037 = vrsqrt.pop %v2034
    %v2038 = vrsqrt.pop %v2035
    %v2039 = vrsqrt.pop %v2036
    %v2040 = vmul.f32 %v2016, %v2037
    %v2041 = vmul.f32 %v2017, %v2038
    %v2042 = vmul.f32 %v2018, %v2039
    %v2044 = vlaneseq
    %v2045 = vshrl.u32 %v2044, 7
    %v2046 = vsub.s32 0, %v2045
    %v2047 = vrot.slane %v2000, %v2046
    %v2049 = vmul.f32 %v2040, %v2047
    %v2050 = vmul.f32 %v2041, %v2047
    %v2051 = vmul.f32 %v2042, %v2047
    %v2053 = vlaneseq
    %v2054 = vshrl.u32 %v2053, 7
    %v2055 = vsub.s32 0, %v2054
    %v2056 = vrot.slane %v2001, %v2055
    %v2058 = vadd.f32 %v2049, %v2056
    %v2059 = vadd.f32 %v2050, %v2056
    %v2060 = vadd.f32 %v2051, %v2056
    %v2061 = vpack.c.bf16 %v2059, %v2058
    %v2062 = vpack.c.bf16 %v2060, %v2060
    %v2063 = vld [vmem:[%s12] sm:$0xf]
    %v2064 = vld [vmem:[%s12 + $0x4] sm:$0xf]
    %v2065 = vld [vmem:[%s12 + $0x8] sm:$0xf]
    %v2066 = vld [vmem:[%s12 + $0xc] sm:$0xf]
    %v2067 = vld [vmem:[%s12 + $0x10] sm:$0xf]
    %v2068 = vld [vmem:[%s12 + $0x14] sm:$0xf]
    %v2069 = vld [vmem:[%s12 + $0x18] sm:$0xf]
    %v2070 = vld [vmem:[%s12 + $0x1c] sm:$0xf]
    %v2071 = vld [vmem:[#allocation10] sm:$0x1]
    %v2073 = vlaneseq
    %v2074 = vshrl.u32 %v2073, 7
    %v2075 = vsub.s32 0, %v2074
    %v2076 = vrot.slane %v2071, %v2075
    %v2086 = vunpack.c.l.b16 %v2063
    %v2087 = vunpack.c.l.b16 %v2064
    %v2088 = vunpack.c.l.b16 %v2065
    %v2089 = vunpack.c.l.b16 %v2066
    %v2090 = vunpack.c.l.b16 %v2067
    %v2091 = vunpack.c.l.b16 %v2068
    %v2092 = vunpack.c.l.b16 %v2069
    %v2093 = vunpack.c.l.b16 %v2070
    %v2094 = vpack.c.b16 %v2087, %v2086
    %v2095 = vpack.c.b16 %v2089, %v2088
    %v2096 = vpack.c.b16 %v2091, %v2090
    %v2097 = vpack.c.b16 %v2093, %v2092
    %v2103 = vsel %vm260, %v2061, 0
    %v2106 = vsel %vm260, %v2062, 0
    %2108 = vmatprep.subr.bf16.mxu0 0
    %2109 = vmatpush1.bf16.msra.mxu0 0
    %2110 = vmatprep.subr.bf16.mxu0 0
    %2111 = vmatpush1.bf16.msra.mxu0 0
    %2112 = vmatprep.subr.bf16.mxu0 0
    %2113 = vmatpush1.bf16.msra.mxu0 0
    %2114 = vmatprep.subr.bf16.mxu0 0
    %2115 = vmatpush1.bf16.msra.mxu0 0
    %2116 = vmatprep.subr.bf16.mxu0 0
    %2117 = vmatpush1.bf16.msra.mxu0 %v2097
    %2118 = vmatprep.subr.bf16.mxu0 0
    %2119 = vmatpush1.bf16.msra.mxu0 %v2096
    %2120 = vmatprep.subr.bf16.mxu0 0
    %2121 = vmatpush1.bf16.msra.mxu0 %v2095
    %2122 = vmatprep.subr.bf16.mxu0 0
    %2123 = vmatpush1.bf16.msra.mxu0 %v2094
    %2124 = vmatprep.subr.bf16.mxu0 0
    %2125 = vmatpush2.bf16.msra.mxu0 0
    %2126 = vmatprep.subr.bf16.mxu0 0
    %2127 = vmatpush2.bf16.msra.mxu0 0
    %2128 = vmatprep.subr.bf16.mxu0 0
    %2129 = vmatpush2.bf16.msra.mxu0 0
    %2130 = vmatprep.subr.bf16.mxu0 0
    %2131 = vmatpush2.bf16.msra.mxu0 0
    %2132 = vmatprep.subr.bf16.mxu0 0
    %2133 = vmatpush2.bf16.msra.mxu0 0
    %2134 = vmatprep.subr.bf16.mxu0 0
    %2135 = vmatpush2.bf16.msra.mxu0 0
    %2136 = vmatprep.subr.bf16.mxu0 0
    %2137 = vmatpush2.bf16.msra.mxu0 0
    %2138 = vmatprep.subr.bf16.mxu0 0
    %2139 = vmatpush2.bf16.msra.mxu0 0
    %2140 = vmatprep.mubr.bf16.mxu0 0
    %2141 = vmatmul.mubr.bf16.gmra.mxu0 %v2103
    %v2142 = vpop.f32.mrf.mxu0
    %v2143 = vadd.f32 %v2076, %v2142
    %v2144 = vpop.f32.mrf.mxu0
    %v2145 = vpop.f32.mrf.mxu0
    %v2146 = vadd.f32 %v2076, %v2145
    %v2147 = vpop.f32.mrf.mxu0
    %2148 = vmatprep.mubr.bf16.mxu0 0
    %2149 = vmatmul.mubr.bf16.gmra.mxu0 %v2106
    %v2150 = vpop.f32.mrf.mxu0
    %v2151 = vadd.f32 %v2076, %v2150
    %v2152 = vpop.f32.mrf.mxu0
    %v2153 = vpop.f32.mrf.mxu0
    %v2154 = vpop.f32.mrf.mxu0
    %2155 = vdwg.mxu0
    %v2156 = vmax.f32 %v2143, 0.0
    %v2157 = vmax.f32 %v2146, 0.0
    %v2158 = vmax.f32 %v2151, 0.0
    %v2159 = vpack.c.bf16 %v2157, %v2156
    %v2160 = vpack.c.bf16 %v2158, %v2158
    %v2161 = vld [vmem:[%s14] sm:$0xf]
    %v2162 = vld [vmem:[%s14 + $0x4] sm:$0xf]
    %v2163 = vld [vmem:[%s14 + $0x8] sm:$0xf]
    %v2164 = vld [vmem:[%s14 + $0xc] sm:$0xf]
    %v2165 = vld [vmem:[%s14 + $0x10] sm:$0xf]
    %v2166 = vld [vmem:[%s14 + $0x14] sm:$0xf]
    %v2167 = vld [vmem:[%s14 + $0x18] sm:$0xf]
    %v2168 = vld [vmem:[%s14 + $0x1c] sm:$0xf]
    %v2169 = vld [vmem:[#allocation12] sm:$0x1]
    %v2171 = vlaneseq
    %v2172 = vshrl.u32 %v2171, 7
    %v2173 = vsub.s32 0, %v2172
    %v2174 = vrot.slane %v2169, %v2173
    %v2184 = vunpack.c.l.b16 %v2161
    %v2185 = vunpack.c.l.b16 %v2162
    %v2186 = vunpack.c.l.b16 %v2163
    %v2187 = vunpack.c.l.b16 %v2164
    %v2188 = vunpack.c.l.b16 %v2165
    %v2189 = vunpack.c.l.b16 %v2166
    %v2190 = vunpack.c.l.b16 %v2167
    %v2191 = vunpack.c.l.b16 %v2168
    %v2192 = vpack.c.b16 %v2185, %v2184
    %v2193 = vpack.c.b16 %v2187, %v2186
    %v2194 = vpack.c.b16 %v2189, %v2188
    %v2195 = vpack.c.b16 %v2191, %v2190
    %v2201 = vsel %vm260, %v2159, 0
    %v2204 = vsel %vm260, %v2160, 0
    %2206 = vmatprep.subr.bf16.mxu0 0
    %2207 = vmatpush1.bf16.msra.mxu0 0
    %2208 = vmatprep.subr.bf16.mxu0 0
    %2209 = vmatpush1.bf16.msra.mxu0 0
    %2210 = vmatprep.subr.bf16.mxu0 0
    %2211 = vmatpush1.bf16.msra.mxu0 0
    %2212 = vmatprep.subr.bf16.mxu0 0
    %2213 = vmatpush1.bf16.msra.mxu0 0
    %2214 = vmatprep.subr.bf16.mxu0 0
    %2215 = vmatpush1.bf16.msra.mxu0 %v2195
    %2216 = vmatprep.subr.bf16.mxu0 0
    %2217 = vmatpush1.bf16.msra.mxu0 %v2194
    %2218 = vmatprep.subr.bf16.mxu0 0
    %2219 = vmatpush1.bf16.msra.mxu0 %v2193
    %2220 = vmatprep.subr.bf16.mxu0 0
    %2221 = vmatpush1.bf16.msra.mxu0 %v2192
    %2222 = vmatprep.subr.bf16.mxu0 0
    %2223 = vmatpush2.bf16.msra.mxu0 0
    %2224 = vmatprep.subr.bf16.mxu0 0
    %2225 = vmatpush2.bf16.msra.mxu0 0
    %2226 = vmatprep.subr.bf16.mxu0 0
    %2227 = vmatpush2.bf16.msra.mxu0 0
    %2228 = vmatprep.subr.bf16.mxu0 0
    %2229 = vmatpush2.bf16.msra.mxu0 0
    %2230 = vmatprep.subr.bf16.mxu0 0
    %2231 = vmatpush2.bf16.msra.mxu0 0
    %2232 = vmatprep.subr.bf16.mxu0 0
    %2233 = vmatpush2.bf16.msra.mxu0 0
    %2234 = vmatprep.subr.bf16.mxu0 0
    %2235 = vmatpush2.bf16.msra.mxu0 0
    %2236 = vmatprep.subr.bf16.mxu0 0
    %2237 = vmatpush2.bf16.msra.mxu0 0
    %2238 = vmatprep.mubr.bf16.mxu0 0
    %2239 = vmatmul.mubr.bf16.gmra.mxu0 %v2201
    %v2240 = vpop.f32.mrf.mxu0
    %v2241 = vadd.f32 %v2174, %v2240
    %v2242 = vpop.f32.mrf.mxu0
    %v2243 = vpop.f32.mrf.mxu0
    %v2244 = vadd.f32 %v2174, %v2243
    %v2245 = vpop.f32.mrf.mxu0
    %2246 = vmatprep.mubr.bf16.mxu0 0
    %2247 = vmatmul.mubr.bf16.gmra.mxu0 %v2204
    %v2248 = vpop.f32.mrf.mxu0
    %v2249 = vadd.f32 %v2174, %v2248
    %v2250 = vpop.f32.mrf.mxu0
    %v2251 = vpop.f32.mrf.mxu0
    %v2252 = vpop.f32.mrf.mxu0
    %2253 = vdwg.mxu0
    %v2254 = vadd.f32 %v2058, %v2241
    %v2255 = vadd.f32 %v2059, %v2244
    %v2256 = vadd.f32 %v2060, %v2249
    %v2257 = vld [vmem:[#allocation13] sm:$0x1]
    %v2258 = vld [vmem:[#allocation15] sm:$0x1]
    %v2259 = vsel %vm260, %v2254, 0.0
    %2260 = vadd.xlane.f32.xlu0 %v2259
    %v2261 = vpop.xlane.xlu0 %2260
    %v2262 = vsel %vm260, %v2255, 0.0
    %2263 = vadd.xlane.f32.xlu0 %v2262
    %v2264 = vpop.xlane.xlu0 %2263
    %v2265 = vsel %vm2008, %v2256, 0.0
    %2266 = vadd.xlane.f32.xlu0 %v2265
    %v2267 = vpop.xlane.xlu0 %2266
    %v2268 = vmul.f32 %v2261, %v2012
    %v2269 = vmul.f32 %v2264, %v2012
    %v2270 = vmul.f32 %v2267, %v2012
    %v2271 = vsub.f32 %v2254, %v2268
    %v2272 = vsub.f32 %v2255, %v2269
    %v2273 = vsub.f32 %v2256, %v2270
    %v2274 = vmul.f32 %v2271, %v2271
    %v2275 = vmul.f32 %v2272, %v2272
    %v2276 = vmul.f32 %v2273, %v2273
    %v2277 = vsel %vm260, %v2274, 0.0
    %2278 = vadd.xlane.f32.xlu0 %v2277
    %v2279 = vpop.xlane.xlu0 %2278
    %v2280 = vsel %vm260, %v2275, 0.0
    %2281 = vadd.xlane.f32.xlu0 %v2280
    %v2282 = vpop.xlane.xlu0 %2281
    %v2283 = vsel %vm2008, %v2276, 0.0
    %2284 = vadd.xlane.f32.xlu0 %v2283
    %v2285 = vpop.xlane.xlu0 %2284
    %v2286 = vmul.f32 %v2279, %v2012
    %v2287 = vmul.f32 %v2282, %v2012
    %v2288 = vmul.f32 %v2285, %v2012
    %v2289 = vadd.f32 %v2286, 1e-05
    %v2290 = vadd.f32 %v2287, 1e-05
    %v2291 = vadd.f32 %v2288, 1e-05
    %v2292 = vrsqrt.pop %v2289
    %v2293 = vrsqrt.pop %v2290
    %v2294 = vrsqrt.pop %v2291
    %v2295 = vmul.f32 %v2271, %v2292
    %v2296 = vmul.f32 %v2272, %v2293
    %v2297 = vmul.f32 %v2273, %v2294
    %v2299 = vlaneseq
    %v2300 = vshrl.u32 %v2299, 7
    %v2301 = vsub.s32 0, %v2300
    %v2302 = vrot.slane %v2257, %v2301
    %v2304 = vmul.f32 %v2295, %v2302
    %v2305 = vmul.f32 %v2296, %v2302
    %v2306 = vmul.f32 %v2297, %v2302
    %v2308 = vlaneseq
    %v2309 = vshrl.u32 %v2308, 7
    %v2310 = vsub.s32 0, %v2309
    %v2311 = vrot.slane %v2258, %v2310
    %v2313 = vadd.f32 %v2304, %v2311
    %v2314 = vadd.f32 %v2305, %v2311
    %v2315 = vadd.f32 %v2306, %v2311
    %v2316 = vpack.c.bf16 %v2314, %v2313
    %v2317 = vpack.c.bf16 %v2315, %v2315
    %s2318 = scalar_lea.vmem %s2, 32
    %v2319 = vld [vmem:[%s2318] sm:$0xf]
    %v2320 = vld [vmem:[%s2318 + $0x4] sm:$0xf]
    %v2321 = vld [vmem:[%s2318 + $0x8] sm:$0xf]
    %v2322 = vld [vmem:[%s2318 + $0xc] sm:$0xf]
    %v2323 = vld [vmem:[%s2318 + $0x10] sm:$0xf]
    %v2324 = vld [vmem:[%s2318 + $0x14] sm:$0xf]
    %v2325 = vld [vmem:[%s2318 + $0x18] sm:$0xf]
    %v2326 = vld [vmem:[%s2318 + $0x1c] sm:$0xf]
    %s2327 = scalar_lea.vmem %s3, 1
    %v2328 = vld [vmem:[%s2327] sm:$0x1]
    %v2330 = vlaneseq
    %v2331 = vshrl.u32 %v2330, 7
    %v2332 = vsub.s32 0, %v2331
    %v2333 = vrot.slane %v2328, %v2332
    %v2343 = vunpack.c.l.b16 %v2319
    %v2344 = vunpack.c.l.b16 %v2320
    %v2345 = vunpack.c.l.b16 %v2321
    %v2346 = vunpack.c.l.b16 %v2322
    %v2347 = vunpack.c.l.b16 %v2323
    %v2348 = vunpack.c.l.b16 %v2324
    %v2349 = vunpack.c.l.b16 %v2325
    %v2350 = vunpack.c.l.b16 %v2326
    %v2351 = vpack.c.b16 %v2344, %v2343
    %v2352 = vpack.c.b16 %v2346, %v2345
    %v2353 = vpack.c.b16 %v2348, %v2347
    %v2354 = vpack.c.b16 %v2350, %v2349
    %v2360 = vsel %vm260, %v2316, 0
    %v2363 = vsel %vm260, %v2317, 0
    %2365 = vmatprep.subr.bf16.mxu0 0
    %2366 = vmatpush1.bf16.msra.mxu0 0
    %2367 = vmatprep.subr.bf16.mxu0 0
    %2368 = vmatpush1.bf16.msra.mxu0 0
    %2369 = vmatprep.subr.bf16.mxu0 0
    %2370 = vmatpush1.bf16.msra.mxu0 0
    %2371 = vmatprep.subr.bf16.mxu0 0
    %2372 = vmatpush1.bf16.msra.mxu0 0
    %2373 = vmatprep.subr.bf16.mxu0 0
    %2374 = vmatpush1.bf16.msra.mxu0 %v2354
    %2375 = vmatprep.subr.bf16.mxu0 0
    %2376 = vmatpush1.bf16.msra.mxu0 %v2353
    %2377 = vmatprep.subr.bf16.mxu0 0
    %2378 = vmatpush1.bf16.msra.mxu0 %v2352
    %2379 = vmatprep.subr.bf16.mxu0 0
    %2380 = vmatpush1.bf16.msra.mxu0 %v2351
    %2381 = vmatprep.subr.bf16.mxu0 0
    %2382 = vmatpush2.bf16.msra.mxu0 0
    %2383 = vmatprep.subr.bf16.mxu0 0
    %2384 = vmatpush2.bf16.msra.mxu0 0
    %2385 = vmatprep.subr.bf16.mxu0 0
    %2386 = vmatpush2.bf16.msra.mxu0 0
    %2387 = vmatprep.subr.bf16.mxu0 0
    %2388 = vmatpush2.bf16.msra.mxu0 0
    %2389 = vmatprep.subr.bf16.mxu0 0
    %2390 = vmatpush2.bf16.msra.mxu0 0
    %2391 = vmatprep.subr.bf16.mxu0 0
    %2392 = vmatpush2.bf16.msra.mxu0 0
    %2393 = vmatprep.subr.bf16.mxu0 0
    %2394 = vmatpush2.bf16.msra.mxu0 0
    %2395 = vmatprep.subr.bf16.mxu0 0
    %2396 = vmatpush2.bf16.msra.mxu0 0
    %2397 = vmatprep.mubr.bf16.mxu0 0
    %2398 = vmatmul.mubr.bf16.gmra.mxu0 %v2360
    %v2399 = vpop.f32.mrf.mxu0
    %v2400 = vadd.f32 %v2333, %v2399
    %v2401 = vpop.f32.mrf.mxu0
    %v2402 = vpop.f32.mrf.mxu0
    %v2403 = vadd.f32 %v2333, %v2402
    %v2404 = vpop.f32.mrf.mxu0
    %2405 = vmatprep.mubr.bf16.mxu0 0
    %2406 = vmatmul.mubr.bf16.gmra.mxu0 %v2363
    %v2407 = vpop.f32.mrf.mxu0
    %v2408 = vadd.f32 %v2333, %v2407
    %v2409 = vpop.f32.mrf.mxu0
    %v2410 = vpop.f32.mrf.mxu0
    %v2411 = vpop.f32.mrf.mxu0
    %2412 = vdwg.mxu0
    %s2413 = scalar_lea.vmem %s4, 32
    %v2414 = vld [vmem:[%s2413] sm:$0xf]
    %v2415 = vld [vmem:[%s2413 + $0x4] sm:$0xf]
    %v2416 = vld [vmem:[%s2413 + $0x8] sm:$0xf]
    %v2417 = vld [vmem:[%s2413 + $0xc] sm:$0xf]
    %v2418 = vld [vmem:[%s2413 + $0x10] sm:$0xf]
    %v2419 = vld [vmem:[%s2413 + $0x14] sm:$0xf]
    %v2420 = vld [vmem:[%s2413 + $0x18] sm:$0xf]
    %v2421 = vld [vmem:[%s2413 + $0x1c] sm:$0xf]
    %s2422 = scalar_lea.vmem [#allocation2], 1
    %v2423 = vld [vmem:[%s2422] sm:$0x1]
    %v2425 = vlaneseq
    %v2426 = vshrl.u32 %v2425, 7
    %v2427 = vsub.s32 0, %v2426
    %v2428 = vrot.slane %v2423, %v2427
    %v2438 = vunpack.c.l.b16 %v2414
    %v2439 = vunpack.c.l.b16 %v2415
    %v2440 = vunpack.c.l.b16 %v2416
    %v2441 = vunpack.c.l.b16 %v2417
    %v2442 = vunpack.c.l.b16 %v2418
    %v2443 = vunpack.c.l.b16 %v2419
    %v2444 = vunpack.c.l.b16 %v2420
    %v2445 = vunpack.c.l.b16 %v2421
    %v2446 = vpack.c.b16 %v2439, %v2438
    %v2447 = vpack.c.b16 %v2441, %v2440
    %v2448 = vpack.c.b16 %v2443, %v2442
    %v2449 = vpack.c.b16 %v2445, %v2444
    %2454 = vmatprep.subr.bf16.mxu0 0
    %2455 = vmatpush1.bf16.msra.mxu0 0
    %2456 = vmatprep.subr.bf16.mxu0 0
    %2457 = vmatpush1.bf16.msra.mxu0 0
    %2458 = vmatprep.subr.bf16.mxu0 0
    %2459 = vmatpush1.bf16.msra.mxu0 0
    %2460 = vmatprep.subr.bf16.mxu0 0
    %2461 = vmatpush1.bf16.msra.mxu0 0
    %2462 = vmatprep.subr.bf16.mxu0 0
    %2463 = vmatpush1.bf16.msra.mxu0 %v2449
    %2464 = vmatprep.subr.bf16.mxu0 0
    %2465 = vmatpush1.bf16.msra.mxu0 %v2448
    %2466 = vmatprep.subr.bf16.mxu0 0
    %2467 = vmatpush1.bf16.msra.mxu0 %v2447
    %2468 = vmatprep.subr.bf16.mxu0 0
    %2469 = vmatpush1.bf16.msra.mxu0 %v2446
    %2470 = vmatprep.subr.bf16.mxu0 0
    %2471 = vmatpush2.bf16.msra.mxu0 0
    %2472 = vmatprep.subr.bf16.mxu0 0
    %2473 = vmatpush2.bf16.msra.mxu0 0
    %2474 = vmatprep.subr.bf16.mxu0 0
    %2475 = vmatpush2.bf16.msra.mxu0 0
    %2476 = vmatprep.subr.bf16.mxu0 0
    %2477 = vmatpush2.bf16.msra.mxu0 0
    %2478 = vmatprep.subr.bf16.mxu0 0
    %2479 = vmatpush2.bf16.msra.mxu0 0
    %2480 = vmatprep.subr.bf16.mxu0 0
    %2481 = vmatpush2.bf16.msra.mxu0 0
    %2482 = vmatprep.subr.bf16.mxu0 0
    %2483 = vmatpush2.bf16.msra.mxu0 0
    %2484 = vmatprep.subr.bf16.mxu0 0
    %2485 = vmatpush2.bf16.msra.mxu0 0
    %2486 = vmatprep.mubr.bf16.mxu0 0
    %2487 = vmatmul.mubr.bf16.gmra.mxu0 %v2360
    %v2488 = vpop.f32.mrf.mxu0
    %v2489 = vadd.f32 %v2428, %v2488
    %v2490 = vpop.f32.mrf.mxu0
    %v2491 = vpop.f32.mrf.mxu0
    %v2492 = vadd.f32 %v2428, %v2491
    %v2493 = vpop.f32.mrf.mxu0
    %2494 = vmatprep.mubr.bf16.mxu0 0
    %2495 = vmatmul.mubr.bf16.gmra.mxu0 %v2363
    %v2496 = vpop.f32.mrf.mxu0
    %v2497 = vadd.f32 %v2428, %v2496
    %v2498 = vpop.f32.mrf.mxu0
    %v2499 = vpop.f32.mrf.mxu0
    %v2500 = vpop.f32.mrf.mxu0
    %2501 = vdwg.mxu0
    %s2502 = scalar_lea.vmem %s6, 32
    %v2503 = vld [vmem:[%s2502] sm:$0xf]
    %v2504 = vld [vmem:[%s2502 + $0x4] sm:$0xf]
    %v2505 = vld [vmem:[%s2502 + $0x8] sm:$0xf]
    %v2506 = vld [vmem:[%s2502 + $0xc] sm:$0xf]
    %v2507 = vld [vmem:[%s2502 + $0x10] sm:$0xf]
    %v2508 = vld [vmem:[%s2502 + $0x14] sm:$0xf]
    %v2509 = vld [vmem:[%s2502 + $0x18] sm:$0xf]
    %v2510 = vld [vmem:[%s2502 + $0x1c] sm:$0xf]
    %s2511 = scalar_lea.vmem [#allocation4], 1
    %v2512 = vld [vmem:[%s2511] sm:$0x1]
    %v2514 = vlaneseq
    %v2515 = vshrl.u32 %v2514, 7
    %v2516 = vsub.s32 0, %v2515
    %v2517 = vrot.slane %v2512, %v2516
    %v2527 = vunpack.c.l.b16 %v2503
    %v2528 = vunpack.c.l.b16 %v2504
    %v2529 = vunpack.c.l.b16 %v2505
    %v2530 = vunpack.c.l.b16 %v2506
    %v2531 = vunpack.c.l.b16 %v2507
    %v2532 = vunpack.c.l.b16 %v2508
    %v2533 = vunpack.c.l.b16 %v2509
    %v2534 = vunpack.c.l.b16 %v2510
    %v2535 = vpack.c.b16 %v2528, %v2527
    %v2536 = vpack.c.b16 %v2530, %v2529
    %v2537 = vpack.c.b16 %v2532, %v2531
    %v2538 = vpack.c.b16 %v2534, %v2533
    %2543 = vmatprep.subr.bf16.mxu0 0
    %2544 = vmatpush1.bf16.msra.mxu0 0
    %2545 = vmatprep.subr.bf16.mxu0 0
    %2546 = vmatpush1.bf16.msra.mxu0 0
    %2547 = vmatprep.subr.bf16.mxu0 0
    %2548 = vmatpush1.bf16.msra.mxu0 0
    %2549 = vmatprep.subr.bf16.mxu0 0
    %2550 = vmatpush1.bf16.msra.mxu0 0
    %2551 = vmatprep.subr.bf16.mxu0 0
    %2552 = vmatpush1.bf16.msra.mxu0 %v2538
    %2553 = vmatprep.subr.bf16.mxu0 0
    %2554 = vmatpush1.bf16.msra.mxu0 %v2537
    %2555 = vmatprep.subr.bf16.mxu0 0
    %2556 = vmatpush1.bf16.msra.mxu0 %v2536
    %2557 = vmatprep.subr.bf16.mxu0 0
    %2558 = vmatpush1.bf16.msra.mxu0 %v2535
    %2559 = vmatprep.subr.bf16.mxu0 0
    %2560 = vmatpush2.bf16.msra.mxu0 0
    %2561 = vmatprep.subr.bf16.mxu0 0
    %2562 = vmatpush2.bf16.msra.mxu0 0
    %2563 = vmatprep.subr.bf16.mxu0 0
    %2564 = vmatpush2.bf16.msra.mxu0 0
    %2565 = vmatprep.subr.bf16.mxu0 0
    %2566 = vmatpush2.bf16.msra.mxu0 0
    %2567 = vmatprep.subr.bf16.mxu0 0
    %2568 = vmatpush2.bf16.msra.mxu0 0
    %2569 = vmatprep.subr.bf16.mxu0 0
    %2570 = vmatpush2.bf16.msra.mxu0 0
    %2571 = vmatprep.subr.bf16.mxu0 0
    %2572 = vmatpush2.bf16.msra.mxu0 0
    %2573 = vmatprep.subr.bf16.mxu0 0
    %2574 = vmatpush2.bf16.msra.mxu0 0
    %2575 = vmatprep.mubr.bf16.mxu0 0
    %2576 = vmatmul.mubr.bf16.gmra.mxu0 %v2360
    %v2577 = vpop.f32.mrf.mxu0
    %v2578 = vadd.f32 %v2517, %v2577
    %v2579 = vpop.f32.mrf.mxu0
    %v2580 = vpop.f32.mrf.mxu0
    %v2581 = vadd.f32 %v2517, %v2580
    %v2582 = vpop.f32.mrf.mxu0
    %2583 = vmatprep.mubr.bf16.mxu0 0
    %2584 = vmatmul.mubr.bf16.gmra.mxu0 %v2363
    %v2585 = vpop.f32.mrf.mxu0
    %v2586 = vadd.f32 %v2517, %v2585
    %v2587 = vpop.f32.mrf.mxu0
    %v2588 = vpop.f32.mrf.mxu0
    %v2589 = vpop.f32.mrf.mxu0
    %2590 = vdwg.mxu0
    %v2591 = vpack.c.bf16 %v2403, %v2400
    %v2592 = vpack.c.bf16 %v2408, %v2408
    %v2593 = vpack.c.bf16 %v2492, %v2489
    %v2594 = vpack.c.bf16 %v2497, %v2497
    %v2595 = vpack.c.bf16 %v2581, %v2578
    %v2596 = vpack.c.bf16 %v2586, %v2586
    %2599 = vrot.lane.b32.xlu0 %v2591, 120
    %v2600 = vpop.permute.xlu0 %2599
    %2601 = vrot.lane.b32.xlu0 %v2592, 120
    %v2602 = vpop.permute.xlu0 %2601
    %2603 = vrot.lane.b32.xlu0 %v2591, 112
    %v2604 = vpop.permute.xlu0 %2603
    %2605 = vrot.lane.b32.xlu0 %v2592, 112
    %v2606 = vpop.permute.xlu0 %2605
    %2607 = vrot.lane.b32.xlu0 %v2591, 104
    %v2608 = vpop.permute.xlu0 %2607
    %2609 = vrot.lane.b32.xlu0 %v2592, 104
    %v2610 = vpop.permute.xlu0 %2609
    %2611 = vrot.lane.b32.xlu0 %v2591, 96
    %v2612 = vpop.permute.xlu0 %2611
    %2613 = vrot.lane.b32.xlu0 %v2592, 96
    %v2614 = vpop.permute.xlu0 %2613
    %2615 = vrot.lane.b32.xlu0 %v2591, 88
    %v2616 = vpop.permute.xlu0 %2615
    %2617 = vrot.lane.b32.xlu0 %v2592, 88
    %v2618 = vpop.permute.xlu0 %2617
    %2619 = vrot.lane.b32.xlu0 %v2591, 80
    %v2620 = vpop.permute.xlu0 %2619
    %2621 = vrot.lane.b32.xlu0 %v2592, 80
    %v2622 = vpop.permute.xlu0 %2621
    %2623 = vrot.lane.b32.xlu0 %v2591, 72
    %v2624 = vpop.permute.xlu0 %2623
    %2625 = vrot.lane.b32.xlu0 %v2592, 72
    %v2626 = vpop.permute.xlu0 %2625
    %2629 = vrot.lane.b32.xlu0 %v2593, 120
    %v2630 = vpop.permute.xlu0 %2629
    %2631 = vrot.lane.b32.xlu0 %v2594, 120
    %v2632 = vpop.permute.xlu0 %2631
    %2633 = vrot.lane.b32.xlu0 %v2593, 112
    %v2634 = vpop.permute.xlu0 %2633
    %2635 = vrot.lane.b32.xlu0 %v2594, 112
    %v2636 = vpop.permute.xlu0 %2635
    %2637 = vrot.lane.b32.xlu0 %v2593, 104
    %v2638 = vpop.permute.xlu0 %2637
    %2639 = vrot.lane.b32.xlu0 %v2594, 104
    %v2640 = vpop.permute.xlu0 %2639
    %2641 = vrot.lane.b32.xlu0 %v2593, 96
    %v2642 = vpop.permute.xlu0 %2641
    %2643 = vrot.lane.b32.xlu0 %v2594, 96
    %v2644 = vpop.permute.xlu0 %2643
    %2645 = vrot.lane.b32.xlu0 %v2593, 88
    %v2646 = vpop.permute.xlu0 %2645
    %2647 = vrot.lane.b32.xlu0 %v2594, 88
    %v2648 = vpop.permute.xlu0 %2647
    %2649 = vrot.lane.b32.xlu0 %v2593, 80
    %v2650 = vpop.permute.xlu0 %2649
    %2651 = vrot.lane.b32.xlu0 %v2594, 80
    %v2652 = vpop.permute.xlu0 %2651
    %2653 = vrot.lane.b32.xlu0 %v2593, 72
    %v2654 = vpop.permute.xlu0 %2653
    %2655 = vrot.lane.b32.xlu0 %v2594, 72
    %v2656 = vpop.permute.xlu0 %2655
    %2659 = vrot.lane.b32.xlu0 %v2595, 120
    %v2660 = vpop.permute.xlu0 %2659
    %2661 = vrot.lane.b32.xlu0 %v2596, 120
    %v2662 = vpop.permute.xlu0 %2661
    %2664 = vrot.lane.b32.xlu0 %v2595, 112
    %v2665 = vpop.permute.xlu0 %2664
    %2666 = vrot.lane.b32.xlu0 %v2596, 112
    %v2667 = vpop.permute.xlu0 %2666
    %2669 = vrot.lane.b32.xlu0 %v2595, 104
    %v2670 = vpop.permute.xlu0 %2669
    %2671 = vrot.lane.b32.xlu0 %v2596, 104
    %v2672 = vpop.permute.xlu0 %2671
    %2674 = vrot.lane.b32.xlu0 %v2595, 96
    %v2675 = vpop.permute.xlu0 %2674
    %2676 = vrot.lane.b32.xlu0 %v2596, 96
    %v2677 = vpop.permute.xlu0 %2676
    %2679 = vrot.lane.b32.xlu0 %v2595, 88
    %v2680 = vpop.permute.xlu0 %2679
    %2681 = vrot.lane.b32.xlu0 %v2596, 88
    %v2682 = vpop.permute.xlu0 %2681
    %2684 = vrot.lane.b32.xlu0 %v2595, 80
    %v2685 = vpop.permute.xlu0 %2684
    %2686 = vrot.lane.b32.xlu0 %v2596, 80
    %v2687 = vpop.permute.xlu0 %2686
    %2689 = vrot.lane.b32.xlu0 %v2595, 72
    %v2690 = vpop.permute.xlu0 %2689
    %2691 = vrot.lane.b32.xlu0 %v2596, 72
    %v2692 = vpop.permute.xlu0 %2691
    %v2695 = vsel %vm592, %v2591, 0
    %v2698 = vsel %vm592, %v2592, 0
    %v2701 = vsel %vm592, %v2593, 0
    %v2704 = vsel %vm592, %v2594, 0
    %2706 = vmatprep.subr.bf16.mxu0 0
    %2707 = vmatpush1.bf16.xpose.msra.mxu0 0
    %2708 = vmatprep.subr.bf16.mxu0 0
    %2709 = vmatpush1.bf16.xpose.msra.mxu0 0
    %2710 = vmatprep.subr.bf16.mxu0 0
    %2711 = vmatpush1.bf16.xpose.msra.mxu0 0
    %2712 = vmatprep.subr.bf16.mxu0 0
    %2713 = vmatpush1.bf16.xpose.msra.mxu0 0
    %2714 = vmatprep.subr.bf16.mxu0 0
    %2715 = vmatpush1.bf16.xpose.msra.mxu0 0
    %2716 = vmatprep.subr.bf16.mxu0 0
    %2717 = vmatpush1.bf16.xpose.msra.mxu0 0
    %2718 = vmatprep.subr.bf16.mxu0 0
    %2719 = vmatpush1.bf16.xpose.msra.mxu0 %v2704
    %2720 = vmatprep.subr.bf16.mxu0 0
    %2721 = vmatpush1.bf16.xpose.msra.mxu0 %v2701
    %2722 = vmatprep.subr.bf16.mxu0 0
    %2723 = vmatpush2.bf16.xpose.msra.mxu0 0
    %2724 = vmatprep.subr.bf16.mxu0 0
    %2725 = vmatpush2.bf16.xpose.msra.mxu0 0
    %2726 = vmatprep.subr.bf16.mxu0 0
    %2727 = vmatpush2.bf16.xpose.msra.mxu0 0
    %2728 = vmatprep.subr.bf16.mxu0 0
    %2729 = vmatpush2.bf16.xpose.msra.mxu0 0
    %2730 = vmatprep.subr.bf16.mxu0 0
    %2731 = vmatpush2.bf16.xpose.msra.mxu0 0
    %2732 = vmatprep.subr.bf16.mxu0 0
    %2733 = vmatpush2.bf16.xpose.msra.mxu0 0
    %2734 = vmatprep.subr.bf16.mxu0 0
    %2735 = vmatpush2.bf16.xpose.msra.mxu0 0
    %2736 = vmatprep.subr.bf16.mxu0 0
    %2737 = vmatpush2.bf16.xpose.msra.mxu0 0
    %2738 = vmatprep.mubr.bf16.mxu0 0
    %2739 = vmatmul.mubr.bf16.gmra.mxu0 %v2695
    %v2740 = vpop.f32.mrf.mxu0
    %v2741 = vadd.f32 %v216, %v2740
    %v2742 = vpop.f32.mrf.mxu0
    %v2743 = vpop.f32.mrf.mxu0
    %v2744 = vadd.f32 %v217, %v2743
    %v2745 = vpop.f32.mrf.mxu0
    %2746 = vmatprep.mubr.bf16.mxu0 0
    %2747 = vmatmul.mubr.bf16.gmra.mxu0 %v2698
    %v2748 = vpop.f32.mrf.mxu0
    %v2749 = vadd.f32 %v218, %v2748
    %v2750 = vpop.f32.mrf.mxu0
    %v2751 = vpop.f32.mrf.mxu0
    %v2752 = vpop.f32.mrf.mxu0
    %2753 = vdwg.mxu0
    %v2755 = vsel %vm592, %v2600, 0
    %v2758 = vsel %vm592, %v2602, 0
    %v2761 = vsel %vm592, %v2630, 0
    %v2764 = vsel %vm592, %v2632, 0
    %2766 = vmatprep.subr.bf16.mxu0 0
    %2767 = vmatpush1.bf16.xpose.msra.mxu0 0
    %2768 = vmatprep.subr.bf16.mxu0 0
    %2769 = vmatpush1.bf16.xpose.msra.mxu0 0
    %2770 = vmatprep.subr.bf16.mxu0 0
    %2771 = vmatpush1.bf16.xpose.msra.mxu0 0
    %2772 = vmatprep.subr.bf16.mxu0 0
    %2773 = vmatpush1.bf16.xpose.msra.mxu0 0
    %2774 = vmatprep.subr.bf16.mxu0 0
    %2775 = vmatpush1.bf16.xpose.msra.mxu0 0
    %2776 = vmatprep.subr.bf16.mxu0 0
    %2777 = vmatpush1.bf16.xpose.msra.mxu0 0
    %2778 = vmatprep.subr.bf16.mxu0 0
    %2779 = vmatpush1.bf16.xpose.msra.mxu0 %v2764
    %2780 = vmatprep.subr.bf16.mxu0 0
    %2781 = vmatpush1.bf16.xpose.msra.mxu0 %v2761
    %2782 = vmatprep.subr.bf16.mxu0 0
    %2783 = vmatpush2.bf16.xpose.msra.mxu0 0
    %2784 = vmatprep.subr.bf16.mxu0 0
    %2785 = vmatpush2.bf16.xpose.msra.mxu0 0
    %2786 = vmatprep.subr.bf16.mxu0 0
    %2787 = vmatpush2.bf16.xpose.msra.mxu0 0
    %2788 = vmatprep.subr.bf16.mxu0 0
    %2789 = vmatpush2.bf16.xpose.msra.mxu0 0
    %2790 = vmatprep.subr.bf16.mxu0 0
    %2791 = vmatpush2.bf16.xpose.msra.mxu0 0
    %2792 = vmatprep.subr.bf16.mxu0 0
    %2793 = vmatpush2.bf16.xpose.msra.mxu0 0
    %2794 = vmatprep.subr.bf16.mxu0 0
    %2795 = vmatpush2.bf16.xpose.msra.mxu0 0
    %2796 = vmatprep.subr.bf16.mxu0 0
    %2797 = vmatpush2.bf16.xpose.msra.mxu0 0
    %2798 = vmatprep.mubr.bf16.mxu0 0
    %2799 = vmatmul.mubr.bf16.gmra.mxu0 %v2755
    %v2800 = vpop.f32.mrf.mxu0
    %v2801 = vadd.f32 %v216, %v2800
    %v2802 = vpop.f32.mrf.mxu0
    %v2803 = vpop.f32.mrf.mxu0
    %v2804 = vadd.f32 %v217, %v2803
    %v2805 = vpop.f32.mrf.mxu0
    %2806 = vmatprep.mubr.bf16.mxu0 0
    %2807 = vmatmul.mubr.bf16.gmra.mxu0 %v2758
    %v2808 = vpop.f32.mrf.mxu0
    %v2809 = vadd.f32 %v218, %v2808
    %v2810 = vpop.f32.mrf.mxu0
    %v2811 = vpop.f32.mrf.mxu0
    %v2812 = vpop.f32.mrf.mxu0
    %2813 = vdwg.mxu0
    %v2815 = vsel %vm592, %v2604, 0
    %v2818 = vsel %vm592, %v2606, 0
    %v2821 = vsel %vm592, %v2634, 0
    %v2824 = vsel %vm592, %v2636, 0
    %2826 = vmatprep.subr.bf16.mxu0 0
    %2827 = vmatpush1.bf16.xpose.msra.mxu0 0
    %2828 = vmatprep.subr.bf16.mxu0 0
    %2829 = vmatpush1.bf16.xpose.msra.mxu0 0
    %2830 = vmatprep.subr.bf16.mxu0 0
    %2831 = vmatpush1.bf16.xpose.msra.mxu0 0
    %2832 = vmatprep.subr.bf16.mxu0 0
    %2833 = vmatpush1.bf16.xpose.msra.mxu0 0
    %2834 = vmatprep.subr.bf16.mxu0 0
    %2835 = vmatpush1.bf16.xpose.msra.mxu0 0
    %2836 = vmatprep.subr.bf16.mxu0 0
    %2837 = vmatpush1.bf16.xpose.msra.mxu0 0
    %2838 = vmatprep.subr.bf16.mxu0 0
    %2839 = vmatpush1.bf16.xpose.msra.mxu0 %v2824
    %2840 = vmatprep.subr.bf16.mxu0 0
    %2841 = vmatpush1.bf16.xpose.msra.mxu0 %v2821
    %2842 = vmatprep.subr.bf16.mxu0 0
    %2843 = vmatpush2.bf16.xpose.msra.mxu0 0
    %2844 = vmatprep.subr.bf16.mxu0 0
    %2845 = vmatpush2.bf16.xpose.msra.mxu0 0
    %2846 = vmatprep.subr.bf16.mxu0 0
    %2847 = vmatpush2.bf16.xpose.msra.mxu0 0
    %2848 = vmatprep.subr.bf16.mxu0 0
    %2849 = vmatpush2.bf16.xpose.msra.mxu0 0
    %2850 = vmatprep.subr.bf16.mxu0 0
    %2851 = vmatpush2.bf16.xpose.msra.mxu0 0
    %2852 = vmatprep.subr.bf16.mxu0 0
    %2853 = vmatpush2.bf16.xpose.msra.mxu0 0
    %2854 = vmatprep.subr.bf16.mxu0 0
    %2855 = vmatpush2.bf16.xpose.msra.mxu0 0
    %2856 = vmatprep.subr.bf16.mxu0 0
    %2857 = vmatpush2.bf16.xpose.msra.mxu0 0
    %2858 = vmatprep.mubr.bf16.mxu0 0
    %2859 = vmatmul.mubr.bf16.gmra.mxu0 %v2815
    %v2860 = vpop.f32.mrf.mxu0
    %v2861 = vadd.f32 %v216, %v2860
    %v2862 = vpop.f32.mrf.mxu0
    %v2863 = vpop.f32.mrf.mxu0
    %v2864 = vadd.f32 %v217, %v2863
    %v2865 = vpop.f32.mrf.mxu0
    %2866 = vmatprep.mubr.bf16.mxu0 0
    %2867 = vmatmul.mubr.bf16.gmra.mxu0 %v2818
    %v2868 = vpop.f32.mrf.mxu0
    %v2869 = vadd.f32 %v218, %v2868
    %v2870 = vpop.f32.mrf.mxu0
    %v2871 = vpop.f32.mrf.mxu0
    %v2872 = vpop.f32.mrf.mxu0
    %2873 = vdwg.mxu0
    %v2875 = vsel %vm592, %v2608, 0
    %v2878 = vsel %vm592, %v2610, 0
    %v2881 = vsel %vm592, %v2638, 0
    %v2884 = vsel %vm592, %v2640, 0
    %2886 = vmatprep.subr.bf16.mxu0 0
    %2887 = vmatpush1.bf16.xpose.msra.mxu0 0
    %2888 = vmatprep.subr.bf16.mxu0 0
    %2889 = vmatpush1.bf16.xpose.msra.mxu0 0
    %2890 = vmatprep.subr.bf16.mxu0 0
    %2891 = vmatpush1.bf16.xpose.msra.mxu0 0
    %2892 = vmatprep.subr.bf16.mxu0 0
    %2893 = vmatpush1.bf16.xpose.msra.mxu0 0
    %2894 = vmatprep.subr.bf16.mxu0 0
    %2895 = vmatpush1.bf16.xpose.msra.mxu0 0
    %2896 = vmatprep.subr.bf16.mxu0 0
    %2897 = vmatpush1.bf16.xpose.msra.mxu0 0
    %2898 = vmatprep.subr.bf16.mxu0 0
    %2899 = vmatpush1.bf16.xpose.msra.mxu0 %v2884
    %2900 = vmatprep.subr.bf16.mxu0 0
    %2901 = vmatpush1.bf16.xpose.msra.mxu0 %v2881
    %2902 = vmatprep.subr.bf16.mxu0 0
    %2903 = vmatpush2.bf16.xpose.msra.mxu0 0
    %2904 = vmatprep.subr.bf16.mxu0 0
    %2905 = vmatpush2.bf16.xpose.msra.mxu0 0
    %2906 = vmatprep.subr.bf16.mxu0 0
    %2907 = vmatpush2.bf16.xpose.msra.mxu0 0
    %2908 = vmatprep.subr.bf16.mxu0 0
    %2909 = vmatpush2.bf16.xpose.msra.mxu0 0
    %2910 = vmatprep.subr.bf16.mxu0 0
    %2911 = vmatpush2.bf16.xpose.msra.mxu0 0
    %2912 = vmatprep.subr.bf16.mxu0 0
    %2913 = vmatpush2.bf16.xpose.msra.mxu0 0
    %2914 = vmatprep.subr.bf16.mxu0 0
    %2915 = vmatpush2.bf16.xpose.msra.mxu0 0
    %2916 = vmatprep.subr.bf16.mxu0 0
    %2917 = vmatpush2.bf16.xpose.msra.mxu0 0
    %2918 = vmatprep.mubr.bf16.mxu0 0
    %2919 = vmatmul.mubr.bf16.gmra.mxu0 %v2875
    %v2920 = vpop.f32.mrf.mxu0
    %v2921 = vadd.f32 %v216, %v2920
    %v2922 = vpop.f32.mrf.mxu0
    %v2923 = vpop.f32.mrf.mxu0
    %v2924 = vadd.f32 %v217, %v2923
    %v2925 = vpop.f32.mrf.mxu0
    %2926 = vmatprep.mubr.bf16.mxu0 0
    %2927 = vmatmul.mubr.bf16.gmra.mxu0 %v2878
    %v2928 = vpop.f32.mrf.mxu0
    %v2929 = vadd.f32 %v218, %v2928
    %v2930 = vpop.f32.mrf.mxu0
    %v2931 = vpop.f32.mrf.mxu0
    %v2932 = vpop.f32.mrf.mxu0
    %2933 = vdwg.mxu0
    %v2935 = vsel %vm592, %v2612, 0
    %v2938 = vsel %vm592, %v2614, 0
    %v2941 = vsel %vm592, %v2642, 0
    %v2944 = vsel %vm592, %v2644, 0
    %2946 = vmatprep.subr.bf16.mxu0 0
    %2947 = vmatpush1.bf16.xpose.msra.mxu0 0
    %2948 = vmatprep.subr.bf16.mxu0 0
    %2949 = vmatpush1.bf16.xpose.msra.mxu0 0
    %2950 = vmatprep.subr.bf16.mxu0 0
    %2951 = vmatpush1.bf16.xpose.msra.mxu0 0
    %2952 = vmatprep.subr.bf16.mxu0 0
    %2953 = vmatpush1.bf16.xpose.msra.mxu0 0
    %2954 = vmatprep.subr.bf16.mxu0 0
    %2955 = vmatpush1.bf16.xpose.msra.mxu0 0
    %2956 = vmatprep.subr.bf16.mxu0 0
    %2957 = vmatpush1.bf16.xpose.msra.mxu0 0
    %2958 = vmatprep.subr.bf16.mxu0 0
    %2959 = vmatpush1.bf16.xpose.msra.mxu0 %v2944
    %2960 = vmatprep.subr.bf16.mxu0 0
    %2961 = vmatpush1.bf16.xpose.msra.mxu0 %v2941
    %2962 = vmatprep.subr.bf16.mxu0 0
    %2963 = vmatpush2.bf16.xpose.msra.mxu0 0
    %2964 = vmatprep.subr.bf16.mxu0 0
    %2965 = vmatpush2.bf16.xpose.msra.mxu0 0
    %2966 = vmatprep.subr.bf16.mxu0 0
    %2967 = vmatpush2.bf16.xpose.msra.mxu0 0
    %2968 = vmatprep.subr.bf16.mxu0 0
    %2969 = vmatpush2.bf16.xpose.msra.mxu0 0
    %2970 = vmatprep.subr.bf16.mxu0 0
    %2971 = vmatpush2.bf16.xpose.msra.mxu0 0
    %2972 = vmatprep.subr.bf16.mxu0 0
    %2973 = vmatpush2.bf16.xpose.msra.mxu0 0
    %2974 = vmatprep.subr.bf16.mxu0 0
    %2975 = vmatpush2.bf16.xpose.msra.mxu0 0
    %2976 = vmatprep.subr.bf16.mxu0 0
    %2977 = vmatpush2.bf16.xpose.msra.mxu0 0
    %2978 = vmatprep.mubr.bf16.mxu0 0
    %2979 = vmatmul.mubr.bf16.gmra.mxu0 %v2935
    %v2980 = vpop.f32.mrf.mxu0
    %v2981 = vadd.f32 %v216, %v2980
    %v2982 = vpop.f32.mrf.mxu0
    %v2983 = vpop.f32.mrf.mxu0
    %v2984 = vadd.f32 %v217, %v2983
    %v2985 = vpop.f32.mrf.mxu0
    %2986 = vmatprep.mubr.bf16.mxu0 0
    %2987 = vmatmul.mubr.bf16.gmra.mxu0 %v2938
    %v2988 = vpop.f32.mrf.mxu0
    %v2989 = vadd.f32 %v218, %v2988
    %v2990 = vpop.f32.mrf.mxu0
    %v2991 = vpop.f32.mrf.mxu0
    %v2992 = vpop.f32.mrf.mxu0
    %2993 = vdwg.mxu0
    %v2995 = vsel %vm592, %v2616, 0
    %v2998 = vsel %vm592, %v2618, 0
    %v3001 = vsel %vm592, %v2646, 0
    %v3004 = vsel %vm592, %v2648, 0
    %3006 = vmatprep.subr.bf16.mxu0 0
    %3007 = vmatpush1.bf16.xpose.msra.mxu0 0
    %3008 = vmatprep.subr.bf16.mxu0 0
    %3009 = vmatpush1.bf16.xpose.msra.mxu0 0
    %3010 = vmatprep.subr.bf16.mxu0 0
    %3011 = vmatpush1.bf16.xpose.msra.mxu0 0
    %3012 = vmatprep.subr.bf16.mxu0 0
    %3013 = vmatpush1.bf16.xpose.msra.mxu0 0
    %3014 = vmatprep.subr.bf16.mxu0 0
    %3015 = vmatpush1.bf16.xpose.msra.mxu0 0
    %3016 = vmatprep.subr.bf16.mxu0 0
    %3017 = vmatpush1.bf16.xpose.msra.mxu0 0
    %3018 = vmatprep.subr.bf16.mxu0 0
    %3019 = vmatpush1.bf16.xpose.msra.mxu0 %v3004
    %3020 = vmatprep.subr.bf16.mxu0 0
    %3021 = vmatpush1.bf16.xpose.msra.mxu0 %v3001
    %3022 = vmatprep.subr.bf16.mxu0 0
    %3023 = vmatpush2.bf16.xpose.msra.mxu0 0
    %3024 = vmatprep.subr.bf16.mxu0 0
    %3025 = vmatpush2.bf16.xpose.msra.mxu0 0
    %3026 = vmatprep.subr.bf16.mxu0 0
    %3027 = vmatpush2.bf16.xpose.msra.mxu0 0
    %3028 = vmatprep.subr.bf16.mxu0 0
    %3029 = vmatpush2.bf16.xpose.msra.mxu0 0
    %3030 = vmatprep.subr.bf16.mxu0 0
    %3031 = vmatpush2.bf16.xpose.msra.mxu0 0
    %3032 = vmatprep.subr.bf16.mxu0 0
    %3033 = vmatpush2.bf16.xpose.msra.mxu0 0
    %3034 = vmatprep.subr.bf16.mxu0 0
    %3035 = vmatpush2.bf16.xpose.msra.mxu0 0
    %3036 = vmatprep.subr.bf16.mxu0 0
    %3037 = vmatpush2.bf16.xpose.msra.mxu0 0
    %3038 = vmatprep.mubr.bf16.mxu0 0
    %3039 = vmatmul.mubr.bf16.gmra.mxu0 %v2995
    %v3040 = vpop.f32.mrf.mxu0
    %v3041 = vadd.f32 %v216, %v3040
    %v3042 = vpop.f32.mrf.mxu0
    %v3043 = vpop.f32.mrf.mxu0
    %v3044 = vadd.f32 %v217, %v3043
    %v3045 = vpop.f32.mrf.mxu0
    %3046 = vmatprep.mubr.bf16.mxu0 0
    %3047 = vmatmul.mubr.bf16.gmra.mxu0 %v2998
    %v3048 = vpop.f32.mrf.mxu0
    %v3049 = vadd.f32 %v218, %v3048
    %v3050 = vpop.f32.mrf.mxu0
    %v3051 = vpop.f32.mrf.mxu0
    %v3052 = vpop.f32.mrf.mxu0
    %3053 = vdwg.mxu0
    %v3055 = vsel %vm592, %v2620, 0
    %v3058 = vsel %vm592, %v2622, 0
    %v3061 = vsel %vm592, %v2650, 0
    %v3064 = vsel %vm592, %v2652, 0
    %3066 = vmatprep.subr.bf16.mxu0 0
    %3067 = vmatpush1.bf16.xpose.msra.mxu0 0
    %3068 = vmatprep.subr.bf16.mxu0 0
    %3069 = vmatpush1.bf16.xpose.msra.mxu0 0
    %3070 = vmatprep.subr.bf16.mxu0 0
    %3071 = vmatpush1.bf16.xpose.msra.mxu0 0
    %3072 = vmatprep.subr.bf16.mxu0 0
    %3073 = vmatpush1.bf16.xpose.msra.mxu0 0
    %3074 = vmatprep.subr.bf16.mxu0 0
    %3075 = vmatpush1.bf16.xpose.msra.mxu0 0
    %3076 = vmatprep.subr.bf16.mxu0 0
    %3077 = vmatpush1.bf16.xpose.msra.mxu0 0
    %3078 = vmatprep.subr.bf16.mxu0 0
    %3079 = vmatpush1.bf16.xpose.msra.mxu0 %v3064
    %3080 = vmatprep.subr.bf16.mxu0 0
    %3081 = vmatpush1.bf16.xpose.msra.mxu0 %v3061
    %3082 = vmatprep.subr.bf16.mxu0 0
    %3083 = vmatpush2.bf16.xpose.msra.mxu0 0
    %3084 = vmatprep.subr.bf16.mxu0 0
    %3085 = vmatpush2.bf16.xpose.msra.mxu0 0
    %3086 = vmatprep.subr.bf16.mxu0 0
    %3087 = vmatpush2.bf16.xpose.msra.mxu0 0
    %3088 = vmatprep.subr.bf16.mxu0 0
    %3089 = vmatpush2.bf16.xpose.msra.mxu0 0
    %3090 = vmatprep.subr.bf16.mxu0 0
    %3091 = vmatpush2.bf16.xpose.msra.mxu0 0
    %3092 = vmatprep.subr.bf16.mxu0 0
    %3093 = vmatpush2.bf16.xpose.msra.mxu0 0
    %3094 = vmatprep.subr.bf16.mxu0 0
    %3095 = vmatpush2.bf16.xpose.msra.mxu0 0
    %3096 = vmatprep.subr.bf16.mxu0 0
    %3097 = vmatpush2.bf16.xpose.msra.mxu0 0
    %3098 = vmatprep.mubr.bf16.mxu0 0
    %3099 = vmatmul.mubr.bf16.gmra.mxu0 %v3055
    %v3100 = vpop.f32.mrf.mxu0
    %v3101 = vadd.f32 %v216, %v3100
    %v3102 = vpop.f32.mrf.mxu0
    %v3103 = vpop.f32.mrf.mxu0
    %v3104 = vadd.f32 %v217, %v3103
    %v3105 = vpop.f32.mrf.mxu0
    %3106 = vmatprep.mubr.bf16.mxu0 0
    %3107 = vmatmul.mubr.bf16.gmra.mxu0 %v3058
    %v3108 = vpop.f32.mrf.mxu0
    %v3109 = vadd.f32 %v218, %v3108
    %v3110 = vpop.f32.mrf.mxu0
    %v3111 = vpop.f32.mrf.mxu0
    %v3112 = vpop.f32.mrf.mxu0
    %3113 = vdwg.mxu0
    %v3115 = vsel %vm592, %v2624, 0
    %v3118 = vsel %vm592, %v2626, 0
    %v3121 = vsel %vm592, %v2654, 0
    %v3124 = vsel %vm592, %v2656, 0
    %3126 = vmatprep.subr.bf16.mxu0 0
    %3127 = vmatpush1.bf16.xpose.msra.mxu0 0
    %3128 = vmatprep.subr.bf16.mxu0 0
    %3129 = vmatpush1.bf16.xpose.msra.mxu0 0
    %3130 = vmatprep.subr.bf16.mxu0 0
    %3131 = vmatpush1.bf16.xpose.msra.mxu0 0
    %3132 = vmatprep.subr.bf16.mxu0 0
    %3133 = vmatpush1.bf16.xpose.msra.mxu0 0
    %3134 = vmatprep.subr.bf16.mxu0 0
    %3135 = vmatpush1.bf16.xpose.msra.mxu0 0
    %3136 = vmatprep.subr.bf16.mxu0 0
    %3137 = vmatpush1.bf16.xpose.msra.mxu0 0
    %3138 = vmatprep.subr.bf16.mxu0 0
    %3139 = vmatpush1.bf16.xpose.msra.mxu0 %v3124
    %3140 = vmatprep.subr.bf16.mxu0 0
    %3141 = vmatpush1.bf16.xpose.msra.mxu0 %v3121
    %3142 = vmatprep.subr.bf16.mxu0 0
    %3143 = vmatpush2.bf16.xpose.msra.mxu0 0
    %3144 = vmatprep.subr.bf16.mxu0 0
    %3145 = vmatpush2.bf16.xpose.msra.mxu0 0
    %3146 = vmatprep.subr.bf16.mxu0 0
    %3147 = vmatpush2.bf16.xpose.msra.mxu0 0
    %3148 = vmatprep.subr.bf16.mxu0 0
    %3149 = vmatpush2.bf16.xpose.msra.mxu0 0
    %3150 = vmatprep.subr.bf16.mxu0 0
    %3151 = vmatpush2.bf16.xpose.msra.mxu0 0
    %3152 = vmatprep.subr.bf16.mxu0 0
    %3153 = vmatpush2.bf16.xpose.msra.mxu0 0
    %3154 = vmatprep.subr.bf16.mxu0 0
    %3155 = vmatpush2.bf16.xpose.msra.mxu0 0
    %3156 = vmatprep.subr.bf16.mxu0 0
    %3157 = vmatpush2.bf16.xpose.msra.mxu0 0
    %3158 = vmatprep.mubr.bf16.mxu0 0
    %3159 = vmatmul.mubr.bf16.gmra.mxu0 %v3115
    %v3160 = vpop.f32.mrf.mxu0
    %v3161 = vadd.f32 %v216, %v3160
    %v3162 = vpop.f32.mrf.mxu0
    %v3163 = vpop.f32.mrf.mxu0
    %v3164 = vadd.f32 %v217, %v3163
    %v3165 = vpop.f32.mrf.mxu0
    %3166 = vmatprep.mubr.bf16.mxu0 0
    %3167 = vmatmul.mubr.bf16.gmra.mxu0 %v3118
    %v3168 = vpop.f32.mrf.mxu0
    %v3169 = vadd.f32 %v218, %v3168
    %v3170 = vpop.f32.mrf.mxu0
    %v3171 = vpop.f32.mrf.mxu0
    %v3172 = vpop.f32.mrf.mxu0
    %3173 = vdwg.mxu0
    %v3174 = vsel %vm1073, %v2741, -inf
    %3175 = vmax.xlane.f32.xlu0 %v3174
    %v3176 = vpop.xlane.xlu0 %3175
    %v3177 = vsel %vm1073, %v2744, -inf
    %3178 = vmax.xlane.f32.xlu0 %v3177
    %v3179 = vpop.xlane.xlu0 %3178
    %v3180 = vsel %vm1080, %v2749, -inf
    %3181 = vmax.xlane.f32.xlu0 %v3180
    %v3182 = vpop.xlane.xlu0 %3181
    %v3183 = vsel %vm1073, %v2801, -inf
    %3184 = vmax.xlane.f32.xlu0 %v3183
    %v3185 = vpop.xlane.xlu0 %3184
    %v3186 = vsel %vm1073, %v2804, -inf
    %3187 = vmax.xlane.f32.xlu0 %v3186
    %v3188 = vpop.xlane.xlu0 %3187
    %v3189 = vsel %vm1080, %v2809, -inf
    %3190 = vmax.xlane.f32.xlu0 %v3189
    %v3191 = vpop.xlane.xlu0 %3190
    %v3192 = vsel %vm1073, %v2861, -inf
    %3193 = vmax.xlane.f32.xlu0 %v3192
    %v3194 = vpop.xlane.xlu0 %3193
    %v3195 = vsel %vm1073, %v2864, -inf
    %3196 = vmax.xlane.f32.xlu0 %v3195
    %v3197 = vpop.xlane.xlu0 %3196
    %v3198 = vsel %vm1080, %v2869, -inf
    %3199 = vmax.xlane.f32.xlu0 %v3198
    %v3200 = vpop.xlane.xlu0 %3199
    %v3201 = vsel %vm1073, %v2921, -inf
    %3202 = vmax.xlane.f32.xlu0 %v3201
    %v3203 = vpop.xlane.xlu0 %3202
    %v3204 = vsel %vm1073, %v2924, -inf
    %3205 = vmax.xlane.f32.xlu0 %v3204
    %v3206 = vpop.xlane.xlu0 %3205
    %v3207 = vsel %vm1080, %v2929, -inf
    %3208 = vmax.xlane.f32.xlu0 %v3207
    %v3209 = vpop.xlane.xlu0 %3208
    %v3210 = vsel %vm1073, %v2981, -inf
    %3211 = vmax.xlane.f32.xlu0 %v3210
    %v3212 = vpop.xlane.xlu0 %3211
    %v3213 = vsel %vm1073, %v2984, -inf
    %3214 = vmax.xlane.f32.xlu0 %v3213
    %v3215 = vpop.xlane.xlu0 %3214
    %v3216 = vsel %vm1080, %v2989, -inf
    %3217 = vmax.xlane.f32.xlu0 %v3216
    %v3218 = vpop.xlane.xlu0 %3217
    %v3219 = vsel %vm1073, %v3041, -inf
    %3220 = vmax.xlane.f32.xlu0 %v3219
    %v3221 = vpop.xlane.xlu0 %3220
    %v3222 = vsel %vm1073, %v3044, -inf
    %3223 = vmax.xlane.f32.xlu0 %v3222
    %v3224 = vpop.xlane.xlu0 %3223
    %v3225 = vsel %vm1080, %v3049, -inf
    %3226 = vmax.xlane.f32.xlu0 %v3225
    %v3227 = vpop.xlane.xlu0 %3226
    %v3228 = vsel %vm1073, %v3101, -inf
    %3229 = vmax.xlane.f32.xlu0 %v3228
    %v3230 = vpop.xlane.xlu0 %3229
    %v3231 = vsel %vm1073, %v3104, -inf
    %3232 = vmax.xlane.f32.xlu0 %v3231
    %v3233 = vpop.xlane.xlu0 %3232
    %v3234 = vsel %vm1080, %v3109, -inf
    %3235 = vmax.xlane.f32.xlu0 %v3234
    %v3236 = vpop.xlane.xlu0 %3235
    %v3237 = vsel %vm1073, %v3161, -inf
    %3238 = vmax.xlane.f32.xlu0 %v3237
    %v3239 = vpop.xlane.xlu0 %3238
    %v3240 = vsel %vm1073, %v3164, -inf
    %3241 = vmax.xlane.f32.xlu0 %v3240
    %v3242 = vpop.xlane.xlu0 %3241
    %v3243 = vsel %vm1080, %v3169, -inf
    %3244 = vmax.xlane.f32.xlu0 %v3243
    %v3245 = vpop.xlane.xlu0 %3244
    %v3246 = vsub.f32 %v2741, %v3176
    %v3247 = vsub.f32 %v2744, %v3179
    %v3248 = vsub.f32 %v2749, %v3182
    %v3249 = vsub.f32 %v2801, %v3185
    %v3250 = vsub.f32 %v2804, %v3188
    %v3251 = vsub.f32 %v2809, %v3191
    %v3252 = vsub.f32 %v2861, %v3194
    %v3253 = vsub.f32 %v2864, %v3197
    %v3254 = vsub.f32 %v2869, %v3200
    %v3255 = vsub.f32 %v2921, %v3203
    %v3256 = vsub.f32 %v2924, %v3206
    %v3257 = vsub.f32 %v2929, %v3209
    %v3258 = vsub.f32 %v2981, %v3212
    %v3259 = vsub.f32 %v2984, %v3215
    %v3260 = vsub.f32 %v2989, %v3218
    %v3261 = vsub.f32 %v3041, %v3221
    %v3262 = vsub.f32 %v3044, %v3224
    %v3263 = vsub.f32 %v3049, %v3227
    %v3264 = vsub.f32 %v3101, %v3230
    %v3265 = vsub.f32 %v3104, %v3233
    %v3266 = vsub.f32 %v3109, %v3236
    %v3267 = vsub.f32 %v3161, %v3239
    %v3268 = vsub.f32 %v3164, %v3242
    %v3269 = vsub.f32 %v3169, %v3245
    %v3270 = vmul.f32 %v3246, 1.442695
    %v3271 = vpow.pop %v3270
    %v3272 = vmul.f32 %v3247, 1.442695
    %v3273 = vpow.pop %v3272
    %v3274 = vmul.f32 %v3248, 1.442695
    %v3275 = vpow.pop %v3274
    %v3276 = vmul.f32 %v3249, 1.442695
    %v3277 = vpow.pop %v3276
    %v3278 = vmul.f32 %v3250, 1.442695
    %v3279 = vpow.pop %v3278
    %v3280 = vmul.f32 %v3251, 1.442695
    %v3281 = vpow.pop %v3280
    %v3282 = vmul.f32 %v3252, 1.442695
    %v3283 = vpow.pop %v3282
    %v3284 = vmul.f32 %v3253, 1.442695
    %v3285 = vpow.pop %v3284
    %v3286 = vmul.f32 %v3254, 1.442695
    %v3287 = vpow.pop %v3286
    %v3288 = vmul.f32 %v3255, 1.442695
    %v3289 = vpow.pop %v3288
    %v3290 = vmul.f32 %v3256, 1.442695
    %v3291 = vpow.pop %v3290
    %v3292 = vmul.f32 %v3257, 1.442695
    %v3293 = vpow.pop %v3292
    %v3294 = vmul.f32 %v3258, 1.442695
    %v3295 = vpow.pop %v3294
    %v3296 = vmul.f32 %v3259, 1.442695
    %v3297 = vpow.pop %v3296
    %v3298 = vmul.f32 %v3260, 1.442695
    %v3299 = vpow.pop %v3298
    %v3300 = vmul.f32 %v3261, 1.442695
    %v3301 = vpow.pop %v3300
    %v3302 = vmul.f32 %v3262, 1.442695
    %v3303 = vpow.pop %v3302
    %v3304 = vmul.f32 %v3263, 1.442695
    %v3305 = vpow.pop %v3304
    %v3306 = vmul.f32 %v3264, 1.442695
    %v3307 = vpow.pop %v3306
    %v3308 = vmul.f32 %v3265, 1.442695
    %v3309 = vpow.pop %v3308
    %v3310 = vmul.f32 %v3266, 1.442695
    %v3311 = vpow.pop %v3310
    %v3312 = vmul.f32 %v3267, 1.442695
    %v3313 = vpow.pop %v3312
    %v3314 = vmul.f32 %v3268, 1.442695
    %v3315 = vpow.pop %v3314
    %v3316 = vmul.f32 %v3269, 1.442695
    %v3317 = vpow.pop %v3316
    %v3318 = vsel %vm1073, %v3271, 0.0
    %3319 = vadd.xlane.f32.xlu0 %v3318
    %v3320 = vpop.xlane.xlu0 %3319
    %v3321 = vsel %vm1073, %v3273, 0.0
    %3322 = vadd.xlane.f32.xlu0 %v3321
    %v3323 = vpop.xlane.xlu0 %3322
    %v3324 = vsel %vm1080, %v3275, 0.0
    %3325 = vadd.xlane.f32.xlu0 %v3324
    %v3326 = vpop.xlane.xlu0 %3325
    %v3327 = vsel %vm1073, %v3277, 0.0
    %3328 = vadd.xlane.f32.xlu0 %v3327
    %v3329 = vpop.xlane.xlu0 %3328
    %v3330 = vsel %vm1073, %v3279, 0.0
    %3331 = vadd.xlane.f32.xlu0 %v3330
    %v3332 = vpop.xlane.xlu0 %3331
    %v3333 = vsel %vm1080, %v3281, 0.0
    %3334 = vadd.xlane.f32.xlu0 %v3333
    %v3335 = vpop.xlane.xlu0 %3334
    %v3336 = vsel %vm1073, %v3283, 0.0
    %3337 = vadd.xlane.f32.xlu0 %v3336
    %v3338 = vpop.xlane.xlu0 %3337
    %v3339 = vsel %vm1073, %v3285, 0.0
    %3340 = vadd.xlane.f32.xlu0 %v3339
    %v3341 = vpop.xlane.xlu0 %3340
    %v3342 = vsel %vm1080, %v3287, 0.0
    %3343 = vadd.xlane.f32.xlu0 %v3342
    %v3344 = vpop.xlane.xlu0 %3343
    %v3345 = vsel %vm1073, %v3289, 0.0
    %3346 = vadd.xlane.f32.xlu0 %v3345
    %v3347 = vpop.xlane.xlu0 %3346
    %v3348 = vsel %vm1073, %v3291, 0.0
    %3349 = vadd.xlane.f32.xlu0 %v3348
    %v3350 = vpop.xlane.xlu0 %3349
    %v3351 = vsel %vm1080, %v3293, 0.0
    %3352 = vadd.xlane.f32.xlu0 %v3351
    %v3353 = vpop.xlane.xlu0 %3352
    %v3354 = vsel %vm1073, %v3295, 0.0
    %3355 = vadd.xlane.f32.xlu0 %v3354
    %v3356 = vpop.xlane.xlu0 %3355
    %v3357 = vsel %vm1073, %v3297, 0.0
    %3358 = vadd.xlane.f32.xlu0 %v3357
    %v3359 = vpop.xlane.xlu0 %3358
    %v3360 = vsel %vm1080, %v3299, 0.0
    %3361 = vadd.xlane.f32.xlu0 %v3360
    %v3362 = vpop.xlane.xlu0 %3361
    %v3363 = vsel %vm1073, %v3301, 0.0
    %3364 = vadd.xlane.f32.xlu0 %v3363
    %v3365 = vpop.xlane.xlu0 %3364
    %v3366 = vsel %vm1073, %v3303, 0.0
    %3367 = vadd.xlane.f32.xlu0 %v3366
    %v3368 = vpop.xlane.xlu0 %3367
    %v3369 = vsel %vm1080, %v3305, 0.0
    %3370 = vadd.xlane.f32.xlu0 %v3369
    %v3371 = vpop.xlane.xlu0 %3370
    %v3372 = vsel %vm1073, %v3307, 0.0
    %3373 = vadd.xlane.f32.xlu0 %v3372
    %v3374 = vpop.xlane.xlu0 %3373
    %v3375 = vsel %vm1073, %v3309, 0.0
    %3376 = vadd.xlane.f32.xlu0 %v3375
    %v3377 = vpop.xlane.xlu0 %3376
    %v3378 = vsel %vm1080, %v3311, 0.0
    %3379 = vadd.xlane.f32.xlu0 %v3378
    %v3380 = vpop.xlane.xlu0 %3379
    %v3381 = vsel %vm1073, %v3313, 0.0
    %3382 = vadd.xlane.f32.xlu0 %v3381
    %v3383 = vpop.xlane.xlu0 %3382
    %v3384 = vsel %vm1073, %v3315, 0.0
    %3385 = vadd.xlane.f32.xlu0 %v3384
    %v3386 = vpop.xlane.xlu0 %3385
    %v3387 = vsel %vm1080, %v3317, 0.0
    %3388 = vadd.xlane.f32.xlu0 %v3387
    %v3389 = vpop.xlane.xlu0 %3388
    %v3390 = vrcp.pop %v3320
    %v3391 = vrcp.pop %v3323
    %v3392 = vrcp.pop %v3326
    %v3393 = vrcp.pop %v3329
    %v3394 = vrcp.pop %v3332
    %v3395 = vrcp.pop %v3335
    %v3396 = vrcp.pop %v3338
    %v3397 = vrcp.pop %v3341
    %v3398 = vrcp.pop %v3344
    %v3399 = vrcp.pop %v3347
    %v3400 = vrcp.pop %v3350
    %v3401 = vrcp.pop %v3353
    %v3402 = vrcp.pop %v3356
    %v3403 = vrcp.pop %v3359
    %v3404 = vrcp.pop %v3362
    %v3405 = vrcp.pop %v3365
    %v3406 = vrcp.pop %v3368
    %v3407 = vrcp.pop %v3371
    %v3408 = vrcp.pop %v3374
    %v3409 = vrcp.pop %v3377
    %v3410 = vrcp.pop %v3380
    %v3411 = vrcp.pop %v3383
    %v3412 = vrcp.pop %v3386
    %v3413 = vrcp.pop %v3389
    %v3414 = vmul.f32 %v3271, %v3390
    %v3415 = vmul.f32 %v3273, %v3391
    %v3416 = vmul.f32 %v3275, %v3392
    %v3417 = vmul.f32 %v3277, %v3393
    %v3418 = vmul.f32 %v3279, %v3394
    %v3419 = vmul.f32 %v3281, %v3395
    %v3420 = vmul.f32 %v3283, %v3396
    %v3421 = vmul.f32 %v3285, %v3397
    %v3422 = vmul.f32 %v3287, %v3398
    %v3423 = vmul.f32 %v3289, %v3399
    %v3424 = vmul.f32 %v3291, %v3400
    %v3425 = vmul.f32 %v3293, %v3401
    %v3426 = vmul.f32 %v3295, %v3402
    %v3427 = vmul.f32 %v3297, %v3403
    %v3428 = vmul.f32 %v3299, %v3404
    %v3429 = vmul.f32 %v3301, %v3405
    %v3430 = vmul.f32 %v3303, %v3406
    %v3431 = vmul.f32 %v3305, %v3407
    %v3432 = vmul.f32 %v3307, %v3408
    %v3433 = vmul.f32 %v3309, %v3409
    %v3434 = vmul.f32 %v3311, %v3410
    %v3435 = vmul.f32 %v3313, %v3411
    %v3436 = vmul.f32 %v3315, %v3412
    %v3437 = vmul.f32 %v3317, %v3413
    %v3438 = vpack.c.bf16 %v3415, %v3414
    %v3439 = vpack.c.bf16 %v3416, %v3416
    %v3440 = vpack.c.bf16 %v3418, %v3417
    %v3441 = vpack.c.bf16 %v3419, %v3419
    %v3442 = vpack.c.bf16 %v3421, %v3420
    %v3443 = vpack.c.bf16 %v3422, %v3422
    %v3444 = vpack.c.bf16 %v3424, %v3423
    %v3445 = vpack.c.bf16 %v3425, %v3425
    %v3446 = vpack.c.bf16 %v3427, %v3426
    %v3447 = vpack.c.bf16 %v3428, %v3428
    %v3448 = vpack.c.bf16 %v3430, %v3429
    %v3449 = vpack.c.bf16 %v3431, %v3431
    %v3450 = vpack.c.bf16 %v3433, %v3432
    %v3451 = vpack.c.bf16 %v3434, %v3434
    %v3452 = vpack.c.bf16 %v3436, %v3435
    %v3453 = vpack.c.bf16 %v3437, %v3437
    %v3455 = vsel %vm1073, %v3438, 0
    %v3458 = vsel %vm1073, %v3439, 0
    %v3461 = vsel %vm1361, %v2596, 0
    %3463 = vmatprep.subr.bf16.mxu0 0
    %3464 = vmatpush1.bf16.msra.mxu0 0
    %3465 = vmatprep.subr.bf16.mxu0 0
    %3466 = vmatpush1.bf16.msra.mxu0 0
    %3467 = vmatprep.subr.bf16.mxu0 0
    %3468 = vmatpush1.bf16.msra.mxu0 0
    %3469 = vmatprep.subr.bf16.mxu0 0
    %3470 = vmatpush1.bf16.msra.mxu0 0
    %3471 = vmatprep.subr.bf16.mxu0 0
    %3472 = vmatpush1.bf16.msra.mxu0 0
    %3473 = vmatprep.subr.bf16.mxu0 0
    %3474 = vmatpush1.bf16.msra.mxu0 0
    %3475 = vmatprep.subr.bf16.mxu0 0
    %3476 = vmatpush1.bf16.msra.mxu0 %v3461
    %3477 = vmatprep.subr.bf16.mxu0 0
    %3478 = vmatpush1.bf16.msra.mxu0 %v2595
    %3479 = vmatprep.subr.bf16.mxu0 0
    %3480 = vmatpush2.bf16.msra.mxu0 0
    %3481 = vmatprep.subr.bf16.mxu0 0
    %3482 = vmatpush2.bf16.msra.mxu0 0
    %3483 = vmatprep.subr.bf16.mxu0 0
    %3484 = vmatpush2.bf16.msra.mxu0 0
    %3485 = vmatprep.subr.bf16.mxu0 0
    %3486 = vmatpush2.bf16.msra.mxu0 0
    %3487 = vmatprep.subr.bf16.mxu0 0
    %3488 = vmatpush2.bf16.msra.mxu0 0
    %3489 = vmatprep.subr.bf16.mxu0 0
    %3490 = vmatpush2.bf16.msra.mxu0 0
    %3491 = vmatprep.subr.bf16.mxu0 0
    %3492 = vmatpush2.bf16.msra.mxu0 0
    %3493 = vmatprep.subr.bf16.mxu0 0
    %3494 = vmatpush2.bf16.msra.mxu0 0
    %3495 = vmatprep.mubr.bf16.mxu0 0
    %3496 = vmatmul.mubr.bf16.gmra.mxu0 %v3455
    %v3497 = vpop.f32.mrf.mxu0
    %v3498 = vadd.f32 0.0, %v3497
    %v3499 = vpop.f32.mrf.mxu0
    %v3500 = vpop.f32.mrf.mxu0
    %v3501 = vadd.f32 0.0, %v3500
    %v3502 = vpop.f32.mrf.mxu0
    %3503 = vmatprep.mubr.bf16.mxu0 0
    %3504 = vmatmul.mubr.bf16.gmra.mxu0 %v3458
    %v3505 = vpop.f32.mrf.mxu0
    %v3506 = vadd.f32 0.0, %v3505
    %v3507 = vpop.f32.mrf.mxu0
    %v3508 = vpop.f32.mrf.mxu0
    %v3509 = vpop.f32.mrf.mxu0
    %3510 = vdwg.mxu0
    %v3512 = vsel %vm1073, %v3440, 0
    %v3515 = vsel %vm1073, %v3441, 0
    %v3518 = vsel %vm1361, %v2662, 0
    %3520 = vmatprep.subr.bf16.mxu0 0
    %3521 = vmatpush1.bf16.msra.mxu0 0
    %3522 = vmatprep.subr.bf16.mxu0 0
    %3523 = vmatpush1.bf16.msra.mxu0 0
    %3524 = vmatprep.subr.bf16.mxu0 0
    %3525 = vmatpush1.bf16.msra.mxu0 0
    %3526 = vmatprep.subr.bf16.mxu0 0
    %3527 = vmatpush1.bf16.msra.mxu0 0
    %3528 = vmatprep.subr.bf16.mxu0 0
    %3529 = vmatpush1.bf16.msra.mxu0 0
    %3530 = vmatprep.subr.bf16.mxu0 0
    %3531 = vmatpush1.bf16.msra.mxu0 0
    %3532 = vmatprep.subr.bf16.mxu0 0
    %3533 = vmatpush1.bf16.msra.mxu0 %v3518
    %3534 = vmatprep.subr.bf16.mxu0 0
    %3535 = vmatpush1.bf16.msra.mxu0 %v2660
    %3536 = vmatprep.subr.bf16.mxu0 0
    %3537 = vmatpush2.bf16.msra.mxu0 0
    %3538 = vmatprep.subr.bf16.mxu0 0
    %3539 = vmatpush2.bf16.msra.mxu0 0
    %3540 = vmatprep.subr.bf16.mxu0 0
    %3541 = vmatpush2.bf16.msra.mxu0 0
    %3542 = vmatprep.subr.bf16.mxu0 0
    %3543 = vmatpush2.bf16.msra.mxu0 0
    %3544 = vmatprep.subr.bf16.mxu0 0
    %3545 = vmatpush2.bf16.msra.mxu0 0
    %3546 = vmatprep.subr.bf16.mxu0 0
    %3547 = vmatpush2.bf16.msra.mxu0 0
    %3548 = vmatprep.subr.bf16.mxu0 0
    %3549 = vmatpush2.bf16.msra.mxu0 0
    %3550 = vmatprep.subr.bf16.mxu0 0
    %3551 = vmatpush2.bf16.msra.mxu0 0
    %3552 = vmatprep.mubr.bf16.mxu0 0
    %3553 = vmatmul.mubr.bf16.gmra.mxu0 %v3512
    %v3554 = vpop.f32.mrf.mxu0
    %v3555 = vadd.f32 0.0, %v3554
    %v3556 = vpop.f32.mrf.mxu0
    %v3557 = vpop.f32.mrf.mxu0
    %v3558 = vadd.f32 0.0, %v3557
    %v3559 = vpop.f32.mrf.mxu0
    %3560 = vmatprep.mubr.bf16.mxu0 0
    %3561 = vmatmul.mubr.bf16.gmra.mxu0 %v3515
    %v3562 = vpop.f32.mrf.mxu0
    %v3563 = vadd.f32 0.0, %v3562
    %v3564 = vpop.f32.mrf.mxu0
    %v3565 = vpop.f32.mrf.mxu0
    %v3566 = vpop.f32.mrf.mxu0
    %3567 = vdwg.mxu0
    %v3569 = vsel %vm1073, %v3442, 0
    %v3572 = vsel %vm1073, %v3443, 0
    %v3575 = vsel %vm1361, %v2667, 0
    %3577 = vmatprep.subr.bf16.mxu0 0
    %3578 = vmatpush1.bf16.msra.mxu0 0
    %3579 = vmatprep.subr.bf16.mxu0 0
    %3580 = vmatpush1.bf16.msra.mxu0 0
    %3581 = vmatprep.subr.bf16.mxu0 0
    %3582 = vmatpush1.bf16.msra.mxu0 0
    %3583 = vmatprep.subr.bf16.mxu0 0
    %3584 = vmatpush1.bf16.msra.mxu0 0
    %3585 = vmatprep.subr.bf16.mxu0 0
    %3586 = vmatpush1.bf16.msra.mxu0 0
    %3587 = vmatprep.subr.bf16.mxu0 0
    %3588 = vmatpush1.bf16.msra.mxu0 0
    %3589 = vmatprep.subr.bf16.mxu0 0
    %3590 = vmatpush1.bf16.msra.mxu0 %v3575
    %3591 = vmatprep.subr.bf16.mxu0 0
    %3592 = vmatpush1.bf16.msra.mxu0 %v2665
    %3593 = vmatprep.subr.bf16.mxu0 0
    %3594 = vmatpush2.bf16.msra.mxu0 0
    %3595 = vmatprep.subr.bf16.mxu0 0
    %3596 = vmatpush2.bf16.msra.mxu0 0
    %3597 = vmatprep.subr.bf16.mxu0 0
    %3598 = vmatpush2.bf16.msra.mxu0 0
    %3599 = vmatprep.subr.bf16.mxu0 0
    %3600 = vmatpush2.bf16.msra.mxu0 0
    %3601 = vmatprep.subr.bf16.mxu0 0
    %3602 = vmatpush2.bf16.msra.mxu0 0
    %3603 = vmatprep.subr.bf16.mxu0 0
    %3604 = vmatpush2.bf16.msra.mxu0 0
    %3605 = vmatprep.subr.bf16.mxu0 0
    %3606 = vmatpush2.bf16.msra.mxu0 0
    %3607 = vmatprep.subr.bf16.mxu0 0
    %3608 = vmatpush2.bf16.msra.mxu0 0
    %3609 = vmatprep.mubr.bf16.mxu0 0
    %3610 = vmatmul.mubr.bf16.gmra.mxu0 %v3569
    %v3611 = vpop.f32.mrf.mxu0
    %v3612 = vadd.f32 0.0, %v3611
    %v3613 = vpop.f32.mrf.mxu0
    %v3614 = vpop.f32.mrf.mxu0
    %v3615 = vadd.f32 0.0, %v3614
    %v3616 = vpop.f32.mrf.mxu0
    %3617 = vmatprep.mubr.bf16.mxu0 0
    %3618 = vmatmul.mubr.bf16.gmra.mxu0 %v3572
    %v3619 = vpop.f32.mrf.mxu0
    %v3620 = vadd.f32 0.0, %v3619
    %v3621 = vpop.f32.mrf.mxu0
    %v3622 = vpop.f32.mrf.mxu0
    %v3623 = vpop.f32.mrf.mxu0
    %3624 = vdwg.mxu0
    %v3626 = vsel %vm1073, %v3444, 0
    %v3629 = vsel %vm1073, %v3445, 0
    %v3632 = vsel %vm1361, %v2672, 0
    %3634 = vmatprep.subr.bf16.mxu0 0
    %3635 = vmatpush1.bf16.msra.mxu0 0
    %3636 = vmatprep.subr.bf16.mxu0 0
    %3637 = vmatpush1.bf16.msra.mxu0 0
    %3638 = vmatprep.subr.bf16.mxu0 0
    %3639 = vmatpush1.bf16.msra.mxu0 0
    %3640 = vmatprep.subr.bf16.mxu0 0
    %3641 = vmatpush1.bf16.msra.mxu0 0
    %3642 = vmatprep.subr.bf16.mxu0 0
    %3643 = vmatpush1.bf16.msra.mxu0 0
    %3644 = vmatprep.subr.bf16.mxu0 0
    %3645 = vmatpush1.bf16.msra.mxu0 0
    %3646 = vmatprep.subr.bf16.mxu0 0
    %3647 = vmatpush1.bf16.msra.mxu0 %v3632
    %3648 = vmatprep.subr.bf16.mxu0 0
    %3649 = vmatpush1.bf16.msra.mxu0 %v2670
    %3650 = vmatprep.subr.bf16.mxu0 0
    %3651 = vmatpush2.bf16.msra.mxu0 0
    %3652 = vmatprep.subr.bf16.mxu0 0
    %3653 = vmatpush2.bf16.msra.mxu0 0
    %3654 = vmatprep.subr.bf16.mxu0 0
    %3655 = vmatpush2.bf16.msra.mxu0 0
    %3656 = vmatprep.subr.bf16.mxu0 0
    %3657 = vmatpush2.bf16.msra.mxu0 0
    %3658 = vmatprep.subr.bf16.mxu0 0
    %3659 = vmatpush2.bf16.msra.mxu0 0
    %3660 = vmatprep.subr.bf16.mxu0 0
    %3661 = vmatpush2.bf16.msra.mxu0 0
    %3662 = vmatprep.subr.bf16.mxu0 0
    %3663 = vmatpush2.bf16.msra.mxu0 0
    %3664 = vmatprep.subr.bf16.mxu0 0
    %3665 = vmatpush2.bf16.msra.mxu0 0
    %3666 = vmatprep.mubr.bf16.mxu0 0
    %3667 = vmatmul.mubr.bf16.gmra.mxu0 %v3626
    %v3668 = vpop.f32.mrf.mxu0
    %v3669 = vadd.f32 0.0, %v3668
    %v3670 = vpop.f32.mrf.mxu0
    %v3671 = vpop.f32.mrf.mxu0
    %v3672 = vadd.f32 0.0, %v3671
    %v3673 = vpop.f32.mrf.mxu0
    %3674 = vmatprep.mubr.bf16.mxu0 0
    %3675 = vmatmul.mubr.bf16.gmra.mxu0 %v3629
    %v3676 = vpop.f32.mrf.mxu0
    %v3677 = vadd.f32 0.0, %v3676
    %v3678 = vpop.f32.mrf.mxu0
    %v3679 = vpop.f32.mrf.mxu0
    %v3680 = vpop.f32.mrf.mxu0
    %3681 = vdwg.mxu0
    %v3683 = vsel %vm1073, %v3446, 0
    %v3686 = vsel %vm1073, %v3447, 0
    %v3689 = vsel %vm1361, %v2677, 0
    %3691 = vmatprep.subr.bf16.mxu0 0
    %3692 = vmatpush1.bf16.msra.mxu0 0
    %3693 = vmatprep.subr.bf16.mxu0 0
    %3694 = vmatpush1.bf16.msra.mxu0 0
    %3695 = vmatprep.subr.bf16.mxu0 0
    %3696 = vmatpush1.bf16.msra.mxu0 0
    %3697 = vmatprep.subr.bf16.mxu0 0
    %3698 = vmatpush1.bf16.msra.mxu0 0
    %3699 = vmatprep.subr.bf16.mxu0 0
    %3700 = vmatpush1.bf16.msra.mxu0 0
    %3701 = vmatprep.subr.bf16.mxu0 0
    %3702 = vmatpush1.bf16.msra.mxu0 0
    %3703 = vmatprep.subr.bf16.mxu0 0
    %3704 = vmatpush1.bf16.msra.mxu0 %v3689
    %3705 = vmatprep.subr.bf16.mxu0 0
    %3706 = vmatpush1.bf16.msra.mxu0 %v2675
    %3707 = vmatprep.subr.bf16.mxu0 0
    %3708 = vmatpush2.bf16.msra.mxu0 0
    %3709 = vmatprep.subr.bf16.mxu0 0
    %3710 = vmatpush2.bf16.msra.mxu0 0
    %3711 = vmatprep.subr.bf16.mxu0 0
    %3712 = vmatpush2.bf16.msra.mxu0 0
    %3713 = vmatprep.subr.bf16.mxu0 0
    %3714 = vmatpush2.bf16.msra.mxu0 0
    %3715 = vmatprep.subr.bf16.mxu0 0
    %3716 = vmatpush2.bf16.msra.mxu0 0
    %3717 = vmatprep.subr.bf16.mxu0 0
    %3718 = vmatpush2.bf16.msra.mxu0 0
    %3719 = vmatprep.subr.bf16.mxu0 0
    %3720 = vmatpush2.bf16.msra.mxu0 0
    %3721 = vmatprep.subr.bf16.mxu0 0
    %3722 = vmatpush2.bf16.msra.mxu0 0
    %3723 = vmatprep.mubr.bf16.mxu0 0
    %3724 = vmatmul.mubr.bf16.gmra.mxu0 %v3683
    %v3725 = vpop.f32.mrf.mxu0
    %v3726 = vadd.f32 0.0, %v3725
    %v3727 = vpop.f32.mrf.mxu0
    %v3728 = vpop.f32.mrf.mxu0
    %v3729 = vadd.f32 0.0, %v3728
    %v3730 = vpop.f32.mrf.mxu0
    %3731 = vmatprep.mubr.bf16.mxu0 0
    %3732 = vmatmul.mubr.bf16.gmra.mxu0 %v3686
    %v3733 = vpop.f32.mrf.mxu0
    %v3734 = vadd.f32 0.0, %v3733
    %v3735 = vpop.f32.mrf.mxu0
    %v3736 = vpop.f32.mrf.mxu0
    %v3737 = vpop.f32.mrf.mxu0
    %3738 = vdwg.mxu0
    %v3740 = vsel %vm1073, %v3448, 0
    %v3743 = vsel %vm1073, %v3449, 0
    %v3746 = vsel %vm1361, %v2682, 0
    %3748 = vmatprep.subr.bf16.mxu0 0
    %3749 = vmatpush1.bf16.msra.mxu0 0
    %3750 = vmatprep.subr.bf16.mxu0 0
    %3751 = vmatpush1.bf16.msra.mxu0 0
    %3752 = vmatprep.subr.bf16.mxu0 0
    %3753 = vmatpush1.bf16.msra.mxu0 0
    %3754 = vmatprep.subr.bf16.mxu0 0
    %3755 = vmatpush1.bf16.msra.mxu0 0
    %3756 = vmatprep.subr.bf16.mxu0 0
    %3757 = vmatpush1.bf16.msra.mxu0 0
    %3758 = vmatprep.subr.bf16.mxu0 0
    %3759 = vmatpush1.bf16.msra.mxu0 0
    %3760 = vmatprep.subr.bf16.mxu0 0
    %3761 = vmatpush1.bf16.msra.mxu0 %v3746
    %3762 = vmatprep.subr.bf16.mxu0 0
    %3763 = vmatpush1.bf16.msra.mxu0 %v2680
    %3764 = vmatprep.subr.bf16.mxu0 0
    %3765 = vmatpush2.bf16.msra.mxu0 0
    %3766 = vmatprep.subr.bf16.mxu0 0
    %3767 = vmatpush2.bf16.msra.mxu0 0
    %3768 = vmatprep.subr.bf16.mxu0 0
    %3769 = vmatpush2.bf16.msra.mxu0 0
    %3770 = vmatprep.subr.bf16.mxu0 0
    %3771 = vmatpush2.bf16.msra.mxu0 0
    %3772 = vmatprep.subr.bf16.mxu0 0
    %3773 = vmatpush2.bf16.msra.mxu0 0
    %3774 = vmatprep.subr.bf16.mxu0 0
    %3775 = vmatpush2.bf16.msra.mxu0 0
    %3776 = vmatprep.subr.bf16.mxu0 0
    %3777 = vmatpush2.bf16.msra.mxu0 0
    %3778 = vmatprep.subr.bf16.mxu0 0
    %3779 = vmatpush2.bf16.msra.mxu0 0
    %3780 = vmatprep.mubr.bf16.mxu0 0
    %3781 = vmatmul.mubr.bf16.gmra.mxu0 %v3740
    %v3782 = vpop.f32.mrf.mxu0
    %v3783 = vadd.f32 0.0, %v3782
    %v3784 = vpop.f32.mrf.mxu0
    %v3785 = vpop.f32.mrf.mxu0
    %v3786 = vadd.f32 0.0, %v3785
    %v3787 = vpop.f32.mrf.mxu0
    %3788 = vmatprep.mubr.bf16.mxu0 0
    %3789 = vmatmul.mubr.bf16.gmra.mxu0 %v3743
    %v3790 = vpop.f32.mrf.mxu0
    %v3791 = vadd.f32 0.0, %v3790
    %v3792 = vpop.f32.mrf.mxu0
    %v3793 = vpop.f32.mrf.mxu0
    %v3794 = vpop.f32.mrf.mxu0
    %3795 = vdwg.mxu0
    %v3797 = vsel %vm1073, %v3450, 0
    %v3800 = vsel %vm1073, %v3451, 0
    %v3803 = vsel %vm1361, %v2687, 0
    %3805 = vmatprep.subr.bf16.mxu0 0
    %3806 = vmatpush1.bf16.msra.mxu0 0
    %3807 = vmatprep.subr.bf16.mxu0 0
    %3808 = vmatpush1.bf16.msra.mxu0 0
    %3809 = vmatprep.subr.bf16.mxu0 0
    %3810 = vmatpush1.bf16.msra.mxu0 0
    %3811 = vmatprep.subr.bf16.mxu0 0
    %3812 = vmatpush1.bf16.msra.mxu0 0
    %3813 = vmatprep.subr.bf16.mxu0 0
    %3814 = vmatpush1.bf16.msra.mxu0 0
    %3815 = vmatprep.subr.bf16.mxu0 0
    %3816 = vmatpush1.bf16.msra.mxu0 0
    %3817 = vmatprep.subr.bf16.mxu0 0
    %3818 = vmatpush1.bf16.msra.mxu0 %v3803
    %3819 = vmatprep.subr.bf16.mxu0 0
    %3820 = vmatpush1.bf16.msra.mxu0 %v2685
    %3821 = vmatprep.subr.bf16.mxu0 0
    %3822 = vmatpush2.bf16.msra.mxu0 0
    %3823 = vmatprep.subr.bf16.mxu0 0
    %3824 = vmatpush2.bf16.msra.mxu0 0
    %3825 = vmatprep.subr.bf16.mxu0 0
    %3826 = vmatpush2.bf16.msra.mxu0 0
    %3827 = vmatprep.subr.bf16.mxu0 0
    %3828 = vmatpush2.bf16.msra.mxu0 0
    %3829 = vmatprep.subr.bf16.mxu0 0
    %3830 = vmatpush2.bf16.msra.mxu0 0
    %3831 = vmatprep.subr.bf16.mxu0 0
    %3832 = vmatpush2.bf16.msra.mxu0 0
    %3833 = vmatprep.subr.bf16.mxu0 0
    %3834 = vmatpush2.bf16.msra.mxu0 0
    %3835 = vmatprep.subr.bf16.mxu0 0
    %3836 = vmatpush2.bf16.msra.mxu0 0
    %3837 = vmatprep.mubr.bf16.mxu0 0
    %3838 = vmatmul.mubr.bf16.gmra.mxu0 %v3797
    %v3839 = vpop.f32.mrf.mxu0
    %v3840 = vadd.f32 0.0, %v3839
    %v3841 = vpop.f32.mrf.mxu0
    %v3842 = vpop.f32.mrf.mxu0
    %v3843 = vadd.f32 0.0, %v3842
    %v3844 = vpop.f32.mrf.mxu0
    %3845 = vmatprep.mubr.bf16.mxu0 0
    %3846 = vmatmul.mubr.bf16.gmra.mxu0 %v3800
    %v3847 = vpop.f32.mrf.mxu0
    %v3848 = vadd.f32 0.0, %v3847
    %v3849 = vpop.f32.mrf.mxu0
    %v3850 = vpop.f32.mrf.mxu0
    %v3851 = vpop.f32.mrf.mxu0
    %3852 = vdwg.mxu0
    %v3854 = vsel %vm1073, %v3452, 0
    %v3857 = vsel %vm1073, %v3453, 0
    %v3860 = vsel %vm1361, %v2692, 0
    %3862 = vmatprep.subr.bf16.mxu0 0
    %3863 = vmatpush1.bf16.msra.mxu0 0
    %3864 = vmatprep.subr.bf16.mxu0 0
    %3865 = vmatpush1.bf16.msra.mxu0 0
    %3866 = vmatprep.subr.bf16.mxu0 0
    %3867 = vmatpush1.bf16.msra.mxu0 0
    %3868 = vmatprep.subr.bf16.mxu0 0
    %3869 = vmatpush1.bf16.msra.mxu0 0
    %3870 = vmatprep.subr.bf16.mxu0 0
    %3871 = vmatpush1.bf16.msra.mxu0 0
    %3872 = vmatprep.subr.bf16.mxu0 0
    %3873 = vmatpush1.bf16.msra.mxu0 0
    %3874 = vmatprep.subr.bf16.mxu0 0
    %3875 = vmatpush1.bf16.msra.mxu0 %v3860
    %3876 = vmatprep.subr.bf16.mxu0 0
    %3877 = vmatpush1.bf16.msra.mxu0 %v2690
    %3878 = vmatprep.subr.bf16.mxu0 0
    %3879 = vmatpush2.bf16.msra.mxu0 0
    %3880 = vmatprep.subr.bf16.mxu0 0
    %3881 = vmatpush2.bf16.msra.mxu0 0
    %3882 = vmatprep.subr.bf16.mxu0 0
    %3883 = vmatpush2.bf16.msra.mxu0 0
    %3884 = vmatprep.subr.bf16.mxu0 0
    %3885 = vmatpush2.bf16.msra.mxu0 0
    %3886 = vmatprep.subr.bf16.mxu0 0
    %3887 = vmatpush2.bf16.msra.mxu0 0
    %3888 = vmatprep.subr.bf16.mxu0 0
    %3889 = vmatpush2.bf16.msra.mxu0 0
    %3890 = vmatprep.subr.bf16.mxu0 0
    %3891 = vmatpush2.bf16.msra.mxu0 0
    %3892 = vmatprep.subr.bf16.mxu0 0
    %3893 = vmatpush2.bf16.msra.mxu0 0
    %3894 = vmatprep.mubr.bf16.mxu0 0
    %3895 = vmatmul.mubr.bf16.gmra.mxu0 %v3854
    %v3896 = vpop.f32.mrf.mxu0
    %v3897 = vadd.f32 0.0, %v3896
    %v3898 = vpop.f32.mrf.mxu0
    %v3899 = vpop.f32.mrf.mxu0
    %v3900 = vadd.f32 0.0, %v3899
    %v3901 = vpop.f32.mrf.mxu0
    %3902 = vmatprep.mubr.bf16.mxu0 0
    %3903 = vmatmul.mubr.bf16.gmra.mxu0 %v3857
    %v3904 = vpop.f32.mrf.mxu0
    %v3905 = vadd.f32 0.0, %v3904
    %v3906 = vpop.f32.mrf.mxu0
    %v3907 = vpop.f32.mrf.mxu0
    %v3908 = vpop.f32.mrf.mxu0
    %3909 = vdwg.mxu0
    %v3910 = vpack.c.bf16 %v3501, %v3498
    %v3911 = vpack.c.bf16 %v3506, %v3506
    %v3912 = vpack.c.bf16 %v3558, %v3555
    %v3913 = vpack.c.bf16 %v3563, %v3563
    %v3914 = vpack.c.bf16 %v3615, %v3612
    %v3915 = vpack.c.bf16 %v3620, %v3620
    %v3916 = vpack.c.bf16 %v3672, %v3669
    %v3917 = vpack.c.bf16 %v3677, %v3677
    %v3918 = vpack.c.bf16 %v3729, %v3726
    %v3919 = vpack.c.bf16 %v3734, %v3734
    %v3920 = vpack.c.bf16 %v3786, %v3783
    %v3921 = vpack.c.bf16 %v3791, %v3791
    %v3922 = vpack.c.bf16 %v3843, %v3840
    %v3923 = vpack.c.bf16 %v3848, %v3848
    %v3924 = vpack.c.bf16 %v3900, %v3897
    %v3925 = vpack.c.bf16 %v3905, %v3905
    %3928 = vrot.lane.b32.xlu0 %v3912, 8
    %v3929 = vpop.permute.xlu0 %3928
    %3930 = vrot.lane.b32.xlu0 %v3913, 8
    %v3931 = vpop.permute.xlu0 %3930
    %3934 = vrot.lane.b32.xlu0 %v3914, 16
    %v3935 = vpop.permute.xlu0 %3934
    %3936 = vrot.lane.b32.xlu0 %v3915, 16
    %v3937 = vpop.permute.xlu0 %3936
    %3940 = vrot.lane.b32.xlu0 %v3916, 24
    %v3941 = vpop.permute.xlu0 %3940
    %3942 = vrot.lane.b32.xlu0 %v3917, 24
    %v3943 = vpop.permute.xlu0 %3942
    %3946 = vrot.lane.b32.xlu0 %v3918, 32
    %v3947 = vpop.permute.xlu0 %3946
    %3948 = vrot.lane.b32.xlu0 %v3919, 32
    %v3949 = vpop.permute.xlu0 %3948
    %3952 = vrot.lane.b32.xlu0 %v3920, 40
    %v3953 = vpop.permute.xlu0 %3952
    %3954 = vrot.lane.b32.xlu0 %v3921, 40
    %v3955 = vpop.permute.xlu0 %3954
    %3958 = vrot.lane.b32.xlu0 %v3922, 48
    %v3959 = vpop.permute.xlu0 %3958
    %3960 = vrot.lane.b32.xlu0 %v3923, 48
    %v3961 = vpop.permute.xlu0 %3960
    %3964 = vrot.lane.b32.xlu0 %v3924, 56
    %v3965 = vpop.permute.xlu0 %3964
    %3966 = vrot.lane.b32.xlu0 %v3925, 56
    %v3967 = vpop.permute.xlu0 %3966
    %v3970 = vsel %vm592, %v3910, %v3929
    %v3973 = vsel %vm592, %v3911, %v3931
    %v3975 = vsel %vm1876, %v3970, %v3935
    %v3977 = vsel %vm1876, %v3973, %v3937
    %v3979 = vsel %vm1881, %v3975, %v3941
    %v3981 = vsel %vm1881, %v3977, %v3943
    %v3983 = vsel %vm1886, %v3979, %v3947
    %v3985 = vsel %vm1886, %v3981, %v3949
    %v3987 = vsel %vm1891, %v3983, %v3953
    %v3989 = vsel %vm1891, %v3985, %v3955
    %v3991 = vsel %vm1896, %v3987, %v3959
    %v3993 = vsel %vm1896, %v3989, %v3961
    %v3995 = vsel %vm1901, %v3991, %v3965
    %v3997 = vsel %vm1901, %v3993, %v3967
    %s3998 = scalar_lea.vmem %s8, 32
    %v3999 = vld [vmem:[%s3998] sm:$0xf]
    %v4000 = vld [vmem:[%s3998 + $0x4] sm:$0xf]
    %v4001 = vld [vmem:[%s3998 + $0x8] sm:$0xf]
    %v4002 = vld [vmem:[%s3998 + $0xc] sm:$0xf]
    %v4003 = vld [vmem:[%s3998 + $0x10] sm:$0xf]
    %v4004 = vld [vmem:[%s3998 + $0x14] sm:$0xf]
    %v4005 = vld [vmem:[%s3998 + $0x18] sm:$0xf]
    %v4006 = vld [vmem:[%s3998 + $0x1c] sm:$0xf]
    %s4007 = scalar_lea.vmem [#allocation6], 1
    %v4008 = vld [vmem:[%s4007] sm:$0x1]
    %v4010 = vlaneseq
    %v4011 = vshrl.u32 %v4010, 7
    %v4012 = vsub.s32 0, %v4011
    %v4013 = vrot.slane %v4008, %v4012
    %v4023 = vunpack.c.l.b16 %v3999
    %v4024 = vunpack.c.l.b16 %v4000
    %v4025 = vunpack.c.l.b16 %v4001
    %v4026 = vunpack.c.l.b16 %v4002
    %v4027 = vunpack.c.l.b16 %v4003
    %v4028 = vunpack.c.l.b16 %v4004
    %v4029 = vunpack.c.l.b16 %v4005
    %v4030 = vunpack.c.l.b16 %v4006
    %v4031 = vpack.c.b16 %v4024, %v4023
    %v4032 = vpack.c.b16 %v4026, %v4025
    %v4033 = vpack.c.b16 %v4028, %v4027
    %v4034 = vpack.c.b16 %v4030, %v4029
    %v4039 = vsel %vm260, %v3995, 0
    %v4041 = vsel %vm260, %v3997, 0
    %4043 = vmatprep.subr.bf16.mxu0 0
    %4044 = vmatpush1.bf16.msra.mxu0 0
    %4045 = vmatprep.subr.bf16.mxu0 0
    %4046 = vmatpush1.bf16.msra.mxu0 0
    %4047 = vmatprep.subr.bf16.mxu0 0
    %4048 = vmatpush1.bf16.msra.mxu0 0
    %4049 = vmatprep.subr.bf16.mxu0 0
    %4050 = vmatpush1.bf16.msra.mxu0 0
    %4051 = vmatprep.subr.bf16.mxu0 0
    %4052 = vmatpush1.bf16.msra.mxu0 %v4034
    %4053 = vmatprep.subr.bf16.mxu0 0
    %4054 = vmatpush1.bf16.msra.mxu0 %v4033
    %4055 = vmatprep.subr.bf16.mxu0 0
    %4056 = vmatpush1.bf16.msra.mxu0 %v4032
    %4057 = vmatprep.subr.bf16.mxu0 0
    %4058 = vmatpush1.bf16.msra.mxu0 %v4031
    %4059 = vmatprep.subr.bf16.mxu0 0
    %4060 = vmatpush2.bf16.msra.mxu0 0
    %4061 = vmatprep.subr.bf16.mxu0 0
    %4062 = vmatpush2.bf16.msra.mxu0 0
    %4063 = vmatprep.subr.bf16.mxu0 0
    %4064 = vmatpush2.bf16.msra.mxu0 0
    %4065 = vmatprep.subr.bf16.mxu0 0
    %4066 = vmatpush2.bf16.msra.mxu0 0
    %4067 = vmatprep.subr.bf16.mxu0 0
    %4068 = vmatpush2.bf16.msra.mxu0 0
    %4069 = vmatprep.subr.bf16.mxu0 0
    %4070 = vmatpush2.bf16.msra.mxu0 0
    %4071 = vmatprep.subr.bf16.mxu0 0
    %4072 = vmatpush2.bf16.msra.mxu0 0
    %4073 = vmatprep.subr.bf16.mxu0 0
    %4074 = vmatpush2.bf16.msra.mxu0 0
    %4075 = vmatprep.mubr.bf16.mxu0 0
    %4076 = vmatmul.mubr.bf16.gmra.mxu0 %v4039
    %v4077 = vpop.f32.mrf.mxu0
    %v4078 = vadd.f32 %v4013, %v4077
    %v4079 = vpop.f32.mrf.mxu0
    %v4080 = vpop.f32.mrf.mxu0
    %v4081 = vadd.f32 %v4013, %v4080
    %v4082 = vpop.f32.mrf.mxu0
    %4083 = vmatprep.mubr.bf16.mxu0 0
    %4084 = vmatmul.mubr.bf16.gmra.mxu0 %v4041
    %v4085 = vpop.f32.mrf.mxu0
    %v4086 = vadd.f32 %v4013, %v4085
    %v4087 = vpop.f32.mrf.mxu0
    %v4088 = vpop.f32.mrf.mxu0
    %v4089 = vpop.f32.mrf.mxu0
    %4090 = vdwg.mxu0
    %v4091 = vadd.f32 %v2313, %v4078
    %v4092 = vadd.f32 %v2314, %v4081
    %v4093 = vadd.f32 %v2315, %v4086
    %s4094 = scalar_lea.vmem [#allocation7], 1
    %v4095 = vld [vmem:[%s4094] sm:$0x1]
    %s4096 = scalar_lea.vmem [#allocation9], 1
    %v4097 = vld [vmem:[%s4096] sm:$0x1]
    %v4098 = vsel %vm260, %v4091, 0.0
    %4099 = vadd.xlane.f32.xlu0 %v4098
    %v4100 = vpop.xlane.xlu0 %4099
    %v4101 = vsel %vm260, %v4092, 0.0
    %4102 = vadd.xlane.f32.xlu0 %v4101
    %v4103 = vpop.xlane.xlu0 %4102
    %v4104 = vsel %vm2008, %v4093, 0.0
    %4105 = vadd.xlane.f32.xlu0 %v4104
    %v4106 = vpop.xlane.xlu0 %4105
    %v4107 = vmul.f32 %v4100, %v2012
    %v4108 = vmul.f32 %v4103, %v2012
    %v4109 = vmul.f32 %v4106, %v2012
    %v4110 = vsub.f32 %v4091, %v4107
    %v4111 = vsub.f32 %v4092, %v4108
    %v4112 = vsub.f32 %v4093, %v4109
    %v4113 = vmul.f32 %v4110, %v4110
    %v4114 = vmul.f32 %v4111, %v4111
    %v4115 = vmul.f32 %v4112, %v4112
    %v4116 = vsel %vm260, %v4113, 0.0
    %4117 = vadd.xlane.f32.xlu0 %v4116
    %v4118 = vpop.xlane.xlu0 %4117
    %v4119 = vsel %vm260, %v4114, 0.0
    %4120 = vadd.xlane.f32.xlu0 %v4119
    %v4121 = vpop.xlane.xlu0 %4120
    %v4122 = vsel %vm2008, %v4115, 0.0
    %4123 = vadd.xlane.f32.xlu0 %v4122
    %v4124 = vpop.xlane.xlu0 %4123
    %v4125 = vmul.f32 %v4118, %v2012
    %v4126 = vmul.f32 %v4121, %v2012
    %v4127 = vmul.f32 %v4124, %v2012
    %v4128 = vadd.f32 %v4125, 1e-05
    %v4129 = vadd.f32 %v4126, 1e-05
    %v4130 = vadd.f32 %v4127, 1e-05
    %v4131 = vrsqrt.pop %v4128
    %v4132 = vrsqrt.pop %v4129
    %v4133 = vrsqrt.pop %v4130
    %v4134 = vmul.f32 %v4110, %v4131
    %v4135 = vmul.f32 %v4111, %v4132
    %v4136 = vmul.f32 %v4112, %v4133
    %v4138 = vlaneseq
    %v4139 = vshrl.u32 %v4138, 7
    %v4140 = vsub.s32 0, %v4139
    %v4141 = vrot.slane %v4095, %v4140
    %v4143 = vmul.f32 %v4134, %v4141
    %v4144 = vmul.f32 %v4135, %v4141
    %v4145 = vmul.f32 %v4136, %v4141
    %v4147 = vlaneseq
    %v4148 = vshrl.u32 %v4147, 7
    %v4149 = vsub.s32 0, %v4148
    %v4150 = vrot.slane %v4097, %v4149
    %v4152 = vadd.f32 %v4143, %v4150
    %v4153 = vadd.f32 %v4144, %v4150
    %v4154 = vadd.f32 %v4145, %v4150
    %v4155 = vpack.c.bf16 %v4153, %v4152
    %v4156 = vpack.c.bf16 %v4154, %v4154
    %s4157 = scalar_lea.vmem %s12, 32
    %v4158 = vld [vmem:[%s4157] sm:$0xf]
    %v4159 = vld [vmem:[%s4157 + $0x4] sm:$0xf]
    %v4160 = vld [vmem:[%s4157 + $0x8] sm:$0xf]
    %v4161 = vld [vmem:[%s4157 + $0xc] sm:$0xf]
    %v4162 = vld [vmem:[%s4157 + $0x10] sm:$0xf]
    %v4163 = vld [vmem:[%s4157 + $0x14] sm:$0xf]
    %v4164 = vld [vmem:[%s4157 + $0x18] sm:$0xf]
    %v4165 = vld [vmem:[%s4157 + $0x1c] sm:$0xf]
    %s4166 = scalar_lea.vmem [#allocation10], 1
    %v4167 = vld [vmem:[%s4166] sm:$0x1]
    %v4169 = vlaneseq
    %v4170 = vshrl.u32 %v4169, 7
    %v4171 = vsub.s32 0, %v4170
    %v4172 = vrot.slane %v4167, %v4171
    %v4182 = vunpack.c.l.b16 %v4158
    %v4183 = vunpack.c.l.b16 %v4159
    %v4184 = vunpack.c.l.b16 %v4160
    %v4185 = vunpack.c.l.b16 %v4161
    %v4186 = vunpack.c.l.b16 %v4162
    %v4187 = vunpack.c.l.b16 %v4163
    %v4188 = vunpack.c.l.b16 %v4164
    %v4189 = vunpack.c.l.b16 %v4165
    %v4190 = vpack.c.b16 %v4183, %v4182
    %v4191 = vpack.c.b16 %v4185, %v4184
    %v4192 = vpack.c.b16 %v4187, %v4186
    %v4193 = vpack.c.b16 %v4189, %v4188
    %v4199 = vsel %vm260, %v4155, 0
    %v4202 = vsel %vm260, %v4156, 0
    %4204 = vmatprep.subr.bf16.mxu0 0
    %4205 = vmatpush1.bf16.msra.mxu0 0
    %4206 = vmatprep.subr.bf16.mxu0 0
    %4207 = vmatpush1.bf16.msra.mxu0 0
    %4208 = vmatprep.subr.bf16.mxu0 0
    %4209 = vmatpush1.bf16.msra.mxu0 0
    %4210 = vmatprep.subr.bf16.mxu0 0
    %4211 = vmatpush1.bf16.msra.mxu0 0
    %4212 = vmatprep.subr.bf16.mxu0 0
    %4213 = vmatpush1.bf16.msra.mxu0 %v4193
    %4214 = vmatprep.subr.bf16.mxu0 0
    %4215 = vmatpush1.bf16.msra.mxu0 %v4192
    %4216 = vmatprep.subr.bf16.mxu0 0
    %4217 = vmatpush1.bf16.msra.mxu0 %v4191
    %4218 = vmatprep.subr.bf16.mxu0 0
    %4219 = vmatpush1.bf16.msra.mxu0 %v4190
    %4220 = vmatprep.subr.bf16.mxu0 0
    %4221 = vmatpush2.bf16.msra.mxu0 0
    %4222 = vmatprep.subr.bf16.mxu0 0
    %4223 = vmatpush2.bf16.msra.mxu0 0
    %4224 = vmatprep.subr.bf16.mxu0 0
    %4225 = vmatpush2.bf16.msra.mxu0 0
    %4226 = vmatprep.subr.bf16.mxu0 0
    %4227 = vmatpush2.bf16.msra.mxu0 0
    %4228 = vmatprep.subr.bf16.mxu0 0
    %4229 = vmatpush2.bf16.msra.mxu0 0
    %4230 = vmatprep.subr.bf16.mxu0 0
    %4231 = vmatpush2.bf16.msra.mxu0 0
    %4232 = vmatprep.subr.bf16.mxu0 0
    %4233 = vmatpush2.bf16.msra.mxu0 0
    %4234 = vmatprep.subr.bf16.mxu0 0
    %4235 = vmatpush2.bf16.msra.mxu0 0
    %4236 = vmatprep.mubr.bf16.mxu0 0
    %4237 = vmatmul.mubr.bf16.gmra.mxu0 %v4199
    %v4238 = vpop.f32.mrf.mxu0
    %v4239 = vadd.f32 %v4172, %v4238
    %v4240 = vpop.f32.mrf.mxu0
    %v4241 = vpop.f32.mrf.mxu0
    %v4242 = vadd.f32 %v4172, %v4241
    %v4243 = vpop.f32.mrf.mxu0
    %4244 = vmatprep.mubr.bf16.mxu0 0
    %4245 = vmatmul.mubr.bf16.gmra.mxu0 %v4202
    %v4246 = vpop.f32.mrf.mxu0
    %v4247 = vadd.f32 %v4172, %v4246
    %v4248 = vpop.f32.mrf.mxu0
    %v4249 = vpop.f32.mrf.mxu0
    %v4250 = vpop.f32.mrf.mxu0
    %4251 = vdwg.mxu0
    %v4252 = vmax.f32 %v4239, 0.0
    %v4253 = vmax.f32 %v4242, 0.0
    %v4254 = vmax.f32 %v4247, 0.0
    %v4255 = vpack.c.bf16 %v4253, %v4252
    %v4256 = vpack.c.bf16 %v4254, %v4254
    %s4257 = scalar_lea.vmem %s14, 32
    %v4258 = vld [vmem:[%s4257] sm:$0xf]
    %v4259 = vld [vmem:[%s4257 + $0x4] sm:$0xf]
    %v4260 = vld [vmem:[%s4257 + $0x8] sm:$0xf]
    %v4261 = vld [vmem:[%s4257 + $0xc] sm:$0xf]
    %v4262 = vld [vmem:[%s4257 + $0x10] sm:$0xf]
    %v4263 = vld [vmem:[%s4257 + $0x14] sm:$0xf]
    %v4264 = vld [vmem:[%s4257 + $0x18] sm:$0xf]
    %v4265 = vld [vmem:[%s4257 + $0x1c] sm:$0xf]
    %s4266 = scalar_lea.vmem [#allocation12], 1
    %v4267 = vld [vmem:[%s4266] sm:$0x1]
    %v4269 = vlaneseq
    %v4270 = vshrl.u32 %v4269, 7
    %v4271 = vsub.s32 0, %v4270
    %v4272 = vrot.slane %v4267, %v4271
    %v4282 = vunpack.c.l.b16 %v4258
    %v4283 = vunpack.c.l.b16 %v4259
    %v4284 = vunpack.c.l.b16 %v4260
    %v4285 = vunpack.c.l.b16 %v4261
    %v4286 = vunpack.c.l.b16 %v4262
    %v4287 = vunpack.c.l.b16 %v4263
    %v4288 = vunpack.c.l.b16 %v4264
    %v4289 = vunpack.c.l.b16 %v4265
    %v4290 = vpack.c.b16 %v4283, %v4282
    %v4291 = vpack.c.b16 %v4285, %v4284
    %v4292 = vpack.c.b16 %v4287, %v4286
    %v4293 = vpack.c.b16 %v4289, %v4288
    %v4299 = vsel %vm260, %v4255, 0
    %v4302 = vsel %vm260, %v4256, 0
    %4304 = vmatprep.subr.bf16.mxu0 0
    %4305 = vmatpush1.bf16.msra.mxu0 0
    %4306 = vmatprep.subr.bf16.mxu0 0
    %4307 = vmatpush1.bf16.msra.mxu0 0
    %4308 = vmatprep.subr.bf16.mxu0 0
    %4309 = vmatpush1.bf16.msra.mxu0 0
    %4310 = vmatprep.subr.bf16.mxu0 0
    %4311 = vmatpush1.bf16.msra.mxu0 0
    %4312 = vmatprep.subr.bf16.mxu0 0
    %4313 = vmatpush1.bf16.msra.mxu0 %v4293
    %4314 = vmatprep.subr.bf16.mxu0 0
    %4315 = vmatpush1.bf16.msra.mxu0 %v4292
    %4316 = vmatprep.subr.bf16.mxu0 0
    %4317 = vmatpush1.bf16.msra.mxu0 %v4291
    %4318 = vmatprep.subr.bf16.mxu0 0
    %4319 = vmatpush1.bf16.msra.mxu0 %v4290
    %4320 = vmatprep.subr.bf16.mxu0 0
    %4321 = vmatpush2.bf16.msra.mxu0 0
    %4322 = vmatprep.subr.bf16.mxu0 0
    %4323 = vmatpush2.bf16.msra.mxu0 0
    %4324 = vmatprep.subr.bf16.mxu0 0
    %4325 = vmatpush2.bf16.msra.mxu0 0
    %4326 = vmatprep.subr.bf16.mxu0 0
    %4327 = vmatpush2.bf16.msra.mxu0 0
    %4328 = vmatprep.subr.bf16.mxu0 0
    %4329 = vmatpush2.bf16.msra.mxu0 0
    %4330 = vmatprep.subr.bf16.mxu0 0
    %4331 = vmatpush2.bf16.msra.mxu0 0
    %4332 = vmatprep.subr.bf16.mxu0 0
    %4333 = vmatpush2.bf16.msra.mxu0 0
    %4334 = vmatprep.subr.bf16.mxu0 0
    %4335 = vmatpush2.bf16.msra.mxu0 0
    %4336 = vmatprep.mubr.bf16.mxu0 0
    %4337 = vmatmul.mubr.bf16.gmra.mxu0 %v4299
    %v4338 = vpop.f32.mrf.mxu0
    %v4339 = vadd.f32 %v4272, %v4338
    %v4340 = vpop.f32.mrf.mxu0
    %v4341 = vpop.f32.mrf.mxu0
    %v4342 = vadd.f32 %v4272, %v4341
    %v4343 = vpop.f32.mrf.mxu0
    %4344 = vmatprep.mubr.bf16.mxu0 0
    %4345 = vmatmul.mubr.bf16.gmra.mxu0 %v4302
    %v4346 = vpop.f32.mrf.mxu0
    %v4347 = vadd.f32 %v4272, %v4346
    %v4348 = vpop.f32.mrf.mxu0
    %v4349 = vpop.f32.mrf.mxu0
    %v4350 = vpop.f32.mrf.mxu0
    %4351 = vdwg.mxu0
    %v4352 = vadd.f32 %v4152, %v4339
    %v4353 = vadd.f32 %v4153, %v4342
    %v4354 = vadd.f32 %v4154, %v4347
    %s4355 = scalar_lea.vmem [#allocation13], 1
    %v4356 = vld [vmem:[%s4355] sm:$0x1]
    %s4357 = scalar_lea.vmem [#allocation15], 1
    %v4358 = vld [vmem:[%s4357] sm:$0x1]
    %v4359 = vsel %vm260, %v4352, 0.0
    %4360 = vadd.xlane.f32.xlu0 %v4359
    %v4361 = vpop.xlane.xlu0 %4360
    %v4362 = vsel %vm260, %v4353, 0.0
    %4363 = vadd.xlane.f32.xlu0 %v4362
    %v4364 = vpop.xlane.xlu0 %4363
    %v4365 = vsel %vm2008, %v4354, 0.0
    %4366 = vadd.xlane.f32.xlu0 %v4365
    %v4367 = vpop.xlane.xlu0 %4366
    %v4368 = vmul.f32 %v4361, %v2012
    %v4369 = vmul.f32 %v4364, %v2012
    %v4370 = vmul.f32 %v4367, %v2012
    %v4371 = vsub.f32 %v4352, %v4368
    %v4372 = vsub.f32 %v4353, %v4369
    %v4373 = vsub.f32 %v4354, %v4370
    %v4374 = vmul.f32 %v4371, %v4371
    %v4375 = vmul.f32 %v4372, %v4372
    %v4376 = vmul.f32 %v4373, %v4373
    %v4377 = vsel %vm260, %v4374, 0.0
    %4378 = vadd.xlane.f32.xlu0 %v4377
    %v4379 = vpop.xlane.xlu0 %4378
    %v4380 = vsel %vm260, %v4375, 0.0
    %4381 = vadd.xlane.f32.xlu0 %v4380
    %v4382 = vpop.xlane.xlu0 %4381
    %v4383 = vsel %vm2008, %v4376, 0.0
    %4384 = vadd.xlane.f32.xlu0 %v4383
    %v4385 = vpop.xlane.xlu0 %4384
    %v4386 = vmul.f32 %v4379, %v2012
    %v4387 = vmul.f32 %v4382, %v2012
    %v4388 = vmul.f32 %v4385, %v2012
    %v4389 = vadd.f32 %v4386, 1e-05
    %v4390 = vadd.f32 %v4387, 1e-05
    %v4391 = vadd.f32 %v4388, 1e-05
    %v4392 = vrsqrt.pop %v4389
    %v4393 = vrsqrt.pop %v4390
    %v4394 = vrsqrt.pop %v4391
    %v4395 = vmul.f32 %v4371, %v4392
    %v4396 = vmul.f32 %v4372, %v4393
    %v4397 = vmul.f32 %v4373, %v4394
    %v4399 = vlaneseq
    %v4400 = vshrl.u32 %v4399, 7
    %v4401 = vsub.s32 0, %v4400
    %v4402 = vrot.slane %v4356, %v4401
    %v4404 = vmul.f32 %v4395, %v4402
    %v4405 = vmul.f32 %v4396, %v4402
    %v4406 = vmul.f32 %v4397, %v4402
    %v4408 = vlaneseq
    %v4409 = vshrl.u32 %v4408, 7
    %v4410 = vsub.s32 0, %v4409
    %v4411 = vrot.slane %v4358, %v4410
    %v4413 = vadd.f32 %v4404, %v4411
    %v4414 = vadd.f32 %v4405, %v4411
    %v4415 = vadd.f32 %v4406, %v4411
    %v4416 = vpack.c.bf16 %v4414, %v4413
    %v4417 = vpack.c.bf16 %v4415, %v4415
    %s4418 = scalar_lea.vmem %s2, 64
    %v4419 = vld [vmem:[%s4418] sm:$0xf]
    %v4420 = vld [vmem:[%s4418 + $0x4] sm:$0xf]
    %v4421 = vld [vmem:[%s4418 + $0x8] sm:$0xf]
    %v4422 = vld [vmem:[%s4418 + $0xc] sm:$0xf]
    %v4423 = vld [vmem:[%s4418 + $0x10] sm:$0xf]
    %v4424 = vld [vmem:[%s4418 + $0x14] sm:$0xf]
    %v4425 = vld [vmem:[%s4418 + $0x18] sm:$0xf]
    %v4426 = vld [vmem:[%s4418 + $0x1c] sm:$0xf]
    %s4427 = scalar_lea.vmem %s3, 2
    %v4428 = vld [vmem:[%s4427] sm:$0x1]
    %v4430 = vlaneseq
    %v4431 = vshrl.u32 %v4430, 7
    %v4432 = vsub.s32 0, %v4431
    %v4433 = vrot.slane %v4428, %v4432
    %v4443 = vunpack.c.l.b16 %v4419
    %v4444 = vunpack.c.l.b16 %v4420
    %v4445 = vunpack.c.l.b16 %v4421
    %v4446 = vunpack.c.l.b16 %v4422
    %v4447 = vunpack.c.l.b16 %v4423
    %v4448 = vunpack.c.l.b16 %v4424
    %v4449 = vunpack.c.l.b16 %v4425
    %v4450 = vunpack.c.l.b16 %v4426
    %v4451 = vpack.c.b16 %v4444, %v4443
    %v4452 = vpack.c.b16 %v4446, %v4445
    %v4453 = vpack.c.b16 %v4448, %v4447
    %v4454 = vpack.c.b16 %v4450, %v4449
    %v4460 = vsel %vm260, %v4416, 0
    %v4463 = vsel %vm260, %v4417, 0
    %4465 = vmatprep.subr.bf16.mxu0 0
    %4466 = vmatpush1.bf16.msra.mxu0 0
    %4467 = vmatprep.subr.bf16.mxu0 0
    %4468 = vmatpush1.bf16.msra.mxu0 0
    %4469 = vmatprep.subr.bf16.mxu0 0
    %4470 = vmatpush1.bf16.msra.mxu0 0
    %4471 = vmatprep.subr.bf16.mxu0 0
    %4472 = vmatpush1.bf16.msra.mxu0 0
    %4473 = vmatprep.subr.bf16.mxu0 0
    %4474 = vmatpush1.bf16.msra.mxu0 %v4454
    %4475 = vmatprep.subr.bf16.mxu0 0
    %4476 = vmatpush1.bf16.msra.mxu0 %v4453
    %4477 = vmatprep.subr.bf16.mxu0 0
    %4478 = vmatpush1.bf16.msra.mxu0 %v4452
    %4479 = vmatprep.subr.bf16.mxu0 0
    %4480 = vmatpush1.bf16.msra.mxu0 %v4451
    %4481 = vmatprep.subr.bf16.mxu0 0
    %4482 = vmatpush2.bf16.msra.mxu0 0
    %4483 = vmatprep.subr.bf16.mxu0 0
    %4484 = vmatpush2.bf16.msra.mxu0 0
    %4485 = vmatprep.subr.bf16.mxu0 0
    %4486 = vmatpush2.bf16.msra.mxu0 0
    %4487 = vmatprep.subr.bf16.mxu0 0
    %4488 = vmatpush2.bf16.msra.mxu0 0
    %4489 = vmatprep.subr.bf16.mxu0 0
    %4490 = vmatpush2.bf16.msra.mxu0 0
    %4491 = vmatprep.subr.bf16.mxu0 0
    %4492 = vmatpush2.bf16.msra.mxu0 0
    %4493 = vmatprep.subr.bf16.mxu0 0
    %4494 = vmatpush2.bf16.msra.mxu0 0
    %4495 = vmatprep.subr.bf16.mxu0 0
    %4496 = vmatpush2.bf16.msra.mxu0 0
    %4497 = vmatprep.mubr.bf16.mxu0 0
    %4498 = vmatmul.mubr.bf16.gmra.mxu0 %v4460
    %v4499 = vpop.f32.mrf.mxu0
    %v4500 = vadd.f32 %v4433, %v4499
    %v4501 = vpop.f32.mrf.mxu0
    %v4502 = vpop.f32.mrf.mxu0
    %v4503 = vadd.f32 %v4433, %v4502
    %v4504 = vpop.f32.mrf.mxu0
    %4505 = vmatprep.mubr.bf16.mxu0 0
    %4506 = vmatmul.mubr.bf16.gmra.mxu0 %v4463
    %v4507 = vpop.f32.mrf.mxu0
    %v4508 = vadd.f32 %v4433, %v4507
    %v4509 = vpop.f32.mrf.mxu0
    %v4510 = vpop.f32.mrf.mxu0
    %v4511 = vpop.f32.mrf.mxu0
    %4512 = vdwg.mxu0
    %s4513 = scalar_lea.vmem %s4, 64
    %v4514 = vld [vmem:[%s4513] sm:$0xf]
    %v4515 = vld [vmem:[%s4513 + $0x4] sm:$0xf]
    %v4516 = vld [vmem:[%s4513 + $0x8] sm:$0xf]
    %v4517 = vld [vmem:[%s4513 + $0xc] sm:$0xf]
    %v4518 = vld [vmem:[%s4513 + $0x10] sm:$0xf]
    %v4519 = vld [vmem:[%s4513 + $0x14] sm:$0xf]
    %v4520 = vld [vmem:[%s4513 + $0x18] sm:$0xf]
    %v4521 = vld [vmem:[%s4513 + $0x1c] sm:$0xf]
    %s4522 = scalar_lea.vmem [#allocation2], 2
    %v4523 = vld [vmem:[%s4522] sm:$0x1]
    %v4525 = vlaneseq
    %v4526 = vshrl.u32 %v4525, 7
    %v4527 = vsub.s32 0, %v4526
    %v4528 = vrot.slane %v4523, %v4527
    %v4538 = vunpack.c.l.b16 %v4514
    %v4539 = vunpack.c.l.b16 %v4515
    %v4540 = vunpack.c.l.b16 %v4516
    %v4541 = vunpack.c.l.b16 %v4517
    %v4542 = vunpack.c.l.b16 %v4518
    %v4543 = vunpack.c.l.b16 %v4519
    %v4544 = vunpack.c.l.b16 %v4520
    %v4545 = vunpack.c.l.b16 %v4521
    %v4546 = vpack.c.b16 %v4539, %v4538
    %v4547 = vpack.c.b16 %v4541, %v4540
    %v4548 = vpack.c.b16 %v4543, %v4542
    %v4549 = vpack.c.b16 %v4545, %v4544
    %4554 = vmatprep.subr.bf16.mxu0 0
    %4555 = vmatpush1.bf16.msra.mxu0 0
    %4556 = vmatprep.subr.bf16.mxu0 0
    %4557 = vmatpush1.bf16.msra.mxu0 0
    %4558 = vmatprep.subr.bf16.mxu0 0
    %4559 = vmatpush1.bf16.msra.mxu0 0
    %4560 = vmatprep.subr.bf16.mxu0 0
    %4561 = vmatpush1.bf16.msra.mxu0 0
    %4562 = vmatprep.subr.bf16.mxu0 0
    %4563 = vmatpush1.bf16.msra.mxu0 %v4549
    %4564 = vmatprep.subr.bf16.mxu0 0
    %4565 = vmatpush1.bf16.msra.mxu0 %v4548
    %4566 = vmatprep.subr.bf16.mxu0 0
    %4567 = vmatpush1.bf16.msra.mxu0 %v4547
    %4568 = vmatprep.subr.bf16.mxu0 0
    %4569 = vmatpush1.bf16.msra.mxu0 %v4546
    %4570 = vmatprep.subr.bf16.mxu0 0
    %4571 = vmatpush2.bf16.msra.mxu0 0
    %4572 = vmatprep.subr.bf16.mxu0 0
    %4573 = vmatpush2.bf16.msra.mxu0 0
    %4574 = vmatprep.subr.bf16.mxu0 0
    %4575 = vmatpush2.bf16.msra.mxu0 0
    %4576 = vmatprep.subr.bf16.mxu0 0
    %4577 = vmatpush2.bf16.msra.mxu0 0
    %4578 = vmatprep.subr.bf16.mxu0 0
    %4579 = vmatpush2.bf16.msra.mxu0 0
    %4580 = vmatprep.subr.bf16.mxu0 0
    %4581 = vmatpush2.bf16.msra.mxu0 0
    %4582 = vmatprep.subr.bf16.mxu0 0
    %4583 = vmatpush2.bf16.msra.mxu0 0
    %4584 = vmatprep.subr.bf16.mxu0 0
    %4585 = vmatpush2.bf16.msra.mxu0 0
    %4586 = vmatprep.mubr.bf16.mxu0 0
    %4587 = vmatmul.mubr.bf16.gmra.mxu0 %v4460
    %v4588 = vpop.f32.mrf.mxu0
    %v4589 = vadd.f32 %v4528, %v4588
    %v4590 = vpop.f32.mrf.mxu0
    %v4591 = vpop.f32.mrf.mxu0
    %v4592 = vadd.f32 %v4528, %v4591
    %v4593 = vpop.f32.mrf.mxu0
    %4594 = vmatprep.mubr.bf16.mxu0 0
    %4595 = vmatmul.mubr.bf16.gmra.mxu0 %v4463
    %v4596 = vpop.f32.mrf.mxu0
    %v4597 = vadd.f32 %v4528, %v4596
    %v4598 = vpop.f32.mrf.mxu0
    %v4599 = vpop.f32.mrf.mxu0
    %v4600 = vpop.f32.mrf.mxu0
    %4601 = vdwg.mxu0
    %s4602 = scalar_lea.vmem %s6, 64
    %v4603 = vld [vmem:[%s4602] sm:$0xf]
    %v4604 = vld [vmem:[%s4602 + $0x4] sm:$0xf]
    %v4605 = vld [vmem:[%s4602 + $0x8] sm:$0xf]
    %v4606 = vld [vmem:[%s4602 + $0xc] sm:$0xf]
    %v4607 = vld [vmem:[%s4602 + $0x10] sm:$0xf]
    %v4608 = vld [vmem:[%s4602 + $0x14] sm:$0xf]
    %v4609 = vld [vmem:[%s4602 + $0x18] sm:$0xf]
    %v4610 = vld [vmem:[%s4602 + $0x1c] sm:$0xf]
    %s4611 = scalar_lea.vmem [#allocation4], 2
    %v4612 = vld [vmem:[%s4611] sm:$0x1]
    %v4614 = vlaneseq
    %v4615 = vshrl.u32 %v4614, 7
    %v4616 = vsub.s32 0, %v4615
    %v4617 = vrot.slane %v4612, %v4616
    %v4627 = vunpack.c.l.b16 %v4603
    %v4628 = vunpack.c.l.b16 %v4604
    %v4629 = vunpack.c.l.b16 %v4605
    %v4630 = vunpack.c.l.b16 %v4606
    %v4631 = vunpack.c.l.b16 %v4607
    %v4632 = vunpack.c.l.b16 %v4608
    %v4633 = vunpack.c.l.b16 %v4609
    %v4634 = vunpack.c.l.b16 %v4610
    %v4635 = vpack.c.b16 %v4628, %v4627
    %v4636 = vpack.c.b16 %v4630, %v4629
    %v4637 = vpack.c.b16 %v4632, %v4631
    %v4638 = vpack.c.b16 %v4634, %v4633
    %4643 = vmatprep.subr.bf16.mxu0 0
    %4644 = vmatpush1.bf16.msra.mxu0 0
    %4645 = vmatprep.subr.bf16.mxu0 0
    %4646 = vmatpush1.bf16.msra.mxu0 0
    %4647 = vmatprep.subr.bf16.mxu0 0
    %4648 = vmatpush1.bf16.msra.mxu0 0
    %4649 = vmatprep.subr.bf16.mxu0 0
    %4650 = vmatpush1.bf16.msra.mxu0 0
    %4651 = vmatprep.subr.bf16.mxu0 0
    %4652 = vmatpush1.bf16.msra.mxu0 %v4638
    %4653 = vmatprep.subr.bf16.mxu0 0
    %4654 = vmatpush1.bf16.msra.mxu0 %v4637
    %4655 = vmatprep.subr.bf16.mxu0 0
    %4656 = vmatpush1.bf16.msra.mxu0 %v4636
    %4657 = vmatprep.subr.bf16.mxu0 0
    %4658 = vmatpush1.bf16.msra.mxu0 %v4635
    %4659 = vmatprep.subr.bf16.mxu0 0
    %4660 = vmatpush2.bf16.msra.mxu0 0
    %4661 = vmatprep.subr.bf16.mxu0 0
    %4662 = vmatpush2.bf16.msra.mxu0 0
    %4663 = vmatprep.subr.bf16.mxu0 0
    %4664 = vmatpush2.bf16.msra.mxu0 0
    %4665 = vmatprep.subr.bf16.mxu0 0
    %4666 = vmatpush2.bf16.msra.mxu0 0
    %4667 = vmatprep.subr.bf16.mxu0 0
    %4668 = vmatpush2.bf16.msra.mxu0 0
    %4669 = vmatprep.subr.bf16.mxu0 0
    %4670 = vmatpush2.bf16.msra.mxu0 0
    %4671 = vmatprep.subr.bf16.mxu0 0
    %4672 = vmatpush2.bf16.msra.mxu0 0
    %4673 = vmatprep.subr.bf16.mxu0 0
    %4674 = vmatpush2.bf16.msra.mxu0 0
    %4675 = vmatprep.mubr.bf16.mxu0 0
    %4676 = vmatmul.mubr.bf16.gmra.mxu0 %v4460
    %v4677 = vpop.f32.mrf.mxu0
    %v4678 = vadd.f32 %v4617, %v4677
    %v4679 = vpop.f32.mrf.mxu0
    %v4680 = vpop.f32.mrf.mxu0
    %v4681 = vadd.f32 %v4617, %v4680
    %v4682 = vpop.f32.mrf.mxu0
    %4683 = vmatprep.mubr.bf16.mxu0 0
    %4684 = vmatmul.mubr.bf16.gmra.mxu0 %v4463
    %v4685 = vpop.f32.mrf.mxu0
    %v4686 = vadd.f32 %v4617, %v4685
    %v4687 = vpop.f32.mrf.mxu0
    %v4688 = vpop.f32.mrf.mxu0
    %v4689 = vpop.f32.mrf.mxu0
    %4690 = vdwg.mxu0
    %v4691 = vpack.c.bf16 %v4503, %v4500
    %v4692 = vpack.c.bf16 %v4508, %v4508
    %v4693 = vpack.c.bf16 %v4592, %v4589
    %v4694 = vpack.c.bf16 %v4597, %v4597
    %v4695 = vpack.c.bf16 %v4681, %v4678
    %v4696 = vpack.c.bf16 %v4686, %v4686
    %4699 = vrot.lane.b32.xlu0 %v4691, 120
    %v4700 = vpop.permute.xlu0 %4699
    %4701 = vrot.lane.b32.xlu0 %v4692, 120
    %v4702 = vpop.permute.xlu0 %4701
    %4703 = vrot.lane.b32.xlu0 %v4691, 112
    %v4704 = vpop.permute.xlu0 %4703
    %4705 = vrot.lane.b32.xlu0 %v4692, 112
    %v4706 = vpop.permute.xlu0 %4705
    %4707 = vrot.lane.b32.xlu0 %v4691, 104
    %v4708 = vpop.permute.xlu0 %4707
    %4709 = vrot.lane.b32.xlu0 %v4692, 104
    %v4710 = vpop.permute.xlu0 %4709
    %4711 = vrot.lane.b32.xlu0 %v4691, 96
    %v4712 = vpop.permute.xlu0 %4711
    %4713 = vrot.lane.b32.xlu0 %v4692, 96
    %v4714 = vpop.permute.xlu0 %4713
    %4715 = vrot.lane.b32.xlu0 %v4691, 88
    %v4716 = vpop.permute.xlu0 %4715
    %4717 = vrot.lane.b32.xlu0 %v4692, 88
    %v4718 = vpop.permute.xlu0 %4717
    %4719 = vrot.lane.b32.xlu0 %v4691, 80
    %v4720 = vpop.permute.xlu0 %4719
    %4721 = vrot.lane.b32.xlu0 %v4692, 80
    %v4722 = vpop.permute.xlu0 %4721
    %4723 = vrot.lane.b32.xlu0 %v4691, 72
    %v4724 = vpop.permute.xlu0 %4723
    %4725 = vrot.lane.b32.xlu0 %v4692, 72
    %v4726 = vpop.permute.xlu0 %4725
    %4729 = vrot.lane.b32.xlu0 %v4693, 120
    %v4730 = vpop.permute.xlu0 %4729
    %4731 = vrot.lane.b32.xlu0 %v4694, 120
    %v4732 = vpop.permute.xlu0 %4731
    %4733 = vrot.lane.b32.xlu0 %v4693, 112
    %v4734 = vpop.permute.xlu0 %4733
    %4735 = vrot.lane.b32.xlu0 %v4694, 112
    %v4736 = vpop.permute.xlu0 %4735
    %4737 = vrot.lane.b32.xlu0 %v4693, 104
    %v4738 = vpop.permute.xlu0 %4737
    %4739 = vrot.lane.b32.xlu0 %v4694, 104
    %v4740 = vpop.permute.xlu0 %4739
    %4741 = vrot.lane.b32.xlu0 %v4693, 96
    %v4742 = vpop.permute.xlu0 %4741
    %4743 = vrot.lane.b32.xlu0 %v4694, 96
    %v4744 = vpop.permute.xlu0 %4743
    %4745 = vrot.lane.b32.xlu0 %v4693, 88
    %v4746 = vpop.permute.xlu0 %4745
    %4747 = vrot.lane.b32.xlu0 %v4694, 88
    %v4748 = vpop.permute.xlu0 %4747
    %4749 = vrot.lane.b32.xlu0 %v4693, 80
    %v4750 = vpop.permute.xlu0 %4749
    %4751 = vrot.lane.b32.xlu0 %v4694, 80
    %v4752 = vpop.permute.xlu0 %4751
    %4753 = vrot.lane.b32.xlu0 %v4693, 72
    %v4754 = vpop.permute.xlu0 %4753
    %4755 = vrot.lane.b32.xlu0 %v4694, 72
    %v4756 = vpop.permute.xlu0 %4755
    %4759 = vrot.lane.b32.xlu0 %v4695, 120
    %v4760 = vpop.permute.xlu0 %4759
    %4761 = vrot.lane.b32.xlu0 %v4696, 120
    %v4762 = vpop.permute.xlu0 %4761
    %4764 = vrot.lane.b32.xlu0 %v4695, 112
    %v4765 = vpop.permute.xlu0 %4764
    %4766 = vrot.lane.b32.xlu0 %v4696, 112
    %v4767 = vpop.permute.xlu0 %4766
    %4769 = vrot.lane.b32.xlu0 %v4695, 104
    %v4770 = vpop.permute.xlu0 %4769
    %4771 = vrot.lane.b32.xlu0 %v4696, 104
    %v4772 = vpop.permute.xlu0 %4771
    %4774 = vrot.lane.b32.xlu0 %v4695, 96
    %v4775 = vpop.permute.xlu0 %4774
    %4776 = vrot.lane.b32.xlu0 %v4696, 96
    %v4777 = vpop.permute.xlu0 %4776
    %4779 = vrot.lane.b32.xlu0 %v4695, 88
    %v4780 = vpop.permute.xlu0 %4779
    %4781 = vrot.lane.b32.xlu0 %v4696, 88
    %v4782 = vpop.permute.xlu0 %4781
    %4784 = vrot.lane.b32.xlu0 %v4695, 80
    %v4785 = vpop.permute.xlu0 %4784
    %4786 = vrot.lane.b32.xlu0 %v4696, 80
    %v4787 = vpop.permute.xlu0 %4786
    %4789 = vrot.lane.b32.xlu0 %v4695, 72
    %v4790 = vpop.permute.xlu0 %4789
    %4791 = vrot.lane.b32.xlu0 %v4696, 72
    %v4792 = vpop.permute.xlu0 %4791
    %v4795 = vsel %vm592, %v4691, 0
    %v4798 = vsel %vm592, %v4692, 0
    %v4801 = vsel %vm592, %v4693, 0
    %v4804 = vsel %vm592, %v4694, 0
    %4806 = vmatprep.subr.bf16.mxu0 0
    %4807 = vmatpush1.bf16.xpose.msra.mxu0 0
    %4808 = vmatprep.subr.bf16.mxu0 0
    %4809 = vmatpush1.bf16.xpose.msra.mxu0 0
    %4810 = vmatprep.subr.bf16.mxu0 0
    %4811 = vmatpush1.bf16.xpose.msra.mxu0 0
    %4812 = vmatprep.subr.bf16.mxu0 0
    %4813 = vmatpush1.bf16.xpose.msra.mxu0 0
    %4814 = vmatprep.subr.bf16.mxu0 0
    %4815 = vmatpush1.bf16.xpose.msra.mxu0 0
    %4816 = vmatprep.subr.bf16.mxu0 0
    %4817 = vmatpush1.bf16.xpose.msra.mxu0 0
    %4818 = vmatprep.subr.bf16.mxu0 0
    %4819 = vmatpush1.bf16.xpose.msra.mxu0 %v4804
    %4820 = vmatprep.subr.bf16.mxu0 0
    %4821 = vmatpush1.bf16.xpose.msra.mxu0 %v4801
    %4822 = vmatprep.subr.bf16.mxu0 0
    %4823 = vmatpush2.bf16.xpose.msra.mxu0 0
    %4824 = vmatprep.subr.bf16.mxu0 0
    %4825 = vmatpush2.bf16.xpose.msra.mxu0 0
    %4826 = vmatprep.subr.bf16.mxu0 0
    %4827 = vmatpush2.bf16.xpose.msra.mxu0 0
    %4828 = vmatprep.subr.bf16.mxu0 0
    %4829 = vmatpush2.bf16.xpose.msra.mxu0 0
    %4830 = vmatprep.subr.bf16.mxu0 0
    %4831 = vmatpush2.bf16.xpose.msra.mxu0 0
    %4832 = vmatprep.subr.bf16.mxu0 0
    %4833 = vmatpush2.bf16.xpose.msra.mxu0 0
    %4834 = vmatprep.subr.bf16.mxu0 0
    %4835 = vmatpush2.bf16.xpose.msra.mxu0 0
    %4836 = vmatprep.subr.bf16.mxu0 0
    %4837 = vmatpush2.bf16.xpose.msra.mxu0 0
    %4838 = vmatprep.mubr.bf16.mxu0 0
    %4839 = vmatmul.mubr.bf16.gmra.mxu0 %v4795
    %v4840 = vpop.f32.mrf.mxu0
    %v4841 = vadd.f32 %v216, %v4840
    %v4842 = vpop.f32.mrf.mxu0
    %v4843 = vpop.f32.mrf.mxu0
    %v4844 = vadd.f32 %v217, %v4843
    %v4845 = vpop.f32.mrf.mxu0
    %4846 = vmatprep.mubr.bf16.mxu0 0
    %4847 = vmatmul.mubr.bf16.gmra.mxu0 %v4798
    %v4848 = vpop.f32.mrf.mxu0
    %v4849 = vadd.f32 %v218, %v4848
    %v4850 = vpop.f32.mrf.mxu0
    %v4851 = vpop.f32.mrf.mxu0
    %v4852 = vpop.f32.mrf.mxu0
    %4853 = vdwg.mxu0
    %v4855 = vsel %vm592, %v4700, 0
    %v4858 = vsel %vm592, %v4702, 0
    %v4861 = vsel %vm592, %v4730, 0
    %v4864 = vsel %vm592, %v4732, 0
    %4866 = vmatprep.subr.bf16.mxu0 0
    %4867 = vmatpush1.bf16.xpose.msra.mxu0 0
    %4868 = vmatprep.subr.bf16.mxu0 0
    %4869 = vmatpush1.bf16.xpose.msra.mxu0 0
    %4870 = vmatprep.subr.bf16.mxu0 0
    %4871 = vmatpush1.bf16.xpose.msra.mxu0 0
    %4872 = vmatprep.subr.bf16.mxu0 0
    %4873 = vmatpush1.bf16.xpose.msra.mxu0 0
    %4874 = vmatprep.subr.bf16.mxu0 0
    %4875 = vmatpush1.bf16.xpose.msra.mxu0 0
    %4876 = vmatprep.subr.bf16.mxu0 0
    %4877 = vmatpush1.bf16.xpose.msra.mxu0 0
    %4878 = vmatprep.subr.bf16.mxu0 0
    %4879 = vmatpush1.bf16.xpose.msra.mxu0 %v4864
    %4880 = vmatprep.subr.bf16.mxu0 0
    %4881 = vmatpush1.bf16.xpose.msra.mxu0 %v4861
    %4882 = vmatprep.subr.bf16.mxu0 0
    %4883 = vmatpush2.bf16.xpose.msra.mxu0 0
    %4884 = vmatprep.subr.bf16.mxu0 0
    %4885 = vmatpush2.bf16.xpose.msra.mxu0 0
    %4886 = vmatprep.subr.bf16.mxu0 0
    %4887 = vmatpush2.bf16.xpose.msra.mxu0 0
    %4888 = vmatprep.subr.bf16.mxu0 0
    %4889 = vmatpush2.bf16.xpose.msra.mxu0 0
    %4890 = vmatprep.subr.bf16.mxu0 0
    %4891 = vmatpush2.bf16.xpose.msra.mxu0 0
    %4892 = vmatprep.subr.bf16.mxu0 0
    %4893 = vmatpush2.bf16.xpose.msra.mxu0 0
    %4894 = vmatprep.subr.bf16.mxu0 0
    %4895 = vmatpush2.bf16.xpose.msra.mxu0 0
    %4896 = vmatprep.subr.bf16.mxu0 0
    %4897 = vmatpush2.bf16.xpose.msra.mxu0 0
    %4898 = vmatprep.mubr.bf16.mxu0 0
    %4899 = vmatmul.mubr.bf16.gmra.mxu0 %v4855
    %v4900 = vpop.f32.mrf.mxu0
    %v4901 = vadd.f32 %v216, %v4900
    %v4902 = vpop.f32.mrf.mxu0
    %v4903 = vpop.f32.mrf.mxu0
    %v4904 = vadd.f32 %v217, %v4903
    %v4905 = vpop.f32.mrf.mxu0
    %4906 = vmatprep.mubr.bf16.mxu0 0
    %4907 = vmatmul.mubr.bf16.gmra.mxu0 %v4858
    %v4908 = vpop.f32.mrf.mxu0
    %v4909 = vadd.f32 %v218, %v4908
    %v4910 = vpop.f32.mrf.mxu0
    %v4911 = vpop.f32.mrf.mxu0
    %v4912 = vpop.f32.mrf.mxu0
    %4913 = vdwg.mxu0
    %v4915 = vsel %vm592, %v4704, 0
    %v4918 = vsel %vm592, %v4706, 0
    %v4921 = vsel %vm592, %v4734, 0
    %v4924 = vsel %vm592, %v4736, 0
    %4926 = vmatprep.subr.bf16.mxu0 0
    %4927 = vmatpush1.bf16.xpose.msra.mxu0 0
    %4928 = vmatprep.subr.bf16.mxu0 0
    %4929 = vmatpush1.bf16.xpose.msra.mxu0 0
    %4930 = vmatprep.subr.bf16.mxu0 0
    %4931 = vmatpush1.bf16.xpose.msra.mxu0 0
    %4932 = vmatprep.subr.bf16.mxu0 0
    %4933 = vmatpush1.bf16.xpose.msra.mxu0 0
    %4934 = vmatprep.subr.bf16.mxu0 0
    %4935 = vmatpush1.bf16.xpose.msra.mxu0 0
    %4936 = vmatprep.subr.bf16.mxu0 0
    %4937 = vmatpush1.bf16.xpose.msra.mxu0 0
    %4938 = vmatprep.subr.bf16.mxu0 0
    %4939 = vmatpush1.bf16.xpose.msra.mxu0 %v4924
    %4940 = vmatprep.subr.bf16.mxu0 0
    %4941 = vmatpush1.bf16.xpose.msra.mxu0 %v4921
    %4942 = vmatprep.subr.bf16.mxu0 0
    %4943 = vmatpush2.bf16.xpose.msra.mxu0 0
    %4944 = vmatprep.subr.bf16.mxu0 0
    %4945 = vmatpush2.bf16.xpose.msra.mxu0 0
    %4946 = vmatprep.subr.bf16.mxu0 0
    %4947 = vmatpush2.bf16.xpose.msra.mxu0 0
    %4948 = vmatprep.subr.bf16.mxu0 0
    %4949 = vmatpush2.bf16.xpose.msra.mxu0 0
    %4950 = vmatprep.subr.bf16.mxu0 0
    %4951 = vmatpush2.bf16.xpose.msra.mxu0 0
    %4952 = vmatprep.subr.bf16.mxu0 0
    %4953 = vmatpush2.bf16.xpose.msra.mxu0 0
    %4954 = vmatprep.subr.bf16.mxu0 0
    %4955 = vmatpush2.bf16.xpose.msra.mxu0 0
    %4956 = vmatprep.subr.bf16.mxu0 0
    %4957 = vmatpush2.bf16.xpose.msra.mxu0 0
    %4958 = vmatprep.mubr.bf16.mxu0 0
    %4959 = vmatmul.mubr.bf16.gmra.mxu0 %v4915
    %v4960 = vpop.f32.mrf.mxu0
    %v4961 = vadd.f32 %v216, %v4960
    %v4962 = vpop.f32.mrf.mxu0
    %v4963 = vpop.f32.mrf.mxu0
    %v4964 = vadd.f32 %v217, %v4963
    %v4965 = vpop.f32.mrf.mxu0
    %4966 = vmatprep.mubr.bf16.mxu0 0
    %4967 = vmatmul.mubr.bf16.gmra.mxu0 %v4918
    %v4968 = vpop.f32.mrf.mxu0
    %v4969 = vadd.f32 %v218, %v4968
    %v4970 = vpop.f32.mrf.mxu0
    %v4971 = vpop.f32.mrf.mxu0
    %v4972 = vpop.f32.mrf.mxu0
    %4973 = vdwg.mxu0
    %v4975 = vsel %vm592, %v4708, 0
    %v4978 = vsel %vm592, %v4710, 0
    %v4981 = vsel %vm592, %v4738, 0
    %v4984 = vsel %vm592, %v4740, 0
    %4986 = vmatprep.subr.bf16.mxu0 0
    %4987 = vmatpush1.bf16.xpose.msra.mxu0 0
    %4988 = vmatprep.subr.bf16.mxu0 0
    %4989 = vmatpush1.bf16.xpose.msra.mxu0 0
    %4990 = vmatprep.subr.bf16.mxu0 0
    %4991 = vmatpush1.bf16.xpose.msra.mxu0 0
    %4992 = vmatprep.subr.bf16.mxu0 0
    %4993 = vmatpush1.bf16.xpose.msra.mxu0 0
    %4994 = vmatprep.subr.bf16.mxu0 0
    %4995 = vmatpush1.bf16.xpose.msra.mxu0 0
    %4996 = vmatprep.subr.bf16.mxu0 0
    %4997 = vmatpush1.bf16.xpose.msra.mxu0 0
    %4998 = vmatprep.subr.bf16.mxu0 0
    %4999 = vmatpush1.bf16.xpose.msra.mxu0 %v4984
    %5000 = vmatprep.subr.bf16.mxu0 0
    %5001 = vmatpush1.bf16.xpose.msra.mxu0 %v4981
    %5002 = vmatprep.subr.bf16.mxu0 0
    %5003 = vmatpush2.bf16.xpose.msra.mxu0 0
    %5004 = vmatprep.subr.bf16.mxu0 0
    %5005 = vmatpush2.bf16.xpose.msra.mxu0 0
    %5006 = vmatprep.subr.bf16.mxu0 0
    %5007 = vmatpush2.bf16.xpose.msra.mxu0 0
    %5008 = vmatprep.subr.bf16.mxu0 0
    %5009 = vmatpush2.bf16.xpose.msra.mxu0 0
    %5010 = vmatprep.subr.bf16.mxu0 0
    %5011 = vmatpush2.bf16.xpose.msra.mxu0 0
    %5012 = vmatprep.subr.bf16.mxu0 0
    %5013 = vmatpush2.bf16.xpose.msra.mxu0 0
    %5014 = vmatprep.subr.bf16.mxu0 0
    %5015 = vmatpush2.bf16.xpose.msra.mxu0 0
    %5016 = vmatprep.subr.bf16.mxu0 0
    %5017 = vmatpush2.bf16.xpose.msra.mxu0 0
    %5018 = vmatprep.mubr.bf16.mxu0 0
    %5019 = vmatmul.mubr.bf16.gmra.mxu0 %v4975
    %v5020 = vpop.f32.mrf.mxu0
    %v5021 = vadd.f32 %v216, %v5020
    %v5022 = vpop.f32.mrf.mxu0
    %v5023 = vpop.f32.mrf.mxu0
    %v5024 = vadd.f32 %v217, %v5023
    %v5025 = vpop.f32.mrf.mxu0
    %5026 = vmatprep.mubr.bf16.mxu0 0
    %5027 = vmatmul.mubr.bf16.gmra.mxu0 %v4978
    %v5028 = vpop.f32.mrf.mxu0
    %v5029 = vadd.f32 %v218, %v5028
    %v5030 = vpop.f32.mrf.mxu0
    %v5031 = vpop.f32.mrf.mxu0
    %v5032 = vpop.f32.mrf.mxu0
    %5033 = vdwg.mxu0
    %v5035 = vsel %vm592, %v4712, 0
    %v5038 = vsel %vm592, %v4714, 0
    %v5041 = vsel %vm592, %v4742, 0
    %v5044 = vsel %vm592, %v4744, 0
    %5046 = vmatprep.subr.bf16.mxu0 0
    %5047 = vmatpush1.bf16.xpose.msra.mxu0 0
    %5048 = vmatprep.subr.bf16.mxu0 0
    %5049 = vmatpush1.bf16.xpose.msra.mxu0 0
    %5050 = vmatprep.subr.bf16.mxu0 0
    %5051 = vmatpush1.bf16.xpose.msra.mxu0 0
    %5052 = vmatprep.subr.bf16.mxu0 0
    %5053 = vmatpush1.bf16.xpose.msra.mxu0 0
    %5054 = vmatprep.subr.bf16.mxu0 0
    %5055 = vmatpush1.bf16.xpose.msra.mxu0 0
    %5056 = vmatprep.subr.bf16.mxu0 0
    %5057 = vmatpush1.bf16.xpose.msra.mxu0 0
    %5058 = vmatprep.subr.bf16.mxu0 0
    %5059 = vmatpush1.bf16.xpose.msra.mxu0 %v5044
    %5060 = vmatprep.subr.bf16.mxu0 0
    %5061 = vmatpush1.bf16.xpose.msra.mxu0 %v5041
    %5062 = vmatprep.subr.bf16.mxu0 0
    %5063 = vmatpush2.bf16.xpose.msra.mxu0 0
    %5064 = vmatprep.subr.bf16.mxu0 0
    %5065 = vmatpush2.bf16.xpose.msra.mxu0 0
    %5066 = vmatprep.subr.bf16.mxu0 0
    %5067 = vmatpush2.bf16.xpose.msra.mxu0 0
    %5068 = vmatprep.subr.bf16.mxu0 0
    %5069 = vmatpush2.bf16.xpose.msra.mxu0 0
    %5070 = vmatprep.subr.bf16.mxu0 0
    %5071 = vmatpush2.bf16.xpose.msra.mxu0 0
    %5072 = vmatprep.subr.bf16.mxu0 0
    %5073 = vmatpush2.bf16.xpose.msra.mxu0 0
    %5074 = vmatprep.subr.bf16.mxu0 0
    %5075 = vmatpush2.bf16.xpose.msra.mxu0 0
    %5076 = vmatprep.subr.bf16.mxu0 0
    %5077 = vmatpush2.bf16.xpose.msra.mxu0 0
    %5078 = vmatprep.mubr.bf16.mxu0 0
    %5079 = vmatmul.mubr.bf16.gmra.mxu0 %v5035
    %v5080 = vpop.f32.mrf.mxu0
    %v5081 = vadd.f32 %v216, %v5080
    %v5082 = vpop.f32.mrf.mxu0
    %v5083 = vpop.f32.mrf.mxu0
    %v5084 = vadd.f32 %v217, %v5083
    %v5085 = vpop.f32.mrf.mxu0
    %5086 = vmatprep.mubr.bf16.mxu0 0
    %5087 = vmatmul.mubr.bf16.gmra.mxu0 %v5038
    %v5088 = vpop.f32.mrf.mxu0
    %v5089 = vadd.f32 %v218, %v5088
    %v5090 = vpop.f32.mrf.mxu0
    %v5091 = vpop.f32.mrf.mxu0
    %v5092 = vpop.f32.mrf.mxu0
    %5093 = vdwg.mxu0
    %v5095 = vsel %vm592, %v4716, 0
    %v5098 = vsel %vm592, %v4718, 0
    %v5101 = vsel %vm592, %v4746, 0
    %v5104 = vsel %vm592, %v4748, 0
    %5106 = vmatprep.subr.bf16.mxu0 0
    %5107 = vmatpush1.bf16.xpose.msra.mxu0 0
    %5108 = vmatprep.subr.bf16.mxu0 0
    %5109 = vmatpush1.bf16.xpose.msra.mxu0 0
    %5110 = vmatprep.subr.bf16.mxu0 0
    %5111 = vmatpush1.bf16.xpose.msra.mxu0 0
    %5112 = vmatprep.subr.bf16.mxu0 0
    %5113 = vmatpush1.bf16.xpose.msra.mxu0 0
    %5114 = vmatprep.subr.bf16.mxu0 0
    %5115 = vmatpush1.bf16.xpose.msra.mxu0 0
    %5116 = vmatprep.subr.bf16.mxu0 0
    %5117 = vmatpush1.bf16.xpose.msra.mxu0 0
    %5118 = vmatprep.subr.bf16.mxu0 0
    %5119 = vmatpush1.bf16.xpose.msra.mxu0 %v5104
    %5120 = vmatprep.subr.bf16.mxu0 0
    %5121 = vmatpush1.bf16.xpose.msra.mxu0 %v5101
    %5122 = vmatprep.subr.bf16.mxu0 0
    %5123 = vmatpush2.bf16.xpose.msra.mxu0 0
    %5124 = vmatprep.subr.bf16.mxu0 0
    %5125 = vmatpush2.bf16.xpose.msra.mxu0 0
    %5126 = vmatprep.subr.bf16.mxu0 0
    %5127 = vmatpush2.bf16.xpose.msra.mxu0 0
    %5128 = vmatprep.subr.bf16.mxu0 0
    %5129 = vmatpush2.bf16.xpose.msra.mxu0 0
    %5130 = vmatprep.subr.bf16.mxu0 0
    %5131 = vmatpush2.bf16.xpose.msra.mxu0 0
    %5132 = vmatprep.subr.bf16.mxu0 0
    %5133 = vmatpush2.bf16.xpose.msra.mxu0 0
    %5134 = vmatprep.subr.bf16.mxu0 0
    %5135 = vmatpush2.bf16.xpose.msra.mxu0 0
    %5136 = vmatprep.subr.bf16.mxu0 0
    %5137 = vmatpush2.bf16.xpose.msra.mxu0 0
    %5138 = vmatprep.mubr.bf16.mxu0 0
    %5139 = vmatmul.mubr.bf16.gmra.mxu0 %v5095
    %v5140 = vpop.f32.mrf.mxu0
    %v5141 = vadd.f32 %v216, %v5140
    %v5142 = vpop.f32.mrf.mxu0
    %v5143 = vpop.f32.mrf.mxu0
    %v5144 = vadd.f32 %v217, %v5143
    %v5145 = vpop.f32.mrf.mxu0
    %5146 = vmatprep.mubr.bf16.mxu0 0
    %5147 = vmatmul.mubr.bf16.gmra.mxu0 %v5098
    %v5148 = vpop.f32.mrf.mxu0
    %v5149 = vadd.f32 %v218, %v5148
    %v5150 = vpop.f32.mrf.mxu0
    %v5151 = vpop.f32.mrf.mxu0
    %v5152 = vpop.f32.mrf.mxu0
    %5153 = vdwg.mxu0
    %v5155 = vsel %vm592, %v4720, 0
    %v5158 = vsel %vm592, %v4722, 0
    %v5161 = vsel %vm592, %v4750, 0
    %v5164 = vsel %vm592, %v4752, 0
    %5166 = vmatprep.subr.bf16.mxu0 0
    %5167 = vmatpush1.bf16.xpose.msra.mxu0 0
    %5168 = vmatprep.subr.bf16.mxu0 0
    %5169 = vmatpush1.bf16.xpose.msra.mxu0 0
    %5170 = vmatprep.subr.bf16.mxu0 0
    %5171 = vmatpush1.bf16.xpose.msra.mxu0 0
    %5172 = vmatprep.subr.bf16.mxu0 0
    %5173 = vmatpush1.bf16.xpose.msra.mxu0 0
    %5174 = vmatprep.subr.bf16.mxu0 0
    %5175 = vmatpush1.bf16.xpose.msra.mxu0 0
    %5176 = vmatprep.subr.bf16.mxu0 0
    %5177 = vmatpush1.bf16.xpose.msra.mxu0 0
    %5178 = vmatprep.subr.bf16.mxu0 0
    %5179 = vmatpush1.bf16.xpose.msra.mxu0 %v5164
    %5180 = vmatprep.subr.bf16.mxu0 0
    %5181 = vmatpush1.bf16.xpose.msra.mxu0 %v5161
    %5182 = vmatprep.subr.bf16.mxu0 0
    %5183 = vmatpush2.bf16.xpose.msra.mxu0 0
    %5184 = vmatprep.subr.bf16.mxu0 0
    %5185 = vmatpush2.bf16.xpose.msra.mxu0 0
    %5186 = vmatprep.subr.bf16.mxu0 0
    %5187 = vmatpush2.bf16.xpose.msra.mxu0 0
    %5188 = vmatprep.subr.bf16.mxu0 0
    %5189 = vmatpush2.bf16.xpose.msra.mxu0 0
    %5190 = vmatprep.subr.bf16.mxu0 0
    %5191 = vmatpush2.bf16.xpose.msra.mxu0 0
    %5192 = vmatprep.subr.bf16.mxu0 0
    %5193 = vmatpush2.bf16.xpose.msra.mxu0 0
    %5194 = vmatprep.subr.bf16.mxu0 0
    %5195 = vmatpush2.bf16.xpose.msra.mxu0 0
    %5196 = vmatprep.subr.bf16.mxu0 0
    %5197 = vmatpush2.bf16.xpose.msra.mxu0 0
    %5198 = vmatprep.mubr.bf16.mxu0 0
    %5199 = vmatmul.mubr.bf16.gmra.mxu0 %v5155
    %v5200 = vpop.f32.mrf.mxu0
    %v5201 = vadd.f32 %v216, %v5200
    %v5202 = vpop.f32.mrf.mxu0
    %v5203 = vpop.f32.mrf.mxu0
    %v5204 = vadd.f32 %v217, %v5203
    %v5205 = vpop.f32.mrf.mxu0
    %5206 = vmatprep.mubr.bf16.mxu0 0
    %5207 = vmatmul.mubr.bf16.gmra.mxu0 %v5158
    %v5208 = vpop.f32.mrf.mxu0
    %v5209 = vadd.f32 %v218, %v5208
    %v5210 = vpop.f32.mrf.mxu0
    %v5211 = vpop.f32.mrf.mxu0
    %v5212 = vpop.f32.mrf.mxu0
    %5213 = vdwg.mxu0
    %v5215 = vsel %vm592, %v4724, 0
    %v5218 = vsel %vm592, %v4726, 0
    %v5221 = vsel %vm592, %v4754, 0
    %v5224 = vsel %vm592, %v4756, 0
    %5226 = vmatprep.subr.bf16.mxu0 0
    %5227 = vmatpush1.bf16.xpose.msra.mxu0 0
    %5228 = vmatprep.subr.bf16.mxu0 0
    %5229 = vmatpush1.bf16.xpose.msra.mxu0 0
    %5230 = vmatprep.subr.bf16.mxu0 0
    %5231 = vmatpush1.bf16.xpose.msra.mxu0 0
    %5232 = vmatprep.subr.bf16.mxu0 0
    %5233 = vmatpush1.bf16.xpose.msra.mxu0 0
    %5234 = vmatprep.subr.bf16.mxu0 0
    %5235 = vmatpush1.bf16.xpose.msra.mxu0 0
    %5236 = vmatprep.subr.bf16.mxu0 0
    %5237 = vmatpush1.bf16.xpose.msra.mxu0 0
    %5238 = vmatprep.subr.bf16.mxu0 0
    %5239 = vmatpush1.bf16.xpose.msra.mxu0 %v5224
    %5240 = vmatprep.subr.bf16.mxu0 0
    %5241 = vmatpush1.bf16.xpose.msra.mxu0 %v5221
    %5242 = vmatprep.subr.bf16.mxu0 0
    %5243 = vmatpush2.bf16.xpose.msra.mxu0 0
    %5244 = vmatprep.subr.bf16.mxu0 0
    %5245 = vmatpush2.bf16.xpose.msra.mxu0 0
    %5246 = vmatprep.subr.bf16.mxu0 0
    %5247 = vmatpush2.bf16.xpose.msra.mxu0 0
    %5248 = vmatprep.subr.bf16.mxu0 0
    %5249 = vmatpush2.bf16.xpose.msra.mxu0 0
    %5250 = vmatprep.subr.bf16.mxu0 0
    %5251 = vmatpush2.bf16.xpose.msra.mxu0 0
    %5252 = vmatprep.subr.bf16.mxu0 0
    %5253 = vmatpush2.bf16.xpose.msra.mxu0 0
    %5254 = vmatprep.subr.bf16.mxu0 0
    %5255 = vmatpush2.bf16.xpose.msra.mxu0 0
    %5256 = vmatprep.subr.bf16.mxu0 0
    %5257 = vmatpush2.bf16.xpose.msra.mxu0 0
    %5258 = vmatprep.mubr.bf16.mxu0 0
    %5259 = vmatmul.mubr.bf16.gmra.mxu0 %v5215
    %v5260 = vpop.f32.mrf.mxu0
    %v5261 = vadd.f32 %v216, %v5260
    %v5262 = vpop.f32.mrf.mxu0
    %v5263 = vpop.f32.mrf.mxu0
    %v5264 = vadd.f32 %v217, %v5263
    %v5265 = vpop.f32.mrf.mxu0
    %5266 = vmatprep.mubr.bf16.mxu0 0
    %5267 = vmatmul.mubr.bf16.gmra.mxu0 %v5218
    %v5268 = vpop.f32.mrf.mxu0
    %v5269 = vadd.f32 %v218, %v5268
    %v5270 = vpop.f32.mrf.mxu0
    %v5271 = vpop.f32.mrf.mxu0
    %v5272 = vpop.f32.mrf.mxu0
    %5273 = vdwg.mxu0
    %v5274 = vsel %vm1073, %v4841, -inf
    %5275 = vmax.xlane.f32.xlu0 %v5274
    %v5276 = vpop.xlane.xlu0 %5275
    %v5277 = vsel %vm1073, %v4844, -inf
    %5278 = vmax.xlane.f32.xlu0 %v5277
    %v5279 = vpop.xlane.xlu0 %5278
    %v5280 = vsel %vm1080, %v4849, -inf
    %5281 = vmax.xlane.f32.xlu0 %v5280
    %v5282 = vpop.xlane.xlu0 %5281
    %v5283 = vsel %vm1073, %v4901, -inf
    %5284 = vmax.xlane.f32.xlu0 %v5283
    %v5285 = vpop.xlane.xlu0 %5284
    %v5286 = vsel %vm1073, %v4904, -inf
    %5287 = vmax.xlane.f32.xlu0 %v5286
    %v5288 = vpop.xlane.xlu0 %5287
    %v5289 = vsel %vm1080, %v4909, -inf
    %5290 = vmax.xlane.f32.xlu0 %v5289
    %v5291 = vpop.xlane.xlu0 %5290
    %v5292 = vsel %vm1073, %v4961, -inf
    %5293 = vmax.xlane.f32.xlu0 %v5292
    %v5294 = vpop.xlane.xlu0 %5293
    %v5295 = vsel %vm1073, %v4964, -inf
    %5296 = vmax.xlane.f32.xlu0 %v5295
    %v5297 = vpop.xlane.xlu0 %5296
    %v5298 = vsel %vm1080, %v4969, -inf
    %5299 = vmax.xlane.f32.xlu0 %v5298
    %v5300 = vpop.xlane.xlu0 %5299
    %v5301 = vsel %vm1073, %v5021, -inf
    %5302 = vmax.xlane.f32.xlu0 %v5301
    %v5303 = vpop.xlane.xlu0 %5302
    %v5304 = vsel %vm1073, %v5024, -inf
    %5305 = vmax.xlane.f32.xlu0 %v5304
    %v5306 = vpop.xlane.xlu0 %5305
    %v5307 = vsel %vm1080, %v5029, -inf
    %5308 = vmax.xlane.f32.xlu0 %v5307
    %v5309 = vpop.xlane.xlu0 %5308
    %v5310 = vsel %vm1073, %v5081, -inf
    %5311 = vmax.xlane.f32.xlu0 %v5310
    %v5312 = vpop.xlane.xlu0 %5311
    %v5313 = vsel %vm1073, %v5084, -inf
    %5314 = vmax.xlane.f32.xlu0 %v5313
    %v5315 = vpop.xlane.xlu0 %5314
    %v5316 = vsel %vm1080, %v5089, -inf
    %5317 = vmax.xlane.f32.xlu0 %v5316
    %v5318 = vpop.xlane.xlu0 %5317
    %v5319 = vsel %vm1073, %v5141, -inf
    %5320 = vmax.xlane.f32.xlu0 %v5319
    %v5321 = vpop.xlane.xlu0 %5320
    %v5322 = vsel %vm1073, %v5144, -inf
    %5323 = vmax.xlane.f32.xlu0 %v5322
    %v5324 = vpop.xlane.xlu0 %5323
    %v5325 = vsel %vm1080, %v5149, -inf
    %5326 = vmax.xlane.f32.xlu0 %v5325
    %v5327 = vpop.xlane.xlu0 %5326
    %v5328 = vsel %vm1073, %v5201, -inf
    %5329 = vmax.xlane.f32.xlu0 %v5328
    %v5330 = vpop.xlane.xlu0 %5329
    %v5331 = vsel %vm1073, %v5204, -inf
    %5332 = vmax.xlane.f32.xlu0 %v5331
    %v5333 = vpop.xlane.xlu0 %5332
    %v5334 = vsel %vm1080, %v5209, -inf
    %5335 = vmax.xlane.f32.xlu0 %v5334
    %v5336 = vpop.xlane.xlu0 %5335
    %v5337 = vsel %vm1073, %v5261, -inf
    %5338 = vmax.xlane.f32.xlu0 %v5337
    %v5339 = vpop.xlane.xlu0 %5338
    %v5340 = vsel %vm1073, %v5264, -inf
    %5341 = vmax.xlane.f32.xlu0 %v5340
    %v5342 = vpop.xlane.xlu0 %5341
    %v5343 = vsel %vm1080, %v5269, -inf
    %5344 = vmax.xlane.f32.xlu0 %v5343
    %v5345 = vpop.xlane.xlu0 %5344
    %v5346 = vsub.f32 %v4841, %v5276
    %v5347 = vsub.f32 %v4844, %v5279
    %v5348 = vsub.f32 %v4849, %v5282
    %v5349 = vsub.f32 %v4901, %v5285
    %v5350 = vsub.f32 %v4904, %v5288
    %v5351 = vsub.f32 %v4909, %v5291
    %v5352 = vsub.f32 %v4961, %v5294
    %v5353 = vsub.f32 %v4964, %v5297
    %v5354 = vsub.f32 %v4969, %v5300
    %v5355 = vsub.f32 %v5021, %v5303
    %v5356 = vsub.f32 %v5024, %v5306
    %v5357 = vsub.f32 %v5029, %v5309
    %v5358 = vsub.f32 %v5081, %v5312
    %v5359 = vsub.f32 %v5084, %v5315
    %v5360 = vsub.f32 %v5089, %v5318
    %v5361 = vsub.f32 %v5141, %v5321
    %v5362 = vsub.f32 %v5144, %v5324
    %v5363 = vsub.f32 %v5149, %v5327
    %v5364 = vsub.f32 %v5201, %v5330
    %v5365 = vsub.f32 %v5204, %v5333
    %v5366 = vsub.f32 %v5209, %v5336
    %v5367 = vsub.f32 %v5261, %v5339
    %v5368 = vsub.f32 %v5264, %v5342
    %v5369 = vsub.f32 %v5269, %v5345
    %v5370 = vmul.f32 %v5346, 1.442695
    %v5371 = vpow.pop %v5370
    %v5372 = vmul.f32 %v5347, 1.442695
    %v5373 = vpow.pop %v5372
    %v5374 = vmul.f32 %v5348, 1.442695
    %v5375 = vpow.pop %v5374
    %v5376 = vmul.f32 %v5349, 1.442695
    %v5377 = vpow.pop %v5376
    %v5378 = vmul.f32 %v5350, 1.442695
    %v5379 = vpow.pop %v5378
    %v5380 = vmul.f32 %v5351, 1.442695
    %v5381 = vpow.pop %v5380
    %v5382 = vmul.f32 %v5352, 1.442695
    %v5383 = vpow.pop %v5382
    %v5384 = vmul.f32 %v5353, 1.442695
    %v5385 = vpow.pop %v5384
    %v5386 = vmul.f32 %v5354, 1.442695
    %v5387 = vpow.pop %v5386
    %v5388 = vmul.f32 %v5355, 1.442695
    %v5389 = vpow.pop %v5388
    %v5390 = vmul.f32 %v5356, 1.442695
    %v5391 = vpow.pop %v5390
    %v5392 = vmul.f32 %v5357, 1.442695
    %v5393 = vpow.pop %v5392
    %v5394 = vmul.f32 %v5358, 1.442695
    %v5395 = vpow.pop %v5394
    %v5396 = vmul.f32 %v5359, 1.442695
    %v5397 = vpow.pop %v5396
    %v5398 = vmul.f32 %v5360, 1.442695
    %v5399 = vpow.pop %v5398
    %v5400 = vmul.f32 %v5361, 1.442695
    %v5401 = vpow.pop %v5400
    %v5402 = vmul.f32 %v5362, 1.442695
    %v5403 = vpow.pop %v5402
    %v5404 = vmul.f32 %v5363, 1.442695
    %v5405 = vpow.pop %v5404
    %v5406 = vmul.f32 %v5364, 1.442695
    %v5407 = vpow.pop %v5406
    %v5408 = vmul.f32 %v5365, 1.442695
    %v5409 = vpow.pop %v5408
    %v5410 = vmul.f32 %v5366, 1.442695
    %v5411 = vpow.pop %v5410
    %v5412 = vmul.f32 %v5367, 1.442695
    %v5413 = vpow.pop %v5412
    %v5414 = vmul.f32 %v5368, 1.442695
    %v5415 = vpow.pop %v5414
    %v5416 = vmul.f32 %v5369, 1.442695
    %v5417 = vpow.pop %v5416
    %v5418 = vsel %vm1073, %v5371, 0.0
    %5419 = vadd.xlane.f32.xlu0 %v5418
    %v5420 = vpop.xlane.xlu0 %5419
    %v5421 = vsel %vm1073, %v5373, 0.0
    %5422 = vadd.xlane.f32.xlu0 %v5421
    %v5423 = vpop.xlane.xlu0 %5422
    %v5424 = vsel %vm1080, %v5375, 0.0
    %5425 = vadd.xlane.f32.xlu0 %v5424
    %v5426 = vpop.xlane.xlu0 %5425
    %v5427 = vsel %vm1073, %v5377, 0.0
    %5428 = vadd.xlane.f32.xlu0 %v5427
    %v5429 = vpop.xlane.xlu0 %5428
    %v5430 = vsel %vm1073, %v5379, 0.0
    %5431 = vadd.xlane.f32.xlu0 %v5430
    %v5432 = vpop.xlane.xlu0 %5431
    %v5433 = vsel %vm1080, %v5381, 0.0
    %5434 = vadd.xlane.f32.xlu0 %v5433
    %v5435 = vpop.xlane.xlu0 %5434
    %v5436 = vsel %vm1073, %v5383, 0.0
    %5437 = vadd.xlane.f32.xlu0 %v5436
    %v5438 = vpop.xlane.xlu0 %5437
    %v5439 = vsel %vm1073, %v5385, 0.0
    %5440 = vadd.xlane.f32.xlu0 %v5439
    %v5441 = vpop.xlane.xlu0 %5440
    %v5442 = vsel %vm1080, %v5387, 0.0
    %5443 = vadd.xlane.f32.xlu0 %v5442
    %v5444 = vpop.xlane.xlu0 %5443
    %v5445 = vsel %vm1073, %v5389, 0.0
    %5446 = vadd.xlane.f32.xlu0 %v5445
    %v5447 = vpop.xlane.xlu0 %5446
    %v5448 = vsel %vm1073, %v5391, 0.0
    %5449 = vadd.xlane.f32.xlu0 %v5448
    %v5450 = vpop.xlane.xlu0 %5449
    %v5451 = vsel %vm1080, %v5393, 0.0
    %5452 = vadd.xlane.f32.xlu0 %v5451
    %v5453 = vpop.xlane.xlu0 %5452
    %v5454 = vsel %vm1073, %v5395, 0.0
    %5455 = vadd.xlane.f32.xlu0 %v5454
    %v5456 = vpop.xlane.xlu0 %5455
    %v5457 = vsel %vm1073, %v5397, 0.0
    %5458 = vadd.xlane.f32.xlu0 %v5457
    %v5459 = vpop.xlane.xlu0 %5458
    %v5460 = vsel %vm1080, %v5399, 0.0
    %5461 = vadd.xlane.f32.xlu0 %v5460
    %v5462 = vpop.xlane.xlu0 %5461
    %v5463 = vsel %vm1073, %v5401, 0.0
    %5464 = vadd.xlane.f32.xlu0 %v5463
    %v5465 = vpop.xlane.xlu0 %5464
    %v5466 = vsel %vm1073, %v5403, 0.0
    %5467 = vadd.xlane.f32.xlu0 %v5466
    %v5468 = vpop.xlane.xlu0 %5467
    %v5469 = vsel %vm1080, %v5405, 0.0
    %5470 = vadd.xlane.f32.xlu0 %v5469
    %v5471 = vpop.xlane.xlu0 %5470
    %v5472 = vsel %vm1073, %v5407, 0.0
    %5473 = vadd.xlane.f32.xlu0 %v5472
    %v5474 = vpop.xlane.xlu0 %5473
    %v5475 = vsel %vm1073, %v5409, 0.0
    %5476 = vadd.xlane.f32.xlu0 %v5475
    %v5477 = vpop.xlane.xlu0 %5476
    %v5478 = vsel %vm1080, %v5411, 0.0
    %5479 = vadd.xlane.f32.xlu0 %v5478
    %v5480 = vpop.xlane.xlu0 %5479
    %v5481 = vsel %vm1073, %v5413, 0.0
    %5482 = vadd.xlane.f32.xlu0 %v5481
    %v5483 = vpop.xlane.xlu0 %5482
    %v5484 = vsel %vm1073, %v5415, 0.0
    %5485 = vadd.xlane.f32.xlu0 %v5484
    %v5486 = vpop.xlane.xlu0 %5485
    %v5487 = vsel %vm1080, %v5417, 0.0
    %5488 = vadd.xlane.f32.xlu0 %v5487
    %v5489 = vpop.xlane.xlu0 %5488
    %v5490 = vrcp.pop %v5420
    %v5491 = vrcp.pop %v5423
    %v5492 = vrcp.pop %v5426
    %v5493 = vrcp.pop %v5429
    %v5494 = vrcp.pop %v5432
    %v5495 = vrcp.pop %v5435
    %v5496 = vrcp.pop %v5438
    %v5497 = vrcp.pop %v5441
    %v5498 = vrcp.pop %v5444
    %v5499 = vrcp.pop %v5447
    %v5500 = vrcp.pop %v5450
    %v5501 = vrcp.pop %v5453
    %v5502 = vrcp.pop %v5456
    %v5503 = vrcp.pop %v5459
    %v5504 = vrcp.pop %v5462
    %v5505 = vrcp.pop %v5465
    %v5506 = vrcp.pop %v5468
    %v5507 = vrcp.pop %v5471
    %v5508 = vrcp.pop %v5474
    %v5509 = vrcp.pop %v5477
    %v5510 = vrcp.pop %v5480
    %v5511 = vrcp.pop %v5483
    %v5512 = vrcp.pop %v5486
    %v5513 = vrcp.pop %v5489
    %v5514 = vmul.f32 %v5371, %v5490
    %v5515 = vmul.f32 %v5373, %v5491
    %v5516 = vmul.f32 %v5375, %v5492
    %v5517 = vmul.f32 %v5377, %v5493
    %v5518 = vmul.f32 %v5379, %v5494
    %v5519 = vmul.f32 %v5381, %v5495
    %v5520 = vmul.f32 %v5383, %v5496
    %v5521 = vmul.f32 %v5385, %v5497
    %v5522 = vmul.f32 %v5387, %v5498
    %v5523 = vmul.f32 %v5389, %v5499
    %v5524 = vmul.f32 %v5391, %v5500
    %v5525 = vmul.f32 %v5393, %v5501
    %v5526 = vmul.f32 %v5395, %v5502
    %v5527 = vmul.f32 %v5397, %v5503
    %v5528 = vmul.f32 %v5399, %v5504
    %v5529 = vmul.f32 %v5401, %v5505
    %v5530 = vmul.f32 %v5403, %v5506
    %v5531 = vmul.f32 %v5405, %v5507
    %v5532 = vmul.f32 %v5407, %v5508
    %v5533 = vmul.f32 %v5409, %v5509
    %v5534 = vmul.f32 %v5411, %v5510
    %v5535 = vmul.f32 %v5413, %v5511
    %v5536 = vmul.f32 %v5415, %v5512
    %v5537 = vmul.f32 %v5417, %v5513
    %v5538 = vpack.c.bf16 %v5515, %v5514
    %v5539 = vpack.c.bf16 %v5516, %v5516
    %v5540 = vpack.c.bf16 %v5518, %v5517
    %v5541 = vpack.c.bf16 %v5519, %v5519
    %v5542 = vpack.c.bf16 %v5521, %v5520
    %v5543 = vpack.c.bf16 %v5522, %v5522
    %v5544 = vpack.c.bf16 %v5524, %v5523
    %v5545 = vpack.c.bf16 %v5525, %v5525
    %v5546 = vpack.c.bf16 %v5527, %v5526
    %v5547 = vpack.c.bf16 %v5528, %v5528
    %v5548 = vpack.c.bf16 %v5530, %v5529
    %v5549 = vpack.c.bf16 %v5531, %v5531
    %v5550 = vpack.c.bf16 %v5533, %v5532
    %v5551 = vpack.c.bf16 %v5534, %v5534
    %v5552 = vpack.c.bf16 %v5536, %v5535
    %v5553 = vpack.c.bf16 %v5537, %v5537
    %v5555 = vsel %vm1073, %v5538, 0
    %v5558 = vsel %vm1073, %v5539, 0
    %v5561 = vsel %vm1361, %v4696, 0
    %5563 = vmatprep.subr.bf16.mxu0 0
    %5564 = vmatpush1.bf16.msra.mxu0 0
    %5565 = vmatprep.subr.bf16.mxu0 0
    %5566 = vmatpush1.bf16.msra.mxu0 0
    %5567 = vmatprep.subr.bf16.mxu0 0
    %5568 = vmatpush1.bf16.msra.mxu0 0
    %5569 = vmatprep.subr.bf16.mxu0 0
    %5570 = vmatpush1.bf16.msra.mxu0 0
    %5571 = vmatprep.subr.bf16.mxu0 0
    %5572 = vmatpush1.bf16.msra.mxu0 0
    %5573 = vmatprep.subr.bf16.mxu0 0
    %5574 = vmatpush1.bf16.msra.mxu0 0
    %5575 = vmatprep.subr.bf16.mxu0 0
    %5576 = vmatpush1.bf16.msra.mxu0 %v5561
    %5577 = vmatprep.subr.bf16.mxu0 0
    %5578 = vmatpush1.bf16.msra.mxu0 %v4695
    %5579 = vmatprep.subr.bf16.mxu0 0
    %5580 = vmatpush2.bf16.msra.mxu0 0
    %5581 = vmatprep.subr.bf16.mxu0 0
    %5582 = vmatpush2.bf16.msra.mxu0 0
    %5583 = vmatprep.subr.bf16.mxu0 0
    %5584 = vmatpush2.bf16.msra.mxu0 0
    %5585 = vmatprep.subr.bf16.mxu0 0
    %5586 = vmatpush2.bf16.msra.mxu0 0
    %5587 = vmatprep.subr.bf16.mxu0 0
    %5588 = vmatpush2.bf16.msra.mxu0 0
    %5589 = vmatprep.subr.bf16.mxu0 0
    %5590 = vmatpush2.bf16.msra.mxu0 0
    %5591 = vmatprep.subr.bf16.mxu0 0
    %5592 = vmatpush2.bf16.msra.mxu0 0
    %5593 = vmatprep.subr.bf16.mxu0 0
    %5594 = vmatpush2.bf16.msra.mxu0 0
    %5595 = vmatprep.mubr.bf16.mxu0 0
    %5596 = vmatmul.mubr.bf16.gmra.mxu0 %v5555
    %v5597 = vpop.f32.mrf.mxu0
    %v5598 = vadd.f32 0.0, %v5597
    %v5599 = vpop.f32.mrf.mxu0
    %v5600 = vpop.f32.mrf.mxu0
    %v5601 = vadd.f32 0.0, %v5600
    %v5602 = vpop.f32.mrf.mxu0
    %5603 = vmatprep.mubr.bf16.mxu0 0
    %5604 = vmatmul.mubr.bf16.gmra.mxu0 %v5558
    %v5605 = vpop.f32.mrf.mxu0
    %v5606 = vadd.f32 0.0, %v5605
    %v5607 = vpop.f32.mrf.mxu0
    %v5608 = vpop.f32.mrf.mxu0
    %v5609 = vpop.f32.mrf.mxu0
    %5610 = vdwg.mxu0
    %v5612 = vsel %vm1073, %v5540, 0
    %v5615 = vsel %vm1073, %v5541, 0
    %v5618 = vsel %vm1361, %v4762, 0
    %5620 = vmatprep.subr.bf16.mxu0 0
    %5621 = vmatpush1.bf16.msra.mxu0 0
    %5622 = vmatprep.subr.bf16.mxu0 0
    %5623 = vmatpush1.bf16.msra.mxu0 0
    %5624 = vmatprep.subr.bf16.mxu0 0
    %5625 = vmatpush1.bf16.msra.mxu0 0
    %5626 = vmatprep.subr.bf16.mxu0 0
    %5627 = vmatpush1.bf16.msra.mxu0 0
    %5628 = vmatprep.subr.bf16.mxu0 0
    %5629 = vmatpush1.bf16.msra.mxu0 0
    %5630 = vmatprep.subr.bf16.mxu0 0
    %5631 = vmatpush1.bf16.msra.mxu0 0
    %5632 = vmatprep.subr.bf16.mxu0 0
    %5633 = vmatpush1.bf16.msra.mxu0 %v5618
    %5634 = vmatprep.subr.bf16.mxu0 0
    %5635 = vmatpush1.bf16.msra.mxu0 %v4760
    %5636 = vmatprep.subr.bf16.mxu0 0
    %5637 = vmatpush2.bf16.msra.mxu0 0
    %5638 = vmatprep.subr.bf16.mxu0 0
    %5639 = vmatpush2.bf16.msra.mxu0 0
    %5640 = vmatprep.subr.bf16.mxu0 0
    %5641 = vmatpush2.bf16.msra.mxu0 0
    %5642 = vmatprep.subr.bf16.mxu0 0
    %5643 = vmatpush2.bf16.msra.mxu0 0
    %5644 = vmatprep.subr.bf16.mxu0 0
    %5645 = vmatpush2.bf16.msra.mxu0 0
    %5646 = vmatprep.subr.bf16.mxu0 0
    %5647 = vmatpush2.bf16.msra.mxu0 0
    %5648 = vmatprep.subr.bf16.mxu0 0
    %5649 = vmatpush2.bf16.msra.mxu0 0
    %5650 = vmatprep.subr.bf16.mxu0 0
    %5651 = vmatpush2.bf16.msra.mxu0 0
    %5652 = vmatprep.mubr.bf16.mxu0 0
    %5653 = vmatmul.mubr.bf16.gmra.mxu0 %v5612
    %v5654 = vpop.f32.mrf.mxu0
    %v5655 = vadd.f32 0.0, %v5654
    %v5656 = vpop.f32.mrf.mxu0
    %v5657 = vpop.f32.mrf.mxu0
    %v5658 = vadd.f32 0.0, %v5657
    %v5659 = vpop.f32.mrf.mxu0
    %5660 = vmatprep.mubr.bf16.mxu0 0
    %5661 = vmatmul.mubr.bf16.gmra.mxu0 %v5615
    %v5662 = vpop.f32.mrf.mxu0
    %v5663 = vadd.f32 0.0, %v5662
    %v5664 = vpop.f32.mrf.mxu0
    %v5665 = vpop.f32.mrf.mxu0
    %v5666 = vpop.f32.mrf.mxu0
    %5667 = vdwg.mxu0
    %v5669 = vsel %vm1073, %v5542, 0
    %v5672 = vsel %vm1073, %v5543, 0
    %v5675 = vsel %vm1361, %v4767, 0
    %5677 = vmatprep.subr.bf16.mxu0 0
    %5678 = vmatpush1.bf16.msra.mxu0 0
    %5679 = vmatprep.subr.bf16.mxu0 0
    %5680 = vmatpush1.bf16.msra.mxu0 0
    %5681 = vmatprep.subr.bf16.mxu0 0
    %5682 = vmatpush1.bf16.msra.mxu0 0
    %5683 = vmatprep.subr.bf16.mxu0 0
    %5684 = vmatpush1.bf16.msra.mxu0 0
    %5685 = vmatprep.subr.bf16.mxu0 0
    %5686 = vmatpush1.bf16.msra.mxu0 0
    %5687 = vmatprep.subr.bf16.mxu0 0
    %5688 = vmatpush1.bf16.msra.mxu0 0
    %5689 = vmatprep.subr.bf16.mxu0 0
    %5690 = vmatpush1.bf16.msra.mxu0 %v5675
    %5691 = vmatprep.subr.bf16.mxu0 0
    %5692 = vmatpush1.bf16.msra.mxu0 %v4765
    %5693 = vmatprep.subr.bf16.mxu0 0
    %5694 = vmatpush2.bf16.msra.mxu0 0
    %5695 = vmatprep.subr.bf16.mxu0 0
    %5696 = vmatpush2.bf16.msra.mxu0 0
    %5697 = vmatprep.subr.bf16.mxu0 0
    %5698 = vmatpush2.bf16.msra.mxu0 0
    %5699 = vmatprep.subr.bf16.mxu0 0
    %5700 = vmatpush2.bf16.msra.mxu0 0
    %5701 = vmatprep.subr.bf16.mxu0 0
    %5702 = vmatpush2.bf16.msra.mxu0 0
    %5703 = vmatprep.subr.bf16.mxu0 0
    %5704 = vmatpush2.bf16.msra.mxu0 0
    %5705 = vmatprep.subr.bf16.mxu0 0
    %5706 = vmatpush2.bf16.msra.mxu0 0
    %5707 = vmatprep.subr.bf16.mxu0 0
    %5708 = vmatpush2.bf16.msra.mxu0 0
    %5709 = vmatprep.mubr.bf16.mxu0 0
    %5710 = vmatmul.mubr.bf16.gmra.mxu0 %v5669
    %v5711 = vpop.f32.mrf.mxu0
    %v5712 = vadd.f32 0.0, %v5711
    %v5713 = vpop.f32.mrf.mxu0
    %v5714 = vpop.f32.mrf.mxu0
    %v5715 = vadd.f32 0.0, %v5714
    %v5716 = vpop.f32.mrf.mxu0
    %5717 = vmatprep.mubr.bf16.mxu0 0
    %5718 = vmatmul.mubr.bf16.gmra.mxu0 %v5672
    %v5719 = vpop.f32.mrf.mxu0
    %v5720 = vadd.f32 0.0, %v5719
    %v5721 = vpop.f32.mrf.mxu0
    %v5722 = vpop.f32.mrf.mxu0
    %v5723 = vpop.f32.mrf.mxu0
    %5724 = vdwg.mxu0
    %v5726 = vsel %vm1073, %v5544, 0
    %v5729 = vsel %vm1073, %v5545, 0
    %v5732 = vsel %vm1361, %v4772, 0
    %5734 = vmatprep.subr.bf16.mxu0 0
    %5735 = vmatpush1.bf16.msra.mxu0 0
    %5736 = vmatprep.subr.bf16.mxu0 0
    %5737 = vmatpush1.bf16.msra.mxu0 0
    %5738 = vmatprep.subr.bf16.mxu0 0
    %5739 = vmatpush1.bf16.msra.mxu0 0
    %5740 = vmatprep.subr.bf16.mxu0 0
    %5741 = vmatpush1.bf16.msra.mxu0 0
    %5742 = vmatprep.subr.bf16.mxu0 0
    %5743 = vmatpush1.bf16.msra.mxu0 0
    %5744 = vmatprep.subr.bf16.mxu0 0
    %5745 = vmatpush1.bf16.msra.mxu0 0
    %5746 = vmatprep.subr.bf16.mxu0 0
    %5747 = vmatpush1.bf16.msra.mxu0 %v5732
    %5748 = vmatprep.subr.bf16.mxu0 0
    %5749 = vmatpush1.bf16.msra.mxu0 %v4770
    %5750 = vmatprep.subr.bf16.mxu0 0
    %5751 = vmatpush2.bf16.msra.mxu0 0
    %5752 = vmatprep.subr.bf16.mxu0 0
    %5753 = vmatpush2.bf16.msra.mxu0 0
    %5754 = vmatprep.subr.bf16.mxu0 0
    %5755 = vmatpush2.bf16.msra.mxu0 0
    %5756 = vmatprep.subr.bf16.mxu0 0
    %5757 = vmatpush2.bf16.msra.mxu0 0
    %5758 = vmatprep.subr.bf16.mxu0 0
    %5759 = vmatpush2.bf16.msra.mxu0 0
    %5760 = vmatprep.subr.bf16.mxu0 0
    %5761 = vmatpush2.bf16.msra.mxu0 0
    %5762 = vmatprep.subr.bf16.mxu0 0
    %5763 = vmatpush2.bf16.msra.mxu0 0
    %5764 = vmatprep.subr.bf16.mxu0 0
    %5765 = vmatpush2.bf16.msra.mxu0 0
    %5766 = vmatprep.mubr.bf16.mxu0 0
    %5767 = vmatmul.mubr.bf16.gmra.mxu0 %v5726
    %v5768 = vpop.f32.mrf.mxu0
    %v5769 = vadd.f32 0.0, %v5768
    %v5770 = vpop.f32.mrf.mxu0
    %v5771 = vpop.f32.mrf.mxu0
    %v5772 = vadd.f32 0.0, %v5771
    %v5773 = vpop.f32.mrf.mxu0
    %5774 = vmatprep.mubr.bf16.mxu0 0
    %5775 = vmatmul.mubr.bf16.gmra.mxu0 %v5729
    %v5776 = vpop.f32.mrf.mxu0
    %v5777 = vadd.f32 0.0, %v5776
    %v5778 = vpop.f32.mrf.mxu0
    %v5779 = vpop.f32.mrf.mxu0
    %v5780 = vpop.f32.mrf.mxu0
    %5781 = vdwg.mxu0
    %v5783 = vsel %vm1073, %v5546, 0
    %v5786 = vsel %vm1073, %v5547, 0
    %v5789 = vsel %vm1361, %v4777, 0
    %5791 = vmatprep.subr.bf16.mxu0 0
    %5792 = vmatpush1.bf16.msra.mxu0 0
    %5793 = vmatprep.subr.bf16.mxu0 0
    %5794 = vmatpush1.bf16.msra.mxu0 0
    %5795 = vmatprep.subr.bf16.mxu0 0
    %5796 = vmatpush1.bf16.msra.mxu0 0
    %5797 = vmatprep.subr.bf16.mxu0 0
    %5798 = vmatpush1.bf16.msra.mxu0 0
    %5799 = vmatprep.subr.bf16.mxu0 0
    %5800 = vmatpush1.bf16.msra.mxu0 0
    %5801 = vmatprep.subr.bf16.mxu0 0
    %5802 = vmatpush1.bf16.msra.mxu0 0
    %5803 = vmatprep.subr.bf16.mxu0 0
    %5804 = vmatpush1.bf16.msra.mxu0 %v5789
    %5805 = vmatprep.subr.bf16.mxu0 0
    %5806 = vmatpush1.bf16.msra.mxu0 %v4775
    %5807 = vmatprep.subr.bf16.mxu0 0
    %5808 = vmatpush2.bf16.msra.mxu0 0
    %5809 = vmatprep.subr.bf16.mxu0 0
    %5810 = vmatpush2.bf16.msra.mxu0 0
    %5811 = vmatprep.subr.bf16.mxu0 0
    %5812 = vmatpush2.bf16.msra.mxu0 0
    %5813 = vmatprep.subr.bf16.mxu0 0
    %5814 = vmatpush2.bf16.msra.mxu0 0
    %5815 = vmatprep.subr.bf16.mxu0 0
    %5816 = vmatpush2.bf16.msra.mxu0 0
    %5817 = vmatprep.subr.bf16.mxu0 0
    %5818 = vmatpush2.bf16.msra.mxu0 0
    %5819 = vmatprep.subr.bf16.mxu0 0
    %5820 = vmatpush2.bf16.msra.mxu0 0
    %5821 = vmatprep.subr.bf16.mxu0 0
    %5822 = vmatpush2.bf16.msra.mxu0 0
    %5823 = vmatprep.mubr.bf16.mxu0 0
    %5824 = vmatmul.mubr.bf16.gmra.mxu0 %v5783
    %v5825 = vpop.f32.mrf.mxu0
    %v5826 = vadd.f32 0.0, %v5825
    %v5827 = vpop.f32.mrf.mxu0
    %v5828 = vpop.f32.mrf.mxu0
    %v5829 = vadd.f32 0.0, %v5828
    %v5830 = vpop.f32.mrf.mxu0
    %5831 = vmatprep.mubr.bf16.mxu0 0
    %5832 = vmatmul.mubr.bf16.gmra.mxu0 %v5786
    %v5833 = vpop.f32.mrf.mxu0
    %v5834 = vadd.f32 0.0, %v5833
    %v5835 = vpop.f32.mrf.mxu0
    %v5836 = vpop.f32.mrf.mxu0
    %v5837 = vpop.f32.mrf.mxu0
    %5838 = vdwg.mxu0
    %v5840 = vsel %vm1073, %v5548, 0
    %v5843 = vsel %vm1073, %v5549, 0
    %v5846 = vsel %vm1361, %v4782, 0
    %5848 = vmatprep.subr.bf16.mxu0 0
    %5849 = vmatpush1.bf16.msra.mxu0 0
    %5850 = vmatprep.subr.bf16.mxu0 0
    %5851 = vmatpush1.bf16.msra.mxu0 0
    %5852 = vmatprep.subr.bf16.mxu0 0
    %5853 = vmatpush1.bf16.msra.mxu0 0
    %5854 = vmatprep.subr.bf16.mxu0 0
    %5855 = vmatpush1.bf16.msra.mxu0 0
    %5856 = vmatprep.subr.bf16.mxu0 0
    %5857 = vmatpush1.bf16.msra.mxu0 0
    %5858 = vmatprep.subr.bf16.mxu0 0
    %5859 = vmatpush1.bf16.msra.mxu0 0
    %5860 = vmatprep.subr.bf16.mxu0 0
    %5861 = vmatpush1.bf16.msra.mxu0 %v5846
    %5862 = vmatprep.subr.bf16.mxu0 0
    %5863 = vmatpush1.bf16.msra.mxu0 %v4780
    %5864 = vmatprep.subr.bf16.mxu0 0
    %5865 = vmatpush2.bf16.msra.mxu0 0
    %5866 = vmatprep.subr.bf16.mxu0 0
    %5867 = vmatpush2.bf16.msra.mxu0 0
    %5868 = vmatprep.subr.bf16.mxu0 0
    %5869 = vmatpush2.bf16.msra.mxu0 0
    %5870 = vmatprep.subr.bf16.mxu0 0
    %5871 = vmatpush2.bf16.msra.mxu0 0
    %5872 = vmatprep.subr.bf16.mxu0 0
    %5873 = vmatpush2.bf16.msra.mxu0 0
    %5874 = vmatprep.subr.bf16.mxu0 0
    %5875 = vmatpush2.bf16.msra.mxu0 0
    %5876 = vmatprep.subr.bf16.mxu0 0
    %5877 = vmatpush2.bf16.msra.mxu0 0
    %5878 = vmatprep.subr.bf16.mxu0 0
    %5879 = vmatpush2.bf16.msra.mxu0 0
    %5880 = vmatprep.mubr.bf16.mxu0 0
    %5881 = vmatmul.mubr.bf16.gmra.mxu0 %v5840
    %v5882 = vpop.f32.mrf.mxu0
    %v5883 = vadd.f32 0.0, %v5882
    %v5884 = vpop.f32.mrf.mxu0
    %v5885 = vpop.f32.mrf.mxu0
    %v5886 = vadd.f32 0.0, %v5885
    %v5887 = vpop.f32.mrf.mxu0
    %5888 = vmatprep.mubr.bf16.mxu0 0
    %5889 = vmatmul.mubr.bf16.gmra.mxu0 %v5843
    %v5890 = vpop.f32.mrf.mxu0
    %v5891 = vadd.f32 0.0, %v5890
    %v5892 = vpop.f32.mrf.mxu0
    %v5893 = vpop.f32.mrf.mxu0
    %v5894 = vpop.f32.mrf.mxu0
    %5895 = vdwg.mxu0
    %v5897 = vsel %vm1073, %v5550, 0
    %v5900 = vsel %vm1073, %v5551, 0
    %v5903 = vsel %vm1361, %v4787, 0
    %5905 = vmatprep.subr.bf16.mxu0 0
    %5906 = vmatpush1.bf16.msra.mxu0 0
    %5907 = vmatprep.subr.bf16.mxu0 0
    %5908 = vmatpush1.bf16.msra.mxu0 0
    %5909 = vmatprep.subr.bf16.mxu0 0
    %5910 = vmatpush1.bf16.msra.mxu0 0
    %5911 = vmatprep.subr.bf16.mxu0 0
    %5912 = vmatpush1.bf16.msra.mxu0 0
    %5913 = vmatprep.subr.bf16.mxu0 0
    %5914 = vmatpush1.bf16.msra.mxu0 0
    %5915 = vmatprep.subr.bf16.mxu0 0
    %5916 = vmatpush1.bf16.msra.mxu0 0
    %5917 = vmatprep.subr.bf16.mxu0 0
    %5918 = vmatpush1.bf16.msra.mxu0 %v5903
    %5919 = vmatprep.subr.bf16.mxu0 0
    %5920 = vmatpush1.bf16.msra.mxu0 %v4785
    %5921 = vmatprep.subr.bf16.mxu0 0
    %5922 = vmatpush2.bf16.msra.mxu0 0
    %5923 = vmatprep.subr.bf16.mxu0 0
    %5924 = vmatpush2.bf16.msra.mxu0 0
    %5925 = vmatprep.subr.bf16.mxu0 0
    %5926 = vmatpush2.bf16.msra.mxu0 0
    %5927 = vmatprep.subr.bf16.mxu0 0
    %5928 = vmatpush2.bf16.msra.mxu0 0
    %5929 = vmatprep.subr.bf16.mxu0 0
    %5930 = vmatpush2.bf16.msra.mxu0 0
    %5931 = vmatprep.subr.bf16.mxu0 0
    %5932 = vmatpush2.bf16.msra.mxu0 0
    %5933 = vmatprep.subr.bf16.mxu0 0
    %5934 = vmatpush2.bf16.msra.mxu0 0
    %5935 = vmatprep.subr.bf16.mxu0 0
    %5936 = vmatpush2.bf16.msra.mxu0 0
    %5937 = vmatprep.mubr.bf16.mxu0 0
    %5938 = vmatmul.mubr.bf16.gmra.mxu0 %v5897
    %v5939 = vpop.f32.mrf.mxu0
    %v5940 = vadd.f32 0.0, %v5939
    %v5941 = vpop.f32.mrf.mxu0
    %v5942 = vpop.f32.mrf.mxu0
    %v5943 = vadd.f32 0.0, %v5942
    %v5944 = vpop.f32.mrf.mxu0
    %5945 = vmatprep.mubr.bf16.mxu0 0
    %5946 = vmatmul.mubr.bf16.gmra.mxu0 %v5900
    %v5947 = vpop.f32.mrf.mxu0
    %v5948 = vadd.f32 0.0, %v5947
    %v5949 = vpop.f32.mrf.mxu0
    %v5950 = vpop.f32.mrf.mxu0
    %v5951 = vpop.f32.mrf.mxu0
    %5952 = vdwg.mxu0
    %v5954 = vsel %vm1073, %v5552, 0
    %v5957 = vsel %vm1073, %v5553, 0
    %v5960 = vsel %vm1361, %v4792, 0
    %5962 = vmatprep.subr.bf16.mxu0 0
    %5963 = vmatpush1.bf16.msra.mxu0 0
    %5964 = vmatprep.subr.bf16.mxu0 0
    %5965 = vmatpush1.bf16.msra.mxu0 0
    %5966 = vmatprep.subr.bf16.mxu0 0
    %5967 = vmatpush1.bf16.msra.mxu0 0
    %5968 = vmatprep.subr.bf16.mxu0 0
    %5969 = vmatpush1.bf16.msra.mxu0 0
    %5970 = vmatprep.subr.bf16.mxu0 0
    %5971 = vmatpush1.bf16.msra.mxu0 0
    %5972 = vmatprep.subr.bf16.mxu0 0
    %5973 = vmatpush1.bf16.msra.mxu0 0
    %5974 = vmatprep.subr.bf16.mxu0 0
    %5975 = vmatpush1.bf16.msra.mxu0 %v5960
    %5976 = vmatprep.subr.bf16.mxu0 0
    %5977 = vmatpush1.bf16.msra.mxu0 %v4790
    %5978 = vmatprep.subr.bf16.mxu0 0
    %5979 = vmatpush2.bf16.msra.mxu0 0
    %5980 = vmatprep.subr.bf16.mxu0 0
    %5981 = vmatpush2.bf16.msra.mxu0 0
    %5982 = vmatprep.subr.bf16.mxu0 0
    %5983 = vmatpush2.bf16.msra.mxu0 0
    %5984 = vmatprep.subr.bf16.mxu0 0
    %5985 = vmatpush2.bf16.msra.mxu0 0
    %5986 = vmatprep.subr.bf16.mxu0 0
    %5987 = vmatpush2.bf16.msra.mxu0 0
    %5988 = vmatprep.subr.bf16.mxu0 0
    %5989 = vmatpush2.bf16.msra.mxu0 0
    %5990 = vmatprep.subr.bf16.mxu0 0
    %5991 = vmatpush2.bf16.msra.mxu0 0
    %5992 = vmatprep.subr.bf16.mxu0 0
    %5993 = vmatpush2.bf16.msra.mxu0 0
    %5994 = vmatprep.mubr.bf16.mxu0 0
    %5995 = vmatmul.mubr.bf16.gmra.mxu0 %v5954
    %v5996 = vpop.f32.mrf.mxu0
    %v5997 = vadd.f32 0.0, %v5996
    %v5998 = vpop.f32.mrf.mxu0
    %v5999 = vpop.f32.mrf.mxu0
    %v6000 = vadd.f32 0.0, %v5999
    %v6001 = vpop.f32.mrf.mxu0
    %6002 = vmatprep.mubr.bf16.mxu0 0
    %6003 = vmatmul.mubr.bf16.gmra.mxu0 %v5957
    %v6004 = vpop.f32.mrf.mxu0
    %v6005 = vadd.f32 0.0, %v6004
    %v6006 = vpop.f32.mrf.mxu0
    %v6007 = vpop.f32.mrf.mxu0
    %v6008 = vpop.f32.mrf.mxu0
    %6009 = vdwg.mxu0
    %v6010 = vpack.c.bf16 %v5601, %v5598
    %v6011 = vpack.c.bf16 %v5606, %v5606
    %v6012 = vpack.c.bf16 %v5658, %v5655
    %v6013 = vpack.c.bf16 %v5663, %v5663
    %v6014 = vpack.c.bf16 %v5715, %v5712
    %v6015 = vpack.c.bf16 %v5720, %v5720
    %v6016 = vpack.c.bf16 %v5772, %v5769
    %v6017 = vpack.c.bf16 %v5777, %v5777
    %v6018 = vpack.c.bf16 %v5829, %v5826
    %v6019 = vpack.c.bf16 %v5834, %v5834
    %v6020 = vpack.c.bf16 %v5886, %v5883
    %v6021 = vpack.c.bf16 %v5891, %v5891
    %v6022 = vpack.c.bf16 %v5943, %v5940
    %v6023 = vpack.c.bf16 %v5948, %v5948
    %v6024 = vpack.c.bf16 %v6000, %v5997
    %v6025 = vpack.c.bf16 %v6005, %v6005
    %6028 = vrot.lane.b32.xlu0 %v6012, 8
    %v6029 = vpop.permute.xlu0 %6028
    %6030 = vrot.lane.b32.xlu0 %v6013, 8
    %v6031 = vpop.permute.xlu0 %6030
    %6034 = vrot.lane.b32.xlu0 %v6014, 16
    %v6035 = vpop.permute.xlu0 %6034
    %6036 = vrot.lane.b32.xlu0 %v6015, 16
    %v6037 = vpop.permute.xlu0 %6036
    %6040 = vrot.lane.b32.xlu0 %v6016, 24
    %v6041 = vpop.permute.xlu0 %6040
    %6042 = vrot.lane.b32.xlu0 %v6017, 24
    %v6043 = vpop.permute.xlu0 %6042
    %6046 = vrot.lane.b32.xlu0 %v6018, 32
    %v6047 = vpop.permute.xlu0 %6046
    %6048 = vrot.lane.b32.xlu0 %v6019, 32
    %v6049 = vpop.permute.xlu0 %6048
    %6052 = vrot.lane.b32.xlu0 %v6020, 40
    %v6053 = vpop.permute.xlu0 %6052
    %6054 = vrot.lane.b32.xlu0 %v6021, 40
    %v6055 = vpop.permute.xlu0 %6054
    %6058 = vrot.lane.b32.xlu0 %v6022, 48
    %v6059 = vpop.permute.xlu0 %6058
    %6060 = vrot.lane.b32.xlu0 %v6023, 48
    %v6061 = vpop.permute.xlu0 %6060
    %6064 = vrot.lane.b32.xlu0 %v6024, 56
    %v6065 = vpop.permute.xlu0 %6064
    %6066 = vrot.lane.b32.xlu0 %v6025, 56
    %v6067 = vpop.permute.xlu0 %6066
    %v6070 = vsel %vm592, %v6010, %v6029
    %v6073 = vsel %vm592, %v6011, %v6031
    %v6075 = vsel %vm1876, %v6070, %v6035
    %v6077 = vsel %vm1876, %v6073, %v6037
    %v6079 = vsel %vm1881, %v6075, %v6041
    %v6081 = vsel %vm1881, %v6077, %v6043
    %v6083 = vsel %vm1886, %v6079, %v6047
    %v6085 = vsel %vm1886, %v6081, %v6049
    %v6087 = vsel %vm1891, %v6083, %v6053
    %v6089 = vsel %vm1891, %v6085, %v6055
    %v6091 = vsel %vm1896, %v6087, %v6059
    %v6093 = vsel %vm1896, %v6089, %v6061
    %v6095 = vsel %vm1901, %v6091, %v6065
    %v6097 = vsel %vm1901, %v6093, %v6067
    %s6098 = scalar_lea.vmem %s8, 64
    %v6099 = vld [vmem:[%s6098] sm:$0xf]
    %v6100 = vld [vmem:[%s6098 + $0x4] sm:$0xf]
    %v6101 = vld [vmem:[%s6098 + $0x8] sm:$0xf]
    %v6102 = vld [vmem:[%s6098 + $0xc] sm:$0xf]
    %v6103 = vld [vmem:[%s6098 + $0x10] sm:$0xf]
    %v6104 = vld [vmem:[%s6098 + $0x14] sm:$0xf]
    %v6105 = vld [vmem:[%s6098 + $0x18] sm:$0xf]
    %v6106 = vld [vmem:[%s6098 + $0x1c] sm:$0xf]
    %s6107 = scalar_lea.vmem [#allocation6], 2
    %v6108 = vld [vmem:[%s6107] sm:$0x1]
    %v6110 = vlaneseq
    %v6111 = vshrl.u32 %v6110, 7
    %v6112 = vsub.s32 0, %v6111
    %v6113 = vrot.slane %v6108, %v6112
    %v6123 = vunpack.c.l.b16 %v6099
    %v6124 = vunpack.c.l.b16 %v6100
    %v6125 = vunpack.c.l.b16 %v6101
    %v6126 = vunpack.c.l.b16 %v6102
    %v6127 = vunpack.c.l.b16 %v6103
    %v6128 = vunpack.c.l.b16 %v6104
    %v6129 = vunpack.c.l.b16 %v6105
    %v6130 = vunpack.c.l.b16 %v6106
    %v6131 = vpack.c.b16 %v6124, %v6123
    %v6132 = vpack.c.b16 %v6126, %v6125
    %v6133 = vpack.c.b16 %v6128, %v6127
    %v6134 = vpack.c.b16 %v6130, %v6129
    %v6139 = vsel %vm260, %v6095, 0
    %v6141 = vsel %vm260, %v6097, 0
    %6143 = vmatprep.subr.bf16.mxu0 0
    %6144 = vmatpush1.bf16.msra.mxu0 0
    %6145 = vmatprep.subr.bf16.mxu0 0
    %6146 = vmatpush1.bf16.msra.mxu0 0
    %6147 = vmatprep.subr.bf16.mxu0 0
    %6148 = vmatpush1.bf16.msra.mxu0 0
    %6149 = vmatprep.subr.bf16.mxu0 0
    %6150 = vmatpush1.bf16.msra.mxu0 0
    %6151 = vmatprep.subr.bf16.mxu0 0
    %6152 = vmatpush1.bf16.msra.mxu0 %v6134
    %6153 = vmatprep.subr.bf16.mxu0 0
    %6154 = vmatpush1.bf16.msra.mxu0 %v6133
    %6155 = vmatprep.subr.bf16.mxu0 0
    %6156 = vmatpush1.bf16.msra.mxu0 %v6132
    %6157 = vmatprep.subr.bf16.mxu0 0
    %6158 = vmatpush1.bf16.msra.mxu0 %v6131
    %6159 = vmatprep.subr.bf16.mxu0 0
    %6160 = vmatpush2.bf16.msra.mxu0 0
    %6161 = vmatprep.subr.bf16.mxu0 0
    %6162 = vmatpush2.bf16.msra.mxu0 0
    %6163 = vmatprep.subr.bf16.mxu0 0
    %6164 = vmatpush2.bf16.msra.mxu0 0
    %6165 = vmatprep.subr.bf16.mxu0 0
    %6166 = vmatpush2.bf16.msra.mxu0 0
    %6167 = vmatprep.subr.bf16.mxu0 0
    %6168 = vmatpush2.bf16.msra.mxu0 0
    %6169 = vmatprep.subr.bf16.mxu0 0
    %6170 = vmatpush2.bf16.msra.mxu0 0
    %6171 = vmatprep.subr.bf16.mxu0 0
    %6172 = vmatpush2.bf16.msra.mxu0 0
    %6173 = vmatprep.subr.bf16.mxu0 0
    %6174 = vmatpush2.bf16.msra.mxu0 0
    %6175 = vmatprep.mubr.bf16.mxu0 0
    %6176 = vmatmul.mubr.bf16.gmra.mxu0 %v6139
    %v6177 = vpop.f32.mrf.mxu0
    %v6178 = vadd.f32 %v6113, %v6177
    %v6179 = vpop.f32.mrf.mxu0
    %v6180 = vpop.f32.mrf.mxu0
    %v6181 = vadd.f32 %v6113, %v6180
    %v6182 = vpop.f32.mrf.mxu0
    %6183 = vmatprep.mubr.bf16.mxu0 0
    %6184 = vmatmul.mubr.bf16.gmra.mxu0 %v6141
    %v6185 = vpop.f32.mrf.mxu0
    %v6186 = vadd.f32 %v6113, %v6185
    %v6187 = vpop.f32.mrf.mxu0
    %v6188 = vpop.f32.mrf.mxu0
    %v6189 = vpop.f32.mrf.mxu0
    %6190 = vdwg.mxu0
    %v6191 = vadd.f32 %v4413, %v6178
    %v6192 = vadd.f32 %v4414, %v6181
    %v6193 = vadd.f32 %v4415, %v6186
    %s6194 = scalar_lea.vmem [#allocation7], 2
    %v6195 = vld [vmem:[%s6194] sm:$0x1]
    %s6196 = scalar_lea.vmem [#allocation9], 2
    %v6197 = vld [vmem:[%s6196] sm:$0x1]
    %v6198 = vsel %vm260, %v6191, 0.0
    %6199 = vadd.xlane.f32.xlu0 %v6198
    %v6200 = vpop.xlane.xlu0 %6199
    %v6201 = vsel %vm260, %v6192, 0.0
    %6202 = vadd.xlane.f32.xlu0 %v6201
    %v6203 = vpop.xlane.xlu0 %6202
    %v6204 = vsel %vm2008, %v6193, 0.0
    %6205 = vadd.xlane.f32.xlu0 %v6204
    %v6206 = vpop.xlane.xlu0 %6205
    %v6207 = vmul.f32 %v6200, %v2012
    %v6208 = vmul.f32 %v6203, %v2012
    %v6209 = vmul.f32 %v6206, %v2012
    %v6210 = vsub.f32 %v6191, %v6207
    %v6211 = vsub.f32 %v6192, %v6208
    %v6212 = vsub.f32 %v6193, %v6209
    %v6213 = vmul.f32 %v6210, %v6210
    %v6214 = vmul.f32 %v6211, %v6211
    %v6215 = vmul.f32 %v6212, %v6212
    %v6216 = vsel %vm260, %v6213, 0.0
    %6217 = vadd.xlane.f32.xlu0 %v6216
    %v6218 = vpop.xlane.xlu0 %6217
    %v6219 = vsel %vm260, %v6214, 0.0
    %6220 = vadd.xlane.f32.xlu0 %v6219
    %v6221 = vpop.xlane.xlu0 %6220
    %v6222 = vsel %vm2008, %v6215, 0.0
    %6223 = vadd.xlane.f32.xlu0 %v6222
    %v6224 = vpop.xlane.xlu0 %6223
    %v6225 = vmul.f32 %v6218, %v2012
    %v6226 = vmul.f32 %v6221, %v2012
    %v6227 = vmul.f32 %v6224, %v2012
    %v6228 = vadd.f32 %v6225, 1e-05
    %v6229 = vadd.f32 %v6226, 1e-05
    %v6230 = vadd.f32 %v6227, 1e-05
    %v6231 = vrsqrt.pop %v6228
    %v6232 = vrsqrt.pop %v6229
    %v6233 = vrsqrt.pop %v6230
    %v6234 = vmul.f32 %v6210, %v6231
    %v6235 = vmul.f32 %v6211, %v6232
    %v6236 = vmul.f32 %v6212, %v6233
    %v6238 = vlaneseq
    %v6239 = vshrl.u32 %v6238, 7
    %v6240 = vsub.s32 0, %v6239
    %v6241 = vrot.slane %v6195, %v6240
    %v6243 = vmul.f32 %v6234, %v6241
    %v6244 = vmul.f32 %v6235, %v6241
    %v6245 = vmul.f32 %v6236, %v6241
    %v6247 = vlaneseq
    %v6248 = vshrl.u32 %v6247, 7
    %v6249 = vsub.s32 0, %v6248
    %v6250 = vrot.slane %v6197, %v6249
    %v6252 = vadd.f32 %v6243, %v6250
    %v6253 = vadd.f32 %v6244, %v6250
    %v6254 = vadd.f32 %v6245, %v6250
    %v6255 = vpack.c.bf16 %v6253, %v6252
    %v6256 = vpack.c.bf16 %v6254, %v6254
    %s6257 = scalar_lea.vmem %s12, 64
    %v6258 = vld [vmem:[%s6257] sm:$0xf]
    %v6259 = vld [vmem:[%s6257 + $0x4] sm:$0xf]
    %v6260 = vld [vmem:[%s6257 + $0x8] sm:$0xf]
    %v6261 = vld [vmem:[%s6257 + $0xc] sm:$0xf]
    %v6262 = vld [vmem:[%s6257 + $0x10] sm:$0xf]
    %v6263 = vld [vmem:[%s6257 + $0x14] sm:$0xf]
    %v6264 = vld [vmem:[%s6257 + $0x18] sm:$0xf]
    %v6265 = vld [vmem:[%s6257 + $0x1c] sm:$0xf]
    %s6266 = scalar_lea.vmem [#allocation10], 2
    %v6267 = vld [vmem:[%s6266] sm:$0x1]
    %v6269 = vlaneseq
    %v6270 = vshrl.u32 %v6269, 7
    %v6271 = vsub.s32 0, %v6270
    %v6272 = vrot.slane %v6267, %v6271
    %v6282 = vunpack.c.l.b16 %v6258
    %v6283 = vunpack.c.l.b16 %v6259
    %v6284 = vunpack.c.l.b16 %v6260
    %v6285 = vunpack.c.l.b16 %v6261
    %v6286 = vunpack.c.l.b16 %v6262
    %v6287 = vunpack.c.l.b16 %v6263
    %v6288 = vunpack.c.l.b16 %v6264
    %v6289 = vunpack.c.l.b16 %v6265
    %v6290 = vpack.c.b16 %v6283, %v6282
    %v6291 = vpack.c.b16 %v6285, %v6284
    %v6292 = vpack.c.b16 %v6287, %v6286
    %v6293 = vpack.c.b16 %v6289, %v6288
    %v6299 = vsel %vm260, %v6255, 0
    %v6302 = vsel %vm260, %v6256, 0
    %6304 = vmatprep.subr.bf16.mxu0 0
    %6305 = vmatpush1.bf16.msra.mxu0 0
    %6306 = vmatprep.subr.bf16.mxu0 0
    %6307 = vmatpush1.bf16.msra.mxu0 0
    %6308 = vmatprep.subr.bf16.mxu0 0
    %6309 = vmatpush1.bf16.msra.mxu0 0
    %6310 = vmatprep.subr.bf16.mxu0 0
    %6311 = vmatpush1.bf16.msra.mxu0 0
    %6312 = vmatprep.subr.bf16.mxu0 0
    %6313 = vmatpush1.bf16.msra.mxu0 %v6293
    %6314 = vmatprep.subr.bf16.mxu0 0
    %6315 = vmatpush1.bf16.msra.mxu0 %v6292
    %6316 = vmatprep.subr.bf16.mxu0 0
    %6317 = vmatpush1.bf16.msra.mxu0 %v6291
    %6318 = vmatprep.subr.bf16.mxu0 0
    %6319 = vmatpush1.bf16.msra.mxu0 %v6290
    %6320 = vmatprep.subr.bf16.mxu0 0
    %6321 = vmatpush2.bf16.msra.mxu0 0
    %6322 = vmatprep.subr.bf16.mxu0 0
    %6323 = vmatpush2.bf16.msra.mxu0 0
    %6324 = vmatprep.subr.bf16.mxu0 0
    %6325 = vmatpush2.bf16.msra.mxu0 0
    %6326 = vmatprep.subr.bf16.mxu0 0
    %6327 = vmatpush2.bf16.msra.mxu0 0
    %6328 = vmatprep.subr.bf16.mxu0 0
    %6329 = vmatpush2.bf16.msra.mxu0 0
    %6330 = vmatprep.subr.bf16.mxu0 0
    %6331 = vmatpush2.bf16.msra.mxu0 0
    %6332 = vmatprep.subr.bf16.mxu0 0
    %6333 = vmatpush2.bf16.msra.mxu0 0
    %6334 = vmatprep.subr.bf16.mxu0 0
    %6335 = vmatpush2.bf16.msra.mxu0 0
    %6336 = vmatprep.mubr.bf16.mxu0 0
    %6337 = vmatmul.mubr.bf16.gmra.mxu0 %v6299
    %v6338 = vpop.f32.mrf.mxu0
    %v6339 = vadd.f32 %v6272, %v6338
    %v6340 = vpop.f32.mrf.mxu0
    %v6341 = vpop.f32.mrf.mxu0
    %v6342 = vadd.f32 %v6272, %v6341
    %v6343 = vpop.f32.mrf.mxu0
    %6344 = vmatprep.mubr.bf16.mxu0 0
    %6345 = vmatmul.mubr.bf16.gmra.mxu0 %v6302
    %v6346 = vpop.f32.mrf.mxu0
    %v6347 = vadd.f32 %v6272, %v6346
    %v6348 = vpop.f32.mrf.mxu0
    %v6349 = vpop.f32.mrf.mxu0
    %v6350 = vpop.f32.mrf.mxu0
    %6351 = vdwg.mxu0
    %v6352 = vmax.f32 %v6339, 0.0
    %v6353 = vmax.f32 %v6342, 0.0
    %v6354 = vmax.f32 %v6347, 0.0
    %v6355 = vpack.c.bf16 %v6353, %v6352
    %v6356 = vpack.c.bf16 %v6354, %v6354
    %s6357 = scalar_lea.vmem %s14, 64
    %v6358 = vld [vmem:[%s6357] sm:$0xf]
    %v6359 = vld [vmem:[%s6357 + $0x4] sm:$0xf]
    %v6360 = vld [vmem:[%s6357 + $0x8] sm:$0xf]
    %v6361 = vld [vmem:[%s6357 + $0xc] sm:$0xf]
    %v6362 = vld [vmem:[%s6357 + $0x10] sm:$0xf]
    %v6363 = vld [vmem:[%s6357 + $0x14] sm:$0xf]
    %v6364 = vld [vmem:[%s6357 + $0x18] sm:$0xf]
    %v6365 = vld [vmem:[%s6357 + $0x1c] sm:$0xf]
    %s6366 = scalar_lea.vmem [#allocation12], 2
    %v6367 = vld [vmem:[%s6366] sm:$0x1]
    %v6369 = vlaneseq
    %v6370 = vshrl.u32 %v6369, 7
    %v6371 = vsub.s32 0, %v6370
    %v6372 = vrot.slane %v6367, %v6371
    %v6382 = vunpack.c.l.b16 %v6358
    %v6383 = vunpack.c.l.b16 %v6359
    %v6384 = vunpack.c.l.b16 %v6360
    %v6385 = vunpack.c.l.b16 %v6361
    %v6386 = vunpack.c.l.b16 %v6362
    %v6387 = vunpack.c.l.b16 %v6363
    %v6388 = vunpack.c.l.b16 %v6364
    %v6389 = vunpack.c.l.b16 %v6365
    %v6390 = vpack.c.b16 %v6383, %v6382
    %v6391 = vpack.c.b16 %v6385, %v6384
    %v6392 = vpack.c.b16 %v6387, %v6386
    %v6393 = vpack.c.b16 %v6389, %v6388
    %v6399 = vsel %vm260, %v6355, 0
    %v6402 = vsel %vm260, %v6356, 0
    %6404 = vmatprep.subr.bf16.mxu0 0
    %6405 = vmatpush1.bf16.msra.mxu0 0
    %6406 = vmatprep.subr.bf16.mxu0 0
    %6407 = vmatpush1.bf16.msra.mxu0 0
    %6408 = vmatprep.subr.bf16.mxu0 0
    %6409 = vmatpush1.bf16.msra.mxu0 0
    %6410 = vmatprep.subr.bf16.mxu0 0
    %6411 = vmatpush1.bf16.msra.mxu0 0
    %6412 = vmatprep.subr.bf16.mxu0 0
    %6413 = vmatpush1.bf16.msra.mxu0 %v6393
    %6414 = vmatprep.subr.bf16.mxu0 0
    %6415 = vmatpush1.bf16.msra.mxu0 %v6392
    %6416 = vmatprep.subr.bf16.mxu0 0
    %6417 = vmatpush1.bf16.msra.mxu0 %v6391
    %6418 = vmatprep.subr.bf16.mxu0 0
    %6419 = vmatpush1.bf16.msra.mxu0 %v6390
    %6420 = vmatprep.subr.bf16.mxu0 0
    %6421 = vmatpush2.bf16.msra.mxu0 0
    %6422 = vmatprep.subr.bf16.mxu0 0
    %6423 = vmatpush2.bf16.msra.mxu0 0
    %6424 = vmatprep.subr.bf16.mxu0 0
    %6425 = vmatpush2.bf16.msra.mxu0 0
    %6426 = vmatprep.subr.bf16.mxu0 0
    %6427 = vmatpush2.bf16.msra.mxu0 0
    %6428 = vmatprep.subr.bf16.mxu0 0
    %6429 = vmatpush2.bf16.msra.mxu0 0
    %6430 = vmatprep.subr.bf16.mxu0 0
    %6431 = vmatpush2.bf16.msra.mxu0 0
    %6432 = vmatprep.subr.bf16.mxu0 0
    %6433 = vmatpush2.bf16.msra.mxu0 0
    %6434 = vmatprep.subr.bf16.mxu0 0
    %6435 = vmatpush2.bf16.msra.mxu0 0
    %6436 = vmatprep.mubr.bf16.mxu0 0
    %6437 = vmatmul.mubr.bf16.gmra.mxu0 %v6399
    %v6438 = vpop.f32.mrf.mxu0
    %v6439 = vadd.f32 %v6372, %v6438
    %v6440 = vpop.f32.mrf.mxu0
    %v6441 = vpop.f32.mrf.mxu0
    %v6442 = vadd.f32 %v6372, %v6441
    %v6443 = vpop.f32.mrf.mxu0
    %6444 = vmatprep.mubr.bf16.mxu0 0
    %6445 = vmatmul.mubr.bf16.gmra.mxu0 %v6402
    %v6446 = vpop.f32.mrf.mxu0
    %v6447 = vadd.f32 %v6372, %v6446
    %v6448 = vpop.f32.mrf.mxu0
    %v6449 = vpop.f32.mrf.mxu0
    %v6450 = vpop.f32.mrf.mxu0
    %6451 = vdwg.mxu0
    %v6452 = vadd.f32 %v6252, %v6439
    %v6453 = vadd.f32 %v6253, %v6442
    %v6454 = vadd.f32 %v6254, %v6447
    %s6455 = scalar_lea.vmem [#allocation13], 2
    %v6456 = vld [vmem:[%s6455] sm:$0x1]
    %s6457 = scalar_lea.vmem [#allocation15], 2
    %v6458 = vld [vmem:[%s6457] sm:$0x1]
    %v6459 = vsel %vm260, %v6452, 0.0
    %6460 = vadd.xlane.f32.xlu0 %v6459
    %v6461 = vpop.xlane.xlu0 %6460
    %v6462 = vsel %vm260, %v6453, 0.0
    %6463 = vadd.xlane.f32.xlu0 %v6462
    %v6464 = vpop.xlane.xlu0 %6463
    %v6465 = vsel %vm2008, %v6454, 0.0
    %6466 = vadd.xlane.f32.xlu0 %v6465
    %v6467 = vpop.xlane.xlu0 %6466
    %v6468 = vmul.f32 %v6461, %v2012
    %v6469 = vmul.f32 %v6464, %v2012
    %v6470 = vmul.f32 %v6467, %v2012
    %v6471 = vsub.f32 %v6452, %v6468
    %v6472 = vsub.f32 %v6453, %v6469
    %v6473 = vsub.f32 %v6454, %v6470
    %v6474 = vmul.f32 %v6471, %v6471
    %v6475 = vmul.f32 %v6472, %v6472
    %v6476 = vmul.f32 %v6473, %v6473
    %v6477 = vsel %vm260, %v6474, 0.0
    %6478 = vadd.xlane.f32.xlu0 %v6477
    %v6479 = vpop.xlane.xlu0 %6478
    %v6480 = vsel %vm260, %v6475, 0.0
    %6481 = vadd.xlane.f32.xlu0 %v6480
    %v6482 = vpop.xlane.xlu0 %6481
    %v6483 = vsel %vm2008, %v6476, 0.0
    %6484 = vadd.xlane.f32.xlu0 %v6483
    %v6485 = vpop.xlane.xlu0 %6484
    %v6486 = vmul.f32 %v6479, %v2012
    %v6487 = vmul.f32 %v6482, %v2012
    %v6488 = vmul.f32 %v6485, %v2012
    %v6489 = vadd.f32 %v6486, 1e-05
    %v6490 = vadd.f32 %v6487, 1e-05
    %v6491 = vadd.f32 %v6488, 1e-05
    %v6492 = vrsqrt.pop %v6489
    %v6493 = vrsqrt.pop %v6490
    %v6494 = vrsqrt.pop %v6491
    %v6495 = vmul.f32 %v6471, %v6492
    %v6496 = vmul.f32 %v6472, %v6493
    %v6497 = vmul.f32 %v6473, %v6494
    %v6499 = vlaneseq
    %v6500 = vshrl.u32 %v6499, 7
    %v6501 = vsub.s32 0, %v6500
    %v6502 = vrot.slane %v6456, %v6501
    %v6504 = vmul.f32 %v6495, %v6502
    %v6505 = vmul.f32 %v6496, %v6502
    %v6506 = vmul.f32 %v6497, %v6502
    %v6508 = vlaneseq
    %v6509 = vshrl.u32 %v6508, 7
    %v6510 = vsub.s32 0, %v6509
    %v6511 = vrot.slane %v6458, %v6510
    %v6513 = vadd.f32 %v6504, %v6511
    %v6514 = vadd.f32 %v6505, %v6511
    %v6515 = vadd.f32 %v6506, %v6511
    %v6516 = vpack.c.bf16 %v6514, %v6513
    %v6517 = vpack.c.bf16 %v6515, %v6515
    %v6518 = vld [vmem:[#allocation16] sm:$0xf]
    %v6519 = vld [vmem:[#allocation16 + $0x4] sm:$0xf]
    %v6520 = vld [vmem:[#allocation16 + $0x8] sm:$0xf]
    %v6521 = vld [vmem:[#allocation16 + $0xc] sm:$0xf]
    %v6522 = vld [vmem:[#allocation16 + $0x10] sm:$0xf]
    %v6523 = vld [vmem:[#allocation16 + $0x14] sm:$0xf]
    %v6524 = vld [vmem:[#allocation16 + $0x18] sm:$0xf]
    %v6525 = vld [vmem:[#allocation16 + $0x1c] sm:$0xf]
    %v6526 = vld [vmem:[#allocation18] sm:$0x1]
    %v6528 = vlaneseq
    %v6529 = vshrl.u32 %v6528, 7
    %v6530 = vsub.s32 0, %v6529
    %v6531 = vrot.slane %v6526, %v6530
    %v6541 = vunpack.c.l.b16 %v6518
    %v6542 = vunpack.c.l.b16 %v6519
    %v6543 = vunpack.c.l.b16 %v6520
    %v6544 = vunpack.c.l.b16 %v6521
    %v6545 = vunpack.c.l.b16 %v6522
    %v6546 = vunpack.c.l.b16 %v6523
    %v6547 = vunpack.c.l.b16 %v6524
    %v6548 = vunpack.c.l.b16 %v6525
    %v6549 = vpack.c.b16 %v6542, %v6541
    %v6550 = vpack.c.b16 %v6544, %v6543
    %v6551 = vpack.c.b16 %v6546, %v6545
    %v6552 = vpack.c.b16 %v6548, %v6547
    %v6558 = vsel %vm260, %v6516, 0
    %v6561 = vsel %vm260, %v6517, 0
    %6563 = vmatprep.subr.bf16.mxu0 0
    %6564 = vmatpush1.bf16.msra.mxu0 0
    %6565 = vmatprep.subr.bf16.mxu0 0
    %6566 = vmatpush1.bf16.msra.mxu0 0
    %6567 = vmatprep.subr.bf16.mxu0 0
    %6568 = vmatpush1.bf16.msra.mxu0 0
    %6569 = vmatprep.subr.bf16.mxu0 0
    %6570 = vmatpush1.bf16.msra.mxu0 0
    %6571 = vmatprep.subr.bf16.mxu0 0
    %6572 = vmatpush1.bf16.msra.mxu0 %v6552
    %6573 = vmatprep.subr.bf16.mxu0 0
    %6574 = vmatpush1.bf16.msra.mxu0 %v6551
    %6575 = vmatprep.subr.bf16.mxu0 0
    %6576 = vmatpush1.bf16.msra.mxu0 %v6550
    %6577 = vmatprep.subr.bf16.mxu0 0
    %6578 = vmatpush1.bf16.msra.mxu0 %v6549
    %6579 = vmatprep.subr.bf16.mxu0 0
    %6580 = vmatpush2.bf16.msra.mxu0 0
    %6581 = vmatprep.subr.bf16.mxu0 0
    %6582 = vmatpush2.bf16.msra.mxu0 0
    %6583 = vmatprep.subr.bf16.mxu0 0
    %6584 = vmatpush2.bf16.msra.mxu0 0
    %6585 = vmatprep.subr.bf16.mxu0 0
    %6586 = vmatpush2.bf16.msra.mxu0 0
    %6587 = vmatprep.subr.bf16.mxu0 0
    %6588 = vmatpush2.bf16.msra.mxu0 0
    %6589 = vmatprep.subr.bf16.mxu0 0
    %6590 = vmatpush2.bf16.msra.mxu0 0
    %6591 = vmatprep.subr.bf16.mxu0 0
    %6592 = vmatpush2.bf16.msra.mxu0 0
    %6593 = vmatprep.subr.bf16.mxu0 0
    %6594 = vmatpush2.bf16.msra.mxu0 0
    %6595 = vmatprep.mubr.bf16.mxu0 0
    %6596 = vmatmul.mubr.bf16.gmra.mxu0 %v6558
    %v6597 = vpop.f32.mrf.mxu0
    %v6598 = vadd.f32 %v6531, %v6597
    %v6599 = vpop.f32.mrf.mxu0
    %v6600 = vpop.f32.mrf.mxu0
    %v6601 = vadd.f32 %v6531, %v6600
    %v6602 = vpop.f32.mrf.mxu0
    %6603 = vmatprep.mubr.bf16.mxu0 0
    %6604 = vmatmul.mubr.bf16.gmra.mxu0 %v6561
    %v6605 = vpop.f32.mrf.mxu0
    %v6606 = vadd.f32 %v6531, %v6605
    %v6607 = vpop.f32.mrf.mxu0
    %v6608 = vpop.f32.mrf.mxu0
    %v6609 = vpop.f32.mrf.mxu0
    %6610 = vdwg.mxu0
    %6611 = vst [vmem:[%s20] sm:$0xff] %v6598
    %6612 = vst [vmem:[%s20 + $0x8] sm:$0xff] %v6601
    %6613 = vst [vmem:[%s20 + $0x10] sm:$0xf] %v6606
    // Predicated region
    $region126: #{name_generator_forward.1} parent=1 // pred_check
      _
    $region127: #{name_generator_forward.1} parent=1 // pred_check_branch
      %6615 = sbr.rel (0) target = $region129
    $region128: #{name_generator_forward.1} parent=1 // pred_region
      _
    $region129: #{name_generator_forward.1} parent=1 // pred_fallthru
      _
    // Predicated region
    $region130: #{name_generator_forward.1} parent=1 // pred_check
      _
    $region131: #{name_generator_forward.1} parent=1 // pred_check_branch
      %6617 = sbr.rel (0) target = $region133
    $region132: #{name_generator_forward.1} parent=1 // pred_region
      _
    $region133: #{name_generator_forward.1} parent=1 // pred_fallthru
      _
    %6618 = vsyncpa [#allocation3], 1
    %6619 = vsyncpa [#allocation5], 1
    %6620 = vsyncpa [#allocation8], 1
    %6621 = vsyncpa [#allocation11], 1
    %6622 = vsyncpa [#allocation14], 1
    %6623 = vsyncpa [#allocation17], 1

</llo_original>
